<compile_context>
chip_gen: v5e
topology: v5e:2x2
jax: 0.10.0
libtpu: 0.0.40
codegen_flags: <defaults>
</compile_context>

<pallas_src>
import functools

import jax
import jax.numpy as jnp
from jax.experimental import pallas as pl
from jax.experimental.pallas import tpu as pltpu

NUM_GATES = 3        # forget, input, output(zero) gate
MIN_GRID_STEPS = 4   # >= 2 grid steps per TensorCore on v7x => pipelined DMAs


def cell_kernel(x_ref, h_ref, c_ref, xm_ref, hm_ref, om_ref,
                wx_ref, wh_ref, b_ref,
                out_ref, nh_ref, nc_ref):
    H = h_ref.shape[-1]
    mm_dtype = wx_ref.dtype

    # Dropout masks applied in the streamed dtype; single cast to the MXU
    # operand dtype (bf16 by default).
    xd = (xm_ref[...] * x_ref[...]).astype(mm_dtype)
    hd = (hm_ref[...] * h_ref[...]).astype(mm_dtype)

    # One fused projection, split as xd @ Wx + hd @ Wh (host-packed weights),
    # fp32 accumulation on the MXU.  Column layout:
    #   [content | g_forget | g_input | g_output]  -> 128-lane aligned slices.
    pre = jnp.dot(xd, wx_ref[...], preferred_element_type=jnp.float32)
    pre = pre + jnp.dot(hd, wh_ref[...], preferred_element_type=jnp.float32)
    pre = pre + b_ref[...]

    # NOTE(v5e): tanh(H) + sigmoid(3H) + tanh(H) all share the single EUP slot
    # (no bf16 EUP on v5e); once HBM traffic is cut this is the next likely
    # limiter there — hide it behind DMA with larger batch tiles rather than
    # adding VPU-side approximations.
    content = jnp.tanh(pre[:, 0:H])
    gates = jax.nn.sigmoid(pre[:, H:])           # (tb, 3H)
    g_forget = gates[:, 0:H]
    g_input = gates[:, H:2 * H]
    g_output = gates[:, 2 * H:3 * H]

    # fp32 epilogue; cell state carried in fp32.
    new_cell = g_forget * c_ref[...] + g_input * content
    new_hidden = g_output * jnp.tanh(new_cell)

    out_ref[...] = (om_ref[...].astype(jnp.float32) * new_hidden).astype(out_ref.dtype)
    nh_ref[...] = new_hidden.astype(nh_ref.dtype)
    nc_ref[...] = new_cell.astype(nc_ref.dtype)


def _round_up(n, m):
    return ((n + m - 1) // m) * m


@functools.partial(jax.jit, static_argnames=("block_b", "matmul_dtype"))
def cell_forward(x, h, c, x_mask, h_mask, o_mask,
                 w_content, b_content, w_gates, b_gates,
                 *, block_b=512, matmul_dtype=jnp.bfloat16):
    B, I = x.shape
    H = h.shape[-1]
    G = (NUM_GATES + 1) * H  # content column block + 3 gate column blocks

    # ---- host-side weight packing (kills in-kernel concatenates) ----------
    # content path consumes [xd, hd]: W_c rows [0:I] -> x, rows [I:I+H] -> h
    # gate path consumes    [hd, xd]: W_g rows [0:H] -> h, rows [H:H+I] -> x
    w_x = jnp.concatenate([w_content[:I, :], w_gates[H:H + I, :]],
                          axis=1).astype(matmul_dtype)
    w_h = jnp.concatenate([w_content[I:I + H, :], w_gates[:H, :]],
                          axis=1).astype(matmul_dtype)
    b_all = jnp.concatenate([b_content, b_gates]).reshape(1, G).astype(jnp.float32)

    # ---- batch tiling ------------------------------------------------------
    # Tile as large as block_b allows, but keep >= MIN_GRID_STEPS grid steps so
    # every generation (incl. v7x with 2 TCs under "parallel") gets a
    # double-buffered pipeline.  No host-side padding: grid = cdiv(B, tb); the
    # ragged last block only produces garbage in discarded OOB output rows.
    tb = _round_up(-(-B // MIN_GRID_STEPS), 32)
    tb = max(32, min(block_b, tb))
    grid = (pl.cdiv(B, tb),)

    def batch_spec(F):
        return pl.BlockSpec((tb, F), lambda i: (i, 0))

    def resident(shape):  # constant index_map -> stays in VMEM across steps
        return pl.BlockSpec(shape, lambda i: (0, 0))

    grid_spec = pl.GridSpec(
        grid=grid,
        in_specs=[
            batch_spec(I),        # x
            batch_spec(H),        # h
            batch_spec(H),        # c
            batch_spec(I),        # x_mask
            batch_spec(H),        # h_mask
            batch_spec(H),        # o_mask
            resident((I, G)),     # packed W_x
            resident((H, G)),     # packed W_h
            resident((1, G)),     # packed bias
        ],
        out_specs=(batch_spec(H), batch_spec(H), batch_spec(H)),
    )

    bytes_in = sum(int(a.size) * a.dtype.itemsize
                   for a in (x, h, c, x_mask, h_mask, o_mask, w_x, w_h, b_all))
    bytes_out = B * H * (2 * jnp.dtype(h.dtype).itemsize
                         + jnp.dtype(c.dtype).itemsize)
    cost = pl.CostEstimate(
        flops=2 * B * (I + H) * G + 10 * B * H,
        transcendentals=(NUM_GATES + 2) * B * H,   # tanh(H)+sigmoid(3H)+tanh(H)
        bytes_accessed=bytes_in + bytes_out,
    )

    out, new_hidden, new_cell = pl.pallas_call(
        cell_kernel,
        out_shape=(jax.ShapeDtypeStruct((B, H), h.dtype),   # output
                   jax.ShapeDtypeStruct((B, H), h.dtype),   # new_hidden
                   jax.ShapeDtypeStruct((B, H), c.dtype)),  # new_cell (fp32 carry)
        grid_spec=grid_spec,
        compiler_params=pltpu.CompilerParams(
            dimension_semantics=("parallel",)),
        cost_estimate=cost,
    )(x, h, c, x_mask, h_mask, o_mask, w_x, w_h, b_all)

    return out, (new_hidden, new_cell)


def cell_forward_ref(x, h, c, x_mask, h_mask, o_mask, w_content, b_content,
                     w_gates, b_gates):
    """Pure-JAX reference matching the PyTorch forward (fp32)."""
    H = h.shape[-1]
    xd = x_mask * x
    hd = h_mask * h
    content = jnp.tanh(jnp.concatenate([xd, hd], -1) @ w_content + b_content)
    gates = jax.nn.sigmoid(jnp.concatenate([hd, xd], -1) @ w_gates + b_gates)
    g0, g1, g2 = gates[:, :H], gates[:, H:2 * H], gates[:, 2 * H:3 * H]
    new_cell = g0 * c + g1 * content
    new_hidden = g2 * jnp.tanh(new_cell)
    output = o_mask * new_hidden
    return output, (new_hidden, new_cell)


def xavier_uniform(key, shape):
    fan_in, fan_out = shape
    bound = (6.0 / (fan_in + fan_out)) ** 0.5
    return jax.random.uniform(key, shape, jnp.float32, -bound, bound)


if __name__ == "__main__":
    # Lane-aligned feature dims (I = H = 128); B chosen so the wrapper picks a
    # 512-row tile, a 4-step grid, and a ragged last block (no host-side pad).
    B, I, H = 2000, 128, 128

    key = jax.random.PRNGKey(0)
    k_x, k_h, k_c, k_xm, k_hm, k_om, k_wc, k_wg = jax.random.split(key, 8)

    x = jax.random.normal(k_x, (B, I), jnp.float32)
    h = jax.random.normal(k_h, (B, H), jnp.float32)
    c = jax.random.normal(k_c, (B, H), jnp.float32)

    # dropout masks (keep_prob = 0.8, scaled, deterministic) — values 0 / 1.25
    # are exactly representable in bf16.
    keep = 0.8
    x_mask = jax.random.bernoulli(k_xm, keep, (B, I)).astype(jnp.float32) / keep
    h_mask = jax.random.bernoulli(k_hm, keep, (B, H)).astype(jnp.float32) / keep
    o_mask = jax.random.bernoulli(k_om, keep, (B, H)).astype(jnp.float32) / keep

    # parameters (xavier_uniform for matrices, zeros for biases — as init_weights)
    w_content = xavier_uniform(k_wc, (I + H, H))
    b_content = jnp.zeros((H,), jnp.float32)
    w_gates = xavier_uniform(k_wg, (H + I, NUM_GATES * H))
    b_gates = jnp.zeros((NUM_GATES * H,), jnp.float32)

    params = (w_content, b_content, w_gates, b_gates)

    out_r, (nh_r, nc_r) = cell_forward_ref(x, h, c, x_mask, h_mask, o_mask, *params)
    jax.block_until_ready((out_r, nh_r, nc_r))

    # Strict/debug path: fp32 streams + fp32 MXU operands — tight check.
    out32, (nh32, nc32) = cell_forward(x, h, c, x_mask, h_mask, o_mask, *params,
                                       matmul_dtype=jnp.float32)
    jax.block_until_ready((out32, nh32, nc32))
    assert jnp.allclose(out32, out_r, atol=1e-4, rtol=1e-4)
    assert jnp.allclose(nh32, nh_r, atol=1e-4, rtol=1e-4)
    assert jnp.allclose(nc32, nc_r, atol=1e-4, rtol=1e-4)

    # Default fast path: caller supplies bf16 activations/masks (halves the HBM
    # streams), bf16 MXU operands, fp32 accumulation, fp32 cell-state carry.
    to16 = lambda a: a.astype(jnp.bfloat16)
    out_b, (nh_b, nc_b) = cell_forward(to16(x), to16(h), c,
                                       to16(x_mask), to16(h_mask), to16(o_mask),
                                       *params)
    jax.block_until_ready((out_b, nh_b, nc_b))
    assert jnp.allclose(out_b.astype(jnp.float32), out_r, atol=6e-2, rtol=6e-2)
    assert jnp.allclose(nh_b.astype(jnp.float32), nh_r, atol=6e-2, rtol=6e-2)
    assert jnp.allclose(nc_b, nc_r, atol=6e-2, rtol=6e-2)

    print("KERNEL_OK")
</pallas_src>

<mosaic_0001>
module attributes {stable_mosaic.version = 11 : i64} {
  func.func @cell_kernel(%arg0: i32, %arg1: memref<512x128xf32, #tpu.memory_space<vmem>>, %arg2: memref<512x128xf32, #tpu.memory_space<vmem>>, %arg3: memref<512x128xf32, #tpu.memory_space<vmem>>, %arg4: memref<512x128xf32, #tpu.memory_space<vmem>>, %arg5: memref<512x128xf32, #tpu.memory_space<vmem>>, %arg6: memref<512x128xf32, #tpu.memory_space<vmem>>, %arg7: memref<128x512xf32, #tpu.memory_space<vmem>>, %arg8: memref<128x512xf32, #tpu.memory_space<vmem>>, %arg9: memref<1x512xf32, #tpu.memory_space<vmem>>, %arg10: memref<512x128xf32, #tpu.memory_space<vmem>>, %arg11: memref<512x128xf32, #tpu.memory_space<vmem>>, %arg12: memref<512x128xf32, #tpu.memory_space<vmem>>) attributes {dimension_semantics = [#tpu.dimension_semantics<parallel>], iteration_bounds = array<i64: 4>, scalar_prefetch = 0 : i64, scratch_operands = 0 : i64, tpu.core_type = #tpu.core_type<tc>, window_params = [{transform_indices = @transform_0, window_bounds = array<i64: 512, 128>}, {transform_indices = @transform_1, window_bounds = array<i64: 512, 128>}, {transform_indices = @transform_2, window_bounds = array<i64: 512, 128>}, {transform_indices = @transform_3, window_bounds = array<i64: 512, 128>}, {transform_indices = @transform_4, window_bounds = array<i64: 512, 128>}, {transform_indices = @transform_5, window_bounds = array<i64: 512, 128>}, {pipeline_mode = #tpu.pipeline_mode<synchronous>, transform_indices = @transform_6, window_bounds = array<i64: 128, 512>}, {pipeline_mode = #tpu.pipeline_mode<synchronous>, transform_indices = @transform_7, window_bounds = array<i64: 128, 512>}, {pipeline_mode = #tpu.pipeline_mode<synchronous>, transform_indices = @transform_8, window_bounds = array<i64: 1, 512>}, {transform_indices = @transform_9, window_bounds = array<i64: 512, 128>}, {transform_indices = @transform_10, window_bounds = array<i64: 512, 128>}, {transform_indices = @transform_11, window_bounds = array<i64: 512, 128>}]} {
    %c0 = arith.constant 0 : index
    %c0_0 = arith.constant 0 : index
    %0 = vector.load %arg4[%c0, %c0_0] : memref<512x128xf32, #tpu.memory_space<vmem>>, vector<512x128xf32>
    %c0_1 = arith.constant 0 : index
    %c0_2 = arith.constant 0 : index
    %1 = vector.load %arg1[%c0_1, %c0_2] : memref<512x128xf32, #tpu.memory_space<vmem>>, vector<512x128xf32>
    %2 = arith.mulf %0, %1 : vector<512x128xf32>
    %c0_3 = arith.constant 0 : index
    %c0_4 = arith.constant 0 : index
    %3 = vector.load %arg5[%c0_3, %c0_4] : memref<512x128xf32, #tpu.memory_space<vmem>>, vector<512x128xf32>
    %c0_5 = arith.constant 0 : index
    %c0_6 = arith.constant 0 : index
    %4 = vector.load %arg2[%c0_5, %c0_6] : memref<512x128xf32, #tpu.memory_space<vmem>>, vector<512x128xf32>
    %5 = arith.mulf %3, %4 : vector<512x128xf32>
    %c0_7 = arith.constant 0 : index
    %c0_8 = arith.constant 0 : index
    %6 = vector.load %arg7[%c0_7, %c0_8] : memref<128x512xf32, #tpu.memory_space<vmem>>, vector<128x512xf32>
    %cst = arith.constant dense<0.000000e+00> : vector<512x512xf32>
    %7 = tpu.matmul %2, %6, %cst {dimension_numbers = #tpu.dot_dimension_numbers<[1], [0], [0], [1], [0, 0, 1, 1], [], []>} : vector<512x128xf32>, vector<128x512xf32>, vector<512x512xf32> -> vector<512x512xf32>
    %c0_9 = arith.constant 0 : index
    %c0_10 = arith.constant 0 : index
    %8 = vector.load %arg8[%c0_9, %c0_10] : memref<128x512xf32, #tpu.memory_space<vmem>>, vector<128x512xf32>
    %cst_11 = arith.constant dense<0.000000e+00> : vector<512x512xf32>
    %9 = tpu.matmul %5, %8, %cst_11 {dimension_numbers = #tpu.dot_dimension_numbers<[1], [0], [0], [1], [0, 0, 1, 1], [], []>} : vector<512x128xf32>, vector<128x512xf32>, vector<512x512xf32> -> vector<512x512xf32>
    %10 = arith.addf %7, %9 : vector<512x512xf32>
    %c0_12 = arith.constant 0 : index
    %c0_13 = arith.constant 0 : index
    %11 = vector.load %arg9[%c0_12, %c0_13] : memref<1x512xf32, #tpu.memory_space<vmem>>, vector<1x512xf32>
    %12 = vector.broadcast %11 : vector<1x512xf32> to vector<512x512xf32>
    %13 = arith.addf %10, %12 : vector<512x512xf32>
    %14 = vector.extract_strided_slice %13 {offsets = [0, 0], sizes = [512, 128], strides = [1, 1]} : vector<512x512xf32> to vector<512x128xf32>
    %15 = math.tanh %14 : vector<512x128xf32>
    %16 = vector.extract_strided_slice %13 {offsets = [0, 128], sizes = [512, 384], strides = [1, 1]} : vector<512x512xf32> to vector<512x384xf32>
    %17 = arith.negf %16 : vector<512x384xf32>
    %18 = math.exp %17 : vector<512x384xf32>
    %cst_14 = arith.constant 1.000000e+00 : f32
    %19 = vector.broadcast %cst_14 : f32 to vector<512x384xf32>
    %20 = arith.addf %19, %18 : vector<512x384xf32>
    %21 = arith.divf %19, %20 : vector<512x384xf32>
    %22 = vector.extract_strided_slice %21 {offsets = [0, 0], sizes = [512, 128], strides = [1, 1]} : vector<512x384xf32> to vector<512x128xf32>
    %23 = vector.extract_strided_slice %21 {offsets = [0, 128], sizes = [512, 128], strides = [1, 1]} : vector<512x384xf32> to vector<512x128xf32>
    %24 = vector.extract_strided_slice %21 {offsets = [0, 256], sizes = [512, 128], strides = [1, 1]} : vector<512x384xf32> to vector<512x128xf32>
    %c0_15 = arith.constant 0 : index
    %c0_16 = arith.constant 0 : index
    %25 = vector.load %arg3[%c0_15, %c0_16] : memref<512x128xf32, #tpu.memory_space<vmem>>, vector<512x128xf32>
    %26 = arith.mulf %22, %25 : vector<512x128xf32>
    %27 = arith.mulf %23, %15 : vector<512x128xf32>
    %28 = arith.addf %26, %27 : vector<512x128xf32>
    %29 = math.tanh %28 : vector<512x128xf32>
    %30 = arith.mulf %24, %29 : vector<512x128xf32>
    %c0_17 = arith.constant 0 : index
    %c0_18 = arith.constant 0 : index
    %31 = vector.load %arg6[%c0_17, %c0_18] : memref<512x128xf32, #tpu.memory_space<vmem>>, vector<512x128xf32>
    %32 = arith.mulf %31, %30 : vector<512x128xf32>
    %c0_19 = arith.constant 0 : index
    %c0_20 = arith.constant 0 : index
    %33 = vector.load %arg10[%c0_19, %c0_20] : memref<512x128xf32, #tpu.memory_space<vmem>>, vector<512x128xf32>
    tpu.vector_store %arg10[%c0_19, %c0_20], %32 {strides = array<i32>} : memref<512x128xf32, #tpu.memory_space<vmem>>, vector<512x128xf32>,
    %c0_21 = arith.constant 0 : index
    %c0_22 = arith.constant 0 : index
    %34 = vector.load %arg11[%c0_21, %c0_22] : memref<512x128xf32, #tpu.memory_space<vmem>>, vector<512x128xf32>
    tpu.vector_store %arg11[%c0_21, %c0_22], %30 {strides = array<i32>} : memref<512x128xf32, #tpu.memory_space<vmem>>, vector<512x128xf32>,
    %c0_23 = arith.constant 0 : index
    %c0_24 = arith.constant 0 : index
    %35 = vector.load %arg12[%c0_23, %c0_24] : memref<512x128xf32, #tpu.memory_space<vmem>>, vector<512x128xf32>
    tpu.vector_store %arg12[%c0_23, %c0_24], %28 {strides = array<i32>} : memref<512x128xf32, #tpu.memory_space<vmem>>, vector<512x128xf32>,
    return
  }
  func.func @transform_0(%arg0: i32) -> (i32, i32) {
    %c0_i32 = arith.constant 0 : i32
    %c0_i32_0 = arith.constant 0 : i32
    return %arg0, %c0_i32 : i32, i32
  }
  func.func @transform_1(%arg0: i32) -> (i32, i32) {
    %c0_i32 = arith.constant 0 : i32
    %c0_i32_0 = arith.constant 0 : i32
    return %arg0, %c0_i32 : i32, i32
  }
  func.func @transform_2(%arg0: i32) -> (i32, i32) {
    %c0_i32 = arith.constant 0 : i32
    %c0_i32_0 = arith.constant 0 : i32
    return %arg0, %c0_i32 : i32, i32
  }
  func.func @transform_3(%arg0: i32) -> (i32, i32) {
    %c0_i32 = arith.constant 0 : i32
    %c0_i32_0 = arith.constant 0 : i32
    return %arg0, %c0_i32 : i32, i32
  }
  func.func @transform_4(%arg0: i32) -> (i32, i32) {
    %c0_i32 = arith.constant 0 : i32
    %c0_i32_0 = arith.constant 0 : i32
    return %arg0, %c0_i32 : i32, i32
  }
  func.func @transform_5(%arg0: i32) -> (i32, i32) {
    %c0_i32 = arith.constant 0 : i32
    %c0_i32_0 = arith.constant 0 : i32
    return %arg0, %c0_i32 : i32, i32
  }
  func.func @transform_6(%arg0: i32) -> (i32, i32) {
    %c0_i32 = arith.constant 0 : i32
    %c0_i32_0 = arith.constant 0 : i32
    %c0_i32_1 = arith.constant 0 : i32
    return %c0_i32, %c0_i32_0 : i32, i32
  }
  func.func @transform_7(%arg0: i32) -> (i32, i32) {
    %c0_i32 = arith.constant 0 : i32
    %c0_i32_0 = arith.constant 0 : i32
    %c0_i32_1 = arith.constant 0 : i32
    return %c0_i32, %c0_i32_0 : i32, i32
  }
  func.func @transform_8(%arg0: i32) -> (i32, i32) {
    %c0_i32 = arith.constant 0 : i32
    %c0_i32_0 = arith.constant 0 : i32
    %c0_i32_1 = arith.constant 0 : i32
    return %c0_i32, %c0_i32_0 : i32, i32
  }
  func.func @transform_9(%arg0: i32) -> (i32, i32) {
    %c0_i32 = arith.constant 0 : i32
    %c0_i32_0 = arith.constant 0 : i32
    return %arg0, %c0_i32 : i32, i32
  }
  func.func @transform_10(%arg0: i32) -> (i32, i32) {
    %c0_i32 = arith.constant 0 : i32
    %c0_i32_0 = arith.constant 0 : i32
    return %arg0, %c0_i32 : i32, i32
  }
  func.func @transform_11(%arg0: i32) -> (i32, i32) {
    %c0_i32 = arith.constant 0 : i32
    %c0_i32_0 = arith.constant 0 : i32
    return %arg0, %c0_i32 : i32, i32
  }
}

</mosaic_0001>

<llo_original>
// kernel: cell_forward.1
$region0: #{cell_forward.1}
  #allocation0 [shape = 'u32[]', space=smem, size = 0x4, offset = 0x4, fixed_abs, tag = 'smem constant byte address 0x4 - core index']
  #allocation1 [shape = 'u32[72,128]{1,0:T(1,128)}', space=vmem, size = 0x9000, scoped, tag = 'internal scratch']
  %s0 = inlined_call_operand.vmem [shape: f32[2000,128], index: 0, kind: input, shape index: {}]
  %s1 = inlined_call_operand.vmem [shape: f32[2000,128], index: 1, kind: input, shape index: {}]
  %s2 = inlined_call_operand.hbm [shape: f32[2000,128], index: 2, kind: input, shape index: {}]
  %s3 = inlined_call_operand.hbm [shape: f32[2000,128], index: 3, kind: input, shape index: {}]
  %s4 = inlined_call_operand.hbm [shape: f32[2000,128], index: 4, kind: input, shape index: {}]
  %s5 = inlined_call_operand.hbm [shape: f32[2000,128], index: 5, kind: input, shape index: {}]
  %s6 = inlined_call_operand.vmem [shape: f32[128,512], index: 6, kind: input, shape index: {}]
  %s7 = inlined_call_operand.vmem [shape: f32[128,512], index: 7, kind: input, shape index: {}]
  %s8 = inlined_call_operand.vmem [shape: f32[1,512], index: 8, kind: input, shape index: {}]
  %s9 = inlined_call_operand.hbm [shape: f32[2000,128], index: 9, kind: output, shape index: {0}]
  %s10 = inlined_call_operand.hbm [shape: f32[2000,128], index: 10, kind: output, shape index: {1}]
  %s11 = inlined_call_operand.hbm [shape: f32[2000,128], index: 11, kind: output, shape index: {2}]
  %12 = xla_tuple %s9, %s10, %s11
  %s13 = sld [smem:[#allocation0]]
  $region101: #{cell_forward.1} parent=0
    _
  %s15 = ssub.s32 1, %s13
  %s16 = scalar_select 0, %s15, %s13
  $region1: #{cell_forward.1} parent=0
    #allocation2 [shape = 'u8[524288]{0}', space=vmem, size = 0x80000, scoped, tag = 'input window, operand 2']
    #allocation3 [shape = 's32[2]{0}', space=sflag, size = 0x8, scoped, tag = 'scoped memory for cell_forward.1']
    #allocation4 [shape = 's32[2]{0}', space=sflag, size = 0x8, scoped, tag = 'scoped memory for cell_forward.1']
    #allocation5 [shape = 'u8[524288]{0}', space=vmem, size = 0x80000, scoped, tag = 'input window, operand 3']
    #allocation6 [shape = 's32[2]{0}', space=sflag, size = 0x8, scoped, tag = 'scoped memory for cell_forward.1']
    #allocation7 [shape = 'u8[524288]{0}', space=vmem, size = 0x80000, scoped, tag = 'input window, operand 4']
    #allocation8 [shape = 'u8[524288]{0}', space=vmem, size = 0x80000, scoped, tag = 'input window, operand 5']
    #allocation9 [shape = 's32[2]{0}', space=sflag, size = 0x8, scoped, tag = 'scoped memory for cell_forward.1']
    #allocation10 [shape = 'u8[524288]{0}', space=vmem, size = 0x80000, scoped, tag = 'output window, operand 0']
    #allocation11 [shape = 'u8[524288]{0}', space=vmem, size = 0x80000, scoped, tag = 'output window, operand 1']
    #allocation12 [shape = 's32[2]{0}', space=sflag, size = 0x8, scoped, tag = 'scoped memory for cell_forward.1']
    #allocation13 [shape = 'u8[524288]{0}', space=vmem, size = 0x80000, scoped, tag = 'output window, operand 2']
    %17 = vsyncpa [#allocation3], 0
    %s18 = scalar_lea.sflag [#allocation3], 1
    %19 = vsyncpa %s18, 0
    %20 = vsyncpa [#allocation6], 0
    %s21 = scalar_lea.sflag [#allocation6], 1
    %22 = vsyncpa %s21, 0
    %23 = vsyncpa [#allocation9], 0
    %s24 = scalar_lea.sflag [#allocation9], 1
    %25 = vsyncpa %s24, 0
    %26 = vsyncpa [#allocation4], 0
    %s27 = scalar_lea.sflag [#allocation4], 1
    %28 = vsyncpa %s27, 0
    %29 = vsyncpa [#allocation12], 0
    %s30 = scalar_lea.sflag [#allocation12], 1
    %31 = vsyncpa %s30, 0
    loop: start=0, step=1, limit=6
    $region2: #{cell_forward.1} parent=1 // loop_pre_header
      _
    $region3: #{cell_forward.1} parent=1 // loop_header
      %s33 = sphi 0, %s37
      %p34 = scmp.ge.s32.totalorder %s33, 6
      %s43 = sphi 0, %s45
      %s46 = sphi 0, %s43
      %s47 = sphi 0, %s46
      %s63 = sphi 0, %s47
      %s69 = sphi 0, %s71
      %s72 = sphi 0, %s69
      %s73 = sphi 0, %s72
      %s89 = sphi 0, %s73
      %s95 = sphi 0, %s97
      %s98 = sphi 0, %s95
      %s99 = sphi 0, %s98
      %s115 = sphi 0, %s99
      %s121 = sphi 0, %s123
      %s124 = sphi 0, %s121
      %s125 = sphi 0, %s124
      %s141 = sphi 0, %s125
      %s147 = sphi 0, %s149
      %s150 = sphi 0, %s147
      %s151 = sphi 0, %s150
      %s167 = sphi 0, %s151
      %s173 = sphi 0, %s175
      %s176 = sphi 0, %s173
      %s177 = sphi 0, %s176
      %s193 = sphi 0, %s177
      %s197 = sphi 0, %s197
      %s199 = sphi 0, %s197
      %s200 = sphi 0, %s199
      %s214 = sphi 0, %s200
      %s218 = sphi 0, %s218
      %s220 = sphi 0, %s218
      %s221 = sphi 0, %s220
      %s235 = sphi 0, %s221
      %s239 = sphi 0, %s239
      %s241 = sphi 0, %s239
      %s242 = sphi 0, %s241
      %s256 = sphi 0, %s242
      %s262 = sphi 0, %s264
      %s265 = sphi 0, %s262
      %s266 = sphi 0, %s265
      %s282 = sphi 0, %s266
      %s288 = sphi 0, %s290
      %s291 = sphi 0, %s288
      %s292 = sphi 0, %s291
      %s308 = sphi 0, %s292
      %s314 = sphi 0, %s316
      %s317 = sphi 0, %s314
      %s318 = sphi 0, %s317
      %s334 = sphi 0, %s318
    $region4: #{cell_forward.1} parent=1 // loop_header_branch
      %36 = sbr.rel (%p34) target = $region8
    $region5: #{cell_forward.1} parent=1 // loop_body
      %s38 = ssub.s32 %s33, 1
      %s39 = ssub.s32 %s33, 2
      %s40 = sadd.s32 %s33, 1
      %s41 = ssub.s32 %s33, %s40
      %p42 = scmp.eq.s32.totalorder %s41, 0
      %s44 = sadd.s32 %s43, 1
      %s45 = scalar_select %p42, %s43, %s44
      %p48 = pneg %p42
      %p49 = scmp.eq.s32.totalorder %s33, 3
      %p50 = por %p48, %p49
      %p51 = scmp.ne.s32.totalorder %s43, %s46
      %p52 = scmp.eq.s32.totalorder %s33, 0
      %p53 = por %p51, %p52
      %p54 = scmp.ne.s32.totalorder %s43, %s46
      %p55 = scmp.eq.s32.totalorder %s38, 3
      %p56 = por %p54, %p55
      %p57 = scmp.ne.s32.totalorder %s46, %s47
      %p58 = scmp.eq.s32.totalorder %s38, 0
      %p59 = por %p57, %p58
      %p60 = scmp.ne.s32.totalorder %s46, %s47
      %p61 = scmp.eq.s32.totalorder %s39, 3
      %p62 = por %p60, %p61
      %p64 = scmp.ne.s32.totalorder %s47, %s63
      %p65 = scmp.eq.s32.totalorder %s39, 0
      %p66 = por %p64, %p65
      %s67 = ssub.s32 %s33, %s40
      %p68 = scmp.eq.s32.totalorder %s67, 0
      %s70 = sadd.s32 %s69, 1
      %s71 = scalar_select %p68, %s69, %s70
      %p74 = pneg %p68
      %p75 = scmp.eq.s32.totalorder %s33, 3
      %p76 = por %p74, %p75
      %p77 = scmp.ne.s32.totalorder %s69, %s72
      %p78 = scmp.eq.s32.totalorder %s33, 0
      %p79 = por %p77, %p78
      %p80 = scmp.ne.s32.totalorder %s69, %s72
      %p81 = scmp.eq.s32.totalorder %s38, 3
      %p82 = por %p80, %p81
      %p83 = scmp.ne.s32.totalorder %s72, %s73
      %p84 = scmp.eq.s32.totalorder %s38, 0
      %p85 = por %p83, %p84
      %p86 = scmp.ne.s32.totalorder %s72, %s73
      %p87 = scmp.eq.s32.totalorder %s39, 3
      %p88 = por %p86, %p87
      %p90 = scmp.ne.s32.totalorder %s73, %s89
      %p91 = scmp.eq.s32.totalorder %s39, 0
      %p92 = por %p90, %p91
      %s93 = ssub.s32 %s33, %s40
      %p94 = scmp.eq.s32.totalorder %s93, 0
      %s96 = sadd.s32 %s95, 1
      %s97 = scalar_select %p94, %s95, %s96
      %p100 = pneg %p94
      %p101 = scmp.eq.s32.totalorder %s33, 3
      %p102 = por %p100, %p101
      %p103 = scmp.ne.s32.totalorder %s95, %s98
      %p104 = scmp.eq.s32.totalorder %s33, 0
      %p105 = por %p103, %p104
      %p106 = scmp.ne.s32.totalorder %s95, %s98
      %p107 = scmp.eq.s32.totalorder %s38, 3
      %p108 = por %p106, %p107
      %p109 = scmp.ne.s32.totalorder %s98, %s99
      %p110 = scmp.eq.s32.totalorder %s38, 0
      %p111 = por %p109, %p110
      %p112 = scmp.ne.s32.totalorder %s98, %s99
      %p113 = scmp.eq.s32.totalorder %s39, 3
      %p114 = por %p112, %p113
      %p116 = scmp.ne.s32.totalorder %s99, %s115
      %p117 = scmp.eq.s32.totalorder %s39, 0
      %p118 = por %p116, %p117
      %s119 = ssub.s32 %s33, %s40
      %p120 = scmp.eq.s32.totalorder %s119, 0
      %s122 = sadd.s32 %s121, 1
      %s123 = scalar_select %p120, %s121, %s122
      %p126 = pneg %p120
      %p127 = scmp.eq.s32.totalorder %s33, 3
      %p128 = por %p126, %p127
      %p129 = scmp.ne.s32.totalorder %s121, %s124
      %p130 = scmp.eq.s32.totalorder %s33, 0
      %p131 = por %p129, %p130
      %p132 = scmp.ne.s32.totalorder %s121, %s124
      %p133 = scmp.eq.s32.totalorder %s38, 3
      %p134 = por %p132, %p133
      %p135 = scmp.ne.s32.totalorder %s124, %s125
      %p136 = scmp.eq.s32.totalorder %s38, 0
      %p137 = por %p135, %p136
      %p138 = scmp.ne.s32.totalorder %s124, %s125
      %p139 = scmp.eq.s32.totalorder %s39, 3
      %p140 = por %p138, %p139
      %p142 = scmp.ne.s32.totalorder %s125, %s141
      %p143 = scmp.eq.s32.totalorder %s39, 0
      %p144 = por %p142, %p143
      %s145 = ssub.s32 %s33, %s40
      %p146 = scmp.eq.s32.totalorder %s145, 0
      %s148 = sadd.s32 %s147, 1
      %s149 = scalar_select %p146, %s147, %s148
      %p152 = pneg %p146
      %p153 = scmp.eq.s32.totalorder %s33, 3
      %p154 = por %p152, %p153
      %p155 = scmp.ne.s32.totalorder %s147, %s150
      %p156 = scmp.eq.s32.totalorder %s33, 0
      %p157 = por %p155, %p156
      %p158 = scmp.ne.s32.totalorder %s147, %s150
      %p159 = scmp.eq.s32.totalorder %s38, 3
      %p160 = por %p158, %p159
      %p161 = scmp.ne.s32.totalorder %s150, %s151
      %p162 = scmp.eq.s32.totalorder %s38, 0
      %p163 = por %p161, %p162
      %p164 = scmp.ne.s32.totalorder %s150, %s151
      %p165 = scmp.eq.s32.totalorder %s39, 3
      %p166 = por %p164, %p165
      %p168 = scmp.ne.s32.totalorder %s151, %s167
      %p169 = scmp.eq.s32.totalorder %s39, 0
      %p170 = por %p168, %p169
      %s171 = ssub.s32 %s33, %s40
      %p172 = scmp.eq.s32.totalorder %s171, 0
      %s174 = sadd.s32 %s173, 1
      %s175 = scalar_select %p172, %s173, %s174
      %p178 = pneg %p172
      %p179 = scmp.eq.s32.totalorder %s33, 3
      %p180 = por %p178, %p179
      %p181 = scmp.ne.s32.totalorder %s173, %s176
      %p182 = scmp.eq.s32.totalorder %s33, 0
      %p183 = por %p181, %p182
      %p184 = scmp.ne.s32.totalorder %s173, %s176
      %p185 = scmp.eq.s32.totalorder %s38, 3
      %p186 = por %p184, %p185
      %p187 = scmp.ne.s32.totalorder %s176, %s177
      %p188 = scmp.eq.s32.totalorder %s38, 0
      %p189 = por %p187, %p188
      %p190 = scmp.ne.s32.totalorder %s176, %s177
      %p191 = scmp.eq.s32.totalorder %s39, 3
      %p192 = por %p190, %p191
      %p194 = scmp.ne.s32.totalorder %s177, %s193
      %p195 = scmp.eq.s32.totalorder %s39, 0
      %p196 = por %p194, %p195
      %s198 = sadd.s32 %s197, 1
      %p201 = scmp.eq.s32.totalorder %s33, 3
      %p202 = scmp.ne.s32.totalorder %s197, %s199
      %p203 = scmp.eq.s32.totalorder %s33, 0
      %p204 = por %p202, %p203
      %p205 = scmp.ne.s32.totalorder %s197, %s199
      %p206 = scmp.eq.s32.totalorder %s38, 3
      %p207 = por %p205, %p206
      %p208 = scmp.ne.s32.totalorder %s199, %s200
      %p209 = scmp.eq.s32.totalorder %s38, 0
      %p210 = por %p208, %p209
      %p211 = scmp.ne.s32.totalorder %s199, %s200
      %p212 = scmp.eq.s32.totalorder %s39, 3
      %p213 = por %p211, %p212
      %p215 = scmp.ne.s32.totalorder %s200, %s214
      %p216 = scmp.eq.s32.totalorder %s39, 0
      %p217 = por %p215, %p216
      %s219 = sadd.s32 %s218, 1
      %p222 = scmp.eq.s32.totalorder %s33, 3
      %p223 = scmp.ne.s32.totalorder %s218, %s220
      %p224 = scmp.eq.s32.totalorder %s33, 0
      %p225 = por %p223, %p224
      %p226 = scmp.ne.s32.totalorder %s218, %s220
      %p227 = scmp.eq.s32.totalorder %s38, 3
      %p228 = por %p226, %p227
      %p229 = scmp.ne.s32.totalorder %s220, %s221
      %p230 = scmp.eq.s32.totalorder %s38, 0
      %p231 = por %p229, %p230
      %p232 = scmp.ne.s32.totalorder %s220, %s221
      %p233 = scmp.eq.s32.totalorder %s39, 3
      %p234 = por %p232, %p233
      %p236 = scmp.ne.s32.totalorder %s221, %s235
      %p237 = scmp.eq.s32.totalorder %s39, 0
      %p238 = por %p236, %p237
      %s240 = sadd.s32 %s239, 1
      %p243 = scmp.eq.s32.totalorder %s33, 3
      %p244 = scmp.ne.s32.totalorder %s239, %s241
      %p245 = scmp.eq.s32.totalorder %s33, 0
      %p246 = por %p244, %p245
      %p247 = scmp.ne.s32.totalorder %s239, %s241
      %p248 = scmp.eq.s32.totalorder %s38, 3
      %p249 = por %p247, %p248
      %p250 = scmp.ne.s32.totalorder %s241, %s242
      %p251 = scmp.eq.s32.totalorder %s38, 0
      %p252 = por %p250, %p251
      %p253 = scmp.ne.s32.totalorder %s241, %s242
      %p254 = scmp.eq.s32.totalorder %s39, 3
      %p255 = por %p253, %p254
      %p257 = scmp.ne.s32.totalorder %s242, %s256
      %p258 = scmp.eq.s32.totalorder %s39, 0
      %p259 = por %p257, %p258
      %s260 = ssub.s32 %s33, %s40
      %p261 = scmp.eq.s32.totalorder %s260, 0
      %s263 = sadd.s32 %s262, 1
      %s264 = scalar_select %p261, %s262, %s263
      %p267 = pneg %p261
      %p268 = scmp.eq.s32.totalorder %s33, 3
      %p269 = por %p267, %p268
      %p270 = scmp.ne.s32.totalorder %s262, %s265
      %p271 = scmp.eq.s32.totalorder %s33, 0
      %p272 = por %p270, %p271
      %p273 = scmp.ne.s32.totalorder %s262, %s265
      %p274 = scmp.eq.s32.totalorder %s38, 3
      %p275 = por %p273, %p274
      %p276 = scmp.ne.s32.totalorder %s265, %s266
      %p277 = scmp.eq.s32.totalorder %s38, 0
      %p278 = por %p276, %p277
      %p279 = scmp.ne.s32.totalorder %s265, %s266
      %p280 = scmp.eq.s32.totalorder %s39, 3
      %p281 = por %p279, %p280
      %p283 = scmp.ne.s32.totalorder %s266, %s282
      %p284 = scmp.eq.s32.totalorder %s39, 0
      %p285 = por %p283, %p284
      %s286 = ssub.s32 %s33, %s40
      %p287 = scmp.eq.s32.totalorder %s286, 0
      %s289 = sadd.s32 %s288, 1
      %s290 = scalar_select %p287, %s288, %s289
      %p293 = pneg %p287
      %p294 = scmp.eq.s32.totalorder %s33, 3
      %p295 = por %p293, %p294
      %p296 = scmp.ne.s32.totalorder %s288, %s291
      %p297 = scmp.eq.s32.totalorder %s33, 0
      %p298 = por %p296, %p297
      %p299 = scmp.ne.s32.totalorder %s288, %s291
      %p300 = scmp.eq.s32.totalorder %s38, 3
      %p301 = por %p299, %p300
      %p302 = scmp.ne.s32.totalorder %s291, %s292
      %p303 = scmp.eq.s32.totalorder %s38, 0
      %p304 = por %p302, %p303
      %p305 = scmp.ne.s32.totalorder %s291, %s292
      %p306 = scmp.eq.s32.totalorder %s39, 3
      %p307 = por %p305, %p306
      %p309 = scmp.ne.s32.totalorder %s292, %s308
      %p310 = scmp.eq.s32.totalorder %s39, 0
      %p311 = por %p309, %p310
      %s312 = ssub.s32 %s33, %s40
      %p313 = scmp.eq.s32.totalorder %s312, 0
      %s315 = sadd.s32 %s314, 1
      %s316 = scalar_select %p313, %s314, %s315
      %p319 = pneg %p313
      %p320 = scmp.eq.s32.totalorder %s33, 3
      %p321 = por %p319, %p320
      %p322 = scmp.ne.s32.totalorder %s314, %s317
      %p323 = scmp.eq.s32.totalorder %s33, 0
      %p324 = por %p322, %p323
      %p325 = scmp.ne.s32.totalorder %s314, %s317
      %p326 = scmp.eq.s32.totalorder %s38, 3
      %p327 = por %p325, %p326
      %p328 = scmp.ne.s32.totalorder %s317, %s318
      %p329 = scmp.eq.s32.totalorder %s38, 0
      %p330 = por %p328, %p329
      %p331 = scmp.ne.s32.totalorder %s317, %s318
      %p332 = scmp.eq.s32.totalorder %s39, 3
      %p333 = por %p331, %p332
      %p335 = scmp.ne.s32.totalorder %s318, %s334
      %p336 = scmp.eq.s32.totalorder %s39, 0
      %p337 = por %p335, %p336
      %p338 = scmp.le.s32.totalorder 1, %s33
      %p339 = scmp.lt.s32.totalorder %s33, 5
      %p340 = pnand %p338, %p339
      %p341 = pneg %p340
      // Predicated region
      $region9: #{cell_forward.1} parent=5 // pred_check
        _
      $region10: #{cell_forward.1} parent=5 // pred_check_branch
        %343 = sbr.rel (%p340) target = $region12
      $region11: #{cell_forward.1} parent=5 // pred_region
        %s344 = ssub.s32 %s33, 1
        // Predicated region
        $region13: #{cell_forward.1} parent=11 // pred_check
          %p345 = pneg %p210
        $region14: #{cell_forward.1} parent=11 // pred_check_branch
          %347 = sbr.rel (%p345) target = $region16
        $region15: #{cell_forward.1} parent=11 // pred_region
          _
        $region16: #{cell_forward.1} parent=11 // pred_fallthru
          _
        // Predicated region
        $region17: #{cell_forward.1} parent=11 // pred_check
          %p348 = pneg %p231
        $region18: #{cell_forward.1} parent=11 // pred_check_branch
          %350 = sbr.rel (%p348) target = $region20
        $region19: #{cell_forward.1} parent=11 // pred_region
          _
        $region20: #{cell_forward.1} parent=11 // pred_fallthru
          _
        // Predicated region
        $region21: #{cell_forward.1} parent=11 // pred_check
          %p351 = pneg %p252
        $region22: #{cell_forward.1} parent=11 // pred_check_branch
          %353 = sbr.rel (%p351) target = $region24
        $region23: #{cell_forward.1} parent=11 // pred_region
          _
        $region24: #{cell_forward.1} parent=11 // pred_fallthru
          _
      $region12: #{cell_forward.1} parent=5 // pred_fallthru
        _
      %p354 = scmp.lt.s32.totalorder %s33, 4
      // Predicated region
      $region25: #{cell_forward.1} parent=5 // pred_check
        %p355 = pneg %p354
      $region26: #{cell_forward.1} parent=5 // pred_check_branch
        %357 = sbr.rel (%p355) target = $region28
      $region27: #{cell_forward.1} parent=5 // pred_region
        // Predicated region
        $region29: #{cell_forward.1} parent=27 // pred_check
          %p358 = pneg %p53
        $region30: #{cell_forward.1} parent=27 // pred_check_branch
          %360 = sbr.rel (%p358) target = $region32
        $region31: #{cell_forward.1} parent=27 // pred_region
          %s361 = smul.u32 64, %s33
          %s362 = ssub.s32 250, %s361
          %p363 = scmp.lt.s32.totalorder %s362, 64
          %s364 = scalar_select %p363, %s362, 64
          %s365 = smul.u32 8, %s364
          %p366 = scmp.lt.s32.totalorder %s361, 249
          %s367 = scalar_select %p366, %s361, 249
          %s368 = smul.addr %s367, 8
          %s369 = scalar_lea.vmem %s0, %s368
          %s370 = smul.u32 64, %s33
          %s371 = ssub.s32 250, %s370
          %p372 = scmp.lt.s32.totalorder %s371, 64
          %s373 = scalar_select %p372, %s371, 64
          %s374 = smul.u32 8, %s373
        $region32: #{cell_forward.1} parent=27 // pred_fallthru
          _
        // Predicated region
        $region33: #{cell_forward.1} parent=27 // pred_check
          %p375 = pneg %p79
        $region34: #{cell_forward.1} parent=27 // pred_check_branch
          %377 = sbr.rel (%p375) target = $region36
        $region35: #{cell_forward.1} parent=27 // pred_region
          %s378 = smul.u32 64, %s33
          %s379 = ssub.s32 250, %s378
          %p380 = scmp.lt.s32.totalorder %s379, 64
          %s381 = scalar_select %p380, %s379, 64
          %s382 = smul.u32 8, %s381
          %p383 = scmp.lt.s32.totalorder %s378, 249
          %s384 = scalar_select %p383, %s378, 249
          %s385 = smul.addr %s384, 8
          %s386 = scalar_lea.vmem %s1, %s385
          %s387 = smul.u32 64, %s33
          %s388 = ssub.s32 250, %s387
          %p389 = scmp.lt.s32.totalorder %s388, 64
          %s390 = scalar_select %p389, %s388, 64
          %s391 = smul.u32 8, %s390
        $region36: #{cell_forward.1} parent=27 // pred_fallthru
          _
        // Predicated region
        $region37: #{cell_forward.1} parent=27 // pred_check
          %p392 = pneg %p105
        $region38: #{cell_forward.1} parent=27 // pred_check_branch
          %394 = sbr.rel (%p392) target = $region40
        $region39: #{cell_forward.1} parent=27 // pred_region
          %s395 = sand.u32 %s95, 1
          %s396 = scalar_lea.sflag [#allocation3], %s395
          %s397 = sand.u32 %s95, 1
          %s398 = smul.addr %s397, 512
          %s399 = scalar_lea.vmem [#allocation2], %s398
          %s400 = smul.u32 64, %s33
          %s401 = ssub.s32 250, %s400
          %p402 = scmp.lt.s32.totalorder %s401, 64
          %s403 = scalar_select %p402, %s401, 64
          %s404 = smul.u32 8, %s403
          %s405 = ssub.s32 512, %s404
          %s406 = sshll.u32 %s405, 4
          %407 = vsyncadd %s396, %s406
          %p408 = scmp.ne.s32.totalorder 0, %s404
          %s409 = smul.addr %s400, 8
          %s410 = scalar_lea.hbm %s2, %s409
          %s411 = smul.u32 8, %s403
          %s412 = sshll.u32 %s410, 4
          %s413 = int_to_ptr.hbm [resolvable:$true] %s412
          %s414 = sshll.u32 %s399, 4
          %s415 = int_to_ptr.vmem [resolvable:$true] %s414
          %s416 = sshll.u32 %s411, 4
          %420 = dma.hbm_to_vmem [thread:$0]  (%p408), %s413, %s416, %s415, %s396, 128, 128, 8
        $region40: #{cell_forward.1} parent=27 // pred_fallthru
          _
        // Predicated region
        $region41: #{cell_forward.1} parent=27 // pred_check
          %p421 = pneg %p131
        $region42: #{cell_forward.1} parent=27 // pred_check_branch
          %423 = sbr.rel (%p421) target = $region44
        $region43: #{cell_forward.1} parent=27 // pred_region
          %s424 = sand.u32 %s33, 1
          %s425 = scalar_lea.sflag [#allocation6], %s424
          %s426 = sand.u32 %s121, 1
          %s427 = smul.addr %s426, 512
          %s428 = scalar_lea.vmem [#allocation5], %s427
          %s429 = smul.u32 64, %s33
          %s430 = ssub.s32 250, %s429
          %p431 = scmp.lt.s32.totalorder %s430, 64
          %s432 = scalar_select %p431, %s430, 64
          %s433 = smul.u32 8, %s432
          %s434 = ssub.s32 512, %s433
          %s435 = sshll.u32 %s434, 4
          %436 = vsyncadd %s425, %s435
          %p437 = scmp.ne.s32.totalorder 0, %s433
          %s438 = smul.addr %s429, 8
          %s439 = scalar_lea.hbm %s3, %s438
          %s440 = smul.u32 8, %s432
          %s441 = sshll.u32 %s439, 4
          %s442 = int_to_ptr.hbm [resolvable:$true] %s441
          %s443 = sshll.u32 %s428, 4
          %s444 = int_to_ptr.vmem [resolvable:$true] %s443
          %s445 = sshll.u32 %s440, 4
          %449 = dma.hbm_to_vmem [thread:$0]  (%p437), %s442, %s445, %s444, %s425, 128, 128, 8
        $region44: #{cell_forward.1} parent=27 // pred_fallthru
          _
        // Predicated region
        $region45: #{cell_forward.1} parent=27 // pred_check
          %p450 = pneg %p157
        $region46: #{cell_forward.1} parent=27 // pred_check_branch
          %452 = sbr.rel (%p450) target = $region48
        $region47: #{cell_forward.1} parent=27 // pred_region
          %s453 = sand.u32 %s33, 1
          %s454 = scalar_lea.sflag [#allocation6], %s453
          %s455 = sand.u32 %s147, 1
          %s456 = smul.addr %s455, 512
          %s457 = scalar_lea.vmem [#allocation7], %s456
          %s458 = smul.u32 64, %s33
          %s459 = ssub.s32 250, %s458
          %p460 = scmp.lt.s32.totalorder %s459, 64
          %s461 = scalar_select %p460, %s459, 64
          %s462 = smul.u32 8, %s461
          %s463 = ssub.s32 512, %s462
          %s464 = sshll.u32 %s463, 4
          %465 = vsyncadd %s454, %s464
          %p466 = scmp.ne.s32.totalorder 0, %s462
          %s467 = smul.addr %s458, 8
          %s468 = scalar_lea.hbm %s4, %s467
          %s469 = smul.u32 8, %s461
          %s470 = sshll.u32 %s468, 4
          %s471 = int_to_ptr.hbm [resolvable:$true] %s470
          %s472 = sshll.u32 %s457, 4
          %s473 = int_to_ptr.vmem [resolvable:$true] %s472
          %s474 = sshll.u32 %s469, 4
          %478 = dma.hbm_to_vmem [thread:$0]  (%p466), %s471, %s474, %s473, %s454, 128, 128, 8
        $region48: #{cell_forward.1} parent=27 // pred_fallthru
          _
        // Predicated region
        $region49: #{cell_forward.1} parent=27 // pred_check
          %p479 = pneg %p183
        $region50: #{cell_forward.1} parent=27 // pred_check_branch
          %481 = sbr.rel (%p479) target = $region52
        $region51: #{cell_forward.1} parent=27 // pred_region
          %s482 = sand.u32 %s173, 1
          %s483 = scalar_lea.sflag [#allocation9], %s482
          %s484 = sand.u32 %s173, 1
          %s485 = smul.addr %s484, 512
          %s486 = scalar_lea.vmem [#allocation8], %s485
          %s487 = smul.u32 64, %s33
          %s488 = ssub.s32 250, %s487
          %p489 = scmp.lt.s32.totalorder %s488, 64
          %s490 = scalar_select %p489, %s488, 64
          %s491 = smul.u32 8, %s490
          %s492 = ssub.s32 512, %s491
          %s493 = sshll.u32 %s492, 4
          %494 = vsyncadd %s483, %s493
          %p495 = scmp.ne.s32.totalorder 0, %s491
          %s496 = smul.addr %s487, 8
          %s497 = scalar_lea.hbm %s5, %s496
          %s498 = smul.u32 8, %s490
          %s499 = sshll.u32 %s497, 4
          %s500 = int_to_ptr.hbm [resolvable:$true] %s499
          %s501 = sshll.u32 %s486, 4
          %s502 = int_to_ptr.vmem [resolvable:$true] %s501
          %s503 = sshll.u32 %s498, 4
          %507 = dma.hbm_to_vmem [thread:$0]  (%p495), %s500, %s503, %s502, %s483, 128, 128, 8
        $region52: #{cell_forward.1} parent=27 // pred_fallthru
          _
      $region28: #{cell_forward.1} parent=5 // pred_fallthru
        _
      %p508 = scmp.le.s32.totalorder 1, %s33
      %p509 = scmp.lt.s32.totalorder %s33, 5
      %p510 = pnand %p508, %p509
      %p511 = pneg %p510
      // Predicated region
      $region53: #{cell_forward.1} parent=5 // pred_check
        _
      $region54: #{cell_forward.1} parent=5 // pred_check_branch
        %513 = sbr.rel (%p510) target = $region56
      $region55: #{cell_forward.1} parent=5 // pred_region
        %s514 = ssub.s32 %s33, 1
        %s515 = sand.u32 %s98, 1
        %s516 = scalar_lea.sflag [#allocation3], %s515
        %s517 = sand.u32 %s98, 1
        %s518 = smul.addr %s517, 512
        %s519 = scalar_lea.vmem [#allocation2], %s518
        // Predicated region
        $region57: #{cell_forward.1} parent=55 // pred_check
          %p520 = pneg %p111
        $region58: #{cell_forward.1} parent=55 // pred_check_branch
          %522 = sbr.rel (%p520) target = $region60
        $region59: #{cell_forward.1} parent=55 // pred_region
          %524 = dma.done %s516, 8192
        $region60: #{cell_forward.1} parent=55 // pred_fallthru
          _
        %s525 = sand.u32 %s38, 1
        %s526 = scalar_lea.sflag [#allocation6], %s525
        %s527 = sand.u32 %s124, 1
        %s528 = smul.addr %s527, 512
        %s529 = scalar_lea.vmem [#allocation5], %s528
        // Predicated region
        $region61: #{cell_forward.1} parent=55 // pred_check
          %p530 = pneg %p137
        $region62: #{cell_forward.1} parent=55 // pred_check_branch
          %532 = sbr.rel (%p530) target = $region64
        $region63: #{cell_forward.1} parent=55 // pred_region
          %534 = dma.done %s526, 8192
        $region64: #{cell_forward.1} parent=55 // pred_fallthru
          _
        %s535 = sand.u32 %s38, 1
        %s536 = scalar_lea.sflag [#allocation6], %s535
        %s537 = sand.u32 %s150, 1
        %s538 = smul.addr %s537, 512
        %s539 = scalar_lea.vmem [#allocation7], %s538
        // Predicated region
        $region65: #{cell_forward.1} parent=55 // pred_check
          %p540 = pneg %p163
        $region66: #{cell_forward.1} parent=55 // pred_check_branch
          %542 = sbr.rel (%p540) target = $region68
        $region67: #{cell_forward.1} parent=55 // pred_region
          %544 = dma.done %s536, 8192
        $region68: #{cell_forward.1} parent=55 // pred_fallthru
          _
        %s545 = sand.u32 %s176, 1
        %s546 = scalar_lea.sflag [#allocation9], %s545
        %s547 = sand.u32 %s176, 1
        %s548 = smul.addr %s547, 512
        %s549 = scalar_lea.vmem [#allocation8], %s548
        // Predicated region
        $region69: #{cell_forward.1} parent=55 // pred_check
          %p550 = pneg %p189
        $region70: #{cell_forward.1} parent=55 // pred_check_branch
          %552 = sbr.rel (%p550) target = $region72
        $region71: #{cell_forward.1} parent=55 // pred_region
          %554 = dma.done %s546, 8192
        $region72: #{cell_forward.1} parent=55 // pred_fallthru
          _
        %s555 = smul.u32 64, %s38
        %s556 = ssub.s32 250, %s555
        %p557 = scmp.lt.s32.totalorder %s556, 64
        %s558 = scalar_select %p557, %s556, 64
        %s559 = smul.u32 8, %s558
        %p560 = scmp.lt.s32.totalorder %s555, 249
        %s561 = scalar_select %p560, %s555, 249
        %s562 = smul.addr %s561, 8
        %s563 = scalar_lea.vmem %s0, %s562
        %p564 = pneg %p59
        %p565 = pneg %p56
        %s566 = smul.u32 64, %s38
        %s567 = ssub.s32 250, %s566
        %p568 = scmp.lt.s32.totalorder %s567, 64
        %s569 = scalar_select %p568, %s567, 64
        %s570 = smul.u32 8, %s569
        %p571 = scmp.lt.s32.totalorder %s566, 249
        %s572 = scalar_select %p571, %s566, 249
        %s573 = smul.addr %s572, 8
        %s574 = scalar_lea.vmem %s1, %s573
        %p575 = pneg %p85
        %p576 = pneg %p82
        %s577 = sand.u32 %s98, 1
        %s578 = scalar_lea.sflag [#allocation3], %s577
        %s579 = sand.u32 %s98, 1
        %s580 = smul.addr %s579, 512
        %s581 = scalar_lea.vmem [#allocation2], %s580
        %p582 = pneg %p111
        %p583 = pneg %p108
        %s584 = sand.u32 %s38, 1
        %s585 = scalar_lea.sflag [#allocation6], %s584
        %s586 = sand.u32 %s124, 1
        %s587 = smul.addr %s586, 512
        %s588 = scalar_lea.vmem [#allocation5], %s587
        %p589 = pneg %p137
        %p590 = pneg %p134
        %s591 = sand.u32 %s38, 1
        %s592 = scalar_lea.sflag [#allocation6], %s591
        %s593 = sand.u32 %s150, 1
        %s594 = smul.addr %s593, 512
        %s595 = scalar_lea.vmem [#allocation7], %s594
        %p596 = pneg %p163
        %p597 = pneg %p160
        %s598 = sand.u32 %s176, 1
        %s599 = scalar_lea.sflag [#allocation9], %s598
        %s600 = sand.u32 %s176, 1
        %s601 = smul.addr %s600, 512
        %s602 = scalar_lea.vmem [#allocation8], %s601
        %p603 = pneg %p189
        %p604 = pneg %p186
        %p605 = pneg %p210
        %p606 = pneg %p207
        %p607 = pneg %p231
        %p608 = pneg %p228
        %p609 = pneg %p252
        %p610 = pneg %p249
        %p611 = pneg %p278
        %p612 = pneg %p275
        %s613 = sand.u32 %s265, 1
        %s614 = scalar_lea.sflag [#allocation4], %s613
        %s615 = sand.u32 %s265, 1
        %s616 = smul.addr %s615, 512
        %s617 = scalar_lea.vmem [#allocation10], %s616
        %p618 = pneg %p304
        %p619 = pneg %p301
        %s620 = sand.u32 %s38, 1
        %s621 = scalar_lea.sflag [#allocation12], %s620
        %s622 = sand.u32 %s291, 1
        %s623 = smul.addr %s622, 512
        %s624 = scalar_lea.vmem [#allocation11], %s623
        %p625 = pneg %p330
        %p626 = pneg %p327
        %s627 = sand.u32 %s38, 1
        %s628 = scalar_lea.sflag [#allocation12], %s627
        %s629 = sand.u32 %s317, 1
        %s630 = smul.addr %s629, 512
        %s631 = scalar_lea.vmem [#allocation13], %s630
        %s632 = smul.u32 64, %s38
        %s633 = ssub.s32 250, %s632
        %p634 = scmp.lt.s32.totalorder %s633, 64
        %s635 = scalar_select %p634, %s633, 64
        %s636 = smul.u32 8, %s635
        %p637 = scmp.lt.s32.totalorder %s632, 249
        %s638 = scalar_select %p637, %s632, 249
        %s639 = smul.addr %s638, 8
        %s640 = scalar_lea.vmem %s0, %s639
        %s641 = smul.u32 64, %s38
        %s642 = ssub.s32 250, %s641
        %p643 = scmp.lt.s32.totalorder %s642, 64
        %s644 = scalar_select %p643, %s642, 64
        %s645 = smul.u32 8, %s644
        %s646 = smul.u32 64, %s38
        %s647 = ssub.s32 250, %s646
        %p648 = scmp.lt.s32.totalorder %s647, 64
        %s649 = scalar_select %p648, %s647, 64
        %s650 = smul.u32 8, %s649
        %p651 = scmp.lt.s32.totalorder %s646, 249
        %s652 = scalar_select %p651, %s646, 249
        %s653 = smul.addr %s652, 8
        %s654 = scalar_lea.vmem %s1, %s653
        %s655 = smul.u32 64, %s38
        %s656 = ssub.s32 250, %s655
        %p657 = scmp.lt.s32.totalorder %s656, 64
        %s658 = scalar_select %p657, %s656, 64
        %s659 = smul.u32 8, %s658
        %s660 = smul.u32 64, %s38
        %s661 = ssub.s32 250, %s660
        %p662 = scmp.lt.s32.totalorder %s661, 64
        %s663 = scalar_select %p662, %s661, 64
        %s664 = smul.u32 8, %s663
        %s665 = smul.u32 64, %s38
        %s666 = ssub.s32 250, %s665
        %p667 = scmp.lt.s32.totalorder %s666, 64
        %s668 = scalar_select %p667, %s666, 64
        %s669 = smul.u32 8, %s668
        %s670 = smul.u32 64, %s38
        %s671 = ssub.s32 250, %s670
        %p672 = scmp.lt.s32.totalorder %s671, 64
        %s673 = scalar_select %p672, %s671, 64
        %s674 = smul.u32 8, %s673
        %s675 = smul.u32 64, %s38
        %s676 = ssub.s32 250, %s675
        %p677 = scmp.lt.s32.totalorder %s676, 64
        %s678 = scalar_select %p677, %s676, 64
        %s679 = smul.u32 8, %s678
        %s680 = smul.u32 64, %s38
        %s681 = ssub.s32 250, %s680
        %p682 = scmp.lt.s32.totalorder %s681, 64
        %s683 = scalar_select %p682, %s681, 64
        %s684 = smul.u32 8, %s683
        %s685 = smul.u32 64, %s38
        %s686 = ssub.s32 250, %s685
        %p687 = scmp.lt.s32.totalorder %s686, 64
        %s688 = scalar_select %p687, %s686, 64
        %s689 = smul.u32 8, %s688
        %s690 = smul.u32 64, %s38
        %s691 = ssub.s32 250, %s690
        %p692 = scmp.lt.s32.totalorder %s691, 64
        %s693 = scalar_select %p692, %s691, 64
        %s694 = smul.u32 8, %s693
        %v695 = vld [vmem:[%s529] sm:$0xff]
        %v696 = vld [vmem:[%s529 + $0x8] sm:$0xff]
        %v697 = vld [vmem:[%s529 + $0x10] sm:$0xff]
        %v698 = vld [vmem:[%s529 + $0x18] sm:$0xff]
        %v699 = vld [vmem:[%s529 + $0x20] sm:$0xff]
        %v700 = vld [vmem:[%s529 + $0x28] sm:$0xff]
        %v701 = vld [vmem:[%s529 + $0x30] sm:$0xff]
        %v702 = vld [vmem:[%s529 + $0x38] sm:$0xff]
        %v703 = vld [vmem:[%s529 + $0x40] sm:$0xff]
        %v704 = vld [vmem:[%s529 + $0x48] sm:$0xff]
        %v705 = vld [vmem:[%s529 + $0x50] sm:$0xff]
        %v706 = vld [vmem:[%s529 + $0x58] sm:$0xff]
        %v707 = vld [vmem:[%s529 + $0x60] sm:$0xff]
        %v708 = vld [vmem:[%s529 + $0x68] sm:$0xff]
        %v709 = vld [vmem:[%s529 + $0x70] sm:$0xff]
        %v710 = vld [vmem:[%s529 + $0x78] sm:$0xff]
        %v711 = vld [vmem:[%s529 + $0x80] sm:$0xff]
        %v712 = vld [vmem:[%s529 + $0x88] sm:$0xff]
        %v713 = vld [vmem:[%s529 + $0x90] sm:$0xff]
        %v714 = vld [vmem:[%s529 + $0x98] sm:$0xff]
        %v715 = vld [vmem:[%s529 + $0xa0] sm:$0xff]
        %v716 = vld [vmem:[%s529 + $0xa8] sm:$0xff]
        %v717 = vld [vmem:[%s529 + $0xb0] sm:$0xff]
        %v718 = vld [vmem:[%s529 + $0xb8] sm:$0xff]
        %v719 = vld [vmem:[%s529 + $0xc0] sm:$0xff]
        %v720 = vld [vmem:[%s529 + $0xc8] sm:$0xff]
        %v721 = vld [vmem:[%s529 + $0xd0] sm:$0xff]
        %v722 = vld [vmem:[%s529 + $0xd8] sm:$0xff]
        %v723 = vld [vmem:[%s529 + $0xe0] sm:$0xff]
        %v724 = vld [vmem:[%s529 + $0xe8] sm:$0xff]
        %v725 = vld [vmem:[%s529 + $0xf0] sm:$0xff]
        %v726 = vld [vmem:[%s529 + $0xf8] sm:$0xff]
        %v727 = vld [vmem:[%s529 + $0x100] sm:$0xff]
        %v728 = vld [vmem:[%s529 + $0x108] sm:$0xff]
        %v729 = vld [vmem:[%s529 + $0x110] sm:$0xff]
        %v730 = vld [vmem:[%s529 + $0x118] sm:$0xff]
        %v731 = vld [vmem:[%s529 + $0x120] sm:$0xff]
        %v732 = vld [vmem:[%s529 + $0x128] sm:$0xff]
        %v733 = vld [vmem:[%s529 + $0x130] sm:$0xff]
        %v734 = vld [vmem:[%s529 + $0x138] sm:$0xff]
        %v735 = vld [vmem:[%s529 + $0x140] sm:$0xff]
        %v736 = vld [vmem:[%s529 + $0x148] sm:$0xff]
        %v737 = vld [vmem:[%s529 + $0x150] sm:$0xff]
        %v738 = vld [vmem:[%s529 + $0x158] sm:$0xff]
        %v739 = vld [vmem:[%s529 + $0x160] sm:$0xff]
        %v740 = vld [vmem:[%s529 + $0x168] sm:$0xff]
        %v741 = vld [vmem:[%s529 + $0x170] sm:$0xff]
        %v742 = vld [vmem:[%s529 + $0x178] sm:$0xff]
        %v743 = vld [vmem:[%s529 + $0x180] sm:$0xff]
        %v744 = vld [vmem:[%s529 + $0x188] sm:$0xff]
        %v745 = vld [vmem:[%s529 + $0x190] sm:$0xff]
        %v746 = vld [vmem:[%s529 + $0x198] sm:$0xff]
        %v747 = vld [vmem:[%s529 + $0x1a0] sm:$0xff]
        %v748 = vld [vmem:[%s529 + $0x1a8] sm:$0xff]
        %v749 = vld [vmem:[%s529 + $0x1b0] sm:$0xff]
        %v750 = vld [vmem:[%s529 + $0x1b8] sm:$0xff]
        %v751 = vld [vmem:[%s529 + $0x1c0] sm:$0xff]
        %v752 = vld [vmem:[%s529 + $0x1c8] sm:$0xff]
        %v753 = vld [vmem:[%s529 + $0x1d0] sm:$0xff]
        %v754 = vld [vmem:[%s529 + $0x1d8] sm:$0xff]
        %v755 = vld [vmem:[%s529 + $0x1e0] sm:$0xff]
        %v756 = vld [vmem:[%s529 + $0x1e8] sm:$0xff]
        %v757 = vld [vmem:[%s529 + $0x1f0] sm:$0xff]
        %v758 = vld [vmem:[%s529 + $0x1f8] sm:$0xff]
        %v759 = vld [vmem:[%s640] sm:$0xff]
        %v760 = vld [vmem:[%s640 + $0x8] sm:$0xff]
        %v761 = vld [vmem:[%s640 + $0x10] sm:$0xff]
        %v762 = vld [vmem:[%s640 + $0x18] sm:$0xff]
        %v763 = vld [vmem:[%s640 + $0x20] sm:$0xff]
        %v764 = vld [vmem:[%s640 + $0x28] sm:$0xff]
        %v765 = vld [vmem:[%s640 + $0x30] sm:$0xff]
        %v766 = vld [vmem:[%s640 + $0x38] sm:$0xff]
        %v767 = vld [vmem:[%s640 + $0x40] sm:$0xff]
        %v768 = vld [vmem:[%s640 + $0x48] sm:$0xff]
        %v769 = vld [vmem:[%s640 + $0x50] sm:$0xff]
        %v770 = vld [vmem:[%s640 + $0x58] sm:$0xff]
        %v771 = vld [vmem:[%s640 + $0x60] sm:$0xff]
        %v772 = vld [vmem:[%s640 + $0x68] sm:$0xff]
        %v773 = vld [vmem:[%s640 + $0x70] sm:$0xff]
        %v774 = vld [vmem:[%s640 + $0x78] sm:$0xff]
        %v775 = vld [vmem:[%s640 + $0x80] sm:$0xff]
        %v776 = vld [vmem:[%s640 + $0x88] sm:$0xff]
        %v777 = vld [vmem:[%s640 + $0x90] sm:$0xff]
        %v778 = vld [vmem:[%s640 + $0x98] sm:$0xff]
        %v779 = vld [vmem:[%s640 + $0xa0] sm:$0xff]
        %v780 = vld [vmem:[%s640 + $0xa8] sm:$0xff]
        %v781 = vld [vmem:[%s640 + $0xb0] sm:$0xff]
        %v782 = vld [vmem:[%s640 + $0xb8] sm:$0xff]
        %v783 = vld [vmem:[%s640 + $0xc0] sm:$0xff]
        %v784 = vld [vmem:[%s640 + $0xc8] sm:$0xff]
        %v785 = vld [vmem:[%s640 + $0xd0] sm:$0xff]
        %v786 = vld [vmem:[%s640 + $0xd8] sm:$0xff]
        %v787 = vld [vmem:[%s640 + $0xe0] sm:$0xff]
        %v788 = vld [vmem:[%s640 + $0xe8] sm:$0xff]
        %v789 = vld [vmem:[%s640 + $0xf0] sm:$0xff]
        %v790 = vld [vmem:[%s640 + $0xf8] sm:$0xff]
        %v791 = vld [vmem:[%s640 + $0x100] sm:$0xff]
        %v792 = vld [vmem:[%s640 + $0x108] sm:$0xff]
        %v793 = vld [vmem:[%s640 + $0x110] sm:$0xff]
        %v794 = vld [vmem:[%s640 + $0x118] sm:$0xff]
        %v795 = vld [vmem:[%s640 + $0x120] sm:$0xff]
        %v796 = vld [vmem:[%s640 + $0x128] sm:$0xff]
        %v797 = vld [vmem:[%s640 + $0x130] sm:$0xff]
        %v798 = vld [vmem:[%s640 + $0x138] sm:$0xff]
        %v799 = vld [vmem:[%s640 + $0x140] sm:$0xff]
        %v800 = vld [vmem:[%s640 + $0x148] sm:$0xff]
        %v801 = vld [vmem:[%s640 + $0x150] sm:$0xff]
        %v802 = vld [vmem:[%s640 + $0x158] sm:$0xff]
        %v803 = vld [vmem:[%s640 + $0x160] sm:$0xff]
        %v804 = vld [vmem:[%s640 + $0x168] sm:$0xff]
        %v805 = vld [vmem:[%s640 + $0x170] sm:$0xff]
        %v806 = vld [vmem:[%s640 + $0x178] sm:$0xff]
        %v807 = vld [vmem:[%s640 + $0x180] sm:$0xff]
        %v808 = vld [vmem:[%s640 + $0x188] sm:$0xff]
        %v809 = vld [vmem:[%s640 + $0x190] sm:$0xff]
        %v810 = vld [vmem:[%s640 + $0x198] sm:$0xff]
        %v811 = vld [vmem:[%s640 + $0x1a0] sm:$0xff]
        %v812 = vld [vmem:[%s640 + $0x1a8] sm:$0xff]
        %v813 = vld [vmem:[%s640 + $0x1b0] sm:$0xff]
        %v814 = vld [vmem:[%s640 + $0x1b8] sm:$0xff]
        %v815 = vld [vmem:[%s640 + $0x1c0] sm:$0xff]
        %v816 = vld [vmem:[%s640 + $0x1c8] sm:$0xff]
        %v817 = vld [vmem:[%s640 + $0x1d0] sm:$0xff]
        %v818 = vld [vmem:[%s640 + $0x1d8] sm:$0xff]
        %v819 = vld [vmem:[%s640 + $0x1e0] sm:$0xff]
        %v820 = vld [vmem:[%s640 + $0x1e8] sm:$0xff]
        %v821 = vld [vmem:[%s640 + $0x1f0] sm:$0xff]
        %v822 = vld [vmem:[%s640 + $0x1f8] sm:$0xff]
        %v823 = vmul.f32 %v695, %v759
        %v824 = vmul.f32 %v696, %v760
        %v825 = vmul.f32 %v697, %v761
        %v826 = vmul.f32 %v698, %v762
        %v827 = vmul.f32 %v699, %v763
        %v828 = vmul.f32 %v700, %v764
        %v829 = vmul.f32 %v701, %v765
        %v830 = vmul.f32 %v702, %v766
        %v831 = vmul.f32 %v703, %v767
        %v832 = vmul.f32 %v704, %v768
        %v833 = vmul.f32 %v705, %v769
        %v834 = vmul.f32 %v706, %v770
        %v835 = vmul.f32 %v707, %v771
        %v836 = vmul.f32 %v708, %v772
        %v837 = vmul.f32 %v709, %v773
        %v838 = vmul.f32 %v710, %v774
        %v839 = vmul.f32 %v711, %v775
        %v840 = vmul.f32 %v712, %v776
        %v841 = vmul.f32 %v713, %v777
        %v842 = vmul.f32 %v714, %v778
        %v843 = vmul.f32 %v715, %v779
        %v844 = vmul.f32 %v716, %v780
        %v845 = vmul.f32 %v717, %v781
        %v846 = vmul.f32 %v718, %v782
        %v847 = vmul.f32 %v719, %v783
        %v848 = vmul.f32 %v720, %v784
        %v849 = vmul.f32 %v721, %v785
        %v850 = vmul.f32 %v722, %v786
        %v851 = vmul.f32 %v723, %v787
        %v852 = vmul.f32 %v724, %v788
        %v853 = vmul.f32 %v725, %v789
        %v854 = vmul.f32 %v726, %v790
        %v855 = vmul.f32 %v727, %v791
        %v856 = vmul.f32 %v728, %v792
        %v857 = vmul.f32 %v729, %v793
        %v858 = vmul.f32 %v730, %v794
        %v859 = vmul.f32 %v731, %v795
        %v860 = vmul.f32 %v732, %v796
        %v861 = vmul.f32 %v733, %v797
        %v862 = vmul.f32 %v734, %v798
        %v863 = vmul.f32 %v735, %v799
        %v864 = vmul.f32 %v736, %v800
        %v865 = vmul.f32 %v737, %v801
        %v866 = vmul.f32 %v738, %v802
        %v867 = vmul.f32 %v739, %v803
        %v868 = vmul.f32 %v740, %v804
        %v869 = vmul.f32 %v741, %v805
        %v870 = vmul.f32 %v742, %v806
        %v871 = vmul.f32 %v743, %v807
        %v872 = vmul.f32 %v744, %v808
        %v873 = vmul.f32 %v745, %v809
        %v874 = vmul.f32 %v746, %v810
        %v875 = vmul.f32 %v747, %v811
        %v876 = vmul.f32 %v748, %v812
        %v877 = vmul.f32 %v749, %v813
        %v878 = vmul.f32 %v750, %v814
        %v879 = vmul.f32 %v751, %v815
        %v880 = vmul.f32 %v752, %v816
        %v881 = vmul.f32 %v753, %v817
        %v882 = vmul.f32 %v754, %v818
        %v883 = vmul.f32 %v755, %v819
        %v884 = vmul.f32 %v756, %v820
        %v885 = vmul.f32 %v757, %v821
        %v886 = vmul.f32 %v758, %v822
        %v887 = vld [vmem:[%s539] sm:$0xff]
        %v888 = vld [vmem:[%s539 + $0x8] sm:$0xff]
        %v889 = vld [vmem:[%s539 + $0x10] sm:$0xff]
        %v890 = vld [vmem:[%s539 + $0x18] sm:$0xff]
        %v891 = vld [vmem:[%s539 + $0x20] sm:$0xff]
        %v892 = vld [vmem:[%s539 + $0x28] sm:$0xff]
        %v893 = vld [vmem:[%s539 + $0x30] sm:$0xff]
        %v894 = vld [vmem:[%s539 + $0x38] sm:$0xff]
        %v895 = vld [vmem:[%s539 + $0x40] sm:$0xff]
        %v896 = vld [vmem:[%s539 + $0x48] sm:$0xff]
        %v897 = vld [vmem:[%s539 + $0x50] sm:$0xff]
        %v898 = vld [vmem:[%s539 + $0x58] sm:$0xff]
        %v899 = vld [vmem:[%s539 + $0x60] sm:$0xff]
        %v900 = vld [vmem:[%s539 + $0x68] sm:$0xff]
        %v901 = vld [vmem:[%s539 + $0x70] sm:$0xff]
        %v902 = vld [vmem:[%s539 + $0x78] sm:$0xff]
        %v903 = vld [vmem:[%s539 + $0x80] sm:$0xff]
        %v904 = vld [vmem:[%s539 + $0x88] sm:$0xff]
        %v905 = vld [vmem:[%s539 + $0x90] sm:$0xff]
        %v906 = vld [vmem:[%s539 + $0x98] sm:$0xff]
        %v907 = vld [vmem:[%s539 + $0xa0] sm:$0xff]
        %v908 = vld [vmem:[%s539 + $0xa8] sm:$0xff]
        %v909 = vld [vmem:[%s539 + $0xb0] sm:$0xff]
        %v910 = vld [vmem:[%s539 + $0xb8] sm:$0xff]
        %v911 = vld [vmem:[%s539 + $0xc0] sm:$0xff]
        %v912 = vld [vmem:[%s539 + $0xc8] sm:$0xff]
        %v913 = vld [vmem:[%s539 + $0xd0] sm:$0xff]
        %v914 = vld [vmem:[%s539 + $0xd8] sm:$0xff]
        %v915 = vld [vmem:[%s539 + $0xe0] sm:$0xff]
        %v916 = vld [vmem:[%s539 + $0xe8] sm:$0xff]
        %v917 = vld [vmem:[%s539 + $0xf0] sm:$0xff]
        %v918 = vld [vmem:[%s539 + $0xf8] sm:$0xff]
        %v919 = vld [vmem:[%s539 + $0x100] sm:$0xff]
        %v920 = vld [vmem:[%s539 + $0x108] sm:$0xff]
        %v921 = vld [vmem:[%s539 + $0x110] sm:$0xff]
        %v922 = vld [vmem:[%s539 + $0x118] sm:$0xff]
        %v923 = vld [vmem:[%s539 + $0x120] sm:$0xff]
        %v924 = vld [vmem:[%s539 + $0x128] sm:$0xff]
        %v925 = vld [vmem:[%s539 + $0x130] sm:$0xff]
        %v926 = vld [vmem:[%s539 + $0x138] sm:$0xff]
        %v927 = vld [vmem:[%s539 + $0x140] sm:$0xff]
        %v928 = vld [vmem:[%s539 + $0x148] sm:$0xff]
        %v929 = vld [vmem:[%s539 + $0x150] sm:$0xff]
        %v930 = vld [vmem:[%s539 + $0x158] sm:$0xff]
        %v931 = vld [vmem:[%s539 + $0x160] sm:$0xff]
        %v932 = vld [vmem:[%s539 + $0x168] sm:$0xff]
        %v933 = vld [vmem:[%s539 + $0x170] sm:$0xff]
        %v934 = vld [vmem:[%s539 + $0x178] sm:$0xff]
        %v935 = vld [vmem:[%s539 + $0x180] sm:$0xff]
        %v936 = vld [vmem:[%s539 + $0x188] sm:$0xff]
        %v937 = vld [vmem:[%s539 + $0x190] sm:$0xff]
        %v938 = vld [vmem:[%s539 + $0x198] sm:$0xff]
        %v939 = vld [vmem:[%s539 + $0x1a0] sm:$0xff]
        %v940 = vld [vmem:[%s539 + $0x1a8] sm:$0xff]
        %v941 = vld [vmem:[%s539 + $0x1b0] sm:$0xff]
        %v942 = vld [vmem:[%s539 + $0x1b8] sm:$0xff]
        %v943 = vld [vmem:[%s539 + $0x1c0] sm:$0xff]
        %v944 = vld [vmem:[%s539 + $0x1c8] sm:$0xff]
        %v945 = vld [vmem:[%s539 + $0x1d0] sm:$0xff]
        %v946 = vld [vmem:[%s539 + $0x1d8] sm:$0xff]
        %v947 = vld [vmem:[%s539 + $0x1e0] sm:$0xff]
        %v948 = vld [vmem:[%s539 + $0x1e8] sm:$0xff]
        %v949 = vld [vmem:[%s539 + $0x1f0] sm:$0xff]
        %v950 = vld [vmem:[%s539 + $0x1f8] sm:$0xff]
        %v951 = vld [vmem:[%s654] sm:$0xff]
        %v952 = vld [vmem:[%s654 + $0x8] sm:$0xff]
        %v953 = vld [vmem:[%s654 + $0x10] sm:$0xff]
        %v954 = vld [vmem:[%s654 + $0x18] sm:$0xff]
        %v955 = vld [vmem:[%s654 + $0x20] sm:$0xff]
        %v956 = vld [vmem:[%s654 + $0x28] sm:$0xff]
        %v957 = vld [vmem:[%s654 + $0x30] sm:$0xff]
        %v958 = vld [vmem:[%s654 + $0x38] sm:$0xff]
        %v959 = vld [vmem:[%s654 + $0x40] sm:$0xff]
        %v960 = vld [vmem:[%s654 + $0x48] sm:$0xff]
        %v961 = vld [vmem:[%s654 + $0x50] sm:$0xff]
        %v962 = vld [vmem:[%s654 + $0x58] sm:$0xff]
        %v963 = vld [vmem:[%s654 + $0x60] sm:$0xff]
        %v964 = vld [vmem:[%s654 + $0x68] sm:$0xff]
        %v965 = vld [vmem:[%s654 + $0x70] sm:$0xff]
        %v966 = vld [vmem:[%s654 + $0x78] sm:$0xff]
        %v967 = vld [vmem:[%s654 + $0x80] sm:$0xff]
        %v968 = vld [vmem:[%s654 + $0x88] sm:$0xff]
        %v969 = vld [vmem:[%s654 + $0x90] sm:$0xff]
        %v970 = vld [vmem:[%s654 + $0x98] sm:$0xff]
        %v971 = vld [vmem:[%s654 + $0xa0] sm:$0xff]
        %v972 = vld [vmem:[%s654 + $0xa8] sm:$0xff]
        %v973 = vld [vmem:[%s654 + $0xb0] sm:$0xff]
        %v974 = vld [vmem:[%s654 + $0xb8] sm:$0xff]
        %v975 = vld [vmem:[%s654 + $0xc0] sm:$0xff]
        %v976 = vld [vmem:[%s654 + $0xc8] sm:$0xff]
        %v977 = vld [vmem:[%s654 + $0xd0] sm:$0xff]
        %v978 = vld [vmem:[%s654 + $0xd8] sm:$0xff]
        %v979 = vld [vmem:[%s654 + $0xe0] sm:$0xff]
        %v980 = vld [vmem:[%s654 + $0xe8] sm:$0xff]
        %v981 = vld [vmem:[%s654 + $0xf0] sm:$0xff]
        %v982 = vld [vmem:[%s654 + $0xf8] sm:$0xff]
        %v983 = vld [vmem:[%s654 + $0x100] sm:$0xff]
        %v984 = vld [vmem:[%s654 + $0x108] sm:$0xff]
        %v985 = vld [vmem:[%s654 + $0x110] sm:$0xff]
        %v986 = vld [vmem:[%s654 + $0x118] sm:$0xff]
        %v987 = vld [vmem:[%s654 + $0x120] sm:$0xff]
        %v988 = vld [vmem:[%s654 + $0x128] sm:$0xff]
        %v989 = vld [vmem:[%s654 + $0x130] sm:$0xff]
        %v990 = vld [vmem:[%s654 + $0x138] sm:$0xff]
        %v991 = vld [vmem:[%s654 + $0x140] sm:$0xff]
        %v992 = vld [vmem:[%s654 + $0x148] sm:$0xff]
        %v993 = vld [vmem:[%s654 + $0x150] sm:$0xff]
        %v994 = vld [vmem:[%s654 + $0x158] sm:$0xff]
        %v995 = vld [vmem:[%s654 + $0x160] sm:$0xff]
        %v996 = vld [vmem:[%s654 + $0x168] sm:$0xff]
        %v997 = vld [vmem:[%s654 + $0x170] sm:$0xff]
        %v998 = vld [vmem:[%s654 + $0x178] sm:$0xff]
        %v999 = vld [vmem:[%s654 + $0x180] sm:$0xff]
        %v1000 = vld [vmem:[%s654 + $0x188] sm:$0xff]
        %v1001 = vld [vmem:[%s654 + $0x190] sm:$0xff]
        %v1002 = vld [vmem:[%s654 + $0x198] sm:$0xff]
        %v1003 = vld [vmem:[%s654 + $0x1a0] sm:$0xff]
        %v1004 = vld [vmem:[%s654 + $0x1a8] sm:$0xff]
        %v1005 = vld [vmem:[%s654 + $0x1b0] sm:$0xff]
        %v1006 = vld [vmem:[%s654 + $0x1b8] sm:$0xff]
        %v1007 = vld [vmem:[%s654 + $0x1c0] sm:$0xff]
        %v1008 = vld [vmem:[%s654 + $0x1c8] sm:$0xff]
        %v1009 = vld [vmem:[%s654 + $0x1d0] sm:$0xff]
        %v1010 = vld [vmem:[%s654 + $0x1d8] sm:$0xff]
        %v1011 = vld [vmem:[%s654 + $0x1e0] sm:$0xff]
        %v1012 = vld [vmem:[%s654 + $0x1e8] sm:$0xff]
        %v1013 = vld [vmem:[%s654 + $0x1f0] sm:$0xff]
        %v1014 = vld [vmem:[%s654 + $0x1f8] sm:$0xff]
        %v1015 = vmul.f32 %v887, %v951
        %v1016 = vmul.f32 %v888, %v952
        %v1017 = vmul.f32 %v889, %v953
        %v1018 = vmul.f32 %v890, %v954
        %v1019 = vmul.f32 %v891, %v955
        %v1020 = vmul.f32 %v892, %v956
        %v1021 = vmul.f32 %v893, %v957
        %v1022 = vmul.f32 %v894, %v958
        %v1023 = vmul.f32 %v895, %v959
        %v1024 = vmul.f32 %v896, %v960
        %v1025 = vmul.f32 %v897, %v961
        %v1026 = vmul.f32 %v898, %v962
        %v1027 = vmul.f32 %v899, %v963
        %v1028 = vmul.f32 %v900, %v964
        %v1029 = vmul.f32 %v901, %v965
        %v1030 = vmul.f32 %v902, %v966
        %v1031 = vmul.f32 %v903, %v967
        %v1032 = vmul.f32 %v904, %v968
        %v1033 = vmul.f32 %v905, %v969
        %v1034 = vmul.f32 %v906, %v970
        %v1035 = vmul.f32 %v907, %v971
        %v1036 = vmul.f32 %v908, %v972
        %v1037 = vmul.f32 %v909, %v973
        %v1038 = vmul.f32 %v910, %v974
        %v1039 = vmul.f32 %v911, %v975
        %v1040 = vmul.f32 %v912, %v976
        %v1041 = vmul.f32 %v913, %v977
        %v1042 = vmul.f32 %v914, %v978
        %v1043 = vmul.f32 %v915, %v979
        %v1044 = vmul.f32 %v916, %v980
        %v1045 = vmul.f32 %v917, %v981
        %v1046 = vmul.f32 %v918, %v982
        %v1047 = vmul.f32 %v919, %v983
        %v1048 = vmul.f32 %v920, %v984
        %v1049 = vmul.f32 %v921, %v985
        %v1050 = vmul.f32 %v922, %v986
        %v1051 = vmul.f32 %v923, %v987
        %v1052 = vmul.f32 %v924, %v988
        %v1053 = vmul.f32 %v925, %v989
        %v1054 = vmul.f32 %v926, %v990
        %v1055 = vmul.f32 %v927, %v991
        %v1056 = vmul.f32 %v928, %v992
        %v1057 = vmul.f32 %v929, %v993
        %v1058 = vmul.f32 %v930, %v994
        %v1059 = vmul.f32 %v931, %v995
        %v1060 = vmul.f32 %v932, %v996
        %v1061 = vmul.f32 %v933, %v997
        %v1062 = vmul.f32 %v934, %v998
        %v1063 = vmul.f32 %v935, %v999
        %v1064 = vmul.f32 %v936, %v1000
        %v1065 = vmul.f32 %v937, %v1001
        %v1066 = vmul.f32 %v938, %v1002
        %v1067 = vmul.f32 %v939, %v1003
        %v1068 = vmul.f32 %v940, %v1004
        %v1069 = vmul.f32 %v941, %v1005
        %v1070 = vmul.f32 %v942, %v1006
        %v1071 = vmul.f32 %v943, %v1007
        %v1072 = vmul.f32 %v944, %v1008
        %v1073 = vmul.f32 %v945, %v1009
        %v1074 = vmul.f32 %v946, %v1010
        %v1075 = vmul.f32 %v947, %v1011
        %v1076 = vmul.f32 %v948, %v1012
        %v1077 = vmul.f32 %v949, %v1013
        %v1078 = vmul.f32 %v950, %v1014
        %v1079 = vld [vmem:[%s6] sm:$0xff]
        %v1080 = vld [vmem:[%s6 + $0x8] sm:$0xff]
        %v1081 = vld [vmem:[%s6 + $0x10] sm:$0xff]
        %v1082 = vld [vmem:[%s6 + $0x18] sm:$0xff]
        %v1083 = vld [vmem:[%s6 + $0x20] sm:$0xff]
        %v1084 = vld [vmem:[%s6 + $0x28] sm:$0xff]
        %v1085 = vld [vmem:[%s6 + $0x30] sm:$0xff]
        %v1086 = vld [vmem:[%s6 + $0x38] sm:$0xff]
        %v1087 = vld [vmem:[%s6 + $0x40] sm:$0xff]
        %v1088 = vld [vmem:[%s6 + $0x48] sm:$0xff]
        %v1089 = vld [vmem:[%s6 + $0x50] sm:$0xff]
        %v1090 = vld [vmem:[%s6 + $0x58] sm:$0xff]
        %v1091 = vld [vmem:[%s6 + $0x60] sm:$0xff]
        %v1092 = vld [vmem:[%s6 + $0x68] sm:$0xff]
        %v1093 = vld [vmem:[%s6 + $0x70] sm:$0xff]
        %v1094 = vld [vmem:[%s6 + $0x78] sm:$0xff]
        %v1095 = vld [vmem:[%s6 + $0x80] sm:$0xff]
        %v1096 = vld [vmem:[%s6 + $0x88] sm:$0xff]
        %v1097 = vld [vmem:[%s6 + $0x90] sm:$0xff]
        %v1098 = vld [vmem:[%s6 + $0x98] sm:$0xff]
        %v1099 = vld [vmem:[%s6 + $0xa0] sm:$0xff]
        %v1100 = vld [vmem:[%s6 + $0xa8] sm:$0xff]
        %v1101 = vld [vmem:[%s6 + $0xb0] sm:$0xff]
        %v1102 = vld [vmem:[%s6 + $0xb8] sm:$0xff]
        %v1103 = vld [vmem:[%s6 + $0xc0] sm:$0xff]
        %v1104 = vld [vmem:[%s6 + $0xc8] sm:$0xff]
        %v1105 = vld [vmem:[%s6 + $0xd0] sm:$0xff]
        %v1106 = vld [vmem:[%s6 + $0xd8] sm:$0xff]
        %v1107 = vld [vmem:[%s6 + $0xe0] sm:$0xff]
        %v1108 = vld [vmem:[%s6 + $0xe8] sm:$0xff]
        %v1109 = vld [vmem:[%s6 + $0xf0] sm:$0xff]
        %v1110 = vld [vmem:[%s6 + $0xf8] sm:$0xff]
        %v1111 = vld [vmem:[%s6 + $0x100] sm:$0xff]
        %v1112 = vld [vmem:[%s6 + $0x108] sm:$0xff]
        %v1113 = vld [vmem:[%s6 + $0x110] sm:$0xff]
        %v1114 = vld [vmem:[%s6 + $0x118] sm:$0xff]
        %v1115 = vld [vmem:[%s6 + $0x120] sm:$0xff]
        %v1116 = vld [vmem:[%s6 + $0x128] sm:$0xff]
        %v1117 = vld [vmem:[%s6 + $0x130] sm:$0xff]
        %v1118 = vld [vmem:[%s6 + $0x138] sm:$0xff]
        %v1119 = vld [vmem:[%s6 + $0x140] sm:$0xff]
        %v1120 = vld [vmem:[%s6 + $0x148] sm:$0xff]
        %v1121 = vld [vmem:[%s6 + $0x150] sm:$0xff]
        %v1122 = vld [vmem:[%s6 + $0x158] sm:$0xff]
        %v1123 = vld [vmem:[%s6 + $0x160] sm:$0xff]
        %v1124 = vld [vmem:[%s6 + $0x168] sm:$0xff]
        %v1125 = vld [vmem:[%s6 + $0x170] sm:$0xff]
        %v1126 = vld [vmem:[%s6 + $0x178] sm:$0xff]
        %v1127 = vld [vmem:[%s6 + $0x180] sm:$0xff]
        %v1128 = vld [vmem:[%s6 + $0x188] sm:$0xff]
        %v1129 = vld [vmem:[%s6 + $0x190] sm:$0xff]
        %v1130 = vld [vmem:[%s6 + $0x198] sm:$0xff]
        %v1131 = vld [vmem:[%s6 + $0x1a0] sm:$0xff]
        %v1132 = vld [vmem:[%s6 + $0x1a8] sm:$0xff]
        %v1133 = vld [vmem:[%s6 + $0x1b0] sm:$0xff]
        %v1134 = vld [vmem:[%s6 + $0x1b8] sm:$0xff]
        %v1135 = vld [vmem:[%s6 + $0x1c0] sm:$0xff]
        %v1136 = vld [vmem:[%s6 + $0x1c8] sm:$0xff]
        %v1137 = vld [vmem:[%s6 + $0x1d0] sm:$0xff]
        %v1138 = vld [vmem:[%s6 + $0x1d8] sm:$0xff]
        %v1139 = vld [vmem:[%s6 + $0x1e0] sm:$0xff]
        %v1140 = vld [vmem:[%s6 + $0x1e8] sm:$0xff]
        %v1141 = vld [vmem:[%s6 + $0x1f0] sm:$0xff]
        %v1142 = vld [vmem:[%s6 + $0x1f8] sm:$0xff]
        %v1143 = vld [vmem:[%s7] sm:$0xff]
        %v1144 = vld [vmem:[%s7 + $0x8] sm:$0xff]
        %v1145 = vld [vmem:[%s7 + $0x10] sm:$0xff]
        %v1146 = vld [vmem:[%s7 + $0x18] sm:$0xff]
        %v1147 = vld [vmem:[%s7 + $0x20] sm:$0xff]
        %v1148 = vld [vmem:[%s7 + $0x28] sm:$0xff]
        %v1149 = vld [vmem:[%s7 + $0x30] sm:$0xff]
        %v1150 = vld [vmem:[%s7 + $0x38] sm:$0xff]
        %v1151 = vld [vmem:[%s7 + $0x40] sm:$0xff]
        %v1152 = vld [vmem:[%s7 + $0x48] sm:$0xff]
        %v1153 = vld [vmem:[%s7 + $0x50] sm:$0xff]
        %v1154 = vld [vmem:[%s7 + $0x58] sm:$0xff]
        %v1155 = vld [vmem:[%s7 + $0x60] sm:$0xff]
        %v1156 = vld [vmem:[%s7 + $0x68] sm:$0xff]
        %v1157 = vld [vmem:[%s7 + $0x70] sm:$0xff]
        %v1158 = vld [vmem:[%s7 + $0x78] sm:$0xff]
        %v1159 = vld [vmem:[%s7 + $0x80] sm:$0xff]
        %v1160 = vld [vmem:[%s7 + $0x88] sm:$0xff]
        %v1161 = vld [vmem:[%s7 + $0x90] sm:$0xff]
        %v1162 = vld [vmem:[%s7 + $0x98] sm:$0xff]
        %v1163 = vld [vmem:[%s7 + $0xa0] sm:$0xff]
        %v1164 = vld [vmem:[%s7 + $0xa8] sm:$0xff]
        %v1165 = vld [vmem:[%s7 + $0xb0] sm:$0xff]
        %v1166 = vld [vmem:[%s7 + $0xb8] sm:$0xff]
        %v1167 = vld [vmem:[%s7 + $0xc0] sm:$0xff]
        %v1168 = vld [vmem:[%s7 + $0xc8] sm:$0xff]
        %v1169 = vld [vmem:[%s7 + $0xd0] sm:$0xff]
        %v1170 = vld [vmem:[%s7 + $0xd8] sm:$0xff]
        %v1171 = vld [vmem:[%s7 + $0xe0] sm:$0xff]
        %v1172 = vld [vmem:[%s7 + $0xe8] sm:$0xff]
        %v1173 = vld [vmem:[%s7 + $0xf0] sm:$0xff]
        %v1174 = vld [vmem:[%s7 + $0xf8] sm:$0xff]
        %v1175 = vld [vmem:[%s7 + $0x100] sm:$0xff]
        %v1176 = vld [vmem:[%s7 + $0x108] sm:$0xff]
        %v1177 = vld [vmem:[%s7 + $0x110] sm:$0xff]
        %v1178 = vld [vmem:[%s7 + $0x118] sm:$0xff]
        %v1179 = vld [vmem:[%s7 + $0x120] sm:$0xff]
        %v1180 = vld [vmem:[%s7 + $0x128] sm:$0xff]
        %v1181 = vld [vmem:[%s7 + $0x130] sm:$0xff]
        %v1182 = vld [vmem:[%s7 + $0x138] sm:$0xff]
        %v1183 = vld [vmem:[%s7 + $0x140] sm:$0xff]
        %v1184 = vld [vmem:[%s7 + $0x148] sm:$0xff]
        %v1185 = vld [vmem:[%s7 + $0x150] sm:$0xff]
        %v1186 = vld [vmem:[%s7 + $0x158] sm:$0xff]
        %v1187 = vld [vmem:[%s7 + $0x160] sm:$0xff]
        %v1188 = vld [vmem:[%s7 + $0x168] sm:$0xff]
        %v1189 = vld [vmem:[%s7 + $0x170] sm:$0xff]
        %v1190 = vld [vmem:[%s7 + $0x178] sm:$0xff]
        %v1191 = vld [vmem:[%s7 + $0x180] sm:$0xff]
        %v1192 = vld [vmem:[%s7 + $0x188] sm:$0xff]
        %v1193 = vld [vmem:[%s7 + $0x190] sm:$0xff]
        %v1194 = vld [vmem:[%s7 + $0x198] sm:$0xff]
        %v1195 = vld [vmem:[%s7 + $0x1a0] sm:$0xff]
        %v1196 = vld [vmem:[%s7 + $0x1a8] sm:$0xff]
        %v1197 = vld [vmem:[%s7 + $0x1b0] sm:$0xff]
        %v1198 = vld [vmem:[%s7 + $0x1b8] sm:$0xff]
        %v1199 = vld [vmem:[%s7 + $0x1c0] sm:$0xff]
        %v1200 = vld [vmem:[%s7 + $0x1c8] sm:$0xff]
        %v1201 = vld [vmem:[%s7 + $0x1d0] sm:$0xff]
        %v1202 = vld [vmem:[%s7 + $0x1d8] sm:$0xff]
        %v1203 = vld [vmem:[%s7 + $0x1e0] sm:$0xff]
        %v1204 = vld [vmem:[%s7 + $0x1e8] sm:$0xff]
        %v1205 = vld [vmem:[%s7 + $0x1f0] sm:$0xff]
        %v1206 = vld [vmem:[%s7 + $0x1f8] sm:$0xff]
        %1207 = vmatpush.msra.mxu0 %v1203
        %1208 = vmatpush.msra.mxu0 %v1199
        %1209 = vmatpush.msra.mxu0 %v1195
        %1210 = vmatpush.msra.mxu0 %v1191
        %1211 = vmatpush.msra.mxu0 %v1187
        %1212 = vmatpush.msra.mxu0 %v1183
        %1213 = vmatpush.msra.mxu0 %v1179
        %1214 = vmatpush.msra.mxu0 %v1175
        %1215 = vmatpush.msra.mxu0 %v1171
        %1216 = vmatpush.msra.mxu0 %v1167
        %1217 = vmatpush.msra.mxu0 %v1163
        %1218 = vmatpush.msra.mxu0 %v1159
        %1219 = vmatpush.msra.mxu0 %v1155
        %1220 = vmatpush.msra.mxu0 %v1151
        %1221 = vmatpush.msra.mxu0 %v1147
        %1222 = vmatpush.msra.mxu0 %v1143
        %1223 = vmatmul.f32.gmra.mxu0 %v1015
        %v1224 = vpop.f32.mrf.mxu0
        %v1225 = vadd.f32 0.0, %v1224
        %1226 = vmatmul.f32.gmra.mxu0 %v1016
        %v1227 = vpop.f32.mrf.mxu0
        %v1228 = vadd.f32 0.0, %v1227
        %1229 = vmatmul.f32.gmra.mxu0 %v1017
        %v1230 = vpop.f32.mrf.mxu0
        %v1231 = vadd.f32 0.0, %v1230
        %1232 = vmatmul.f32.gmra.mxu0 %v1018
        %v1233 = vpop.f32.mrf.mxu0
        %v1234 = vadd.f32 0.0, %v1233
        %1235 = vmatmul.f32.gmra.mxu0 %v1019
        %v1236 = vpop.f32.mrf.mxu0
        %v1237 = vadd.f32 0.0, %v1236
        %1238 = vmatmul.f32.gmra.mxu0 %v1020
        %v1239 = vpop.f32.mrf.mxu0
        %v1240 = vadd.f32 0.0, %v1239
        %1241 = vmatmul.f32.gmra.mxu0 %v1021
        %v1242 = vpop.f32.mrf.mxu0
        %v1243 = vadd.f32 0.0, %v1242
        %1244 = vmatmul.f32.gmra.mxu0 %v1022
        %v1245 = vpop.f32.mrf.mxu0
        %v1246 = vadd.f32 0.0, %v1245
        %1247 = vmatmul.f32.gmra.mxu0 %v1023
        %v1248 = vpop.f32.mrf.mxu0
        %v1249 = vadd.f32 0.0, %v1248
        %1250 = vmatmul.f32.gmra.mxu0 %v1024
        %v1251 = vpop.f32.mrf.mxu0
        %v1252 = vadd.f32 0.0, %v1251
        %1253 = vmatmul.f32.gmra.mxu0 %v1025
        %v1254 = vpop.f32.mrf.mxu0
        %v1255 = vadd.f32 0.0, %v1254
        %1256 = vmatmul.f32.gmra.mxu0 %v1026
        %v1257 = vpop.f32.mrf.mxu0
        %v1258 = vadd.f32 0.0, %v1257
        %1259 = vmatmul.f32.gmra.mxu0 %v1027
        %v1260 = vpop.f32.mrf.mxu0
        %v1261 = vadd.f32 0.0, %v1260
        %1262 = vmatmul.f32.gmra.mxu0 %v1028
        %v1263 = vpop.f32.mrf.mxu0
        %v1264 = vadd.f32 0.0, %v1263
        %1265 = vmatmul.f32.gmra.mxu0 %v1029
        %v1266 = vpop.f32.mrf.mxu0
        %v1267 = vadd.f32 0.0, %v1266
        %1268 = vmatmul.f32.gmra.mxu0 %v1030
        %v1269 = vpop.f32.mrf.mxu0
        %v1270 = vadd.f32 0.0, %v1269
        %1271 = vmatmul.f32.gmra.mxu0 %v1031
        %v1272 = vpop.f32.mrf.mxu0
        %v1273 = vadd.f32 0.0, %v1272
        %1274 = vmatmul.f32.gmra.mxu0 %v1032
        %v1275 = vpop.f32.mrf.mxu0
        %v1276 = vadd.f32 0.0, %v1275
        %1277 = vmatmul.f32.gmra.mxu0 %v1033
        %v1278 = vpop.f32.mrf.mxu0
        %v1279 = vadd.f32 0.0, %v1278
        %1280 = vmatmul.f32.gmra.mxu0 %v1034
        %v1281 = vpop.f32.mrf.mxu0
        %v1282 = vadd.f32 0.0, %v1281
        %1283 = vmatmul.f32.gmra.mxu0 %v1035
        %v1284 = vpop.f32.mrf.mxu0
        %v1285 = vadd.f32 0.0, %v1284
        %1286 = vmatmul.f32.gmra.mxu0 %v1036
        %v1287 = vpop.f32.mrf.mxu0
        %v1288 = vadd.f32 0.0, %v1287
        %1289 = vmatmul.f32.gmra.mxu0 %v1037
        %v1290 = vpop.f32.mrf.mxu0
        %v1291 = vadd.f32 0.0, %v1290
        %1292 = vmatmul.f32.gmra.mxu0 %v1038
        %v1293 = vpop.f32.mrf.mxu0
        %v1294 = vadd.f32 0.0, %v1293
        %1295 = vmatmul.f32.gmra.mxu0 %v1039
        %v1296 = vpop.f32.mrf.mxu0
        %v1297 = vadd.f32 0.0, %v1296
        %1298 = vmatmul.f32.gmra.mxu0 %v1040
        %v1299 = vpop.f32.mrf.mxu0
        %v1300 = vadd.f32 0.0, %v1299
        %1301 = vmatmul.f32.gmra.mxu0 %v1041
        %v1302 = vpop.f32.mrf.mxu0
        %v1303 = vadd.f32 0.0, %v1302
        %1304 = vmatmul.f32.gmra.mxu0 %v1042
        %v1305 = vpop.f32.mrf.mxu0
        %v1306 = vadd.f32 0.0, %v1305
        %1307 = vmatmul.f32.gmra.mxu0 %v1043
        %v1308 = vpop.f32.mrf.mxu0
        %v1309 = vadd.f32 0.0, %v1308
        %1310 = vmatmul.f32.gmra.mxu0 %v1044
        %v1311 = vpop.f32.mrf.mxu0
        %v1312 = vadd.f32 0.0, %v1311
        %1313 = vmatmul.f32.gmra.mxu0 %v1045
        %v1314 = vpop.f32.mrf.mxu0
        %v1315 = vadd.f32 0.0, %v1314
        %1316 = vmatmul.f32.gmra.mxu0 %v1046
        %v1317 = vpop.f32.mrf.mxu0
        %v1318 = vadd.f32 0.0, %v1317
        %1319 = vmatmul.f32.gmra.mxu0 %v1047
        %v1320 = vpop.f32.mrf.mxu0
        %v1321 = vadd.f32 0.0, %v1320
        %1322 = vmatmul.f32.gmra.mxu0 %v1048
        %v1323 = vpop.f32.mrf.mxu0
        %v1324 = vadd.f32 0.0, %v1323
        %1325 = vmatmul.f32.gmra.mxu0 %v1049
        %v1326 = vpop.f32.mrf.mxu0
        %v1327 = vadd.f32 0.0, %v1326
        %1328 = vmatmul.f32.gmra.mxu0 %v1050
        %v1329 = vpop.f32.mrf.mxu0
        %v1330 = vadd.f32 0.0, %v1329
        %1331 = vmatmul.f32.gmra.mxu0 %v1051
        %v1332 = vpop.f32.mrf.mxu0
        %v1333 = vadd.f32 0.0, %v1332
        %1334 = vmatmul.f32.gmra.mxu0 %v1052
        %v1335 = vpop.f32.mrf.mxu0
        %v1336 = vadd.f32 0.0, %v1335
        %1337 = vmatmul.f32.gmra.mxu0 %v1053
        %v1338 = vpop.f32.mrf.mxu0
        %v1339 = vadd.f32 0.0, %v1338
        %1340 = vmatmul.f32.gmra.mxu0 %v1054
        %v1341 = vpop.f32.mrf.mxu0
        %v1342 = vadd.f32 0.0, %v1341
        %1343 = vmatmul.f32.gmra.mxu0 %v1055
        %v1344 = vpop.f32.mrf.mxu0
        %v1345 = vadd.f32 0.0, %v1344
        %1346 = vmatmul.f32.gmra.mxu0 %v1056
        %v1347 = vpop.f32.mrf.mxu0
        %v1348 = vadd.f32 0.0, %v1347
        %1349 = vmatmul.f32.gmra.mxu0 %v1057
        %v1350 = vpop.f32.mrf.mxu0
        %v1351 = vadd.f32 0.0, %v1350
        %1352 = vmatmul.f32.gmra.mxu0 %v1058
        %v1353 = vpop.f32.mrf.mxu0
        %v1354 = vadd.f32 0.0, %v1353
        %1355 = vmatmul.f32.gmra.mxu0 %v1059
        %v1356 = vpop.f32.mrf.mxu0
        %v1357 = vadd.f32 0.0, %v1356
        %1358 = vmatmul.f32.gmra.mxu0 %v1060
        %v1359 = vpop.f32.mrf.mxu0
        %v1360 = vadd.f32 0.0, %v1359
        %1361 = vmatmul.f32.gmra.mxu0 %v1061
        %v1362 = vpop.f32.mrf.mxu0
        %v1363 = vadd.f32 0.0, %v1362
        %1364 = vmatmul.f32.gmra.mxu0 %v1062
        %v1365 = vpop.f32.mrf.mxu0
        %v1366 = vadd.f32 0.0, %v1365
        %1367 = vmatmul.f32.gmra.mxu0 %v1063
        %v1368 = vpop.f32.mrf.mxu0
        %v1369 = vadd.f32 0.0, %v1368
        %1370 = vmatmul.f32.gmra.mxu0 %v1064
        %v1371 = vpop.f32.mrf.mxu0
        %v1372 = vadd.f32 0.0, %v1371
        %1373 = vmatmul.f32.gmra.mxu0 %v1065
        %v1374 = vpop.f32.mrf.mxu0
        %v1375 = vadd.f32 0.0, %v1374
        %1376 = vmatmul.f32.gmra.mxu0 %v1066
        %v1377 = vpop.f32.mrf.mxu0
        %v1378 = vadd.f32 0.0, %v1377
        %1379 = vmatmul.f32.gmra.mxu0 %v1067
        %v1380 = vpop.f32.mrf.mxu0
        %v1381 = vadd.f32 0.0, %v1380
        %1382 = vmatmul.f32.gmra.mxu0 %v1068
        %v1383 = vpop.f32.mrf.mxu0
        %v1384 = vadd.f32 0.0, %v1383
        %1385 = vmatmul.f32.gmra.mxu0 %v1069
        %v1386 = vpop.f32.mrf.mxu0
        %v1387 = vadd.f32 0.0, %v1386
        %1388 = vmatmul.f32.gmra.mxu0 %v1070
        %v1389 = vpop.f32.mrf.mxu0
        %v1390 = vadd.f32 0.0, %v1389
        %1391 = vmatmul.f32.gmra.mxu0 %v1071
        %v1392 = vpop.f32.mrf.mxu0
        %v1393 = vadd.f32 0.0, %v1392
        %1394 = vmatmul.f32.gmra.mxu0 %v1072
        %v1395 = vpop.f32.mrf.mxu0
        %v1396 = vadd.f32 0.0, %v1395
        %1397 = vmatmul.f32.gmra.mxu0 %v1073
        %v1398 = vpop.f32.mrf.mxu0
        %v1399 = vadd.f32 0.0, %v1398
        %1400 = vmatmul.f32.gmra.mxu0 %v1074
        %v1401 = vpop.f32.mrf.mxu0
        %v1402 = vadd.f32 0.0, %v1401
        %1403 = vmatmul.f32.gmra.mxu0 %v1075
        %v1404 = vpop.f32.mrf.mxu0
        %v1405 = vadd.f32 0.0, %v1404
        %1406 = vmatmul.f32.gmra.mxu0 %v1076
        %v1407 = vpop.f32.mrf.mxu0
        %v1408 = vadd.f32 0.0, %v1407
        %1409 = vmatmul.f32.gmra.mxu0 %v1077
        %v1410 = vpop.f32.mrf.mxu0
        %v1411 = vadd.f32 0.0, %v1410
        %1412 = vmatmul.f32.gmra.mxu0 %v1078
        %v1413 = vpop.f32.mrf.mxu0
        %v1414 = vadd.f32 0.0, %v1413
        %1415 = vdwg.mxu0
        %1416 = vmatpush.msra.mxu0 %v1204
        %1417 = vmatpush.msra.mxu0 %v1200
        %1418 = vmatpush.msra.mxu0 %v1196
        %1419 = vmatpush.msra.mxu0 %v1192
        %1420 = vmatpush.msra.mxu0 %v1188
        %1421 = vmatpush.msra.mxu0 %v1184
        %1422 = vmatpush.msra.mxu0 %v1180
        %1423 = vmatpush.msra.mxu0 %v1176
        %1424 = vmatpush.msra.mxu0 %v1172
        %1425 = vmatpush.msra.mxu0 %v1168
        %1426 = vmatpush.msra.mxu0 %v1164
        %1427 = vmatpush.msra.mxu0 %v1160
        %1428 = vmatpush.msra.mxu0 %v1156
        %1429 = vmatpush.msra.mxu0 %v1152
        %1430 = vmatpush.msra.mxu0 %v1148
        %1431 = vmatpush.msra.mxu0 %v1144
        %1432 = vmatmul.f32.gmra.mxu0 %v1015
        %v1433 = vpop.f32.mrf.mxu0
        %v1434 = vadd.f32 0.0, %v1433
        %1435 = vmatmul.f32.gmra.mxu0 %v1016
        %v1436 = vpop.f32.mrf.mxu0
        %v1437 = vadd.f32 0.0, %v1436
        %1438 = vmatmul.f32.gmra.mxu0 %v1017
        %v1439 = vpop.f32.mrf.mxu0
        %v1440 = vadd.f32 0.0, %v1439
        %1441 = vmatmul.f32.gmra.mxu0 %v1018
        %v1442 = vpop.f32.mrf.mxu0
        %v1443 = vadd.f32 0.0, %v1442
        %1444 = vmatmul.f32.gmra.mxu0 %v1019
        %v1445 = vpop.f32.mrf.mxu0
        %v1446 = vadd.f32 0.0, %v1445
        %1447 = vmatmul.f32.gmra.mxu0 %v1020
        %v1448 = vpop.f32.mrf.mxu0
        %v1449 = vadd.f32 0.0, %v1448
        %1450 = vmatmul.f32.gmra.mxu0 %v1021
        %v1451 = vpop.f32.mrf.mxu0
        %v1452 = vadd.f32 0.0, %v1451
        %1453 = vmatmul.f32.gmra.mxu0 %v1022
        %v1454 = vpop.f32.mrf.mxu0
        %v1455 = vadd.f32 0.0, %v1454
        %1456 = vmatmul.f32.gmra.mxu0 %v1023
        %v1457 = vpop.f32.mrf.mxu0
        %v1458 = vadd.f32 0.0, %v1457
        %1459 = vmatmul.f32.gmra.mxu0 %v1024
        %v1460 = vpop.f32.mrf.mxu0
        %v1461 = vadd.f32 0.0, %v1460
        %1462 = vmatmul.f32.gmra.mxu0 %v1025
        %v1463 = vpop.f32.mrf.mxu0
        %v1464 = vadd.f32 0.0, %v1463
        %1465 = vmatmul.f32.gmra.mxu0 %v1026
        %v1466 = vpop.f32.mrf.mxu0
        %v1467 = vadd.f32 0.0, %v1466
        %1468 = vmatmul.f32.gmra.mxu0 %v1027
        %v1469 = vpop.f32.mrf.mxu0
        %v1470 = vadd.f32 0.0, %v1469
        %1471 = vmatmul.f32.gmra.mxu0 %v1028
        %v1472 = vpop.f32.mrf.mxu0
        %v1473 = vadd.f32 0.0, %v1472
        %1474 = vmatmul.f32.gmra.mxu0 %v1029
        %v1475 = vpop.f32.mrf.mxu0
        %v1476 = vadd.f32 0.0, %v1475
        %1477 = vmatmul.f32.gmra.mxu0 %v1030
        %v1478 = vpop.f32.mrf.mxu0
        %v1479 = vadd.f32 0.0, %v1478
        %1480 = vmatmul.f32.gmra.mxu0 %v1031
        %v1481 = vpop.f32.mrf.mxu0
        %v1482 = vadd.f32 0.0, %v1481
        %1483 = vmatmul.f32.gmra.mxu0 %v1032
        %v1484 = vpop.f32.mrf.mxu0
        %v1485 = vadd.f32 0.0, %v1484
        %1486 = vmatmul.f32.gmra.mxu0 %v1033
        %v1487 = vpop.f32.mrf.mxu0
        %v1488 = vadd.f32 0.0, %v1487
        %1489 = vmatmul.f32.gmra.mxu0 %v1034
        %v1490 = vpop.f32.mrf.mxu0
        %v1491 = vadd.f32 0.0, %v1490
        %1492 = vmatmul.f32.gmra.mxu0 %v1035
        %v1493 = vpop.f32.mrf.mxu0
        %v1494 = vadd.f32 0.0, %v1493
        %1495 = vmatmul.f32.gmra.mxu0 %v1036
        %v1496 = vpop.f32.mrf.mxu0
        %v1497 = vadd.f32 0.0, %v1496
        %1498 = vmatmul.f32.gmra.mxu0 %v1037
        %v1499 = vpop.f32.mrf.mxu0
        %v1500 = vadd.f32 0.0, %v1499
        %1501 = vmatmul.f32.gmra.mxu0 %v1038
        %v1502 = vpop.f32.mrf.mxu0
        %v1503 = vadd.f32 0.0, %v1502
        %1504 = vmatmul.f32.gmra.mxu0 %v1039
        %v1505 = vpop.f32.mrf.mxu0
        %v1506 = vadd.f32 0.0, %v1505
        %1507 = vmatmul.f32.gmra.mxu0 %v1040
        %v1508 = vpop.f32.mrf.mxu0
        %v1509 = vadd.f32 0.0, %v1508
        %1510 = vmatmul.f32.gmra.mxu0 %v1041
        %v1511 = vpop.f32.mrf.mxu0
        %v1512 = vadd.f32 0.0, %v1511
        %1513 = vmatmul.f32.gmra.mxu0 %v1042
        %v1514 = vpop.f32.mrf.mxu0
        %v1515 = vadd.f32 0.0, %v1514
        %1516 = vmatmul.f32.gmra.mxu0 %v1043
        %v1517 = vpop.f32.mrf.mxu0
        %v1518 = vadd.f32 0.0, %v1517
        %1519 = vmatmul.f32.gmra.mxu0 %v1044
        %v1520 = vpop.f32.mrf.mxu0
        %v1521 = vadd.f32 0.0, %v1520
        %1522 = vmatmul.f32.gmra.mxu0 %v1045
        %v1523 = vpop.f32.mrf.mxu0
        %v1524 = vadd.f32 0.0, %v1523
        %1525 = vmatmul.f32.gmra.mxu0 %v1046
        %v1526 = vpop.f32.mrf.mxu0
        %v1527 = vadd.f32 0.0, %v1526
        %1528 = vmatmul.f32.gmra.mxu0 %v1047
        %v1529 = vpop.f32.mrf.mxu0
        %v1530 = vadd.f32 0.0, %v1529
        %1531 = vmatmul.f32.gmra.mxu0 %v1048
        %v1532 = vpop.f32.mrf.mxu0
        %v1533 = vadd.f32 0.0, %v1532
        %1534 = vmatmul.f32.gmra.mxu0 %v1049
        %v1535 = vpop.f32.mrf.mxu0
        %v1536 = vadd.f32 0.0, %v1535
        %1537 = vmatmul.f32.gmra.mxu0 %v1050
        %v1538 = vpop.f32.mrf.mxu0
        %v1539 = vadd.f32 0.0, %v1538
        %1540 = vmatmul.f32.gmra.mxu0 %v1051
        %v1541 = vpop.f32.mrf.mxu0
        %v1542 = vadd.f32 0.0, %v1541
        %1543 = vmatmul.f32.gmra.mxu0 %v1052
        %v1544 = vpop.f32.mrf.mxu0
        %v1545 = vadd.f32 0.0, %v1544
        %1546 = vmatmul.f32.gmra.mxu0 %v1053
        %v1547 = vpop.f32.mrf.mxu0
        %v1548 = vadd.f32 0.0, %v1547
        %1549 = vmatmul.f32.gmra.mxu0 %v1054
        %v1550 = vpop.f32.mrf.mxu0
        %v1551 = vadd.f32 0.0, %v1550
        %1552 = vmatmul.f32.gmra.mxu0 %v1055
        %v1553 = vpop.f32.mrf.mxu0
        %v1554 = vadd.f32 0.0, %v1553
        %1555 = vmatmul.f32.gmra.mxu0 %v1056
        %v1556 = vpop.f32.mrf.mxu0
        %v1557 = vadd.f32 0.0, %v1556
        %1558 = vmatmul.f32.gmra.mxu0 %v1057
        %v1559 = vpop.f32.mrf.mxu0
        %v1560 = vadd.f32 0.0, %v1559
        %1561 = vmatmul.f32.gmra.mxu0 %v1058
        %v1562 = vpop.f32.mrf.mxu0
        %v1563 = vadd.f32 0.0, %v1562
        %1564 = vmatmul.f32.gmra.mxu0 %v1059
        %v1565 = vpop.f32.mrf.mxu0
        %v1566 = vadd.f32 0.0, %v1565
        %1567 = vmatmul.f32.gmra.mxu0 %v1060
        %v1568 = vpop.f32.mrf.mxu0
        %v1569 = vadd.f32 0.0, %v1568
        %1570 = vmatmul.f32.gmra.mxu0 %v1061
        %v1571 = vpop.f32.mrf.mxu0
        %v1572 = vadd.f32 0.0, %v1571
        %1573 = vmatmul.f32.gmra.mxu0 %v1062
        %v1574 = vpop.f32.mrf.mxu0
        %v1575 = vadd.f32 0.0, %v1574
        %1576 = vmatmul.f32.gmra.mxu0 %v1063
        %v1577 = vpop.f32.mrf.mxu0
        %v1578 = vadd.f32 0.0, %v1577
        %1579 = vmatmul.f32.gmra.mxu0 %v1064
        %v1580 = vpop.f32.mrf.mxu0
        %v1581 = vadd.f32 0.0, %v1580
        %1582 = vmatmul.f32.gmra.mxu0 %v1065
        %v1583 = vpop.f32.mrf.mxu0
        %v1584 = vadd.f32 0.0, %v1583
        %1585 = vmatmul.f32.gmra.mxu0 %v1066
        %v1586 = vpop.f32.mrf.mxu0
        %v1587 = vadd.f32 0.0, %v1586
        %1588 = vmatmul.f32.gmra.mxu0 %v1067
        %v1589 = vpop.f32.mrf.mxu0
        %v1590 = vadd.f32 0.0, %v1589
        %1591 = vmatmul.f32.gmra.mxu0 %v1068
        %v1592 = vpop.f32.mrf.mxu0
        %v1593 = vadd.f32 0.0, %v1592
        %1594 = vmatmul.f32.gmra.mxu0 %v1069
        %v1595 = vpop.f32.mrf.mxu0
        %v1596 = vadd.f32 0.0, %v1595
        %1597 = vmatmul.f32.gmra.mxu0 %v1070
        %v1598 = vpop.f32.mrf.mxu0
        %v1599 = vadd.f32 0.0, %v1598
        %1600 = vmatmul.f32.gmra.mxu0 %v1071
        %v1601 = vpop.f32.mrf.mxu0
        %v1602 = vadd.f32 0.0, %v1601
        %1603 = vmatmul.f32.gmra.mxu0 %v1072
        %v1604 = vpop.f32.mrf.mxu0
        %v1605 = vadd.f32 0.0, %v1604
        %1606 = vmatmul.f32.gmra.mxu0 %v1073
        %v1607 = vpop.f32.mrf.mxu0
        %v1608 = vadd.f32 0.0, %v1607
        %1609 = vmatmul.f32.gmra.mxu0 %v1074
        %v1610 = vpop.f32.mrf.mxu0
        %v1611 = vadd.f32 0.0, %v1610
        %1612 = vmatmul.f32.gmra.mxu0 %v1075
        %v1613 = vpop.f32.mrf.mxu0
        %v1614 = vadd.f32 0.0, %v1613
        %1615 = vmatmul.f32.gmra.mxu0 %v1076
        %v1616 = vpop.f32.mrf.mxu0
        %v1617 = vadd.f32 0.0, %v1616
        %1618 = vmatmul.f32.gmra.mxu0 %v1077
        %v1619 = vpop.f32.mrf.mxu0
        %v1620 = vadd.f32 0.0, %v1619
        %1621 = vmatmul.f32.gmra.mxu0 %v1078
        %v1622 = vpop.f32.mrf.mxu0
        %v1623 = vadd.f32 0.0, %v1622
        %1624 = vdwg.mxu0
        %1625 = vmatpush.msra.mxu0 %v1205
        %1626 = vmatpush.msra.mxu0 %v1201
        %1627 = vmatpush.msra.mxu0 %v1197
        %1628 = vmatpush.msra.mxu0 %v1193
        %1629 = vmatpush.msra.mxu0 %v1189
        %1630 = vmatpush.msra.mxu0 %v1185
        %1631 = vmatpush.msra.mxu0 %v1181
        %1632 = vmatpush.msra.mxu0 %v1177
        %1633 = vmatpush.msra.mxu0 %v1173
        %1634 = vmatpush.msra.mxu0 %v1169
        %1635 = vmatpush.msra.mxu0 %v1165
        %1636 = vmatpush.msra.mxu0 %v1161
        %1637 = vmatpush.msra.mxu0 %v1157
        %1638 = vmatpush.msra.mxu0 %v1153
        %1639 = vmatpush.msra.mxu0 %v1149
        %1640 = vmatpush.msra.mxu0 %v1145
        %1641 = vmatmul.f32.gmra.mxu0 %v1015
        %v1642 = vpop.f32.mrf.mxu0
        %v1643 = vadd.f32 0.0, %v1642
        %1644 = vmatmul.f32.gmra.mxu0 %v1016
        %v1645 = vpop.f32.mrf.mxu0
        %v1646 = vadd.f32 0.0, %v1645
        %1647 = vmatmul.f32.gmra.mxu0 %v1017
        %v1648 = vpop.f32.mrf.mxu0
        %v1649 = vadd.f32 0.0, %v1648
        %1650 = vmatmul.f32.gmra.mxu0 %v1018
        %v1651 = vpop.f32.mrf.mxu0
        %v1652 = vadd.f32 0.0, %v1651
        %1653 = vmatmul.f32.gmra.mxu0 %v1019
        %v1654 = vpop.f32.mrf.mxu0
        %v1655 = vadd.f32 0.0, %v1654
        %1656 = vmatmul.f32.gmra.mxu0 %v1020
        %v1657 = vpop.f32.mrf.mxu0
        %v1658 = vadd.f32 0.0, %v1657
        %1659 = vmatmul.f32.gmra.mxu0 %v1021
        %v1660 = vpop.f32.mrf.mxu0
        %v1661 = vadd.f32 0.0, %v1660
        %1662 = vmatmul.f32.gmra.mxu0 %v1022
        %v1663 = vpop.f32.mrf.mxu0
        %v1664 = vadd.f32 0.0, %v1663
        %1665 = vmatmul.f32.gmra.mxu0 %v1023
        %v1666 = vpop.f32.mrf.mxu0
        %v1667 = vadd.f32 0.0, %v1666
        %1668 = vmatmul.f32.gmra.mxu0 %v1024
        %v1669 = vpop.f32.mrf.mxu0
        %v1670 = vadd.f32 0.0, %v1669
        %1671 = vmatmul.f32.gmra.mxu0 %v1025
        %v1672 = vpop.f32.mrf.mxu0
        %v1673 = vadd.f32 0.0, %v1672
        %1674 = vmatmul.f32.gmra.mxu0 %v1026
        %v1675 = vpop.f32.mrf.mxu0
        %v1676 = vadd.f32 0.0, %v1675
        %1677 = vmatmul.f32.gmra.mxu0 %v1027
        %v1678 = vpop.f32.mrf.mxu0
        %v1679 = vadd.f32 0.0, %v1678
        %1680 = vmatmul.f32.gmra.mxu0 %v1028
        %v1681 = vpop.f32.mrf.mxu0
        %v1682 = vadd.f32 0.0, %v1681
        %1683 = vmatmul.f32.gmra.mxu0 %v1029
        %v1684 = vpop.f32.mrf.mxu0
        %v1685 = vadd.f32 0.0, %v1684
        %1686 = vmatmul.f32.gmra.mxu0 %v1030
        %v1687 = vpop.f32.mrf.mxu0
        %v1688 = vadd.f32 0.0, %v1687
        %1689 = vmatmul.f32.gmra.mxu0 %v1031
        %v1690 = vpop.f32.mrf.mxu0
        %v1691 = vadd.f32 0.0, %v1690
        %1692 = vmatmul.f32.gmra.mxu0 %v1032
        %v1693 = vpop.f32.mrf.mxu0
        %v1694 = vadd.f32 0.0, %v1693
        %1695 = vmatmul.f32.gmra.mxu0 %v1033
        %v1696 = vpop.f32.mrf.mxu0
        %v1697 = vadd.f32 0.0, %v1696
        %1698 = vmatmul.f32.gmra.mxu0 %v1034
        %v1699 = vpop.f32.mrf.mxu0
        %v1700 = vadd.f32 0.0, %v1699
        %1701 = vmatmul.f32.gmra.mxu0 %v1035
        %v1702 = vpop.f32.mrf.mxu0
        %v1703 = vadd.f32 0.0, %v1702
        %1704 = vmatmul.f32.gmra.mxu0 %v1036
        %v1705 = vpop.f32.mrf.mxu0
        %v1706 = vadd.f32 0.0, %v1705
        %1707 = vmatmul.f32.gmra.mxu0 %v1037
        %v1708 = vpop.f32.mrf.mxu0
        %v1709 = vadd.f32 0.0, %v1708
        %1710 = vmatmul.f32.gmra.mxu0 %v1038
        %v1711 = vpop.f32.mrf.mxu0
        %v1712 = vadd.f32 0.0, %v1711
        %1713 = vmatmul.f32.gmra.mxu0 %v1039
        %v1714 = vpop.f32.mrf.mxu0
        %v1715 = vadd.f32 0.0, %v1714
        %1716 = vmatmul.f32.gmra.mxu0 %v1040
        %v1717 = vpop.f32.mrf.mxu0
        %v1718 = vadd.f32 0.0, %v1717
        %1719 = vmatmul.f32.gmra.mxu0 %v1041
        %v1720 = vpop.f32.mrf.mxu0
        %v1721 = vadd.f32 0.0, %v1720
        %1722 = vmatmul.f32.gmra.mxu0 %v1042
        %v1723 = vpop.f32.mrf.mxu0
        %v1724 = vadd.f32 0.0, %v1723
        %1725 = vmatmul.f32.gmra.mxu0 %v1043
        %v1726 = vpop.f32.mrf.mxu0
        %v1727 = vadd.f32 0.0, %v1726
        %1728 = vmatmul.f32.gmra.mxu0 %v1044
        %v1729 = vpop.f32.mrf.mxu0
        %v1730 = vadd.f32 0.0, %v1729
        %1731 = vmatmul.f32.gmra.mxu0 %v1045
        %v1732 = vpop.f32.mrf.mxu0
        %v1733 = vadd.f32 0.0, %v1732
        %1734 = vmatmul.f32.gmra.mxu0 %v1046
        %v1735 = vpop.f32.mrf.mxu0
        %v1736 = vadd.f32 0.0, %v1735
        %1737 = vmatmul.f32.gmra.mxu0 %v1047
        %v1738 = vpop.f32.mrf.mxu0
        %v1739 = vadd.f32 0.0, %v1738
        %1740 = vmatmul.f32.gmra.mxu0 %v1048
        %v1741 = vpop.f32.mrf.mxu0
        %v1742 = vadd.f32 0.0, %v1741
        %1743 = vmatmul.f32.gmra.mxu0 %v1049
        %v1744 = vpop.f32.mrf.mxu0
        %v1745 = vadd.f32 0.0, %v1744
        %1746 = vmatmul.f32.gmra.mxu0 %v1050
        %v1747 = vpop.f32.mrf.mxu0
        %v1748 = vadd.f32 0.0, %v1747
        %1749 = vmatmul.f32.gmra.mxu0 %v1051
        %v1750 = vpop.f32.mrf.mxu0
        %v1751 = vadd.f32 0.0, %v1750
        %1752 = vmatmul.f32.gmra.mxu0 %v1052
        %v1753 = vpop.f32.mrf.mxu0
        %v1754 = vadd.f32 0.0, %v1753
        %1755 = vmatmul.f32.gmra.mxu0 %v1053
        %v1756 = vpop.f32.mrf.mxu0
        %v1757 = vadd.f32 0.0, %v1756
        %1758 = vmatmul.f32.gmra.mxu0 %v1054
        %v1759 = vpop.f32.mrf.mxu0
        %v1760 = vadd.f32 0.0, %v1759
        %1761 = vmatmul.f32.gmra.mxu0 %v1055
        %v1762 = vpop.f32.mrf.mxu0
        %v1763 = vadd.f32 0.0, %v1762
        %1764 = vmatmul.f32.gmra.mxu0 %v1056
        %v1765 = vpop.f32.mrf.mxu0
        %v1766 = vadd.f32 0.0, %v1765
        %1767 = vmatmul.f32.gmra.mxu0 %v1057
        %v1768 = vpop.f32.mrf.mxu0
        %v1769 = vadd.f32 0.0, %v1768
        %1770 = vmatmul.f32.gmra.mxu0 %v1058
        %v1771 = vpop.f32.mrf.mxu0
        %v1772 = vadd.f32 0.0, %v1771
        %1773 = vmatmul.f32.gmra.mxu0 %v1059
        %v1774 = vpop.f32.mrf.mxu0
        %v1775 = vadd.f32 0.0, %v1774
        %1776 = vmatmul.f32.gmra.mxu0 %v1060
        %v1777 = vpop.f32.mrf.mxu0
        %v1778 = vadd.f32 0.0, %v1777
        %1779 = vmatmul.f32.gmra.mxu0 %v1061
        %v1780 = vpop.f32.mrf.mxu0
        %v1781 = vadd.f32 0.0, %v1780
        %1782 = vmatmul.f32.gmra.mxu0 %v1062
        %v1783 = vpop.f32.mrf.mxu0
        %v1784 = vadd.f32 0.0, %v1783
        %1785 = vmatmul.f32.gmra.mxu0 %v1063
        %v1786 = vpop.f32.mrf.mxu0
        %v1787 = vadd.f32 0.0, %v1786
        %1788 = vmatmul.f32.gmra.mxu0 %v1064
        %v1789 = vpop.f32.mrf.mxu0
        %v1790 = vadd.f32 0.0, %v1789
        %1791 = vmatmul.f32.gmra.mxu0 %v1065
        %v1792 = vpop.f32.mrf.mxu0
        %v1793 = vadd.f32 0.0, %v1792
        %1794 = vmatmul.f32.gmra.mxu0 %v1066
        %v1795 = vpop.f32.mrf.mxu0
        %v1796 = vadd.f32 0.0, %v1795
        %1797 = vmatmul.f32.gmra.mxu0 %v1067
        %v1798 = vpop.f32.mrf.mxu0
        %v1799 = vadd.f32 0.0, %v1798
        %1800 = vmatmul.f32.gmra.mxu0 %v1068
        %v1801 = vpop.f32.mrf.mxu0
        %v1802 = vadd.f32 0.0, %v1801
        %1803 = vmatmul.f32.gmra.mxu0 %v1069
        %v1804 = vpop.f32.mrf.mxu0
        %v1805 = vadd.f32 0.0, %v1804
        %1806 = vmatmul.f32.gmra.mxu0 %v1070
        %v1807 = vpop.f32.mrf.mxu0
        %v1808 = vadd.f32 0.0, %v1807
        %1809 = vmatmul.f32.gmra.mxu0 %v1071
        %v1810 = vpop.f32.mrf.mxu0
        %v1811 = vadd.f32 0.0, %v1810
        %1812 = vmatmul.f32.gmra.mxu0 %v1072
        %v1813 = vpop.f32.mrf.mxu0
        %v1814 = vadd.f32 0.0, %v1813
        %1815 = vmatmul.f32.gmra.mxu0 %v1073
        %v1816 = vpop.f32.mrf.mxu0
        %v1817 = vadd.f32 0.0, %v1816
        %1818 = vmatmul.f32.gmra.mxu0 %v1074
        %v1819 = vpop.f32.mrf.mxu0
        %v1820 = vadd.f32 0.0, %v1819
        %1821 = vmatmul.f32.gmra.mxu0 %v1075
        %v1822 = vpop.f32.mrf.mxu0
        %v1823 = vadd.f32 0.0, %v1822
        %1824 = vmatmul.f32.gmra.mxu0 %v1076
        %v1825 = vpop.f32.mrf.mxu0
        %v1826 = vadd.f32 0.0, %v1825
        %1827 = vmatmul.f32.gmra.mxu0 %v1077
        %v1828 = vpop.f32.mrf.mxu0
        %v1829 = vadd.f32 0.0, %v1828
        %1830 = vmatmul.f32.gmra.mxu0 %v1078
        %v1831 = vpop.f32.mrf.mxu0
        %v1832 = vadd.f32 0.0, %v1831
        %1833 = vdwg.mxu0
        %1834 = vmatpush.msra.mxu0 %v1206
        %1835 = vmatpush.msra.mxu0 %v1202
        %1836 = vmatpush.msra.mxu0 %v1198
        %1837 = vmatpush.msra.mxu0 %v1194
        %1838 = vmatpush.msra.mxu0 %v1190
        %1839 = vmatpush.msra.mxu0 %v1186
        %1840 = vmatpush.msra.mxu0 %v1182
        %1841 = vmatpush.msra.mxu0 %v1178
        %1842 = vmatpush.msra.mxu0 %v1174
        %1843 = vmatpush.msra.mxu0 %v1170
        %1844 = vmatpush.msra.mxu0 %v1166
        %1845 = vmatpush.msra.mxu0 %v1162
        %1846 = vmatpush.msra.mxu0 %v1158
        %1847 = vmatpush.msra.mxu0 %v1154
        %1848 = vmatpush.msra.mxu0 %v1150
        %1849 = vmatpush.msra.mxu0 %v1146
        %1850 = vmatmul.f32.gmra.mxu0 %v1015
        %v1851 = vpop.f32.mrf.mxu0
        %v1852 = vadd.f32 0.0, %v1851
        %1853 = vmatmul.f32.gmra.mxu0 %v1016
        %v1854 = vpop.f32.mrf.mxu0
        %v1855 = vadd.f32 0.0, %v1854
        %1856 = vmatmul.f32.gmra.mxu0 %v1017
        %v1857 = vpop.f32.mrf.mxu0
        %v1858 = vadd.f32 0.0, %v1857
        %1859 = vmatmul.f32.gmra.mxu0 %v1018
        %v1860 = vpop.f32.mrf.mxu0
        %v1861 = vadd.f32 0.0, %v1860
        %1862 = vmatmul.f32.gmra.mxu0 %v1019
        %v1863 = vpop.f32.mrf.mxu0
        %v1864 = vadd.f32 0.0, %v1863
        %1865 = vmatmul.f32.gmra.mxu0 %v1020
        %v1866 = vpop.f32.mrf.mxu0
        %v1867 = vadd.f32 0.0, %v1866
        %1868 = vmatmul.f32.gmra.mxu0 %v1021
        %v1869 = vpop.f32.mrf.mxu0
        %v1870 = vadd.f32 0.0, %v1869
        %1871 = vmatmul.f32.gmra.mxu0 %v1022
        %v1872 = vpop.f32.mrf.mxu0
        %v1873 = vadd.f32 0.0, %v1872
        %1874 = vmatmul.f32.gmra.mxu0 %v1023
        %v1875 = vpop.f32.mrf.mxu0
        %v1876 = vadd.f32 0.0, %v1875
        %1877 = vmatmul.f32.gmra.mxu0 %v1024
        %v1878 = vpop.f32.mrf.mxu0
        %v1879 = vadd.f32 0.0, %v1878
        %1880 = vmatmul.f32.gmra.mxu0 %v1025
        %v1881 = vpop.f32.mrf.mxu0
        %v1882 = vadd.f32 0.0, %v1881
        %1883 = vmatmul.f32.gmra.mxu0 %v1026
        %v1884 = vpop.f32.mrf.mxu0
        %v1885 = vadd.f32 0.0, %v1884
        %1886 = vmatmul.f32.gmra.mxu0 %v1027
        %v1887 = vpop.f32.mrf.mxu0
        %v1888 = vadd.f32 0.0, %v1887
        %1889 = vmatmul.f32.gmra.mxu0 %v1028
        %v1890 = vpop.f32.mrf.mxu0
        %v1891 = vadd.f32 0.0, %v1890
        %1892 = vmatmul.f32.gmra.mxu0 %v1029
        %v1893 = vpop.f32.mrf.mxu0
        %v1894 = vadd.f32 0.0, %v1893
        %1895 = vmatmul.f32.gmra.mxu0 %v1030
        %v1896 = vpop.f32.mrf.mxu0
        %v1897 = vadd.f32 0.0, %v1896
        %1898 = vmatmul.f32.gmra.mxu0 %v1031
        %v1899 = vpop.f32.mrf.mxu0
        %v1900 = vadd.f32 0.0, %v1899
        %1901 = vmatmul.f32.gmra.mxu0 %v1032
        %v1902 = vpop.f32.mrf.mxu0
        %v1903 = vadd.f32 0.0, %v1902
        %1904 = vmatmul.f32.gmra.mxu0 %v1033
        %v1905 = vpop.f32.mrf.mxu0
        %v1906 = vadd.f32 0.0, %v1905
        %1907 = vmatmul.f32.gmra.mxu0 %v1034
        %v1908 = vpop.f32.mrf.mxu0
        %v1909 = vadd.f32 0.0, %v1908
        %1910 = vmatmul.f32.gmra.mxu0 %v1035
        %v1911 = vpop.f32.mrf.mxu0
        %v1912 = vadd.f32 0.0, %v1911
        %1913 = vmatmul.f32.gmra.mxu0 %v1036
        %v1914 = vpop.f32.mrf.mxu0
        %v1915 = vadd.f32 0.0, %v1914
        %1916 = vmatmul.f32.gmra.mxu0 %v1037
        %v1917 = vpop.f32.mrf.mxu0
        %v1918 = vadd.f32 0.0, %v1917
        %1919 = vmatmul.f32.gmra.mxu0 %v1038
        %v1920 = vpop.f32.mrf.mxu0
        %v1921 = vadd.f32 0.0, %v1920
        %1922 = vmatmul.f32.gmra.mxu0 %v1039
        %v1923 = vpop.f32.mrf.mxu0
        %v1924 = vadd.f32 0.0, %v1923
        %1925 = vmatmul.f32.gmra.mxu0 %v1040
        %v1926 = vpop.f32.mrf.mxu0
        %v1927 = vadd.f32 0.0, %v1926
        %1928 = vmatmul.f32.gmra.mxu0 %v1041
        %v1929 = vpop.f32.mrf.mxu0
        %v1930 = vadd.f32 0.0, %v1929
        %1931 = vmatmul.f32.gmra.mxu0 %v1042
        %v1932 = vpop.f32.mrf.mxu0
        %v1933 = vadd.f32 0.0, %v1932
        %1934 = vmatmul.f32.gmra.mxu0 %v1043
        %v1935 = vpop.f32.mrf.mxu0
        %v1936 = vadd.f32 0.0, %v1935
        %1937 = vmatmul.f32.gmra.mxu0 %v1044
        %v1938 = vpop.f32.mrf.mxu0
        %v1939 = vadd.f32 0.0, %v1938
        %1940 = vmatmul.f32.gmra.mxu0 %v1045
        %v1941 = vpop.f32.mrf.mxu0
        %v1942 = vadd.f32 0.0, %v1941
        %1943 = vmatmul.f32.gmra.mxu0 %v1046
        %v1944 = vpop.f32.mrf.mxu0
        %v1945 = vadd.f32 0.0, %v1944
        %1946 = vmatmul.f32.gmra.mxu0 %v1047
        %v1947 = vpop.f32.mrf.mxu0
        %v1948 = vadd.f32 0.0, %v1947
        %1949 = vmatmul.f32.gmra.mxu0 %v1048
        %v1950 = vpop.f32.mrf.mxu0
        %v1951 = vadd.f32 0.0, %v1950
        %1952 = vmatmul.f32.gmra.mxu0 %v1049
        %v1953 = vpop.f32.mrf.mxu0
        %v1954 = vadd.f32 0.0, %v1953
        %1955 = vmatmul.f32.gmra.mxu0 %v1050
        %v1956 = vpop.f32.mrf.mxu0
        %v1957 = vadd.f32 0.0, %v1956
        %1958 = vmatmul.f32.gmra.mxu0 %v1051
        %v1959 = vpop.f32.mrf.mxu0
        %v1960 = vadd.f32 0.0, %v1959
        %1961 = vmatmul.f32.gmra.mxu0 %v1052
        %v1962 = vpop.f32.mrf.mxu0
        %v1963 = vadd.f32 0.0, %v1962
        %1964 = vmatmul.f32.gmra.mxu0 %v1053
        %v1965 = vpop.f32.mrf.mxu0
        %v1966 = vadd.f32 0.0, %v1965
        %1967 = vmatmul.f32.gmra.mxu0 %v1054
        %v1968 = vpop.f32.mrf.mxu0
        %v1969 = vadd.f32 0.0, %v1968
        %1970 = vmatmul.f32.gmra.mxu0 %v1055
        %v1971 = vpop.f32.mrf.mxu0
        %v1972 = vadd.f32 0.0, %v1971
        %1973 = vmatmul.f32.gmra.mxu0 %v1056
        %v1974 = vpop.f32.mrf.mxu0
        %v1975 = vadd.f32 0.0, %v1974
        %1976 = vmatmul.f32.gmra.mxu0 %v1057
        %v1977 = vpop.f32.mrf.mxu0
        %v1978 = vadd.f32 0.0, %v1977
        %1979 = vmatmul.f32.gmra.mxu0 %v1058
        %v1980 = vpop.f32.mrf.mxu0
        %v1981 = vadd.f32 0.0, %v1980
        %1982 = vmatmul.f32.gmra.mxu0 %v1059
        %v1983 = vpop.f32.mrf.mxu0
        %v1984 = vadd.f32 0.0, %v1983
        %1985 = vmatmul.f32.gmra.mxu0 %v1060
        %v1986 = vpop.f32.mrf.mxu0
        %v1987 = vadd.f32 0.0, %v1986
        %1988 = vmatmul.f32.gmra.mxu0 %v1061
        %v1989 = vpop.f32.mrf.mxu0
        %v1990 = vadd.f32 0.0, %v1989
        %1991 = vmatmul.f32.gmra.mxu0 %v1062
        %v1992 = vpop.f32.mrf.mxu0
        %v1993 = vadd.f32 0.0, %v1992
        %1994 = vmatmul.f32.gmra.mxu0 %v1063
        %v1995 = vpop.f32.mrf.mxu0
        %v1996 = vadd.f32 0.0, %v1995
        %1997 = vmatmul.f32.gmra.mxu0 %v1064
        %v1998 = vpop.f32.mrf.mxu0
        %v1999 = vadd.f32 0.0, %v1998
        %2000 = vmatmul.f32.gmra.mxu0 %v1065
        %v2001 = vpop.f32.mrf.mxu0
        %v2002 = vadd.f32 0.0, %v2001
        %2003 = vmatmul.f32.gmra.mxu0 %v1066
        %v2004 = vpop.f32.mrf.mxu0
        %v2005 = vadd.f32 0.0, %v2004
        %2006 = vmatmul.f32.gmra.mxu0 %v1067
        %v2007 = vpop.f32.mrf.mxu0
        %v2008 = vadd.f32 0.0, %v2007
        %2009 = vmatmul.f32.gmra.mxu0 %v1068
        %v2010 = vpop.f32.mrf.mxu0
        %v2011 = vadd.f32 0.0, %v2010
        %2012 = vmatmul.f32.gmra.mxu0 %v1069
        %v2013 = vpop.f32.mrf.mxu0
        %v2014 = vadd.f32 0.0, %v2013
        %2015 = vmatmul.f32.gmra.mxu0 %v1070
        %v2016 = vpop.f32.mrf.mxu0
        %v2017 = vadd.f32 0.0, %v2016
        %2018 = vmatmul.f32.gmra.mxu0 %v1071
        %v2019 = vpop.f32.mrf.mxu0
        %v2020 = vadd.f32 0.0, %v2019
        %2021 = vmatmul.f32.gmra.mxu0 %v1072
        %v2022 = vpop.f32.mrf.mxu0
        %v2023 = vadd.f32 0.0, %v2022
        %2024 = vmatmul.f32.gmra.mxu0 %v1073
        %v2025 = vpop.f32.mrf.mxu0
        %v2026 = vadd.f32 0.0, %v2025
        %2027 = vmatmul.f32.gmra.mxu0 %v1074
        %v2028 = vpop.f32.mrf.mxu0
        %v2029 = vadd.f32 0.0, %v2028
        %2030 = vmatmul.f32.gmra.mxu0 %v1075
        %v2031 = vpop.f32.mrf.mxu0
        %v2032 = vadd.f32 0.0, %v2031
        %2033 = vmatmul.f32.gmra.mxu0 %v1076
        %v2034 = vpop.f32.mrf.mxu0
        %v2035 = vadd.f32 0.0, %v2034
        %2036 = vmatmul.f32.gmra.mxu0 %v1077
        %v2037 = vpop.f32.mrf.mxu0
        %v2038 = vadd.f32 0.0, %v2037
        %2039 = vmatmul.f32.gmra.mxu0 %v1078
        %v2040 = vpop.f32.mrf.mxu0
        %v2041 = vadd.f32 0.0, %v2040
        %2042 = vdwg.mxu0
        %2043 = vmatpush.msra.mxu0 %v1139
        %2044 = vmatpush.msra.mxu0 %v1135
        %2045 = vmatpush.msra.mxu0 %v1131
        %2046 = vmatpush.msra.mxu0 %v1127
        %2047 = vmatpush.msra.mxu0 %v1123
        %2048 = vmatpush.msra.mxu0 %v1119
        %2049 = vmatpush.msra.mxu0 %v1115
        %2050 = vmatpush.msra.mxu0 %v1111
        %2051 = vmatpush.msra.mxu0 %v1107
        %2052 = vmatpush.msra.mxu0 %v1103
        %2053 = vmatpush.msra.mxu0 %v1099
        %2054 = vmatpush.msra.mxu0 %v1095
        %2055 = vmatpush.msra.mxu0 %v1091
        %2056 = vmatpush.msra.mxu0 %v1087
        %2057 = vmatpush.msra.mxu0 %v1083
        %2058 = vmatpush.msra.mxu0 %v1079
        %2059 = vmatmul.f32.gmra.mxu0 %v823
        %v2060 = vpop.f32.mrf.mxu0
        %v2061 = vadd.f32 %v1225, %v2060
        %2062 = vmatmul.f32.gmra.mxu0 %v824
        %v2063 = vpop.f32.mrf.mxu0
        %v2064 = vadd.f32 %v1228, %v2063
        %2065 = vmatmul.f32.gmra.mxu0 %v825
        %v2066 = vpop.f32.mrf.mxu0
        %v2067 = vadd.f32 %v1231, %v2066
        %2068 = vmatmul.f32.gmra.mxu0 %v826
        %v2069 = vpop.f32.mrf.mxu0
        %v2070 = vadd.f32 %v1234, %v2069
        %2071 = vmatmul.f32.gmra.mxu0 %v827
        %v2072 = vpop.f32.mrf.mxu0
        %v2073 = vadd.f32 %v1237, %v2072
        %2074 = vmatmul.f32.gmra.mxu0 %v828
        %v2075 = vpop.f32.mrf.mxu0
        %v2076 = vadd.f32 %v1240, %v2075
        %2077 = vmatmul.f32.gmra.mxu0 %v829
        %v2078 = vpop.f32.mrf.mxu0
        %v2079 = vadd.f32 %v1243, %v2078
        %2080 = vmatmul.f32.gmra.mxu0 %v830
        %v2081 = vpop.f32.mrf.mxu0
        %v2082 = vadd.f32 %v1246, %v2081
        %2083 = vmatmul.f32.gmra.mxu0 %v831
        %v2084 = vpop.f32.mrf.mxu0
        %v2085 = vadd.f32 %v1249, %v2084
        %2086 = vmatmul.f32.gmra.mxu0 %v832
        %v2087 = vpop.f32.mrf.mxu0
        %v2088 = vadd.f32 %v1252, %v2087
        %2089 = vmatmul.f32.gmra.mxu0 %v833
        %v2090 = vpop.f32.mrf.mxu0
        %v2091 = vadd.f32 %v1255, %v2090
        %2092 = vmatmul.f32.gmra.mxu0 %v834
        %v2093 = vpop.f32.mrf.mxu0
        %v2094 = vadd.f32 %v1258, %v2093
        %2095 = vmatmul.f32.gmra.mxu0 %v835
        %v2096 = vpop.f32.mrf.mxu0
        %v2097 = vadd.f32 %v1261, %v2096
        %2098 = vmatmul.f32.gmra.mxu0 %v836
        %v2099 = vpop.f32.mrf.mxu0
        %v2100 = vadd.f32 %v1264, %v2099
        %2101 = vmatmul.f32.gmra.mxu0 %v837
        %v2102 = vpop.f32.mrf.mxu0
        %v2103 = vadd.f32 %v1267, %v2102
        %2104 = vmatmul.f32.gmra.mxu0 %v838
        %v2105 = vpop.f32.mrf.mxu0
        %v2106 = vadd.f32 %v1270, %v2105
        %2107 = vmatmul.f32.gmra.mxu0 %v839
        %v2108 = vpop.f32.mrf.mxu0
        %v2109 = vadd.f32 %v1273, %v2108
        %2110 = vmatmul.f32.gmra.mxu0 %v840
        %v2111 = vpop.f32.mrf.mxu0
        %v2112 = vadd.f32 %v1276, %v2111
        %2113 = vmatmul.f32.gmra.mxu0 %v841
        %v2114 = vpop.f32.mrf.mxu0
        %v2115 = vadd.f32 %v1279, %v2114
        %2116 = vmatmul.f32.gmra.mxu0 %v842
        %v2117 = vpop.f32.mrf.mxu0
        %v2118 = vadd.f32 %v1282, %v2117
        %2119 = vmatmul.f32.gmra.mxu0 %v843
        %v2120 = vpop.f32.mrf.mxu0
        %v2121 = vadd.f32 %v1285, %v2120
        %2122 = vmatmul.f32.gmra.mxu0 %v844
        %v2123 = vpop.f32.mrf.mxu0
        %v2124 = vadd.f32 %v1288, %v2123
        %2125 = vmatmul.f32.gmra.mxu0 %v845
        %v2126 = vpop.f32.mrf.mxu0
        %v2127 = vadd.f32 %v1291, %v2126
        %2128 = vmatmul.f32.gmra.mxu0 %v846
        %v2129 = vpop.f32.mrf.mxu0
        %v2130 = vadd.f32 %v1294, %v2129
        %2131 = vmatmul.f32.gmra.mxu0 %v847
        %v2132 = vpop.f32.mrf.mxu0
        %v2133 = vadd.f32 %v1297, %v2132
        %2134 = vmatmul.f32.gmra.mxu0 %v848
        %v2135 = vpop.f32.mrf.mxu0
        %v2136 = vadd.f32 %v1300, %v2135
        %2137 = vmatmul.f32.gmra.mxu0 %v849
        %v2138 = vpop.f32.mrf.mxu0
        %v2139 = vadd.f32 %v1303, %v2138
        %2140 = vmatmul.f32.gmra.mxu0 %v850
        %v2141 = vpop.f32.mrf.mxu0
        %v2142 = vadd.f32 %v1306, %v2141
        %2143 = vmatmul.f32.gmra.mxu0 %v851
        %v2144 = vpop.f32.mrf.mxu0
        %v2145 = vadd.f32 %v1309, %v2144
        %2146 = vmatmul.f32.gmra.mxu0 %v852
        %v2147 = vpop.f32.mrf.mxu0
        %v2148 = vadd.f32 %v1312, %v2147
        %2149 = vmatmul.f32.gmra.mxu0 %v853
        %v2150 = vpop.f32.mrf.mxu0
        %v2151 = vadd.f32 %v1315, %v2150
        %2152 = vmatmul.f32.gmra.mxu0 %v854
        %v2153 = vpop.f32.mrf.mxu0
        %v2154 = vadd.f32 %v1318, %v2153
        %2155 = vmatmul.f32.gmra.mxu0 %v855
        %v2156 = vpop.f32.mrf.mxu0
        %v2157 = vadd.f32 %v1321, %v2156
        %2158 = vmatmul.f32.gmra.mxu0 %v856
        %v2159 = vpop.f32.mrf.mxu0
        %v2160 = vadd.f32 %v1324, %v2159
        %2161 = vmatmul.f32.gmra.mxu0 %v857
        %v2162 = vpop.f32.mrf.mxu0
        %v2163 = vadd.f32 %v1327, %v2162
        %2164 = vmatmul.f32.gmra.mxu0 %v858
        %v2165 = vpop.f32.mrf.mxu0
        %v2166 = vadd.f32 %v1330, %v2165
        %2167 = vmatmul.f32.gmra.mxu0 %v859
        %v2168 = vpop.f32.mrf.mxu0
        %v2169 = vadd.f32 %v1333, %v2168
        %2170 = vmatmul.f32.gmra.mxu0 %v860
        %v2171 = vpop.f32.mrf.mxu0
        %v2172 = vadd.f32 %v1336, %v2171
        %2173 = vmatmul.f32.gmra.mxu0 %v861
        %v2174 = vpop.f32.mrf.mxu0
        %v2175 = vadd.f32 %v1339, %v2174
        %2176 = vmatmul.f32.gmra.mxu0 %v862
        %v2177 = vpop.f32.mrf.mxu0
        %v2178 = vadd.f32 %v1342, %v2177
        %2179 = vmatmul.f32.gmra.mxu0 %v863
        %v2180 = vpop.f32.mrf.mxu0
        %v2181 = vadd.f32 %v1345, %v2180
        %2182 = vmatmul.f32.gmra.mxu0 %v864
        %v2183 = vpop.f32.mrf.mxu0
        %v2184 = vadd.f32 %v1348, %v2183
        %2185 = vmatmul.f32.gmra.mxu0 %v865
        %v2186 = vpop.f32.mrf.mxu0
        %v2187 = vadd.f32 %v1351, %v2186
        %2188 = vmatmul.f32.gmra.mxu0 %v866
        %v2189 = vpop.f32.mrf.mxu0
        %v2190 = vadd.f32 %v1354, %v2189
        %2191 = vmatmul.f32.gmra.mxu0 %v867
        %v2192 = vpop.f32.mrf.mxu0
        %v2193 = vadd.f32 %v1357, %v2192
        %2194 = vmatmul.f32.gmra.mxu0 %v868
        %v2195 = vpop.f32.mrf.mxu0
        %v2196 = vadd.f32 %v1360, %v2195
        %2197 = vmatmul.f32.gmra.mxu0 %v869
        %v2198 = vpop.f32.mrf.mxu0
        %v2199 = vadd.f32 %v1363, %v2198
        %2200 = vmatmul.f32.gmra.mxu0 %v870
        %v2201 = vpop.f32.mrf.mxu0
        %v2202 = vadd.f32 %v1366, %v2201
        %2203 = vmatmul.f32.gmra.mxu0 %v871
        %v2204 = vpop.f32.mrf.mxu0
        %v2205 = vadd.f32 %v1369, %v2204
        %2206 = vmatmul.f32.gmra.mxu0 %v872
        %v2207 = vpop.f32.mrf.mxu0
        %v2208 = vadd.f32 %v1372, %v2207
        %2209 = vmatmul.f32.gmra.mxu0 %v873
        %v2210 = vpop.f32.mrf.mxu0
        %v2211 = vadd.f32 %v1375, %v2210
        %2212 = vmatmul.f32.gmra.mxu0 %v874
        %v2213 = vpop.f32.mrf.mxu0
        %v2214 = vadd.f32 %v1378, %v2213
        %2215 = vmatmul.f32.gmra.mxu0 %v875
        %v2216 = vpop.f32.mrf.mxu0
        %v2217 = vadd.f32 %v1381, %v2216
        %2218 = vmatmul.f32.gmra.mxu0 %v876
        %v2219 = vpop.f32.mrf.mxu0
        %v2220 = vadd.f32 %v1384, %v2219
        %2221 = vmatmul.f32.gmra.mxu0 %v877
        %v2222 = vpop.f32.mrf.mxu0
        %v2223 = vadd.f32 %v1387, %v2222
        %2224 = vmatmul.f32.gmra.mxu0 %v878
        %v2225 = vpop.f32.mrf.mxu0
        %v2226 = vadd.f32 %v1390, %v2225
        %2227 = vmatmul.f32.gmra.mxu0 %v879
        %v2228 = vpop.f32.mrf.mxu0
        %v2229 = vadd.f32 %v1393, %v2228
        %2230 = vmatmul.f32.gmra.mxu0 %v880
        %v2231 = vpop.f32.mrf.mxu0
        %v2232 = vadd.f32 %v1396, %v2231
        %2233 = vmatmul.f32.gmra.mxu0 %v881
        %v2234 = vpop.f32.mrf.mxu0
        %v2235 = vadd.f32 %v1399, %v2234
        %2236 = vmatmul.f32.gmra.mxu0 %v882
        %v2237 = vpop.f32.mrf.mxu0
        %v2238 = vadd.f32 %v1402, %v2237
        %2239 = vmatmul.f32.gmra.mxu0 %v883
        %v2240 = vpop.f32.mrf.mxu0
        %v2241 = vadd.f32 %v1405, %v2240
        %2242 = vmatmul.f32.gmra.mxu0 %v884
        %v2243 = vpop.f32.mrf.mxu0
        %v2244 = vadd.f32 %v1408, %v2243
        %2245 = vmatmul.f32.gmra.mxu0 %v885
        %v2246 = vpop.f32.mrf.mxu0
        %v2247 = vadd.f32 %v1411, %v2246
        %2248 = vmatmul.f32.gmra.mxu0 %v886
        %v2249 = vpop.f32.mrf.mxu0
        %v2250 = vadd.f32 %v1414, %v2249
        %2251 = vdwg.mxu0
        %2252 = vmatpush.msra.mxu0 %v1140
        %2253 = vmatpush.msra.mxu0 %v1136
        %2254 = vmatpush.msra.mxu0 %v1132
        %2255 = vmatpush.msra.mxu0 %v1128
        %2256 = vmatpush.msra.mxu0 %v1124
        %2257 = vmatpush.msra.mxu0 %v1120
        %2258 = vmatpush.msra.mxu0 %v1116
        %2259 = vmatpush.msra.mxu0 %v1112
        %2260 = vmatpush.msra.mxu0 %v1108
        %2261 = vmatpush.msra.mxu0 %v1104
        %2262 = vmatpush.msra.mxu0 %v1100
        %2263 = vmatpush.msra.mxu0 %v1096
        %2264 = vmatpush.msra.mxu0 %v1092
        %2265 = vmatpush.msra.mxu0 %v1088
        %2266 = vmatpush.msra.mxu0 %v1084
        %2267 = vmatpush.msra.mxu0 %v1080
        %2268 = vmatmul.f32.gmra.mxu0 %v823
        %v2269 = vpop.f32.mrf.mxu0
        %v2270 = vadd.f32 %v1434, %v2269
        %2271 = vmatmul.f32.gmra.mxu0 %v824
        %v2272 = vpop.f32.mrf.mxu0
        %v2273 = vadd.f32 %v1437, %v2272
        %2274 = vmatmul.f32.gmra.mxu0 %v825
        %v2275 = vpop.f32.mrf.mxu0
        %v2276 = vadd.f32 %v1440, %v2275
        %2277 = vmatmul.f32.gmra.mxu0 %v826
        %v2278 = vpop.f32.mrf.mxu0
        %v2279 = vadd.f32 %v1443, %v2278
        %2280 = vmatmul.f32.gmra.mxu0 %v827
        %v2281 = vpop.f32.mrf.mxu0
        %v2282 = vadd.f32 %v1446, %v2281
        %2283 = vmatmul.f32.gmra.mxu0 %v828
        %v2284 = vpop.f32.mrf.mxu0
        %v2285 = vadd.f32 %v1449, %v2284
        %2286 = vmatmul.f32.gmra.mxu0 %v829
        %v2287 = vpop.f32.mrf.mxu0
        %v2288 = vadd.f32 %v1452, %v2287
        %2289 = vmatmul.f32.gmra.mxu0 %v830
        %v2290 = vpop.f32.mrf.mxu0
        %v2291 = vadd.f32 %v1455, %v2290
        %2292 = vmatmul.f32.gmra.mxu0 %v831
        %v2293 = vpop.f32.mrf.mxu0
        %v2294 = vadd.f32 %v1458, %v2293
        %2295 = vmatmul.f32.gmra.mxu0 %v832
        %v2296 = vpop.f32.mrf.mxu0
        %v2297 = vadd.f32 %v1461, %v2296
        %2298 = vmatmul.f32.gmra.mxu0 %v833
        %v2299 = vpop.f32.mrf.mxu0
        %v2300 = vadd.f32 %v1464, %v2299
        %2301 = vmatmul.f32.gmra.mxu0 %v834
        %v2302 = vpop.f32.mrf.mxu0
        %v2303 = vadd.f32 %v1467, %v2302
        %2304 = vmatmul.f32.gmra.mxu0 %v835
        %v2305 = vpop.f32.mrf.mxu0
        %v2306 = vadd.f32 %v1470, %v2305
        %2307 = vmatmul.f32.gmra.mxu0 %v836
        %v2308 = vpop.f32.mrf.mxu0
        %v2309 = vadd.f32 %v1473, %v2308
        %2310 = vmatmul.f32.gmra.mxu0 %v837
        %v2311 = vpop.f32.mrf.mxu0
        %v2312 = vadd.f32 %v1476, %v2311
        %2313 = vmatmul.f32.gmra.mxu0 %v838
        %v2314 = vpop.f32.mrf.mxu0
        %v2315 = vadd.f32 %v1479, %v2314
        %2316 = vmatmul.f32.gmra.mxu0 %v839
        %v2317 = vpop.f32.mrf.mxu0
        %v2318 = vadd.f32 %v1482, %v2317
        %2319 = vmatmul.f32.gmra.mxu0 %v840
        %v2320 = vpop.f32.mrf.mxu0
        %v2321 = vadd.f32 %v1485, %v2320
        %2322 = vmatmul.f32.gmra.mxu0 %v841
        %v2323 = vpop.f32.mrf.mxu0
        %v2324 = vadd.f32 %v1488, %v2323
        %2325 = vmatmul.f32.gmra.mxu0 %v842
        %v2326 = vpop.f32.mrf.mxu0
        %v2327 = vadd.f32 %v1491, %v2326
        %2328 = vmatmul.f32.gmra.mxu0 %v843
        %v2329 = vpop.f32.mrf.mxu0
        %v2330 = vadd.f32 %v1494, %v2329
        %2331 = vmatmul.f32.gmra.mxu0 %v844
        %v2332 = vpop.f32.mrf.mxu0
        %v2333 = vadd.f32 %v1497, %v2332
        %2334 = vmatmul.f32.gmra.mxu0 %v845
        %v2335 = vpop.f32.mrf.mxu0
        %v2336 = vadd.f32 %v1500, %v2335
        %2337 = vmatmul.f32.gmra.mxu0 %v846
        %v2338 = vpop.f32.mrf.mxu0
        %v2339 = vadd.f32 %v1503, %v2338
        %2340 = vmatmul.f32.gmra.mxu0 %v847
        %v2341 = vpop.f32.mrf.mxu0
        %v2342 = vadd.f32 %v1506, %v2341
        %2343 = vmatmul.f32.gmra.mxu0 %v848
        %v2344 = vpop.f32.mrf.mxu0
        %v2345 = vadd.f32 %v1509, %v2344
        %2346 = vmatmul.f32.gmra.mxu0 %v849
        %v2347 = vpop.f32.mrf.mxu0
        %v2348 = vadd.f32 %v1512, %v2347
        %2349 = vmatmul.f32.gmra.mxu0 %v850
        %v2350 = vpop.f32.mrf.mxu0
        %v2351 = vadd.f32 %v1515, %v2350
        %2352 = vmatmul.f32.gmra.mxu0 %v851
        %v2353 = vpop.f32.mrf.mxu0
        %v2354 = vadd.f32 %v1518, %v2353
        %2355 = vmatmul.f32.gmra.mxu0 %v852
        %v2356 = vpop.f32.mrf.mxu0
        %v2357 = vadd.f32 %v1521, %v2356
        %2358 = vmatmul.f32.gmra.mxu0 %v853
        %v2359 = vpop.f32.mrf.mxu0
        %v2360 = vadd.f32 %v1524, %v2359
        %2361 = vmatmul.f32.gmra.mxu0 %v854
        %v2362 = vpop.f32.mrf.mxu0
        %v2363 = vadd.f32 %v1527, %v2362
        %2364 = vmatmul.f32.gmra.mxu0 %v855
        %v2365 = vpop.f32.mrf.mxu0
        %v2366 = vadd.f32 %v1530, %v2365
        %2367 = vmatmul.f32.gmra.mxu0 %v856
        %v2368 = vpop.f32.mrf.mxu0
        %v2369 = vadd.f32 %v1533, %v2368
        %2370 = vmatmul.f32.gmra.mxu0 %v857
        %v2371 = vpop.f32.mrf.mxu0
        %v2372 = vadd.f32 %v1536, %v2371
        %2373 = vmatmul.f32.gmra.mxu0 %v858
        %v2374 = vpop.f32.mrf.mxu0
        %v2375 = vadd.f32 %v1539, %v2374
        %2376 = vmatmul.f32.gmra.mxu0 %v859
        %v2377 = vpop.f32.mrf.mxu0
        %v2378 = vadd.f32 %v1542, %v2377
        %2379 = vmatmul.f32.gmra.mxu0 %v860
        %v2380 = vpop.f32.mrf.mxu0
        %v2381 = vadd.f32 %v1545, %v2380
        %2382 = vmatmul.f32.gmra.mxu0 %v861
        %v2383 = vpop.f32.mrf.mxu0
        %v2384 = vadd.f32 %v1548, %v2383
        %2385 = vmatmul.f32.gmra.mxu0 %v862
        %v2386 = vpop.f32.mrf.mxu0
        %v2387 = vadd.f32 %v1551, %v2386
        %2388 = vmatmul.f32.gmra.mxu0 %v863
        %v2389 = vpop.f32.mrf.mxu0
        %v2390 = vadd.f32 %v1554, %v2389
        %2391 = vmatmul.f32.gmra.mxu0 %v864
        %v2392 = vpop.f32.mrf.mxu0
        %v2393 = vadd.f32 %v1557, %v2392
        %2394 = vmatmul.f32.gmra.mxu0 %v865
        %v2395 = vpop.f32.mrf.mxu0
        %v2396 = vadd.f32 %v1560, %v2395
        %2397 = vmatmul.f32.gmra.mxu0 %v866
        %v2398 = vpop.f32.mrf.mxu0
        %v2399 = vadd.f32 %v1563, %v2398
        %2400 = vmatmul.f32.gmra.mxu0 %v867
        %v2401 = vpop.f32.mrf.mxu0
        %v2402 = vadd.f32 %v1566, %v2401
        %2403 = vmatmul.f32.gmra.mxu0 %v868
        %v2404 = vpop.f32.mrf.mxu0
        %v2405 = vadd.f32 %v1569, %v2404
        %2406 = vmatmul.f32.gmra.mxu0 %v869
        %v2407 = vpop.f32.mrf.mxu0
        %v2408 = vadd.f32 %v1572, %v2407
        %2409 = vmatmul.f32.gmra.mxu0 %v870
        %v2410 = vpop.f32.mrf.mxu0
        %v2411 = vadd.f32 %v1575, %v2410
        %2412 = vmatmul.f32.gmra.mxu0 %v871
        %v2413 = vpop.f32.mrf.mxu0
        %v2414 = vadd.f32 %v1578, %v2413
        %2415 = vmatmul.f32.gmra.mxu0 %v872
        %v2416 = vpop.f32.mrf.mxu0
        %v2417 = vadd.f32 %v1581, %v2416
        %2418 = vmatmul.f32.gmra.mxu0 %v873
        %v2419 = vpop.f32.mrf.mxu0
        %v2420 = vadd.f32 %v1584, %v2419
        %2421 = vmatmul.f32.gmra.mxu0 %v874
        %v2422 = vpop.f32.mrf.mxu0
        %v2423 = vadd.f32 %v1587, %v2422
        %2424 = vmatmul.f32.gmra.mxu0 %v875
        %v2425 = vpop.f32.mrf.mxu0
        %v2426 = vadd.f32 %v1590, %v2425
        %2427 = vmatmul.f32.gmra.mxu0 %v876
        %v2428 = vpop.f32.mrf.mxu0
        %v2429 = vadd.f32 %v1593, %v2428
        %2430 = vmatmul.f32.gmra.mxu0 %v877
        %v2431 = vpop.f32.mrf.mxu0
        %v2432 = vadd.f32 %v1596, %v2431
        %2433 = vmatmul.f32.gmra.mxu0 %v878
        %v2434 = vpop.f32.mrf.mxu0
        %v2435 = vadd.f32 %v1599, %v2434
        %2436 = vmatmul.f32.gmra.mxu0 %v879
        %v2437 = vpop.f32.mrf.mxu0
        %v2438 = vadd.f32 %v1602, %v2437
        %2439 = vmatmul.f32.gmra.mxu0 %v880
        %v2440 = vpop.f32.mrf.mxu0
        %v2441 = vadd.f32 %v1605, %v2440
        %2442 = vmatmul.f32.gmra.mxu0 %v881
        %v2443 = vpop.f32.mrf.mxu0
        %v2444 = vadd.f32 %v1608, %v2443
        %2445 = vmatmul.f32.gmra.mxu0 %v882
        %v2446 = vpop.f32.mrf.mxu0
        %v2447 = vadd.f32 %v1611, %v2446
        %2448 = vmatmul.f32.gmra.mxu0 %v883
        %v2449 = vpop.f32.mrf.mxu0
        %v2450 = vadd.f32 %v1614, %v2449
        %2451 = vmatmul.f32.gmra.mxu0 %v884
        %v2452 = vpop.f32.mrf.mxu0
        %v2453 = vadd.f32 %v1617, %v2452
        %2454 = vmatmul.f32.gmra.mxu0 %v885
        %v2455 = vpop.f32.mrf.mxu0
        %v2456 = vadd.f32 %v1620, %v2455
        %2457 = vmatmul.f32.gmra.mxu0 %v886
        %v2458 = vpop.f32.mrf.mxu0
        %v2459 = vadd.f32 %v1623, %v2458
        %2460 = vdwg.mxu0
        %2461 = vmatpush.msra.mxu0 %v1141
        %2462 = vmatpush.msra.mxu0 %v1137
        %2463 = vmatpush.msra.mxu0 %v1133
        %2464 = vmatpush.msra.mxu0 %v1129
        %2465 = vmatpush.msra.mxu0 %v1125
        %2466 = vmatpush.msra.mxu0 %v1121
        %2467 = vmatpush.msra.mxu0 %v1117
        %2468 = vmatpush.msra.mxu0 %v1113
        %2469 = vmatpush.msra.mxu0 %v1109
        %2470 = vmatpush.msra.mxu0 %v1105
        %2471 = vmatpush.msra.mxu0 %v1101
        %2472 = vmatpush.msra.mxu0 %v1097
        %2473 = vmatpush.msra.mxu0 %v1093
        %2474 = vmatpush.msra.mxu0 %v1089
        %2475 = vmatpush.msra.mxu0 %v1085
        %2476 = vmatpush.msra.mxu0 %v1081
        %2477 = vmatmul.f32.gmra.mxu0 %v823
        %v2478 = vpop.f32.mrf.mxu0
        %v2479 = vadd.f32 %v1643, %v2478
        %2480 = vmatmul.f32.gmra.mxu0 %v824
        %v2481 = vpop.f32.mrf.mxu0
        %v2482 = vadd.f32 %v1646, %v2481
        %2483 = vmatmul.f32.gmra.mxu0 %v825
        %v2484 = vpop.f32.mrf.mxu0
        %v2485 = vadd.f32 %v1649, %v2484
        %2486 = vmatmul.f32.gmra.mxu0 %v826
        %v2487 = vpop.f32.mrf.mxu0
        %v2488 = vadd.f32 %v1652, %v2487
        %2489 = vmatmul.f32.gmra.mxu0 %v827
        %v2490 = vpop.f32.mrf.mxu0
        %v2491 = vadd.f32 %v1655, %v2490
        %2492 = vmatmul.f32.gmra.mxu0 %v828
        %v2493 = vpop.f32.mrf.mxu0
        %v2494 = vadd.f32 %v1658, %v2493
        %2495 = vmatmul.f32.gmra.mxu0 %v829
        %v2496 = vpop.f32.mrf.mxu0
        %v2497 = vadd.f32 %v1661, %v2496
        %2498 = vmatmul.f32.gmra.mxu0 %v830
        %v2499 = vpop.f32.mrf.mxu0
        %v2500 = vadd.f32 %v1664, %v2499
        %2501 = vmatmul.f32.gmra.mxu0 %v831
        %v2502 = vpop.f32.mrf.mxu0
        %v2503 = vadd.f32 %v1667, %v2502
        %2504 = vmatmul.f32.gmra.mxu0 %v832
        %v2505 = vpop.f32.mrf.mxu0
        %v2506 = vadd.f32 %v1670, %v2505
        %2507 = vmatmul.f32.gmra.mxu0 %v833
        %v2508 = vpop.f32.mrf.mxu0
        %v2509 = vadd.f32 %v1673, %v2508
        %2510 = vmatmul.f32.gmra.mxu0 %v834
        %v2511 = vpop.f32.mrf.mxu0
        %v2512 = vadd.f32 %v1676, %v2511
        %2513 = vmatmul.f32.gmra.mxu0 %v835
        %v2514 = vpop.f32.mrf.mxu0
        %v2515 = vadd.f32 %v1679, %v2514
        %2516 = vmatmul.f32.gmra.mxu0 %v836
        %v2517 = vpop.f32.mrf.mxu0
        %v2518 = vadd.f32 %v1682, %v2517
        %2519 = vmatmul.f32.gmra.mxu0 %v837
        %v2520 = vpop.f32.mrf.mxu0
        %v2521 = vadd.f32 %v1685, %v2520
        %2522 = vmatmul.f32.gmra.mxu0 %v838
        %v2523 = vpop.f32.mrf.mxu0
        %v2524 = vadd.f32 %v1688, %v2523
        %2525 = vmatmul.f32.gmra.mxu0 %v839
        %v2526 = vpop.f32.mrf.mxu0
        %v2527 = vadd.f32 %v1691, %v2526
        %2528 = vmatmul.f32.gmra.mxu0 %v840
        %v2529 = vpop.f32.mrf.mxu0
        %v2530 = vadd.f32 %v1694, %v2529
        %2531 = vmatmul.f32.gmra.mxu0 %v841
        %v2532 = vpop.f32.mrf.mxu0
        %v2533 = vadd.f32 %v1697, %v2532
        %2534 = vmatmul.f32.gmra.mxu0 %v842
        %v2535 = vpop.f32.mrf.mxu0
        %v2536 = vadd.f32 %v1700, %v2535
        %2537 = vmatmul.f32.gmra.mxu0 %v843
        %v2538 = vpop.f32.mrf.mxu0
        %v2539 = vadd.f32 %v1703, %v2538
        %2540 = vmatmul.f32.gmra.mxu0 %v844
        %v2541 = vpop.f32.mrf.mxu0
        %v2542 = vadd.f32 %v1706, %v2541
        %2543 = vmatmul.f32.gmra.mxu0 %v845
        %v2544 = vpop.f32.mrf.mxu0
        %v2545 = vadd.f32 %v1709, %v2544
        %2546 = vmatmul.f32.gmra.mxu0 %v846
        %v2547 = vpop.f32.mrf.mxu0
        %v2548 = vadd.f32 %v1712, %v2547
        %2549 = vmatmul.f32.gmra.mxu0 %v847
        %v2550 = vpop.f32.mrf.mxu0
        %v2551 = vadd.f32 %v1715, %v2550
        %2552 = vmatmul.f32.gmra.mxu0 %v848
        %v2553 = vpop.f32.mrf.mxu0
        %v2554 = vadd.f32 %v1718, %v2553
        %2555 = vmatmul.f32.gmra.mxu0 %v849
        %v2556 = vpop.f32.mrf.mxu0
        %v2557 = vadd.f32 %v1721, %v2556
        %2558 = vmatmul.f32.gmra.mxu0 %v850
        %v2559 = vpop.f32.mrf.mxu0
        %v2560 = vadd.f32 %v1724, %v2559
        %2561 = vmatmul.f32.gmra.mxu0 %v851
        %v2562 = vpop.f32.mrf.mxu0
        %v2563 = vadd.f32 %v1727, %v2562
        %2564 = vmatmul.f32.gmra.mxu0 %v852
        %v2565 = vpop.f32.mrf.mxu0
        %v2566 = vadd.f32 %v1730, %v2565
        %2567 = vmatmul.f32.gmra.mxu0 %v853
        %v2568 = vpop.f32.mrf.mxu0
        %v2569 = vadd.f32 %v1733, %v2568
        %2570 = vmatmul.f32.gmra.mxu0 %v854
        %v2571 = vpop.f32.mrf.mxu0
        %v2572 = vadd.f32 %v1736, %v2571
        %2573 = vmatmul.f32.gmra.mxu0 %v855
        %v2574 = vpop.f32.mrf.mxu0
        %v2575 = vadd.f32 %v1739, %v2574
        %2576 = vmatmul.f32.gmra.mxu0 %v856
        %v2577 = vpop.f32.mrf.mxu0
        %v2578 = vadd.f32 %v1742, %v2577
        %2579 = vmatmul.f32.gmra.mxu0 %v857
        %v2580 = vpop.f32.mrf.mxu0
        %v2581 = vadd.f32 %v1745, %v2580
        %2582 = vmatmul.f32.gmra.mxu0 %v858
        %v2583 = vpop.f32.mrf.mxu0
        %v2584 = vadd.f32 %v1748, %v2583
        %2585 = vmatmul.f32.gmra.mxu0 %v859
        %v2586 = vpop.f32.mrf.mxu0
        %v2587 = vadd.f32 %v1751, %v2586
        %2588 = vmatmul.f32.gmra.mxu0 %v860
        %v2589 = vpop.f32.mrf.mxu0
        %v2590 = vadd.f32 %v1754, %v2589
        %2591 = vmatmul.f32.gmra.mxu0 %v861
        %v2592 = vpop.f32.mrf.mxu0
        %v2593 = vadd.f32 %v1757, %v2592
        %2594 = vmatmul.f32.gmra.mxu0 %v862
        %v2595 = vpop.f32.mrf.mxu0
        %v2596 = vadd.f32 %v1760, %v2595
        %2597 = vmatmul.f32.gmra.mxu0 %v863
        %v2598 = vpop.f32.mrf.mxu0
        %v2599 = vadd.f32 %v1763, %v2598
        %2600 = vmatmul.f32.gmra.mxu0 %v864
        %v2601 = vpop.f32.mrf.mxu0
        %v2602 = vadd.f32 %v1766, %v2601
        %2603 = vmatmul.f32.gmra.mxu0 %v865
        %v2604 = vpop.f32.mrf.mxu0
        %v2605 = vadd.f32 %v1769, %v2604
        %2606 = vmatmul.f32.gmra.mxu0 %v866
        %v2607 = vpop.f32.mrf.mxu0
        %v2608 = vadd.f32 %v1772, %v2607
        %2609 = vmatmul.f32.gmra.mxu0 %v867
        %v2610 = vpop.f32.mrf.mxu0
        %v2611 = vadd.f32 %v1775, %v2610
        %2612 = vmatmul.f32.gmra.mxu0 %v868
        %v2613 = vpop.f32.mrf.mxu0
        %v2614 = vadd.f32 %v1778, %v2613
        %2615 = vmatmul.f32.gmra.mxu0 %v869
        %v2616 = vpop.f32.mrf.mxu0
        %v2617 = vadd.f32 %v1781, %v2616
        %2618 = vmatmul.f32.gmra.mxu0 %v870
        %v2619 = vpop.f32.mrf.mxu0
        %v2620 = vadd.f32 %v1784, %v2619
        %2621 = vmatmul.f32.gmra.mxu0 %v871
        %v2622 = vpop.f32.mrf.mxu0
        %v2623 = vadd.f32 %v1787, %v2622
        %2624 = vmatmul.f32.gmra.mxu0 %v872
        %v2625 = vpop.f32.mrf.mxu0
        %v2626 = vadd.f32 %v1790, %v2625
        %2627 = vmatmul.f32.gmra.mxu0 %v873
        %v2628 = vpop.f32.mrf.mxu0
        %v2629 = vadd.f32 %v1793, %v2628
        %2630 = vmatmul.f32.gmra.mxu0 %v874
        %v2631 = vpop.f32.mrf.mxu0
        %v2632 = vadd.f32 %v1796, %v2631
        %2633 = vmatmul.f32.gmra.mxu0 %v875
        %v2634 = vpop.f32.mrf.mxu0
        %v2635 = vadd.f32 %v1799, %v2634
        %2636 = vmatmul.f32.gmra.mxu0 %v876
        %v2637 = vpop.f32.mrf.mxu0
        %v2638 = vadd.f32 %v1802, %v2637
        %2639 = vmatmul.f32.gmra.mxu0 %v877
        %v2640 = vpop.f32.mrf.mxu0
        %v2641 = vadd.f32 %v1805, %v2640
        %2642 = vmatmul.f32.gmra.mxu0 %v878
        %v2643 = vpop.f32.mrf.mxu0
        %v2644 = vadd.f32 %v1808, %v2643
        %2645 = vmatmul.f32.gmra.mxu0 %v879
        %v2646 = vpop.f32.mrf.mxu0
        %v2647 = vadd.f32 %v1811, %v2646
        %2648 = vmatmul.f32.gmra.mxu0 %v880
        %v2649 = vpop.f32.mrf.mxu0
        %v2650 = vadd.f32 %v1814, %v2649
        %2651 = vmatmul.f32.gmra.mxu0 %v881
        %v2652 = vpop.f32.mrf.mxu0
        %v2653 = vadd.f32 %v1817, %v2652
        %2654 = vmatmul.f32.gmra.mxu0 %v882
        %v2655 = vpop.f32.mrf.mxu0
        %v2656 = vadd.f32 %v1820, %v2655
        %2657 = vmatmul.f32.gmra.mxu0 %v883
        %v2658 = vpop.f32.mrf.mxu0
        %v2659 = vadd.f32 %v1823, %v2658
        %2660 = vmatmul.f32.gmra.mxu0 %v884
        %v2661 = vpop.f32.mrf.mxu0
        %v2662 = vadd.f32 %v1826, %v2661
        %2663 = vmatmul.f32.gmra.mxu0 %v885
        %v2664 = vpop.f32.mrf.mxu0
        %v2665 = vadd.f32 %v1829, %v2664
        %2666 = vmatmul.f32.gmra.mxu0 %v886
        %v2667 = vpop.f32.mrf.mxu0
        %v2668 = vadd.f32 %v1832, %v2667
        %2669 = vdwg.mxu0
        %2670 = vmatpush.msra.mxu0 %v1142
        %2671 = vmatpush.msra.mxu0 %v1138
        %2672 = vmatpush.msra.mxu0 %v1134
        %2673 = vmatpush.msra.mxu0 %v1130
        %2674 = vmatpush.msra.mxu0 %v1126
        %2675 = vmatpush.msra.mxu0 %v1122
        %2676 = vmatpush.msra.mxu0 %v1118
        %2677 = vmatpush.msra.mxu0 %v1114
        %2678 = vmatpush.msra.mxu0 %v1110
        %2679 = vmatpush.msra.mxu0 %v1106
        %2680 = vmatpush.msra.mxu0 %v1102
        %2681 = vmatpush.msra.mxu0 %v1098
        %2682 = vmatpush.msra.mxu0 %v1094
        %2683 = vmatpush.msra.mxu0 %v1090
        %2684 = vmatpush.msra.mxu0 %v1086
        %2685 = vmatpush.msra.mxu0 %v1082
        %2686 = vmatmul.f32.gmra.mxu0 %v823
        %v2687 = vpop.f32.mrf.mxu0
        %v2688 = vadd.f32 %v1852, %v2687
        %2689 = vmatmul.f32.gmra.mxu0 %v824
        %v2690 = vpop.f32.mrf.mxu0
        %v2691 = vadd.f32 %v1855, %v2690
        %2692 = vmatmul.f32.gmra.mxu0 %v825
        %v2693 = vpop.f32.mrf.mxu0
        %v2694 = vadd.f32 %v1858, %v2693
        %2695 = vmatmul.f32.gmra.mxu0 %v826
        %v2696 = vpop.f32.mrf.mxu0
        %v2697 = vadd.f32 %v1861, %v2696
        %2698 = vmatmul.f32.gmra.mxu0 %v827
        %v2699 = vpop.f32.mrf.mxu0
        %v2700 = vadd.f32 %v1864, %v2699
        %2701 = vmatmul.f32.gmra.mxu0 %v828
        %v2702 = vpop.f32.mrf.mxu0
        %v2703 = vadd.f32 %v1867, %v2702
        %2704 = vmatmul.f32.gmra.mxu0 %v829
        %v2705 = vpop.f32.mrf.mxu0
        %v2706 = vadd.f32 %v1870, %v2705
        %2707 = vmatmul.f32.gmra.mxu0 %v830
        %v2708 = vpop.f32.mrf.mxu0
        %v2709 = vadd.f32 %v1873, %v2708
        %2710 = vmatmul.f32.gmra.mxu0 %v831
        %v2711 = vpop.f32.mrf.mxu0
        %v2712 = vadd.f32 %v1876, %v2711
        %2713 = vmatmul.f32.gmra.mxu0 %v832
        %v2714 = vpop.f32.mrf.mxu0
        %v2715 = vadd.f32 %v1879, %v2714
        %2716 = vmatmul.f32.gmra.mxu0 %v833
        %v2717 = vpop.f32.mrf.mxu0
        %v2718 = vadd.f32 %v1882, %v2717
        %2719 = vmatmul.f32.gmra.mxu0 %v834
        %v2720 = vpop.f32.mrf.mxu0
        %v2721 = vadd.f32 %v1885, %v2720
        %2722 = vmatmul.f32.gmra.mxu0 %v835
        %v2723 = vpop.f32.mrf.mxu0
        %v2724 = vadd.f32 %v1888, %v2723
        %2725 = vmatmul.f32.gmra.mxu0 %v836
        %v2726 = vpop.f32.mrf.mxu0
        %v2727 = vadd.f32 %v1891, %v2726
        %2728 = vmatmul.f32.gmra.mxu0 %v837
        %v2729 = vpop.f32.mrf.mxu0
        %v2730 = vadd.f32 %v1894, %v2729
        %2731 = vmatmul.f32.gmra.mxu0 %v838
        %v2732 = vpop.f32.mrf.mxu0
        %v2733 = vadd.f32 %v1897, %v2732
        %2734 = vmatmul.f32.gmra.mxu0 %v839
        %v2735 = vpop.f32.mrf.mxu0
        %v2736 = vadd.f32 %v1900, %v2735
        %2737 = vmatmul.f32.gmra.mxu0 %v840
        %v2738 = vpop.f32.mrf.mxu0
        %v2739 = vadd.f32 %v1903, %v2738
        %2740 = vmatmul.f32.gmra.mxu0 %v841
        %v2741 = vpop.f32.mrf.mxu0
        %v2742 = vadd.f32 %v1906, %v2741
        %2743 = vmatmul.f32.gmra.mxu0 %v842
        %v2744 = vpop.f32.mrf.mxu0
        %v2745 = vadd.f32 %v1909, %v2744
        %2746 = vmatmul.f32.gmra.mxu0 %v843
        %v2747 = vpop.f32.mrf.mxu0
        %v2748 = vadd.f32 %v1912, %v2747
        %2749 = vmatmul.f32.gmra.mxu0 %v844
        %v2750 = vpop.f32.mrf.mxu0
        %v2751 = vadd.f32 %v1915, %v2750
        %2752 = vmatmul.f32.gmra.mxu0 %v845
        %v2753 = vpop.f32.mrf.mxu0
        %v2754 = vadd.f32 %v1918, %v2753
        %2755 = vmatmul.f32.gmra.mxu0 %v846
        %v2756 = vpop.f32.mrf.mxu0
        %v2757 = vadd.f32 %v1921, %v2756
        %2758 = vmatmul.f32.gmra.mxu0 %v847
        %v2759 = vpop.f32.mrf.mxu0
        %v2760 = vadd.f32 %v1924, %v2759
        %2761 = vmatmul.f32.gmra.mxu0 %v848
        %v2762 = vpop.f32.mrf.mxu0
        %v2763 = vadd.f32 %v1927, %v2762
        %2764 = vmatmul.f32.gmra.mxu0 %v849
        %v2765 = vpop.f32.mrf.mxu0
        %v2766 = vadd.f32 %v1930, %v2765
        %2767 = vmatmul.f32.gmra.mxu0 %v850
        %v2768 = vpop.f32.mrf.mxu0
        %v2769 = vadd.f32 %v1933, %v2768
        %2770 = vmatmul.f32.gmra.mxu0 %v851
        %v2771 = vpop.f32.mrf.mxu0
        %v2772 = vadd.f32 %v1936, %v2771
        %2773 = vmatmul.f32.gmra.mxu0 %v852
        %v2774 = vpop.f32.mrf.mxu0
        %v2775 = vadd.f32 %v1939, %v2774
        %2776 = vmatmul.f32.gmra.mxu0 %v853
        %v2777 = vpop.f32.mrf.mxu0
        %v2778 = vadd.f32 %v1942, %v2777
        %2779 = vmatmul.f32.gmra.mxu0 %v854
        %v2780 = vpop.f32.mrf.mxu0
        %v2781 = vadd.f32 %v1945, %v2780
        %2782 = vmatmul.f32.gmra.mxu0 %v855
        %v2783 = vpop.f32.mrf.mxu0
        %v2784 = vadd.f32 %v1948, %v2783
        %2785 = vmatmul.f32.gmra.mxu0 %v856
        %v2786 = vpop.f32.mrf.mxu0
        %v2787 = vadd.f32 %v1951, %v2786
        %2788 = vmatmul.f32.gmra.mxu0 %v857
        %v2789 = vpop.f32.mrf.mxu0
        %v2790 = vadd.f32 %v1954, %v2789
        %2791 = vmatmul.f32.gmra.mxu0 %v858
        %v2792 = vpop.f32.mrf.mxu0
        %v2793 = vadd.f32 %v1957, %v2792
        %2794 = vmatmul.f32.gmra.mxu0 %v859
        %v2795 = vpop.f32.mrf.mxu0
        %v2796 = vadd.f32 %v1960, %v2795
        %2797 = vmatmul.f32.gmra.mxu0 %v860
        %v2798 = vpop.f32.mrf.mxu0
        %v2799 = vadd.f32 %v1963, %v2798
        %2800 = vmatmul.f32.gmra.mxu0 %v861
        %v2801 = vpop.f32.mrf.mxu0
        %v2802 = vadd.f32 %v1966, %v2801
        %2803 = vmatmul.f32.gmra.mxu0 %v862
        %v2804 = vpop.f32.mrf.mxu0
        %v2805 = vadd.f32 %v1969, %v2804
        %2806 = vmatmul.f32.gmra.mxu0 %v863
        %v2807 = vpop.f32.mrf.mxu0
        %v2808 = vadd.f32 %v1972, %v2807
        %2809 = vmatmul.f32.gmra.mxu0 %v864
        %v2810 = vpop.f32.mrf.mxu0
        %v2811 = vadd.f32 %v1975, %v2810
        %2812 = vmatmul.f32.gmra.mxu0 %v865
        %v2813 = vpop.f32.mrf.mxu0
        %v2814 = vadd.f32 %v1978, %v2813
        %2815 = vmatmul.f32.gmra.mxu0 %v866
        %v2816 = vpop.f32.mrf.mxu0
        %v2817 = vadd.f32 %v1981, %v2816
        %2818 = vmatmul.f32.gmra.mxu0 %v867
        %v2819 = vpop.f32.mrf.mxu0
        %v2820 = vadd.f32 %v1984, %v2819
        %2821 = vmatmul.f32.gmra.mxu0 %v868
        %v2822 = vpop.f32.mrf.mxu0
        %v2823 = vadd.f32 %v1987, %v2822
        %2824 = vmatmul.f32.gmra.mxu0 %v869
        %v2825 = vpop.f32.mrf.mxu0
        %v2826 = vadd.f32 %v1990, %v2825
        %2827 = vmatmul.f32.gmra.mxu0 %v870
        %v2828 = vpop.f32.mrf.mxu0
        %v2829 = vadd.f32 %v1993, %v2828
        %2830 = vmatmul.f32.gmra.mxu0 %v871
        %v2831 = vpop.f32.mrf.mxu0
        %v2832 = vadd.f32 %v1996, %v2831
        %2833 = vmatmul.f32.gmra.mxu0 %v872
        %v2834 = vpop.f32.mrf.mxu0
        %v2835 = vadd.f32 %v1999, %v2834
        %2836 = vmatmul.f32.gmra.mxu0 %v873
        %v2837 = vpop.f32.mrf.mxu0
        %v2838 = vadd.f32 %v2002, %v2837
        %2839 = vmatmul.f32.gmra.mxu0 %v874
        %v2840 = vpop.f32.mrf.mxu0
        %v2841 = vadd.f32 %v2005, %v2840
        %2842 = vmatmul.f32.gmra.mxu0 %v875
        %v2843 = vpop.f32.mrf.mxu0
        %v2844 = vadd.f32 %v2008, %v2843
        %2845 = vmatmul.f32.gmra.mxu0 %v876
        %v2846 = vpop.f32.mrf.mxu0
        %v2847 = vadd.f32 %v2011, %v2846
        %2848 = vmatmul.f32.gmra.mxu0 %v877
        %v2849 = vpop.f32.mrf.mxu0
        %v2850 = vadd.f32 %v2014, %v2849
        %2851 = vmatmul.f32.gmra.mxu0 %v878
        %v2852 = vpop.f32.mrf.mxu0
        %v2853 = vadd.f32 %v2017, %v2852
        %2854 = vmatmul.f32.gmra.mxu0 %v879
        %v2855 = vpop.f32.mrf.mxu0
        %v2856 = vadd.f32 %v2020, %v2855
        %2857 = vmatmul.f32.gmra.mxu0 %v880
        %v2858 = vpop.f32.mrf.mxu0
        %v2859 = vadd.f32 %v2023, %v2858
        %2860 = vmatmul.f32.gmra.mxu0 %v881
        %v2861 = vpop.f32.mrf.mxu0
        %v2862 = vadd.f32 %v2026, %v2861
        %2863 = vmatmul.f32.gmra.mxu0 %v882
        %v2864 = vpop.f32.mrf.mxu0
        %v2865 = vadd.f32 %v2029, %v2864
        %2866 = vmatmul.f32.gmra.mxu0 %v883
        %v2867 = vpop.f32.mrf.mxu0
        %v2868 = vadd.f32 %v2032, %v2867
        %2869 = vmatmul.f32.gmra.mxu0 %v884
        %v2870 = vpop.f32.mrf.mxu0
        %v2871 = vadd.f32 %v2035, %v2870
        %2872 = vmatmul.f32.gmra.mxu0 %v885
        %v2873 = vpop.f32.mrf.mxu0
        %v2874 = vadd.f32 %v2038, %v2873
        %2875 = vmatmul.f32.gmra.mxu0 %v886
        %v2876 = vpop.f32.mrf.mxu0
        %v2877 = vadd.f32 %v2041, %v2876
        %2878 = vdwg.mxu0
        %v2879 = vld [vmem:[%s8] sm:$0xf]
        %v2881 = vperm.slane %v2879, 0
        %v2882 = vperm.slane %v2879, 1
        %v2883 = vperm.slane %v2879, 2
        %v2884 = vperm.slane %v2879, 3
        %v2889 = vadd.f32 %v2061, %v2881
        %v2890 = vadd.f32 %v2270, %v2882
        %v2891 = vadd.f32 %v2479, %v2883
        %v2892 = vadd.f32 %v2688, %v2884
        %v2893 = vadd.f32 %v2064, %v2881
        %v2894 = vadd.f32 %v2273, %v2882
        %v2895 = vadd.f32 %v2482, %v2883
        %v2896 = vadd.f32 %v2691, %v2884
        %v2897 = vadd.f32 %v2067, %v2881
        %v2898 = vadd.f32 %v2276, %v2882
        %v2899 = vadd.f32 %v2485, %v2883
        %v2900 = vadd.f32 %v2694, %v2884
        %v2901 = vadd.f32 %v2070, %v2881
        %v2902 = vadd.f32 %v2279, %v2882
        %v2903 = vadd.f32 %v2488, %v2883
        %v2904 = vadd.f32 %v2697, %v2884
        %v2905 = vadd.f32 %v2073, %v2881
        %v2906 = vadd.f32 %v2282, %v2882
        %v2907 = vadd.f32 %v2491, %v2883
        %v2908 = vadd.f32 %v2700, %v2884
        %v2909 = vadd.f32 %v2076, %v2881
        %v2910 = vadd.f32 %v2285, %v2882
        %v2911 = vadd.f32 %v2494, %v2883
        %v2912 = vadd.f32 %v2703, %v2884
        %v2913 = vadd.f32 %v2079, %v2881
        %v2914 = vadd.f32 %v2288, %v2882
        %v2915 = vadd.f32 %v2497, %v2883
        %v2916 = vadd.f32 %v2706, %v2884
        %v2917 = vadd.f32 %v2082, %v2881
        %v2918 = vadd.f32 %v2291, %v2882
        %v2919 = vadd.f32 %v2500, %v2883
        %v2920 = vadd.f32 %v2709, %v2884
        %v2921 = vadd.f32 %v2085, %v2881
        %v2922 = vadd.f32 %v2294, %v2882
        %v2923 = vadd.f32 %v2503, %v2883
        %v2924 = vadd.f32 %v2712, %v2884
        %v2925 = vadd.f32 %v2088, %v2881
        %v2926 = vadd.f32 %v2297, %v2882
        %v2927 = vadd.f32 %v2506, %v2883
        %v2928 = vadd.f32 %v2715, %v2884
        %v2929 = vadd.f32 %v2091, %v2881
        %v2930 = vadd.f32 %v2300, %v2882
        %v2931 = vadd.f32 %v2509, %v2883
        %v2932 = vadd.f32 %v2718, %v2884
        %v2933 = vadd.f32 %v2094, %v2881
        %v2934 = vadd.f32 %v2303, %v2882
        %v2935 = vadd.f32 %v2512, %v2883
        %v2936 = vadd.f32 %v2721, %v2884
        %v2937 = vadd.f32 %v2097, %v2881
        %v2938 = vadd.f32 %v2306, %v2882
        %v2939 = vadd.f32 %v2515, %v2883
        %v2940 = vadd.f32 %v2724, %v2884
        %v2941 = vadd.f32 %v2100, %v2881
        %v2942 = vadd.f32 %v2309, %v2882
        %v2943 = vadd.f32 %v2518, %v2883
        %v2944 = vadd.f32 %v2727, %v2884
        %v2945 = vadd.f32 %v2103, %v2881
        %v2946 = vadd.f32 %v2312, %v2882
        %v2947 = vadd.f32 %v2521, %v2883
        %v2948 = vadd.f32 %v2730, %v2884
        %v2949 = vadd.f32 %v2106, %v2881
        %v2950 = vadd.f32 %v2315, %v2882
        %v2951 = vadd.f32 %v2524, %v2883
        %v2952 = vadd.f32 %v2733, %v2884
        %v2953 = vadd.f32 %v2109, %v2881
        %v2954 = vadd.f32 %v2318, %v2882
        %v2955 = vadd.f32 %v2527, %v2883
        %v2956 = vadd.f32 %v2736, %v2884
        %v2957 = vadd.f32 %v2112, %v2881
        %v2958 = vadd.f32 %v2321, %v2882
        %v2959 = vadd.f32 %v2530, %v2883
        %v2960 = vadd.f32 %v2739, %v2884
        %v2961 = vadd.f32 %v2115, %v2881
        %v2962 = vadd.f32 %v2324, %v2882
        %v2963 = vadd.f32 %v2533, %v2883
        %v2964 = vadd.f32 %v2742, %v2884
        %v2965 = vadd.f32 %v2118, %v2881
        %v2966 = vadd.f32 %v2327, %v2882
        %v2967 = vadd.f32 %v2536, %v2883
        %v2968 = vadd.f32 %v2745, %v2884
        %v2969 = vadd.f32 %v2121, %v2881
        %v2970 = vadd.f32 %v2330, %v2882
        %v2971 = vadd.f32 %v2539, %v2883
        %v2972 = vadd.f32 %v2748, %v2884
        %v2973 = vadd.f32 %v2124, %v2881
        %v2974 = vadd.f32 %v2333, %v2882
        %v2975 = vadd.f32 %v2542, %v2883
        %v2976 = vadd.f32 %v2751, %v2884
        %v2977 = vadd.f32 %v2127, %v2881
        %v2978 = vadd.f32 %v2336, %v2882
        %v2979 = vadd.f32 %v2545, %v2883
        %v2980 = vadd.f32 %v2754, %v2884
        %v2981 = vadd.f32 %v2130, %v2881
        %v2982 = vadd.f32 %v2339, %v2882
        %v2983 = vadd.f32 %v2548, %v2883
        %v2984 = vadd.f32 %v2757, %v2884
        %v2985 = vadd.f32 %v2133, %v2881
        %v2986 = vadd.f32 %v2342, %v2882
        %v2987 = vadd.f32 %v2551, %v2883
        %v2988 = vadd.f32 %v2760, %v2884
        %v2989 = vadd.f32 %v2136, %v2881
        %v2990 = vadd.f32 %v2345, %v2882
        %v2991 = vadd.f32 %v2554, %v2883
        %v2992 = vadd.f32 %v2763, %v2884
        %v2993 = vadd.f32 %v2139, %v2881
        %v2994 = vadd.f32 %v2348, %v2882
        %v2995 = vadd.f32 %v2557, %v2883
        %v2996 = vadd.f32 %v2766, %v2884
        %v2997 = vadd.f32 %v2142, %v2881
        %v2998 = vadd.f32 %v2351, %v2882
        %v2999 = vadd.f32 %v2560, %v2883
        %v3000 = vadd.f32 %v2769, %v2884
        %v3001 = vadd.f32 %v2145, %v2881
        %v3002 = vadd.f32 %v2354, %v2882
        %v3003 = vadd.f32 %v2563, %v2883
        %v3004 = vadd.f32 %v2772, %v2884
        %v3005 = vadd.f32 %v2148, %v2881
        %v3006 = vadd.f32 %v2357, %v2882
        %v3007 = vadd.f32 %v2566, %v2883
        %v3008 = vadd.f32 %v2775, %v2884
        %v3009 = vadd.f32 %v2151, %v2881
        %v3010 = vadd.f32 %v2360, %v2882
        %v3011 = vadd.f32 %v2569, %v2883
        %v3012 = vadd.f32 %v2778, %v2884
        %v3013 = vadd.f32 %v2154, %v2881
        %v3014 = vadd.f32 %v2363, %v2882
        %v3015 = vadd.f32 %v2572, %v2883
        %v3016 = vadd.f32 %v2781, %v2884
        %v3017 = vadd.f32 %v2157, %v2881
        %v3018 = vadd.f32 %v2366, %v2882
        %v3019 = vadd.f32 %v2575, %v2883
        %v3020 = vadd.f32 %v2784, %v2884
        %v3021 = vadd.f32 %v2160, %v2881
        %v3022 = vadd.f32 %v2369, %v2882
        %v3023 = vadd.f32 %v2578, %v2883
        %v3024 = vadd.f32 %v2787, %v2884
        %v3025 = vadd.f32 %v2163, %v2881
        %v3026 = vadd.f32 %v2372, %v2882
        %v3027 = vadd.f32 %v2581, %v2883
        %v3028 = vadd.f32 %v2790, %v2884
        %v3029 = vadd.f32 %v2166, %v2881
        %v3030 = vadd.f32 %v2375, %v2882
        %v3031 = vadd.f32 %v2584, %v2883
        %v3032 = vadd.f32 %v2793, %v2884
        %v3033 = vadd.f32 %v2169, %v2881
        %v3034 = vadd.f32 %v2378, %v2882
        %v3035 = vadd.f32 %v2587, %v2883
        %v3036 = vadd.f32 %v2796, %v2884
        %v3037 = vadd.f32 %v2172, %v2881
        %v3038 = vadd.f32 %v2381, %v2882
        %v3039 = vadd.f32 %v2590, %v2883
        %v3040 = vadd.f32 %v2799, %v2884
        %v3041 = vadd.f32 %v2175, %v2881
        %v3042 = vadd.f32 %v2384, %v2882
        %v3043 = vadd.f32 %v2593, %v2883
        %v3044 = vadd.f32 %v2802, %v2884
        %v3045 = vadd.f32 %v2178, %v2881
        %v3046 = vadd.f32 %v2387, %v2882
        %v3047 = vadd.f32 %v2596, %v2883
        %v3048 = vadd.f32 %v2805, %v2884
        %v3049 = vadd.f32 %v2181, %v2881
        %v3050 = vadd.f32 %v2390, %v2882
        %v3051 = vadd.f32 %v2599, %v2883
        %v3052 = vadd.f32 %v2808, %v2884
        %v3053 = vadd.f32 %v2184, %v2881
        %v3054 = vadd.f32 %v2393, %v2882
        %v3055 = vadd.f32 %v2602, %v2883
        %v3056 = vadd.f32 %v2811, %v2884
        %v3057 = vadd.f32 %v2187, %v2881
        %v3058 = vadd.f32 %v2396, %v2882
        %v3059 = vadd.f32 %v2605, %v2883
        %v3060 = vadd.f32 %v2814, %v2884
        %v3061 = vadd.f32 %v2190, %v2881
        %v3062 = vadd.f32 %v2399, %v2882
        %v3063 = vadd.f32 %v2608, %v2883
        %v3064 = vadd.f32 %v2817, %v2884
        %v3065 = vadd.f32 %v2193, %v2881
        %v3066 = vadd.f32 %v2402, %v2882
        %v3067 = vadd.f32 %v2611, %v2883
        %v3068 = vadd.f32 %v2820, %v2884
        %v3069 = vadd.f32 %v2196, %v2881
        %v3070 = vadd.f32 %v2405, %v2882
        %v3071 = vadd.f32 %v2614, %v2883
        %v3072 = vadd.f32 %v2823, %v2884
        %v3073 = vadd.f32 %v2199, %v2881
        %v3074 = vadd.f32 %v2408, %v2882
        %v3075 = vadd.f32 %v2617, %v2883
        %v3076 = vadd.f32 %v2826, %v2884
        %v3077 = vadd.f32 %v2202, %v2881
        %v3078 = vadd.f32 %v2411, %v2882
        %v3079 = vadd.f32 %v2620, %v2883
        %v3080 = vadd.f32 %v2829, %v2884
        %v3081 = vadd.f32 %v2205, %v2881
        %v3082 = vadd.f32 %v2414, %v2882
        %v3083 = vadd.f32 %v2623, %v2883
        %v3084 = vadd.f32 %v2832, %v2884
        %v3085 = vadd.f32 %v2208, %v2881
        %v3086 = vadd.f32 %v2417, %v2882
        %v3087 = vadd.f32 %v2626, %v2883
        %v3088 = vadd.f32 %v2835, %v2884
        %v3089 = vadd.f32 %v2211, %v2881
        %v3090 = vadd.f32 %v2420, %v2882
        %v3091 = vadd.f32 %v2629, %v2883
        %v3092 = vadd.f32 %v2838, %v2884
        %v3093 = vadd.f32 %v2214, %v2881
        %v3094 = vadd.f32 %v2423, %v2882
        %v3095 = vadd.f32 %v2632, %v2883
        %v3096 = vadd.f32 %v2841, %v2884
        %v3097 = vadd.f32 %v2217, %v2881
        %v3098 = vadd.f32 %v2426, %v2882
        %v3099 = vadd.f32 %v2635, %v2883
        %v3100 = vadd.f32 %v2844, %v2884
        %v3101 = vadd.f32 %v2220, %v2881
        %v3102 = vadd.f32 %v2429, %v2882
        %v3103 = vadd.f32 %v2638, %v2883
        %v3104 = vadd.f32 %v2847, %v2884
        %v3105 = vadd.f32 %v2223, %v2881
        %v3106 = vadd.f32 %v2432, %v2882
        %v3107 = vadd.f32 %v2641, %v2883
        %v3108 = vadd.f32 %v2850, %v2884
        %v3109 = vadd.f32 %v2226, %v2881
        %v3110 = vadd.f32 %v2435, %v2882
        %v3111 = vadd.f32 %v2644, %v2883
        %v3112 = vadd.f32 %v2853, %v2884
        %v3113 = vadd.f32 %v2229, %v2881
        %v3114 = vadd.f32 %v2438, %v2882
        %v3115 = vadd.f32 %v2647, %v2883
        %v3116 = vadd.f32 %v2856, %v2884
        %v3117 = vadd.f32 %v2232, %v2881
        %v3118 = vadd.f32 %v2441, %v2882
        %v3119 = vadd.f32 %v2650, %v2883
        %v3120 = vadd.f32 %v2859, %v2884
        %v3121 = vadd.f32 %v2235, %v2881
        %v3122 = vadd.f32 %v2444, %v2882
        %v3123 = vadd.f32 %v2653, %v2883
        %v3124 = vadd.f32 %v2862, %v2884
        %v3125 = vadd.f32 %v2238, %v2881
        %v3126 = vadd.f32 %v2447, %v2882
        %v3127 = vadd.f32 %v2656, %v2883
        %v3128 = vadd.f32 %v2865, %v2884
        %v3129 = vadd.f32 %v2241, %v2881
        %v3130 = vadd.f32 %v2450, %v2882
        %v3131 = vadd.f32 %v2659, %v2883
        %v3132 = vadd.f32 %v2868, %v2884
        %v3133 = vadd.f32 %v2244, %v2881
        %v3134 = vadd.f32 %v2453, %v2882
        %v3135 = vadd.f32 %v2662, %v2883
        %v3136 = vadd.f32 %v2871, %v2884
        %v3137 = vadd.f32 %v2247, %v2881
        %v3138 = vadd.f32 %v2456, %v2882
        %v3139 = vadd.f32 %v2665, %v2883
        %v3140 = vadd.f32 %v2874, %v2884
        %v3141 = vadd.f32 %v2250, %v2881
        %v3142 = vadd.f32 %v2459, %v2882
        %v3143 = vadd.f32 %v2668, %v2883
        %v3144 = vadd.f32 %v2877, %v2884
        %v3145 = vtanh.pop %v2889
        %v3146 = vtanh.pop %v2893
        %v3147 = vtanh.pop %v2897
        %v3148 = vtanh.pop %v2901
        %v3149 = vtanh.pop %v2905
        %v3150 = vtanh.pop %v2909
        %v3151 = vtanh.pop %v2913
        %v3152 = vtanh.pop %v2917
        %v3153 = vtanh.pop %v2921
        %v3154 = vtanh.pop %v2925
        %v3155 = vtanh.pop %v2929
        %v3156 = vtanh.pop %v2933
        %v3157 = vtanh.pop %v2937
        %v3158 = vtanh.pop %v2941
        %v3159 = vtanh.pop %v2945
        %v3160 = vtanh.pop %v2949
        %v3161 = vtanh.pop %v2953
        %v3162 = vtanh.pop %v2957
        %v3163 = vtanh.pop %v2961
        %v3164 = vtanh.pop %v2965
        %v3165 = vtanh.pop %v2969
        %v3166 = vtanh.pop %v2973
        %v3167 = vtanh.pop %v2977
        %v3168 = vtanh.pop %v2981
        %v3169 = vtanh.pop %v2985
        %v3170 = vtanh.pop %v2989
        %v3171 = vtanh.pop %v2993
        %v3172 = vtanh.pop %v2997
        %v3173 = vtanh.pop %v3001
        %v3174 = vtanh.pop %v3005
        %v3175 = vtanh.pop %v3009
        %v3176 = vtanh.pop %v3013
        %v3177 = vtanh.pop %v3017
        %v3178 = vtanh.pop %v3021
        %v3179 = vtanh.pop %v3025
        %v3180 = vtanh.pop %v3029
        %v3181 = vtanh.pop %v3033
        %v3182 = vtanh.pop %v3037
        %v3183 = vtanh.pop %v3041
        %v3184 = vtanh.pop %v3045
        %v3185 = vtanh.pop %v3049
        %v3186 = vtanh.pop %v3053
        %v3187 = vtanh.pop %v3057
        %v3188 = vtanh.pop %v3061
        %v3189 = vtanh.pop %v3065
        %v3190 = vtanh.pop %v3069
        %v3191 = vtanh.pop %v3073
        %v3192 = vtanh.pop %v3077
        %v3193 = vtanh.pop %v3081
        %v3194 = vtanh.pop %v3085
        %v3195 = vtanh.pop %v3089
        %v3196 = vtanh.pop %v3093
        %v3197 = vtanh.pop %v3097
        %v3198 = vtanh.pop %v3101
        %v3199 = vtanh.pop %v3105
        %v3200 = vtanh.pop %v3109
        %v3201 = vtanh.pop %v3113
        %v3202 = vtanh.pop %v3117
        %v3203 = vtanh.pop %v3121
        %v3204 = vtanh.pop %v3125
        %v3205 = vtanh.pop %v3129
        %v3206 = vtanh.pop %v3133
        %v3207 = vtanh.pop %v3137
        %v3208 = vtanh.pop %v3141
        %v3209 = vxor.u32 %v2890, 2147483648
        %v3210 = vxor.u32 %v2891, 2147483648
        %v3211 = vxor.u32 %v2892, 2147483648
        %v3212 = vxor.u32 %v2894, 2147483648
        %v3213 = vxor.u32 %v2895, 2147483648
        %v3214 = vxor.u32 %v2896, 2147483648
        %v3215 = vxor.u32 %v2898, 2147483648
        %v3216 = vxor.u32 %v2899, 2147483648
        %v3217 = vxor.u32 %v2900, 2147483648
        %v3218 = vxor.u32 %v2902, 2147483648
        %v3219 = vxor.u32 %v2903, 2147483648
        %v3220 = vxor.u32 %v2904, 2147483648
        %v3221 = vxor.u32 %v2906, 2147483648
        %v3222 = vxor.u32 %v2907, 2147483648
        %v3223 = vxor.u32 %v2908, 2147483648
        %v3224 = vxor.u32 %v2910, 2147483648
        %v3225 = vxor.u32 %v2911, 2147483648
        %v3226 = vxor.u32 %v2912, 2147483648
        %v3227 = vxor.u32 %v2914, 2147483648
        %v3228 = vxor.u32 %v2915, 2147483648
        %v3229 = vxor.u32 %v2916, 2147483648
        %v3230 = vxor.u32 %v2918, 2147483648
        %v3231 = vxor.u32 %v2919, 2147483648
        %v3232 = vxor.u32 %v2920, 2147483648
        %v3233 = vxor.u32 %v2922, 2147483648
        %v3234 = vxor.u32 %v2923, 2147483648
        %v3235 = vxor.u32 %v2924, 2147483648
        %v3236 = vxor.u32 %v2926, 2147483648
        %v3237 = vxor.u32 %v2927, 2147483648
        %v3238 = vxor.u32 %v2928, 2147483648
        %v3239 = vxor.u32 %v2930, 2147483648
        %v3240 = vxor.u32 %v2931, 2147483648
        %v3241 = vxor.u32 %v2932, 2147483648
        %v3242 = vxor.u32 %v2934, 2147483648
        %v3243 = vxor.u32 %v2935, 2147483648
        %v3244 = vxor.u32 %v2936, 2147483648
        %v3245 = vxor.u32 %v2938, 2147483648
        %v3246 = vxor.u32 %v2939, 2147483648
        %v3247 = vxor.u32 %v2940, 2147483648
        %v3248 = vxor.u32 %v2942, 2147483648
        %v3249 = vxor.u32 %v2943, 2147483648
        %v3250 = vxor.u32 %v2944, 2147483648
        %v3251 = vxor.u32 %v2946, 2147483648
        %v3252 = vxor.u32 %v2947, 2147483648
        %v3253 = vxor.u32 %v2948, 2147483648
        %v3254 = vxor.u32 %v2950, 2147483648
        %v3255 = vxor.u32 %v2951, 2147483648
        %v3256 = vxor.u32 %v2952, 2147483648
        %v3257 = vxor.u32 %v2954, 2147483648
        %v3258 = vxor.u32 %v2955, 2147483648
        %v3259 = vxor.u32 %v2956, 2147483648
        %v3260 = vxor.u32 %v2958, 2147483648
        %v3261 = vxor.u32 %v2959, 2147483648
        %v3262 = vxor.u32 %v2960, 2147483648
        %v3263 = vxor.u32 %v2962, 2147483648
        %v3264 = vxor.u32 %v2963, 2147483648
        %v3265 = vxor.u32 %v2964, 2147483648
        %v3266 = vxor.u32 %v2966, 2147483648
        %v3267 = vxor.u32 %v2967, 2147483648
        %v3268 = vxor.u32 %v2968, 2147483648
        %v3269 = vxor.u32 %v2970, 2147483648
        %v3270 = vxor.u32 %v2971, 2147483648
        %v3271 = vxor.u32 %v2972, 2147483648
        %v3272 = vxor.u32 %v2974, 2147483648
        %v3273 = vxor.u32 %v2975, 2147483648
        %v3274 = vxor.u32 %v2976, 2147483648
        %v3275 = vxor.u32 %v2978, 2147483648
        %v3276 = vxor.u32 %v2979, 2147483648
        %v3277 = vxor.u32 %v2980, 2147483648
        %v3278 = vxor.u32 %v2982, 2147483648
        %v3279 = vxor.u32 %v2983, 2147483648
        %v3280 = vxor.u32 %v2984, 2147483648
        %v3281 = vxor.u32 %v2986, 2147483648
        %v3282 = vxor.u32 %v2987, 2147483648
        %v3283 = vxor.u32 %v2988, 2147483648
        %v3284 = vxor.u32 %v2990, 2147483648
        %v3285 = vxor.u32 %v2991, 2147483648
        %v3286 = vxor.u32 %v2992, 2147483648
        %v3287 = vxor.u32 %v2994, 2147483648
        %v3288 = vxor.u32 %v2995, 2147483648
        %v3289 = vxor.u32 %v2996, 2147483648
        %v3290 = vxor.u32 %v2998, 2147483648
        %v3291 = vxor.u32 %v2999, 2147483648
        %v3292 = vxor.u32 %v3000, 2147483648
        %v3293 = vxor.u32 %v3002, 2147483648
        %v3294 = vxor.u32 %v3003, 2147483648
        %v3295 = vxor.u32 %v3004, 2147483648
        %v3296 = vxor.u32 %v3006, 2147483648
        %v3297 = vxor.u32 %v3007, 2147483648
        %v3298 = vxor.u32 %v3008, 2147483648
        %v3299 = vxor.u32 %v3010, 2147483648
        %v3300 = vxor.u32 %v3011, 2147483648
        %v3301 = vxor.u32 %v3012, 2147483648
        %v3302 = vxor.u32 %v3014, 2147483648
        %v3303 = vxor.u32 %v3015, 2147483648
        %v3304 = vxor.u32 %v3016, 2147483648
        %v3305 = vxor.u32 %v3018, 2147483648
        %v3306 = vxor.u32 %v3019, 2147483648
        %v3307 = vxor.u32 %v3020, 2147483648
        %v3308 = vxor.u32 %v3022, 2147483648
        %v3309 = vxor.u32 %v3023, 2147483648
        %v3310 = vxor.u32 %v3024, 2147483648
        %v3311 = vxor.u32 %v3026, 2147483648
        %v3312 = vxor.u32 %v3027, 2147483648
        %v3313 = vxor.u32 %v3028, 2147483648
        %v3314 = vxor.u32 %v3030, 2147483648
        %v3315 = vxor.u32 %v3031, 2147483648
        %v3316 = vxor.u32 %v3032, 2147483648
        %v3317 = vxor.u32 %v3034, 2147483648
        %v3318 = vxor.u32 %v3035, 2147483648
        %v3319 = vxor.u32 %v3036, 2147483648
        %v3320 = vxor.u32 %v3038, 2147483648
        %v3321 = vxor.u32 %v3039, 2147483648
        %v3322 = vxor.u32 %v3040, 2147483648
        %v3323 = vxor.u32 %v3042, 2147483648
        %v3324 = vxor.u32 %v3043, 2147483648
        %v3325 = vxor.u32 %v3044, 2147483648
        %v3326 = vxor.u32 %v3046, 2147483648
        %v3327 = vxor.u32 %v3047, 2147483648
        %v3328 = vxor.u32 %v3048, 2147483648
        %v3329 = vxor.u32 %v3050, 2147483648
        %v3330 = vxor.u32 %v3051, 2147483648
        %v3331 = vxor.u32 %v3052, 2147483648
        %v3332 = vxor.u32 %v3054, 2147483648
        %v3333 = vxor.u32 %v3055, 2147483648
        %v3334 = vxor.u32 %v3056, 2147483648
        %v3335 = vxor.u32 %v3058, 2147483648
        %v3336 = vxor.u32 %v3059, 2147483648
        %v3337 = vxor.u32 %v3060, 2147483648
        %v3338 = vxor.u32 %v3062, 2147483648
        %v3339 = vxor.u32 %v3063, 2147483648
        %v3340 = vxor.u32 %v3064, 2147483648
        %v3341 = vxor.u32 %v3066, 2147483648
        %v3342 = vxor.u32 %v3067, 2147483648
        %v3343 = vxor.u32 %v3068, 2147483648
        %v3344 = vxor.u32 %v3070, 2147483648
        %v3345 = vxor.u32 %v3071, 2147483648
        %v3346 = vxor.u32 %v3072, 2147483648
        %v3347 = vxor.u32 %v3074, 2147483648
        %v3348 = vxor.u32 %v3075, 2147483648
        %v3349 = vxor.u32 %v3076, 2147483648
        %v3350 = vxor.u32 %v3078, 2147483648
        %v3351 = vxor.u32 %v3079, 2147483648
        %v3352 = vxor.u32 %v3080, 2147483648
        %v3353 = vxor.u32 %v3082, 2147483648
        %v3354 = vxor.u32 %v3083, 2147483648
        %v3355 = vxor.u32 %v3084, 2147483648
        %v3356 = vxor.u32 %v3086, 2147483648
        %v3357 = vxor.u32 %v3087, 2147483648
        %v3358 = vxor.u32 %v3088, 2147483648
        %v3359 = vxor.u32 %v3090, 2147483648
        %v3360 = vxor.u32 %v3091, 2147483648
        %v3361 = vxor.u32 %v3092, 2147483648
        %v3362 = vxor.u32 %v3094, 2147483648
        %v3363 = vxor.u32 %v3095, 2147483648
        %v3364 = vxor.u32 %v3096, 2147483648
        %v3365 = vxor.u32 %v3098, 2147483648
        %v3366 = vxor.u32 %v3099, 2147483648
        %v3367 = vxor.u32 %v3100, 2147483648
        %v3368 = vxor.u32 %v3102, 2147483648
        %v3369 = vxor.u32 %v3103, 2147483648
        %v3370 = vxor.u32 %v3104, 2147483648
        %v3371 = vxor.u32 %v3106, 2147483648
        %v3372 = vxor.u32 %v3107, 2147483648
        %v3373 = vxor.u32 %v3108, 2147483648
        %v3374 = vxor.u32 %v3110, 2147483648
        %v3375 = vxor.u32 %v3111, 2147483648
        %v3376 = vxor.u32 %v3112, 2147483648
        %v3377 = vxor.u32 %v3114, 2147483648
        %v3378 = vxor.u32 %v3115, 2147483648
        %v3379 = vxor.u32 %v3116, 2147483648
        %v3380 = vxor.u32 %v3118, 2147483648
        %v3381 = vxor.u32 %v3119, 2147483648
        %v3382 = vxor.u32 %v3120, 2147483648
        %v3383 = vxor.u32 %v3122, 2147483648
        %v3384 = vxor.u32 %v3123, 2147483648
        %v3385 = vxor.u32 %v3124, 2147483648
        %v3386 = vxor.u32 %v3126, 2147483648
        %v3387 = vxor.u32 %v3127, 2147483648
        %v3388 = vxor.u32 %v3128, 2147483648
        %v3389 = vxor.u32 %v3130, 2147483648
        %v3390 = vxor.u32 %v3131, 2147483648
        %v3391 = vxor.u32 %v3132, 2147483648
        %v3392 = vxor.u32 %v3134, 2147483648
        %v3393 = vxor.u32 %v3135, 2147483648
        %v3394 = vxor.u32 %v3136, 2147483648
        %v3395 = vxor.u32 %v3138, 2147483648
        %v3396 = vxor.u32 %v3139, 2147483648
        %v3397 = vxor.u32 %v3140, 2147483648
        %v3398 = vxor.u32 %v3142, 2147483648
        %v3399 = vxor.u32 %v3143, 2147483648
        %v3400 = vxor.u32 %v3144, 2147483648
        %v3401 = vmul.f32 %v3209, 1.442695
        %v3402 = vpow.pop %v3401
        %v3403 = vmul.f32 %v3210, 1.442695
        %v3404 = vpow.pop %v3403
        %v3405 = vmul.f32 %v3211, 1.442695
        %v3406 = vpow.pop %v3405
        %v3407 = vmul.f32 %v3212, 1.442695
        %v3408 = vpow.pop %v3407
        %v3409 = vmul.f32 %v3213, 1.442695
        %v3410 = vpow.pop %v3409
        %v3411 = vmul.f32 %v3214, 1.442695
        %v3412 = vpow.pop %v3411
        %v3413 = vmul.f32 %v3215, 1.442695
        %v3414 = vpow.pop %v3413
        %v3415 = vmul.f32 %v3216, 1.442695
        %v3416 = vpow.pop %v3415
        %v3417 = vmul.f32 %v3217, 1.442695
        %v3418 = vpow.pop %v3417
        %v3419 = vmul.f32 %v3218, 1.442695
        %v3420 = vpow.pop %v3419
        %v3421 = vmul.f32 %v3219, 1.442695
        %v3422 = vpow.pop %v3421
        %v3423 = vmul.f32 %v3220, 1.442695
        %v3424 = vpow.pop %v3423
        %v3425 = vmul.f32 %v3221, 1.442695
        %v3426 = vpow.pop %v3425
        %v3427 = vmul.f32 %v3222, 1.442695
        %v3428 = vpow.pop %v3427
        %v3429 = vmul.f32 %v3223, 1.442695
        %v3430 = vpow.pop %v3429
        %v3431 = vmul.f32 %v3224, 1.442695
        %v3432 = vpow.pop %v3431
        %v3433 = vmul.f32 %v3225, 1.442695
        %v3434 = vpow.pop %v3433
        %v3435 = vmul.f32 %v3226, 1.442695
        %v3436 = vpow.pop %v3435
        %v3437 = vmul.f32 %v3227, 1.442695
        %v3438 = vpow.pop %v3437
        %v3439 = vmul.f32 %v3228, 1.442695
        %v3440 = vpow.pop %v3439
        %v3441 = vmul.f32 %v3229, 1.442695
        %v3442 = vpow.pop %v3441
        %v3443 = vmul.f32 %v3230, 1.442695
        %v3444 = vpow.pop %v3443
        %v3445 = vmul.f32 %v3231, 1.442695
        %v3446 = vpow.pop %v3445
        %v3447 = vmul.f32 %v3232, 1.442695
        %v3448 = vpow.pop %v3447
        %v3449 = vmul.f32 %v3233, 1.442695
        %v3450 = vpow.pop %v3449
        %v3451 = vmul.f32 %v3234, 1.442695
        %v3452 = vpow.pop %v3451
        %v3453 = vmul.f32 %v3235, 1.442695
        %v3454 = vpow.pop %v3453
        %v3455 = vmul.f32 %v3236, 1.442695
        %v3456 = vpow.pop %v3455
        %v3457 = vmul.f32 %v3237, 1.442695
        %v3458 = vpow.pop %v3457
        %v3459 = vmul.f32 %v3238, 1.442695
        %v3460 = vpow.pop %v3459
        %v3461 = vmul.f32 %v3239, 1.442695
        %v3462 = vpow.pop %v3461
        %v3463 = vmul.f32 %v3240, 1.442695
        %v3464 = vpow.pop %v3463
        %v3465 = vmul.f32 %v3241, 1.442695
        %v3466 = vpow.pop %v3465
        %v3467 = vmul.f32 %v3242, 1.442695
        %v3468 = vpow.pop %v3467
        %v3469 = vmul.f32 %v3243, 1.442695
        %v3470 = vpow.pop %v3469
        %v3471 = vmul.f32 %v3244, 1.442695
        %v3472 = vpow.pop %v3471
        %v3473 = vmul.f32 %v3245, 1.442695
        %v3474 = vpow.pop %v3473
        %v3475 = vmul.f32 %v3246, 1.442695
        %v3476 = vpow.pop %v3475
        %v3477 = vmul.f32 %v3247, 1.442695
        %v3478 = vpow.pop %v3477
        %v3479 = vmul.f32 %v3248, 1.442695
        %v3480 = vpow.pop %v3479
        %v3481 = vmul.f32 %v3249, 1.442695
        %v3482 = vpow.pop %v3481
        %v3483 = vmul.f32 %v3250, 1.442695
        %v3484 = vpow.pop %v3483
        %v3485 = vmul.f32 %v3251, 1.442695
        %v3486 = vpow.pop %v3485
        %v3487 = vmul.f32 %v3252, 1.442695
        %v3488 = vpow.pop %v3487
        %v3489 = vmul.f32 %v3253, 1.442695
        %v3490 = vpow.pop %v3489
        %v3491 = vmul.f32 %v3254, 1.442695
        %v3492 = vpow.pop %v3491
        %v3493 = vmul.f32 %v3255, 1.442695
        %v3494 = vpow.pop %v3493
        %v3495 = vmul.f32 %v3256, 1.442695
        %v3496 = vpow.pop %v3495
        %v3497 = vmul.f32 %v3257, 1.442695
        %v3498 = vpow.pop %v3497
        %v3499 = vmul.f32 %v3258, 1.442695
        %v3500 = vpow.pop %v3499
        %v3501 = vmul.f32 %v3259, 1.442695
        %v3502 = vpow.pop %v3501
        %v3503 = vmul.f32 %v3260, 1.442695
        %v3504 = vpow.pop %v3503
        %v3505 = vmul.f32 %v3261, 1.442695
        %v3506 = vpow.pop %v3505
        %v3507 = vmul.f32 %v3262, 1.442695
        %v3508 = vpow.pop %v3507
        %v3509 = vmul.f32 %v3263, 1.442695
        %v3510 = vpow.pop %v3509
        %v3511 = vmul.f32 %v3264, 1.442695
        %v3512 = vpow.pop %v3511
        %v3513 = vmul.f32 %v3265, 1.442695
        %v3514 = vpow.pop %v3513
        %v3515 = vmul.f32 %v3266, 1.442695
        %v3516 = vpow.pop %v3515
        %v3517 = vmul.f32 %v3267, 1.442695
        %v3518 = vpow.pop %v3517
        %v3519 = vmul.f32 %v3268, 1.442695
        %v3520 = vpow.pop %v3519
        %v3521 = vmul.f32 %v3269, 1.442695
        %v3522 = vpow.pop %v3521
        %v3523 = vmul.f32 %v3270, 1.442695
        %v3524 = vpow.pop %v3523
        %v3525 = vmul.f32 %v3271, 1.442695
        %v3526 = vpow.pop %v3525
        %v3527 = vmul.f32 %v3272, 1.442695
        %v3528 = vpow.pop %v3527
        %v3529 = vmul.f32 %v3273, 1.442695
        %v3530 = vpow.pop %v3529
        %v3531 = vmul.f32 %v3274, 1.442695
        %v3532 = vpow.pop %v3531
        %v3533 = vmul.f32 %v3275, 1.442695
        %v3534 = vpow.pop %v3533
        %v3535 = vmul.f32 %v3276, 1.442695
        %v3536 = vpow.pop %v3535
        %v3537 = vmul.f32 %v3277, 1.442695
        %v3538 = vpow.pop %v3537
        %v3539 = vmul.f32 %v3278, 1.442695
        %v3540 = vpow.pop %v3539
        %v3541 = vmul.f32 %v3279, 1.442695
        %v3542 = vpow.pop %v3541
        %v3543 = vmul.f32 %v3280, 1.442695
        %v3544 = vpow.pop %v3543
        %v3545 = vmul.f32 %v3281, 1.442695
        %v3546 = vpow.pop %v3545
        %v3547 = vmul.f32 %v3282, 1.442695
        %v3548 = vpow.pop %v3547
        %v3549 = vmul.f32 %v3283, 1.442695
        %v3550 = vpow.pop %v3549
        %v3551 = vmul.f32 %v3284, 1.442695
        %v3552 = vpow.pop %v3551
        %v3553 = vmul.f32 %v3285, 1.442695
        %v3554 = vpow.pop %v3553
        %v3555 = vmul.f32 %v3286, 1.442695
        %v3556 = vpow.pop %v3555
        %v3557 = vmul.f32 %v3287, 1.442695
        %v3558 = vpow.pop %v3557
        %v3559 = vmul.f32 %v3288, 1.442695
        %v3560 = vpow.pop %v3559
        %v3561 = vmul.f32 %v3289, 1.442695
        %v3562 = vpow.pop %v3561
        %v3563 = vmul.f32 %v3290, 1.442695
        %v3564 = vpow.pop %v3563
        %v3565 = vmul.f32 %v3291, 1.442695
        %v3566 = vpow.pop %v3565
        %v3567 = vmul.f32 %v3292, 1.442695
        %v3568 = vpow.pop %v3567
        %v3569 = vmul.f32 %v3293, 1.442695
        %v3570 = vpow.pop %v3569
        %v3571 = vmul.f32 %v3294, 1.442695
        %v3572 = vpow.pop %v3571
        %v3573 = vmul.f32 %v3295, 1.442695
        %v3574 = vpow.pop %v3573
        %v3575 = vmul.f32 %v3296, 1.442695
        %v3576 = vpow.pop %v3575
        %v3577 = vmul.f32 %v3297, 1.442695
        %v3578 = vpow.pop %v3577
        %v3579 = vmul.f32 %v3298, 1.442695
        %v3580 = vpow.pop %v3579
        %v3581 = vmul.f32 %v3299, 1.442695
        %v3582 = vpow.pop %v3581
        %v3583 = vmul.f32 %v3300, 1.442695
        %v3584 = vpow.pop %v3583
        %v3585 = vmul.f32 %v3301, 1.442695
        %v3586 = vpow.pop %v3585
        %v3587 = vmul.f32 %v3302, 1.442695
        %v3588 = vpow.pop %v3587
        %v3589 = vmul.f32 %v3303, 1.442695
        %v3590 = vpow.pop %v3589
        %v3591 = vmul.f32 %v3304, 1.442695
        %v3592 = vpow.pop %v3591
        %v3593 = vmul.f32 %v3305, 1.442695
        %v3594 = vpow.pop %v3593
        %v3595 = vmul.f32 %v3306, 1.442695
        %v3596 = vpow.pop %v3595
        %v3597 = vmul.f32 %v3307, 1.442695
        %v3598 = vpow.pop %v3597
        %v3599 = vmul.f32 %v3308, 1.442695
        %v3600 = vpow.pop %v3599
        %v3601 = vmul.f32 %v3309, 1.442695
        %v3602 = vpow.pop %v3601
        %v3603 = vmul.f32 %v3310, 1.442695
        %v3604 = vpow.pop %v3603
        %v3605 = vmul.f32 %v3311, 1.442695
        %v3606 = vpow.pop %v3605
        %v3607 = vmul.f32 %v3312, 1.442695
        %v3608 = vpow.pop %v3607
        %v3609 = vmul.f32 %v3313, 1.442695
        %v3610 = vpow.pop %v3609
        %v3611 = vmul.f32 %v3314, 1.442695
        %v3612 = vpow.pop %v3611
        %v3613 = vmul.f32 %v3315, 1.442695
        %v3614 = vpow.pop %v3613
        %v3615 = vmul.f32 %v3316, 1.442695
        %v3616 = vpow.pop %v3615
        %v3617 = vmul.f32 %v3317, 1.442695
        %v3618 = vpow.pop %v3617
        %v3619 = vmul.f32 %v3318, 1.442695
        %v3620 = vpow.pop %v3619
        %v3621 = vmul.f32 %v3319, 1.442695
        %v3622 = vpow.pop %v3621
        %v3623 = vmul.f32 %v3320, 1.442695
        %v3624 = vpow.pop %v3623
        %v3625 = vmul.f32 %v3321, 1.442695
        %v3626 = vpow.pop %v3625
        %v3627 = vmul.f32 %v3322, 1.442695
        %v3628 = vpow.pop %v3627
        %v3629 = vmul.f32 %v3323, 1.442695
        %v3630 = vpow.pop %v3629
        %v3631 = vmul.f32 %v3324, 1.442695
        %v3632 = vpow.pop %v3631
        %v3633 = vmul.f32 %v3325, 1.442695
        %v3634 = vpow.pop %v3633
        %v3635 = vmul.f32 %v3326, 1.442695
        %v3636 = vpow.pop %v3635
        %v3637 = vmul.f32 %v3327, 1.442695
        %v3638 = vpow.pop %v3637
        %v3639 = vmul.f32 %v3328, 1.442695
        %v3640 = vpow.pop %v3639
        %v3641 = vmul.f32 %v3329, 1.442695
        %v3642 = vpow.pop %v3641
        %v3643 = vmul.f32 %v3330, 1.442695
        %v3644 = vpow.pop %v3643
        %v3645 = vmul.f32 %v3331, 1.442695
        %v3646 = vpow.pop %v3645
        %v3647 = vmul.f32 %v3332, 1.442695
        %v3648 = vpow.pop %v3647
        %v3649 = vmul.f32 %v3333, 1.442695
        %v3650 = vpow.pop %v3649
        %v3651 = vmul.f32 %v3334, 1.442695
        %v3652 = vpow.pop %v3651
        %v3653 = vmul.f32 %v3335, 1.442695
        %v3654 = vpow.pop %v3653
        %v3655 = vmul.f32 %v3336, 1.442695
        %v3656 = vpow.pop %v3655
        %v3657 = vmul.f32 %v3337, 1.442695
        %v3658 = vpow.pop %v3657
        %v3659 = vmul.f32 %v3338, 1.442695
        %v3660 = vpow.pop %v3659
        %v3661 = vmul.f32 %v3339, 1.442695
        %v3662 = vpow.pop %v3661
        %v3663 = vmul.f32 %v3340, 1.442695
        %v3664 = vpow.pop %v3663
        %v3665 = vmul.f32 %v3341, 1.442695
        %v3666 = vpow.pop %v3665
        %v3667 = vmul.f32 %v3342, 1.442695
        %v3668 = vpow.pop %v3667
        %v3669 = vmul.f32 %v3343, 1.442695
        %v3670 = vpow.pop %v3669
        %v3671 = vmul.f32 %v3344, 1.442695
        %v3672 = vpow.pop %v3671
        %v3673 = vmul.f32 %v3345, 1.442695
        %v3674 = vpow.pop %v3673
        %v3675 = vmul.f32 %v3346, 1.442695
        %v3676 = vpow.pop %v3675
        %v3677 = vmul.f32 %v3347, 1.442695
        %v3678 = vpow.pop %v3677
        %v3679 = vmul.f32 %v3348, 1.442695
        %v3680 = vpow.pop %v3679
        %v3681 = vmul.f32 %v3349, 1.442695
        %v3682 = vpow.pop %v3681
        %v3683 = vmul.f32 %v3350, 1.442695
        %v3684 = vpow.pop %v3683
        %v3685 = vmul.f32 %v3351, 1.442695
        %v3686 = vpow.pop %v3685
        %v3687 = vmul.f32 %v3352, 1.442695
        %v3688 = vpow.pop %v3687
        %v3689 = vmul.f32 %v3353, 1.442695
        %v3690 = vpow.pop %v3689
        %v3691 = vmul.f32 %v3354, 1.442695
        %v3692 = vpow.pop %v3691
        %v3693 = vmul.f32 %v3355, 1.442695
        %v3694 = vpow.pop %v3693
        %v3695 = vmul.f32 %v3356, 1.442695
        %v3696 = vpow.pop %v3695
        %v3697 = vmul.f32 %v3357, 1.442695
        %v3698 = vpow.pop %v3697
        %v3699 = vmul.f32 %v3358, 1.442695
        %v3700 = vpow.pop %v3699
        %v3701 = vmul.f32 %v3359, 1.442695
        %v3702 = vpow.pop %v3701
        %v3703 = vmul.f32 %v3360, 1.442695
        %v3704 = vpow.pop %v3703
        %v3705 = vmul.f32 %v3361, 1.442695
        %v3706 = vpow.pop %v3705
        %v3707 = vmul.f32 %v3362, 1.442695
        %v3708 = vpow.pop %v3707
        %v3709 = vmul.f32 %v3363, 1.442695
        %v3710 = vpow.pop %v3709
        %v3711 = vmul.f32 %v3364, 1.442695
        %v3712 = vpow.pop %v3711
        %v3713 = vmul.f32 %v3365, 1.442695
        %v3714 = vpow.pop %v3713
        %v3715 = vmul.f32 %v3366, 1.442695
        %v3716 = vpow.pop %v3715
        %v3717 = vmul.f32 %v3367, 1.442695
        %v3718 = vpow.pop %v3717
        %v3719 = vmul.f32 %v3368, 1.442695
        %v3720 = vpow.pop %v3719
        %v3721 = vmul.f32 %v3369, 1.442695
        %v3722 = vpow.pop %v3721
        %v3723 = vmul.f32 %v3370, 1.442695
        %v3724 = vpow.pop %v3723
        %v3725 = vmul.f32 %v3371, 1.442695
        %v3726 = vpow.pop %v3725
        %v3727 = vmul.f32 %v3372, 1.442695
        %v3728 = vpow.pop %v3727
        %v3729 = vmul.f32 %v3373, 1.442695
        %v3730 = vpow.pop %v3729
        %v3731 = vmul.f32 %v3374, 1.442695
        %v3732 = vpow.pop %v3731
        %v3733 = vmul.f32 %v3375, 1.442695
        %v3734 = vpow.pop %v3733
        %v3735 = vmul.f32 %v3376, 1.442695
        %v3736 = vpow.pop %v3735
        %v3737 = vmul.f32 %v3377, 1.442695
        %v3738 = vpow.pop %v3737
        %v3739 = vmul.f32 %v3378, 1.442695
        %v3740 = vpow.pop %v3739
        %v3741 = vmul.f32 %v3379, 1.442695
        %v3742 = vpow.pop %v3741
        %v3743 = vmul.f32 %v3380, 1.442695
        %v3744 = vpow.pop %v3743
        %v3745 = vmul.f32 %v3381, 1.442695
        %v3746 = vpow.pop %v3745
        %v3747 = vmul.f32 %v3382, 1.442695
        %v3748 = vpow.pop %v3747
        %v3749 = vmul.f32 %v3383, 1.442695
        %v3750 = vpow.pop %v3749
        %v3751 = vmul.f32 %v3384, 1.442695
        %v3752 = vpow.pop %v3751
        %v3753 = vmul.f32 %v3385, 1.442695
        %v3754 = vpow.pop %v3753
        %v3755 = vmul.f32 %v3386, 1.442695
        %v3756 = vpow.pop %v3755
        %v3757 = vmul.f32 %v3387, 1.442695
        %v3758 = vpow.pop %v3757
        %v3759 = vmul.f32 %v3388, 1.442695
        %v3760 = vpow.pop %v3759
        %v3761 = vmul.f32 %v3389, 1.442695
        %v3762 = vpow.pop %v3761
        %v3763 = vmul.f32 %v3390, 1.442695
        %v3764 = vpow.pop %v3763
        %v3765 = vmul.f32 %v3391, 1.442695
        %v3766 = vpow.pop %v3765
        %v3767 = vmul.f32 %v3392, 1.442695
        %v3768 = vpow.pop %v3767
        %v3769 = vmul.f32 %v3393, 1.442695
        %v3770 = vpow.pop %v3769
        %v3771 = vmul.f32 %v3394, 1.442695
        %v3772 = vpow.pop %v3771
        %v3773 = vmul.f32 %v3395, 1.442695
        %v3774 = vpow.pop %v3773
        %v3775 = vmul.f32 %v3396, 1.442695
        %v3776 = vpow.pop %v3775
        %v3777 = vmul.f32 %v3397, 1.442695
        %v3778 = vpow.pop %v3777
        %v3779 = vmul.f32 %v3398, 1.442695
        %v3780 = vpow.pop %v3779
        %v3781 = vmul.f32 %v3399, 1.442695
        %v3782 = vpow.pop %v3781
        %v3783 = vmul.f32 %v3400, 1.442695
        %v3784 = vpow.pop %v3783
        %v3785 = vadd.f32 %v3402, 1.0
        %v3786 = vadd.f32 %v3404, 1.0
        %v3787 = vadd.f32 %v3406, 1.0
        %v3788 = vadd.f32 %v3408, 1.0
        %v3789 = vadd.f32 %v3410, 1.0
        %v3790 = vadd.f32 %v3412, 1.0
        %v3791 = vadd.f32 %v3414, 1.0
        %v3792 = vadd.f32 %v3416, 1.0
        %v3793 = vadd.f32 %v3418, 1.0
        %v3794 = vadd.f32 %v3420, 1.0
        %v3795 = vadd.f32 %v3422, 1.0
        %v3796 = vadd.f32 %v3424, 1.0
        %v3797 = vadd.f32 %v3426, 1.0
        %v3798 = vadd.f32 %v3428, 1.0
        %v3799 = vadd.f32 %v3430, 1.0
        %v3800 = vadd.f32 %v3432, 1.0
        %v3801 = vadd.f32 %v3434, 1.0
        %v3802 = vadd.f32 %v3436, 1.0
        %v3803 = vadd.f32 %v3438, 1.0
        %v3804 = vadd.f32 %v3440, 1.0
        %v3805 = vadd.f32 %v3442, 1.0
        %v3806 = vadd.f32 %v3444, 1.0
        %v3807 = vadd.f32 %v3446, 1.0
        %v3808 = vadd.f32 %v3448, 1.0
        %v3809 = vadd.f32 %v3450, 1.0
        %v3810 = vadd.f32 %v3452, 1.0
        %v3811 = vadd.f32 %v3454, 1.0
        %v3812 = vadd.f32 %v3456, 1.0
        %v3813 = vadd.f32 %v3458, 1.0
        %v3814 = vadd.f32 %v3460, 1.0
        %v3815 = vadd.f32 %v3462, 1.0
        %v3816 = vadd.f32 %v3464, 1.0
        %v3817 = vadd.f32 %v3466, 1.0
        %v3818 = vadd.f32 %v3468, 1.0
        %v3819 = vadd.f32 %v3470, 1.0
        %v3820 = vadd.f32 %v3472, 1.0
        %v3821 = vadd.f32 %v3474, 1.0
        %v3822 = vadd.f32 %v3476, 1.0
        %v3823 = vadd.f32 %v3478, 1.0
        %v3824 = vadd.f32 %v3480, 1.0
        %v3825 = vadd.f32 %v3482, 1.0
        %v3826 = vadd.f32 %v3484, 1.0
        %v3827 = vadd.f32 %v3486, 1.0
        %v3828 = vadd.f32 %v3488, 1.0
        %v3829 = vadd.f32 %v3490, 1.0
        %v3830 = vadd.f32 %v3492, 1.0
        %v3831 = vadd.f32 %v3494, 1.0
        %v3832 = vadd.f32 %v3496, 1.0
        %v3833 = vadd.f32 %v3498, 1.0
        %v3834 = vadd.f32 %v3500, 1.0
        %v3835 = vadd.f32 %v3502, 1.0
        %v3836 = vadd.f32 %v3504, 1.0
        %v3837 = vadd.f32 %v3506, 1.0
        %v3838 = vadd.f32 %v3508, 1.0
        %v3839 = vadd.f32 %v3510, 1.0
        %v3840 = vadd.f32 %v3512, 1.0
        %v3841 = vadd.f32 %v3514, 1.0
        %v3842 = vadd.f32 %v3516, 1.0
        %v3843 = vadd.f32 %v3518, 1.0
        %v3844 = vadd.f32 %v3520, 1.0
        %v3845 = vadd.f32 %v3522, 1.0
        %v3846 = vadd.f32 %v3524, 1.0
        %v3847 = vadd.f32 %v3526, 1.0
        %v3848 = vadd.f32 %v3528, 1.0
        %v3849 = vadd.f32 %v3530, 1.0
        %v3850 = vadd.f32 %v3532, 1.0
        %v3851 = vadd.f32 %v3534, 1.0
        %v3852 = vadd.f32 %v3536, 1.0
        %v3853 = vadd.f32 %v3538, 1.0
        %v3854 = vadd.f32 %v3540, 1.0
        %v3855 = vadd.f32 %v3542, 1.0
        %v3856 = vadd.f32 %v3544, 1.0
        %v3857 = vadd.f32 %v3546, 1.0
        %v3858 = vadd.f32 %v3548, 1.0
        %v3859 = vadd.f32 %v3550, 1.0
        %v3860 = vadd.f32 %v3552, 1.0
        %v3861 = vadd.f32 %v3554, 1.0
        %v3862 = vadd.f32 %v3556, 1.0
        %v3863 = vadd.f32 %v3558, 1.0
        %v3864 = vadd.f32 %v3560, 1.0
        %v3865 = vadd.f32 %v3562, 1.0
        %v3866 = vadd.f32 %v3564, 1.0
        %v3867 = vadd.f32 %v3566, 1.0
        %v3868 = vadd.f32 %v3568, 1.0
        %v3869 = vadd.f32 %v3570, 1.0
        %v3870 = vadd.f32 %v3572, 1.0
        %v3871 = vadd.f32 %v3574, 1.0
        %v3872 = vadd.f32 %v3576, 1.0
        %v3873 = vadd.f32 %v3578, 1.0
        %v3874 = vadd.f32 %v3580, 1.0
        %v3875 = vadd.f32 %v3582, 1.0
        %v3876 = vadd.f32 %v3584, 1.0
        %v3877 = vadd.f32 %v3586, 1.0
        %v3878 = vadd.f32 %v3588, 1.0
        %v3879 = vadd.f32 %v3590, 1.0
        %v3880 = vadd.f32 %v3592, 1.0
        %v3881 = vadd.f32 %v3594, 1.0
        %v3882 = vadd.f32 %v3596, 1.0
        %v3883 = vadd.f32 %v3598, 1.0
        %v3884 = vadd.f32 %v3600, 1.0
        %v3885 = vadd.f32 %v3602, 1.0
        %v3886 = vadd.f32 %v3604, 1.0
        %v3887 = vadd.f32 %v3606, 1.0
        %v3888 = vadd.f32 %v3608, 1.0
        %v3889 = vadd.f32 %v3610, 1.0
        %v3890 = vadd.f32 %v3612, 1.0
        %v3891 = vadd.f32 %v3614, 1.0
        %v3892 = vadd.f32 %v3616, 1.0
        %v3893 = vadd.f32 %v3618, 1.0
        %v3894 = vadd.f32 %v3620, 1.0
        %v3895 = vadd.f32 %v3622, 1.0
        %v3896 = vadd.f32 %v3624, 1.0
        %v3897 = vadd.f32 %v3626, 1.0
        %v3898 = vadd.f32 %v3628, 1.0
        %v3899 = vadd.f32 %v3630, 1.0
        %v3900 = vadd.f32 %v3632, 1.0
        %v3901 = vadd.f32 %v3634, 1.0
        %v3902 = vadd.f32 %v3636, 1.0
        %v3903 = vadd.f32 %v3638, 1.0
        %v3904 = vadd.f32 %v3640, 1.0
        %v3905 = vadd.f32 %v3642, 1.0
        %v3906 = vadd.f32 %v3644, 1.0
        %v3907 = vadd.f32 %v3646, 1.0
        %v3908 = vadd.f32 %v3648, 1.0
        %v3909 = vadd.f32 %v3650, 1.0
        %v3910 = vadd.f32 %v3652, 1.0
        %v3911 = vadd.f32 %v3654, 1.0
        %v3912 = vadd.f32 %v3656, 1.0
        %v3913 = vadd.f32 %v3658, 1.0
        %v3914 = vadd.f32 %v3660, 1.0
        %v3915 = vadd.f32 %v3662, 1.0
        %v3916 = vadd.f32 %v3664, 1.0
        %v3917 = vadd.f32 %v3666, 1.0
        %v3918 = vadd.f32 %v3668, 1.0
        %v3919 = vadd.f32 %v3670, 1.0
        %v3920 = vadd.f32 %v3672, 1.0
        %v3921 = vadd.f32 %v3674, 1.0
        %v3922 = vadd.f32 %v3676, 1.0
        %v3923 = vadd.f32 %v3678, 1.0
        %v3924 = vadd.f32 %v3680, 1.0
        %v3925 = vadd.f32 %v3682, 1.0
        %v3926 = vadd.f32 %v3684, 1.0
        %v3927 = vadd.f32 %v3686, 1.0
        %v3928 = vadd.f32 %v3688, 1.0
        %v3929 = vadd.f32 %v3690, 1.0
        %v3930 = vadd.f32 %v3692, 1.0
        %v3931 = vadd.f32 %v3694, 1.0
        %v3932 = vadd.f32 %v3696, 1.0
        %v3933 = vadd.f32 %v3698, 1.0
        %v3934 = vadd.f32 %v3700, 1.0
        %v3935 = vadd.f32 %v3702, 1.0
        %v3936 = vadd.f32 %v3704, 1.0
        %v3937 = vadd.f32 %v3706, 1.0
        %v3938 = vadd.f32 %v3708, 1.0
        %v3939 = vadd.f32 %v3710, 1.0
        %v3940 = vadd.f32 %v3712, 1.0
        %v3941 = vadd.f32 %v3714, 1.0
        %v3942 = vadd.f32 %v3716, 1.0
        %v3943 = vadd.f32 %v3718, 1.0
        %v3944 = vadd.f32 %v3720, 1.0
        %v3945 = vadd.f32 %v3722, 1.0
        %v3946 = vadd.f32 %v3724, 1.0
        %v3947 = vadd.f32 %v3726, 1.0
        %v3948 = vadd.f32 %v3728, 1.0
        %v3949 = vadd.f32 %v3730, 1.0
        %v3950 = vadd.f32 %v3732, 1.0
        %v3951 = vadd.f32 %v3734, 1.0
        %v3952 = vadd.f32 %v3736, 1.0
        %v3953 = vadd.f32 %v3738, 1.0
        %v3954 = vadd.f32 %v3740, 1.0
        %v3955 = vadd.f32 %v3742, 1.0
        %v3956 = vadd.f32 %v3744, 1.0
        %v3957 = vadd.f32 %v3746, 1.0
        %v3958 = vadd.f32 %v3748, 1.0
        %v3959 = vadd.f32 %v3750, 1.0
        %v3960 = vadd.f32 %v3752, 1.0
        %v3961 = vadd.f32 %v3754, 1.0
        %v3962 = vadd.f32 %v3756, 1.0
        %v3963 = vadd.f32 %v3758, 1.0
        %v3964 = vadd.f32 %v3760, 1.0
        %v3965 = vadd.f32 %v3762, 1.0
        %v3966 = vadd.f32 %v3764, 1.0
        %v3967 = vadd.f32 %v3766, 1.0
        %v3968 = vadd.f32 %v3768, 1.0
        %v3969 = vadd.f32 %v3770, 1.0
        %v3970 = vadd.f32 %v3772, 1.0
        %v3971 = vadd.f32 %v3774, 1.0
        %v3972 = vadd.f32 %v3776, 1.0
        %v3973 = vadd.f32 %v3778, 1.0
        %v3974 = vadd.f32 %v3780, 1.0
        %v3975 = vadd.f32 %v3782, 1.0
        %v3976 = vadd.f32 %v3784, 1.0
        %v3977 = vrcp.pop %v3785
        %v3978 = vmul.f32 %v3785, %v3977
        %v3979 = vsub.f32 1.0, %v3978
        %v3980 = vmul.f32 %v3977, %v3979
        %v3981 = vadd.f32 %v3977, %v3980
        %vm3982 = vweird.f32 %v3785
        %vm3983 = vweird.f32 %v3977
        %vm3984 = vmor %vm3982, %vm3983
        %v3985 = vsel %vm3984, %v3977, %v3981
        %v3986 = vand.u32 2147483647, %v3785
        %vm3987 = vcmp.eq.f32.partialorder %v3986, 8.507059e+37
        %v3988 = vand.u32 %v3785, 2147483648
        %v3989 = vor.u32 1.1754944e-38, %v3988
        %v3990 = vsel %vm3987, %v3989, %v3985
        %v3991 = vmul.f32 1.0, %v3990
        %v3992 = vrcp.pop %v3786
        %v3993 = vmul.f32 %v3786, %v3992
        %v3994 = vsub.f32 1.0, %v3993
        %v3995 = vmul.f32 %v3992, %v3994
        %v3996 = vadd.f32 %v3992, %v3995
        %vm3997 = vweird.f32 %v3786
        %vm3998 = vweird.f32 %v3992
        %vm3999 = vmor %vm3997, %vm3998
        %v4000 = vsel %vm3999, %v3992, %v3996
        %v4001 = vand.u32 2147483647, %v3786
        %vm4002 = vcmp.eq.f32.partialorder %v4001, 8.507059e+37
        %v4003 = vand.u32 %v3786, 2147483648
        %v4004 = vor.u32 1.1754944e-38, %v4003
        %v4005 = vsel %vm4002, %v4004, %v4000
        %v4006 = vmul.f32 1.0, %v4005
        %v4007 = vrcp.pop %v3787
        %v4008 = vmul.f32 %v3787, %v4007
        %v4009 = vsub.f32 1.0, %v4008
        %v4010 = vmul.f32 %v4007, %v4009
        %v4011 = vadd.f32 %v4007, %v4010
        %vm4012 = vweird.f32 %v3787
        %vm4013 = vweird.f32 %v4007
        %vm4014 = vmor %vm4012, %vm4013
        %v4015 = vsel %vm4014, %v4007, %v4011
        %v4016 = vand.u32 2147483647, %v3787
        %vm4017 = vcmp.eq.f32.partialorder %v4016, 8.507059e+37
        %v4018 = vand.u32 %v3787, 2147483648
        %v4019 = vor.u32 1.1754944e-38, %v4018
        %v4020 = vsel %vm4017, %v4019, %v4015
        %v4021 = vmul.f32 1.0, %v4020
        %v4022 = vrcp.pop %v3788
        %v4023 = vmul.f32 %v3788, %v4022
        %v4024 = vsub.f32 1.0, %v4023
        %v4025 = vmul.f32 %v4022, %v4024
        %v4026 = vadd.f32 %v4022, %v4025
        %vm4027 = vweird.f32 %v3788
        %vm4028 = vweird.f32 %v4022
        %vm4029 = vmor %vm4027, %vm4028
        %v4030 = vsel %vm4029, %v4022, %v4026
        %v4031 = vand.u32 2147483647, %v3788
        %vm4032 = vcmp.eq.f32.partialorder %v4031, 8.507059e+37
        %v4033 = vand.u32 %v3788, 2147483648
        %v4034 = vor.u32 1.1754944e-38, %v4033
        %v4035 = vsel %vm4032, %v4034, %v4030
        %v4036 = vmul.f32 1.0, %v4035
        %v4037 = vrcp.pop %v3789
        %v4038 = vmul.f32 %v3789, %v4037
        %v4039 = vsub.f32 1.0, %v4038
        %v4040 = vmul.f32 %v4037, %v4039
        %v4041 = vadd.f32 %v4037, %v4040
        %vm4042 = vweird.f32 %v3789
        %vm4043 = vweird.f32 %v4037
        %vm4044 = vmor %vm4042, %vm4043
        %v4045 = vsel %vm4044, %v4037, %v4041
        %v4046 = vand.u32 2147483647, %v3789
        %vm4047 = vcmp.eq.f32.partialorder %v4046, 8.507059e+37
        %v4048 = vand.u32 %v3789, 2147483648
        %v4049 = vor.u32 1.1754944e-38, %v4048
        %v4050 = vsel %vm4047, %v4049, %v4045
        %v4051 = vmul.f32 1.0, %v4050
        %v4052 = vrcp.pop %v3790
        %v4053 = vmul.f32 %v3790, %v4052
        %v4054 = vsub.f32 1.0, %v4053
        %v4055 = vmul.f32 %v4052, %v4054
        %v4056 = vadd.f32 %v4052, %v4055
        %vm4057 = vweird.f32 %v3790
        %vm4058 = vweird.f32 %v4052
        %vm4059 = vmor %vm4057, %vm4058
        %v4060 = vsel %vm4059, %v4052, %v4056
        %v4061 = vand.u32 2147483647, %v3790
        %vm4062 = vcmp.eq.f32.partialorder %v4061, 8.507059e+37
        %v4063 = vand.u32 %v3790, 2147483648
        %v4064 = vor.u32 1.1754944e-38, %v4063
        %v4065 = vsel %vm4062, %v4064, %v4060
        %v4066 = vmul.f32 1.0, %v4065
        %v4067 = vrcp.pop %v3791
        %v4068 = vmul.f32 %v3791, %v4067
        %v4069 = vsub.f32 1.0, %v4068
        %v4070 = vmul.f32 %v4067, %v4069
        %v4071 = vadd.f32 %v4067, %v4070
        %vm4072 = vweird.f32 %v3791
        %vm4073 = vweird.f32 %v4067
        %vm4074 = vmor %vm4072, %vm4073
        %v4075 = vsel %vm4074, %v4067, %v4071
        %v4076 = vand.u32 2147483647, %v3791
        %vm4077 = vcmp.eq.f32.partialorder %v4076, 8.507059e+37
        %v4078 = vand.u32 %v3791, 2147483648
        %v4079 = vor.u32 1.1754944e-38, %v4078
        %v4080 = vsel %vm4077, %v4079, %v4075
        %v4081 = vmul.f32 1.0, %v4080
        %v4082 = vrcp.pop %v3792
        %v4083 = vmul.f32 %v3792, %v4082
        %v4084 = vsub.f32 1.0, %v4083
        %v4085 = vmul.f32 %v4082, %v4084
        %v4086 = vadd.f32 %v4082, %v4085
        %vm4087 = vweird.f32 %v3792
        %vm4088 = vweird.f32 %v4082
        %vm4089 = vmor %vm4087, %vm4088
        %v4090 = vsel %vm4089, %v4082, %v4086
        %v4091 = vand.u32 2147483647, %v3792
        %vm4092 = vcmp.eq.f32.partialorder %v4091, 8.507059e+37
        %v4093 = vand.u32 %v3792, 2147483648
        %v4094 = vor.u32 1.1754944e-38, %v4093
        %v4095 = vsel %vm4092, %v4094, %v4090
        %v4096 = vmul.f32 1.0, %v4095
        %v4097 = vrcp.pop %v3793
        %v4098 = vmul.f32 %v3793, %v4097
        %v4099 = vsub.f32 1.0, %v4098
        %v4100 = vmul.f32 %v4097, %v4099
        %v4101 = vadd.f32 %v4097, %v4100
        %vm4102 = vweird.f32 %v3793
        %vm4103 = vweird.f32 %v4097
        %vm4104 = vmor %vm4102, %vm4103
        %v4105 = vsel %vm4104, %v4097, %v4101
        %v4106 = vand.u32 2147483647, %v3793
        %vm4107 = vcmp.eq.f32.partialorder %v4106, 8.507059e+37
        %v4108 = vand.u32 %v3793, 2147483648
        %v4109 = vor.u32 1.1754944e-38, %v4108
        %v4110 = vsel %vm4107, %v4109, %v4105
        %v4111 = vmul.f32 1.0, %v4110
        %v4112 = vrcp.pop %v3794
        %v4113 = vmul.f32 %v3794, %v4112
        %v4114 = vsub.f32 1.0, %v4113
        %v4115 = vmul.f32 %v4112, %v4114
        %v4116 = vadd.f32 %v4112, %v4115
        %vm4117 = vweird.f32 %v3794
        %vm4118 = vweird.f32 %v4112
        %vm4119 = vmor %vm4117, %vm4118
        %v4120 = vsel %vm4119, %v4112, %v4116
        %v4121 = vand.u32 2147483647, %v3794
        %vm4122 = vcmp.eq.f32.partialorder %v4121, 8.507059e+37
        %v4123 = vand.u32 %v3794, 2147483648
        %v4124 = vor.u32 1.1754944e-38, %v4123
        %v4125 = vsel %vm4122, %v4124, %v4120
        %v4126 = vmul.f32 1.0, %v4125
        %v4127 = vrcp.pop %v3795
        %v4128 = vmul.f32 %v3795, %v4127
        %v4129 = vsub.f32 1.0, %v4128
        %v4130 = vmul.f32 %v4127, %v4129
        %v4131 = vadd.f32 %v4127, %v4130
        %vm4132 = vweird.f32 %v3795
        %vm4133 = vweird.f32 %v4127
        %vm4134 = vmor %vm4132, %vm4133
        %v4135 = vsel %vm4134, %v4127, %v4131
        %v4136 = vand.u32 2147483647, %v3795
        %vm4137 = vcmp.eq.f32.partialorder %v4136, 8.507059e+37
        %v4138 = vand.u32 %v3795, 2147483648
        %v4139 = vor.u32 1.1754944e-38, %v4138
        %v4140 = vsel %vm4137, %v4139, %v4135
        %v4141 = vmul.f32 1.0, %v4140
        %v4142 = vrcp.pop %v3796
        %v4143 = vmul.f32 %v3796, %v4142
        %v4144 = vsub.f32 1.0, %v4143
        %v4145 = vmul.f32 %v4142, %v4144
        %v4146 = vadd.f32 %v4142, %v4145
        %vm4147 = vweird.f32 %v3796
        %vm4148 = vweird.f32 %v4142
        %vm4149 = vmor %vm4147, %vm4148
        %v4150 = vsel %vm4149, %v4142, %v4146
        %v4151 = vand.u32 2147483647, %v3796
        %vm4152 = vcmp.eq.f32.partialorder %v4151, 8.507059e+37
        %v4153 = vand.u32 %v3796, 2147483648
        %v4154 = vor.u32 1.1754944e-38, %v4153
        %v4155 = vsel %vm4152, %v4154, %v4150
        %v4156 = vmul.f32 1.0, %v4155
        %v4157 = vrcp.pop %v3797
        %v4158 = vmul.f32 %v3797, %v4157
        %v4159 = vsub.f32 1.0, %v4158
        %v4160 = vmul.f32 %v4157, %v4159
        %v4161 = vadd.f32 %v4157, %v4160
        %vm4162 = vweird.f32 %v3797
        %vm4163 = vweird.f32 %v4157
        %vm4164 = vmor %vm4162, %vm4163
        %v4165 = vsel %vm4164, %v4157, %v4161
        %v4166 = vand.u32 2147483647, %v3797
        %vm4167 = vcmp.eq.f32.partialorder %v4166, 8.507059e+37
        %v4168 = vand.u32 %v3797, 2147483648
        %v4169 = vor.u32 1.1754944e-38, %v4168
        %v4170 = vsel %vm4167, %v4169, %v4165
        %v4171 = vmul.f32 1.0, %v4170
        %v4172 = vrcp.pop %v3798
        %v4173 = vmul.f32 %v3798, %v4172
        %v4174 = vsub.f32 1.0, %v4173
        %v4175 = vmul.f32 %v4172, %v4174
        %v4176 = vadd.f32 %v4172, %v4175
        %vm4177 = vweird.f32 %v3798
        %vm4178 = vweird.f32 %v4172
        %vm4179 = vmor %vm4177, %vm4178
        %v4180 = vsel %vm4179, %v4172, %v4176
        %v4181 = vand.u32 2147483647, %v3798
        %vm4182 = vcmp.eq.f32.partialorder %v4181, 8.507059e+37
        %v4183 = vand.u32 %v3798, 2147483648
        %v4184 = vor.u32 1.1754944e-38, %v4183
        %v4185 = vsel %vm4182, %v4184, %v4180
        %v4186 = vmul.f32 1.0, %v4185
        %v4187 = vrcp.pop %v3799
        %v4188 = vmul.f32 %v3799, %v4187
        %v4189 = vsub.f32 1.0, %v4188
        %v4190 = vmul.f32 %v4187, %v4189
        %v4191 = vadd.f32 %v4187, %v4190
        %vm4192 = vweird.f32 %v3799
        %vm4193 = vweird.f32 %v4187
        %vm4194 = vmor %vm4192, %vm4193
        %v4195 = vsel %vm4194, %v4187, %v4191
        %v4196 = vand.u32 2147483647, %v3799
        %vm4197 = vcmp.eq.f32.partialorder %v4196, 8.507059e+37
        %v4198 = vand.u32 %v3799, 2147483648
        %v4199 = vor.u32 1.1754944e-38, %v4198
        %v4200 = vsel %vm4197, %v4199, %v4195
        %v4201 = vmul.f32 1.0, %v4200
        %v4202 = vrcp.pop %v3800
        %v4203 = vmul.f32 %v3800, %v4202
        %v4204 = vsub.f32 1.0, %v4203
        %v4205 = vmul.f32 %v4202, %v4204
        %v4206 = vadd.f32 %v4202, %v4205
        %vm4207 = vweird.f32 %v3800
        %vm4208 = vweird.f32 %v4202
        %vm4209 = vmor %vm4207, %vm4208
        %v4210 = vsel %vm4209, %v4202, %v4206
        %v4211 = vand.u32 2147483647, %v3800
        %vm4212 = vcmp.eq.f32.partialorder %v4211, 8.507059e+37
        %v4213 = vand.u32 %v3800, 2147483648
        %v4214 = vor.u32 1.1754944e-38, %v4213
        %v4215 = vsel %vm4212, %v4214, %v4210
        %v4216 = vmul.f32 1.0, %v4215
        %v4217 = vrcp.pop %v3801
        %v4218 = vmul.f32 %v3801, %v4217
        %v4219 = vsub.f32 1.0, %v4218
        %v4220 = vmul.f32 %v4217, %v4219
        %v4221 = vadd.f32 %v4217, %v4220
        %vm4222 = vweird.f32 %v3801
        %vm4223 = vweird.f32 %v4217
        %vm4224 = vmor %vm4222, %vm4223
        %v4225 = vsel %vm4224, %v4217, %v4221
        %v4226 = vand.u32 2147483647, %v3801
        %vm4227 = vcmp.eq.f32.partialorder %v4226, 8.507059e+37
        %v4228 = vand.u32 %v3801, 2147483648
        %v4229 = vor.u32 1.1754944e-38, %v4228
        %v4230 = vsel %vm4227, %v4229, %v4225
        %v4231 = vmul.f32 1.0, %v4230
        %v4232 = vrcp.pop %v3802
        %v4233 = vmul.f32 %v3802, %v4232
        %v4234 = vsub.f32 1.0, %v4233
        %v4235 = vmul.f32 %v4232, %v4234
        %v4236 = vadd.f32 %v4232, %v4235
        %vm4237 = vweird.f32 %v3802
        %vm4238 = vweird.f32 %v4232
        %vm4239 = vmor %vm4237, %vm4238
        %v4240 = vsel %vm4239, %v4232, %v4236
        %v4241 = vand.u32 2147483647, %v3802
        %vm4242 = vcmp.eq.f32.partialorder %v4241, 8.507059e+37
        %v4243 = vand.u32 %v3802, 2147483648
        %v4244 = vor.u32 1.1754944e-38, %v4243
        %v4245 = vsel %vm4242, %v4244, %v4240
        %v4246 = vmul.f32 1.0, %v4245
        %v4247 = vrcp.pop %v3803
        %v4248 = vmul.f32 %v3803, %v4247
        %v4249 = vsub.f32 1.0, %v4248
        %v4250 = vmul.f32 %v4247, %v4249
        %v4251 = vadd.f32 %v4247, %v4250
        %vm4252 = vweird.f32 %v3803
        %vm4253 = vweird.f32 %v4247
        %vm4254 = vmor %vm4252, %vm4253
        %v4255 = vsel %vm4254, %v4247, %v4251
        %v4256 = vand.u32 2147483647, %v3803
        %vm4257 = vcmp.eq.f32.partialorder %v4256, 8.507059e+37
        %v4258 = vand.u32 %v3803, 2147483648
        %v4259 = vor.u32 1.1754944e-38, %v4258
        %v4260 = vsel %vm4257, %v4259, %v4255
        %v4261 = vmul.f32 1.0, %v4260
        %v4262 = vrcp.pop %v3804
        %v4263 = vmul.f32 %v3804, %v4262
        %v4264 = vsub.f32 1.0, %v4263
        %v4265 = vmul.f32 %v4262, %v4264
        %v4266 = vadd.f32 %v4262, %v4265
        %vm4267 = vweird.f32 %v3804
        %vm4268 = vweird.f32 %v4262
        %vm4269 = vmor %vm4267, %vm4268
        %v4270 = vsel %vm4269, %v4262, %v4266
        %v4271 = vand.u32 2147483647, %v3804
        %vm4272 = vcmp.eq.f32.partialorder %v4271, 8.507059e+37
        %v4273 = vand.u32 %v3804, 2147483648
        %v4274 = vor.u32 1.1754944e-38, %v4273
        %v4275 = vsel %vm4272, %v4274, %v4270
        %v4276 = vmul.f32 1.0, %v4275
        %v4277 = vrcp.pop %v3805
        %v4278 = vmul.f32 %v3805, %v4277
        %v4279 = vsub.f32 1.0, %v4278
        %v4280 = vmul.f32 %v4277, %v4279
        %v4281 = vadd.f32 %v4277, %v4280
        %vm4282 = vweird.f32 %v3805
        %vm4283 = vweird.f32 %v4277
        %vm4284 = vmor %vm4282, %vm4283
        %v4285 = vsel %vm4284, %v4277, %v4281
        %v4286 = vand.u32 2147483647, %v3805
        %vm4287 = vcmp.eq.f32.partialorder %v4286, 8.507059e+37
        %v4288 = vand.u32 %v3805, 2147483648
        %v4289 = vor.u32 1.1754944e-38, %v4288
        %v4290 = vsel %vm4287, %v4289, %v4285
        %v4291 = vmul.f32 1.0, %v4290
        %v4292 = vrcp.pop %v3806
        %v4293 = vmul.f32 %v3806, %v4292
        %v4294 = vsub.f32 1.0, %v4293
        %v4295 = vmul.f32 %v4292, %v4294
        %v4296 = vadd.f32 %v4292, %v4295
        %vm4297 = vweird.f32 %v3806
        %vm4298 = vweird.f32 %v4292
        %vm4299 = vmor %vm4297, %vm4298
        %v4300 = vsel %vm4299, %v4292, %v4296
        %v4301 = vand.u32 2147483647, %v3806
        %vm4302 = vcmp.eq.f32.partialorder %v4301, 8.507059e+37
        %v4303 = vand.u32 %v3806, 2147483648
        %v4304 = vor.u32 1.1754944e-38, %v4303
        %v4305 = vsel %vm4302, %v4304, %v4300
        %v4306 = vmul.f32 1.0, %v4305
        %v4307 = vrcp.pop %v3807
        %v4308 = vmul.f32 %v3807, %v4307
        %v4309 = vsub.f32 1.0, %v4308
        %v4310 = vmul.f32 %v4307, %v4309
        %v4311 = vadd.f32 %v4307, %v4310
        %vm4312 = vweird.f32 %v3807
        %vm4313 = vweird.f32 %v4307
        %vm4314 = vmor %vm4312, %vm4313
        %v4315 = vsel %vm4314, %v4307, %v4311
        %v4316 = vand.u32 2147483647, %v3807
        %vm4317 = vcmp.eq.f32.partialorder %v4316, 8.507059e+37
        %v4318 = vand.u32 %v3807, 2147483648
        %v4319 = vor.u32 1.1754944e-38, %v4318
        %v4320 = vsel %vm4317, %v4319, %v4315
        %v4321 = vmul.f32 1.0, %v4320
        %v4322 = vrcp.pop %v3808
        %v4323 = vmul.f32 %v3808, %v4322
        %v4324 = vsub.f32 1.0, %v4323
        %v4325 = vmul.f32 %v4322, %v4324
        %v4326 = vadd.f32 %v4322, %v4325
        %vm4327 = vweird.f32 %v3808
        %vm4328 = vweird.f32 %v4322
        %vm4329 = vmor %vm4327, %vm4328
        %v4330 = vsel %vm4329, %v4322, %v4326
        %v4331 = vand.u32 2147483647, %v3808
        %vm4332 = vcmp.eq.f32.partialorder %v4331, 8.507059e+37
        %v4333 = vand.u32 %v3808, 2147483648
        %v4334 = vor.u32 1.1754944e-38, %v4333
        %v4335 = vsel %vm4332, %v4334, %v4330
        %v4336 = vmul.f32 1.0, %v4335
        %v4337 = vrcp.pop %v3809
        %v4338 = vmul.f32 %v3809, %v4337
        %v4339 = vsub.f32 1.0, %v4338
        %v4340 = vmul.f32 %v4337, %v4339
        %v4341 = vadd.f32 %v4337, %v4340
        %vm4342 = vweird.f32 %v3809
        %vm4343 = vweird.f32 %v4337
        %vm4344 = vmor %vm4342, %vm4343
        %v4345 = vsel %vm4344, %v4337, %v4341
        %v4346 = vand.u32 2147483647, %v3809
        %vm4347 = vcmp.eq.f32.partialorder %v4346, 8.507059e+37
        %v4348 = vand.u32 %v3809, 2147483648
        %v4349 = vor.u32 1.1754944e-38, %v4348
        %v4350 = vsel %vm4347, %v4349, %v4345
        %v4351 = vmul.f32 1.0, %v4350
        %v4352 = vrcp.pop %v3810
        %v4353 = vmul.f32 %v3810, %v4352
        %v4354 = vsub.f32 1.0, %v4353
        %v4355 = vmul.f32 %v4352, %v4354
        %v4356 = vadd.f32 %v4352, %v4355
        %vm4357 = vweird.f32 %v3810
        %vm4358 = vweird.f32 %v4352
        %vm4359 = vmor %vm4357, %vm4358
        %v4360 = vsel %vm4359, %v4352, %v4356
        %v4361 = vand.u32 2147483647, %v3810
        %vm4362 = vcmp.eq.f32.partialorder %v4361, 8.507059e+37
        %v4363 = vand.u32 %v3810, 2147483648
        %v4364 = vor.u32 1.1754944e-38, %v4363
        %v4365 = vsel %vm4362, %v4364, %v4360
        %v4366 = vmul.f32 1.0, %v4365
        %v4367 = vrcp.pop %v3811
        %v4368 = vmul.f32 %v3811, %v4367
        %v4369 = vsub.f32 1.0, %v4368
        %v4370 = vmul.f32 %v4367, %v4369
        %v4371 = vadd.f32 %v4367, %v4370
        %vm4372 = vweird.f32 %v3811
        %vm4373 = vweird.f32 %v4367
        %vm4374 = vmor %vm4372, %vm4373
        %v4375 = vsel %vm4374, %v4367, %v4371
        %v4376 = vand.u32 2147483647, %v3811
        %vm4377 = vcmp.eq.f32.partialorder %v4376, 8.507059e+37
        %v4378 = vand.u32 %v3811, 2147483648
        %v4379 = vor.u32 1.1754944e-38, %v4378
        %v4380 = vsel %vm4377, %v4379, %v4375
        %v4381 = vmul.f32 1.0, %v4380
        %v4382 = vrcp.pop %v3812
        %v4383 = vmul.f32 %v3812, %v4382
        %v4384 = vsub.f32 1.0, %v4383
        %v4385 = vmul.f32 %v4382, %v4384
        %v4386 = vadd.f32 %v4382, %v4385
        %vm4387 = vweird.f32 %v3812
        %vm4388 = vweird.f32 %v4382
        %vm4389 = vmor %vm4387, %vm4388
        %v4390 = vsel %vm4389, %v4382, %v4386
        %v4391 = vand.u32 2147483647, %v3812
        %vm4392 = vcmp.eq.f32.partialorder %v4391, 8.507059e+37
        %v4393 = vand.u32 %v3812, 2147483648
        %v4394 = vor.u32 1.1754944e-38, %v4393
        %v4395 = vsel %vm4392, %v4394, %v4390
        %v4396 = vmul.f32 1.0, %v4395
        %v4397 = vrcp.pop %v3813
        %v4398 = vmul.f32 %v3813, %v4397
        %v4399 = vsub.f32 1.0, %v4398
        %v4400 = vmul.f32 %v4397, %v4399
        %v4401 = vadd.f32 %v4397, %v4400
        %vm4402 = vweird.f32 %v3813
        %vm4403 = vweird.f32 %v4397
        %vm4404 = vmor %vm4402, %vm4403
        %v4405 = vsel %vm4404, %v4397, %v4401
        %v4406 = vand.u32 2147483647, %v3813
        %vm4407 = vcmp.eq.f32.partialorder %v4406, 8.507059e+37
        %v4408 = vand.u32 %v3813, 2147483648
        %v4409 = vor.u32 1.1754944e-38, %v4408
        %v4410 = vsel %vm4407, %v4409, %v4405
        %v4411 = vmul.f32 1.0, %v4410
        %v4412 = vrcp.pop %v3814
        %v4413 = vmul.f32 %v3814, %v4412
        %v4414 = vsub.f32 1.0, %v4413
        %v4415 = vmul.f32 %v4412, %v4414
        %v4416 = vadd.f32 %v4412, %v4415
        %vm4417 = vweird.f32 %v3814
        %vm4418 = vweird.f32 %v4412
        %vm4419 = vmor %vm4417, %vm4418
        %v4420 = vsel %vm4419, %v4412, %v4416
        %v4421 = vand.u32 2147483647, %v3814
        %vm4422 = vcmp.eq.f32.partialorder %v4421, 8.507059e+37
        %v4423 = vand.u32 %v3814, 2147483648
        %v4424 = vor.u32 1.1754944e-38, %v4423
        %v4425 = vsel %vm4422, %v4424, %v4420
        %v4426 = vmul.f32 1.0, %v4425
        %v4427 = vrcp.pop %v3815
        %v4428 = vmul.f32 %v3815, %v4427
        %v4429 = vsub.f32 1.0, %v4428
        %v4430 = vmul.f32 %v4427, %v4429
        %v4431 = vadd.f32 %v4427, %v4430
        %vm4432 = vweird.f32 %v3815
        %vm4433 = vweird.f32 %v4427
        %vm4434 = vmor %vm4432, %vm4433
        %v4435 = vsel %vm4434, %v4427, %v4431
        %v4436 = vand.u32 2147483647, %v3815
        %vm4437 = vcmp.eq.f32.partialorder %v4436, 8.507059e+37
        %v4438 = vand.u32 %v3815, 2147483648
        %v4439 = vor.u32 1.1754944e-38, %v4438
        %v4440 = vsel %vm4437, %v4439, %v4435
        %v4441 = vmul.f32 1.0, %v4440
        %v4442 = vrcp.pop %v3816
        %v4443 = vmul.f32 %v3816, %v4442
        %v4444 = vsub.f32 1.0, %v4443
        %v4445 = vmul.f32 %v4442, %v4444
        %v4446 = vadd.f32 %v4442, %v4445
        %vm4447 = vweird.f32 %v3816
        %vm4448 = vweird.f32 %v4442
        %vm4449 = vmor %vm4447, %vm4448
        %v4450 = vsel %vm4449, %v4442, %v4446
        %v4451 = vand.u32 2147483647, %v3816
        %vm4452 = vcmp.eq.f32.partialorder %v4451, 8.507059e+37
        %v4453 = vand.u32 %v3816, 2147483648
        %v4454 = vor.u32 1.1754944e-38, %v4453
        %v4455 = vsel %vm4452, %v4454, %v4450
        %v4456 = vmul.f32 1.0, %v4455
        %v4457 = vrcp.pop %v3817
        %v4458 = vmul.f32 %v3817, %v4457
        %v4459 = vsub.f32 1.0, %v4458
        %v4460 = vmul.f32 %v4457, %v4459
        %v4461 = vadd.f32 %v4457, %v4460
        %vm4462 = vweird.f32 %v3817
        %vm4463 = vweird.f32 %v4457
        %vm4464 = vmor %vm4462, %vm4463
        %v4465 = vsel %vm4464, %v4457, %v4461
        %v4466 = vand.u32 2147483647, %v3817
        %vm4467 = vcmp.eq.f32.partialorder %v4466, 8.507059e+37
        %v4468 = vand.u32 %v3817, 2147483648
        %v4469 = vor.u32 1.1754944e-38, %v4468
        %v4470 = vsel %vm4467, %v4469, %v4465
        %v4471 = vmul.f32 1.0, %v4470
        %v4472 = vrcp.pop %v3818
        %v4473 = vmul.f32 %v3818, %v4472
        %v4474 = vsub.f32 1.0, %v4473
        %v4475 = vmul.f32 %v4472, %v4474
        %v4476 = vadd.f32 %v4472, %v4475
        %vm4477 = vweird.f32 %v3818
        %vm4478 = vweird.f32 %v4472
        %vm4479 = vmor %vm4477, %vm4478
        %v4480 = vsel %vm4479, %v4472, %v4476
        %v4481 = vand.u32 2147483647, %v3818
        %vm4482 = vcmp.eq.f32.partialorder %v4481, 8.507059e+37
        %v4483 = vand.u32 %v3818, 2147483648
        %v4484 = vor.u32 1.1754944e-38, %v4483
        %v4485 = vsel %vm4482, %v4484, %v4480
        %v4486 = vmul.f32 1.0, %v4485
        %v4487 = vrcp.pop %v3819
        %v4488 = vmul.f32 %v3819, %v4487
        %v4489 = vsub.f32 1.0, %v4488
        %v4490 = vmul.f32 %v4487, %v4489
        %v4491 = vadd.f32 %v4487, %v4490
        %vm4492 = vweird.f32 %v3819
        %vm4493 = vweird.f32 %v4487
        %vm4494 = vmor %vm4492, %vm4493
        %v4495 = vsel %vm4494, %v4487, %v4491
        %v4496 = vand.u32 2147483647, %v3819
        %vm4497 = vcmp.eq.f32.partialorder %v4496, 8.507059e+37
        %v4498 = vand.u32 %v3819, 2147483648
        %v4499 = vor.u32 1.1754944e-38, %v4498
        %v4500 = vsel %vm4497, %v4499, %v4495
        %v4501 = vmul.f32 1.0, %v4500
        %v4502 = vrcp.pop %v3820
        %v4503 = vmul.f32 %v3820, %v4502
        %v4504 = vsub.f32 1.0, %v4503
        %v4505 = vmul.f32 %v4502, %v4504
        %v4506 = vadd.f32 %v4502, %v4505
        %vm4507 = vweird.f32 %v3820
        %vm4508 = vweird.f32 %v4502
        %vm4509 = vmor %vm4507, %vm4508
        %v4510 = vsel %vm4509, %v4502, %v4506
        %v4511 = vand.u32 2147483647, %v3820
        %vm4512 = vcmp.eq.f32.partialorder %v4511, 8.507059e+37
        %v4513 = vand.u32 %v3820, 2147483648
        %v4514 = vor.u32 1.1754944e-38, %v4513
        %v4515 = vsel %vm4512, %v4514, %v4510
        %v4516 = vmul.f32 1.0, %v4515
        %v4517 = vrcp.pop %v3821
        %v4518 = vmul.f32 %v3821, %v4517
        %v4519 = vsub.f32 1.0, %v4518
        %v4520 = vmul.f32 %v4517, %v4519
        %v4521 = vadd.f32 %v4517, %v4520
        %vm4522 = vweird.f32 %v3821
        %vm4523 = vweird.f32 %v4517
        %vm4524 = vmor %vm4522, %vm4523
        %v4525 = vsel %vm4524, %v4517, %v4521
        %v4526 = vand.u32 2147483647, %v3821
        %vm4527 = vcmp.eq.f32.partialorder %v4526, 8.507059e+37
        %v4528 = vand.u32 %v3821, 2147483648
        %v4529 = vor.u32 1.1754944e-38, %v4528
        %v4530 = vsel %vm4527, %v4529, %v4525
        %v4531 = vmul.f32 1.0, %v4530
        %v4532 = vrcp.pop %v3822
        %v4533 = vmul.f32 %v3822, %v4532
        %v4534 = vsub.f32 1.0, %v4533
        %v4535 = vmul.f32 %v4532, %v4534
        %v4536 = vadd.f32 %v4532, %v4535
        %vm4537 = vweird.f32 %v3822
        %vm4538 = vweird.f32 %v4532
        %vm4539 = vmor %vm4537, %vm4538
        %v4540 = vsel %vm4539, %v4532, %v4536
        %v4541 = vand.u32 2147483647, %v3822
        %vm4542 = vcmp.eq.f32.partialorder %v4541, 8.507059e+37
        %v4543 = vand.u32 %v3822, 2147483648
        %v4544 = vor.u32 1.1754944e-38, %v4543
        %v4545 = vsel %vm4542, %v4544, %v4540
        %v4546 = vmul.f32 1.0, %v4545
        %v4547 = vrcp.pop %v3823
        %v4548 = vmul.f32 %v3823, %v4547
        %v4549 = vsub.f32 1.0, %v4548
        %v4550 = vmul.f32 %v4547, %v4549
        %v4551 = vadd.f32 %v4547, %v4550
        %vm4552 = vweird.f32 %v3823
        %vm4553 = vweird.f32 %v4547
        %vm4554 = vmor %vm4552, %vm4553
        %v4555 = vsel %vm4554, %v4547, %v4551
        %v4556 = vand.u32 2147483647, %v3823
        %vm4557 = vcmp.eq.f32.partialorder %v4556, 8.507059e+37
        %v4558 = vand.u32 %v3823, 2147483648
        %v4559 = vor.u32 1.1754944e-38, %v4558
        %v4560 = vsel %vm4557, %v4559, %v4555
        %v4561 = vmul.f32 1.0, %v4560
        %v4562 = vrcp.pop %v3824
        %v4563 = vmul.f32 %v3824, %v4562
        %v4564 = vsub.f32 1.0, %v4563
        %v4565 = vmul.f32 %v4562, %v4564
        %v4566 = vadd.f32 %v4562, %v4565
        %vm4567 = vweird.f32 %v3824
        %vm4568 = vweird.f32 %v4562
        %vm4569 = vmor %vm4567, %vm4568
        %v4570 = vsel %vm4569, %v4562, %v4566
        %v4571 = vand.u32 2147483647, %v3824
        %vm4572 = vcmp.eq.f32.partialorder %v4571, 8.507059e+37
        %v4573 = vand.u32 %v3824, 2147483648
        %v4574 = vor.u32 1.1754944e-38, %v4573
        %v4575 = vsel %vm4572, %v4574, %v4570
        %v4576 = vmul.f32 1.0, %v4575
        %v4577 = vrcp.pop %v3825
        %v4578 = vmul.f32 %v3825, %v4577
        %v4579 = vsub.f32 1.0, %v4578
        %v4580 = vmul.f32 %v4577, %v4579
        %v4581 = vadd.f32 %v4577, %v4580
        %vm4582 = vweird.f32 %v3825
        %vm4583 = vweird.f32 %v4577
        %vm4584 = vmor %vm4582, %vm4583
        %v4585 = vsel %vm4584, %v4577, %v4581
        %v4586 = vand.u32 2147483647, %v3825
        %vm4587 = vcmp.eq.f32.partialorder %v4586, 8.507059e+37
        %v4588 = vand.u32 %v3825, 2147483648
        %v4589 = vor.u32 1.1754944e-38, %v4588
        %v4590 = vsel %vm4587, %v4589, %v4585
        %v4591 = vmul.f32 1.0, %v4590
        %v4592 = vrcp.pop %v3826
        %v4593 = vmul.f32 %v3826, %v4592
        %v4594 = vsub.f32 1.0, %v4593
        %v4595 = vmul.f32 %v4592, %v4594
        %v4596 = vadd.f32 %v4592, %v4595
        %vm4597 = vweird.f32 %v3826
        %vm4598 = vweird.f32 %v4592
        %vm4599 = vmor %vm4597, %vm4598
        %v4600 = vsel %vm4599, %v4592, %v4596
        %v4601 = vand.u32 2147483647, %v3826
        %vm4602 = vcmp.eq.f32.partialorder %v4601, 8.507059e+37
        %v4603 = vand.u32 %v3826, 2147483648
        %v4604 = vor.u32 1.1754944e-38, %v4603
        %v4605 = vsel %vm4602, %v4604, %v4600
        %v4606 = vmul.f32 1.0, %v4605
        %v4607 = vrcp.pop %v3827
        %v4608 = vmul.f32 %v3827, %v4607
        %v4609 = vsub.f32 1.0, %v4608
        %v4610 = vmul.f32 %v4607, %v4609
        %v4611 = vadd.f32 %v4607, %v4610
        %vm4612 = vweird.f32 %v3827
        %vm4613 = vweird.f32 %v4607
        %vm4614 = vmor %vm4612, %vm4613
        %v4615 = vsel %vm4614, %v4607, %v4611
        %v4616 = vand.u32 2147483647, %v3827
        %vm4617 = vcmp.eq.f32.partialorder %v4616, 8.507059e+37
        %v4618 = vand.u32 %v3827, 2147483648
        %v4619 = vor.u32 1.1754944e-38, %v4618
        %v4620 = vsel %vm4617, %v4619, %v4615
        %v4621 = vmul.f32 1.0, %v4620
        %v4622 = vrcp.pop %v3828
        %v4623 = vmul.f32 %v3828, %v4622
        %v4624 = vsub.f32 1.0, %v4623
        %v4625 = vmul.f32 %v4622, %v4624
        %v4626 = vadd.f32 %v4622, %v4625
        %vm4627 = vweird.f32 %v3828
        %vm4628 = vweird.f32 %v4622
        %vm4629 = vmor %vm4627, %vm4628
        %v4630 = vsel %vm4629, %v4622, %v4626
        %v4631 = vand.u32 2147483647, %v3828
        %vm4632 = vcmp.eq.f32.partialorder %v4631, 8.507059e+37
        %v4633 = vand.u32 %v3828, 2147483648
        %v4634 = vor.u32 1.1754944e-38, %v4633
        %v4635 = vsel %vm4632, %v4634, %v4630
        %v4636 = vmul.f32 1.0, %v4635
        %v4637 = vrcp.pop %v3829
        %v4638 = vmul.f32 %v3829, %v4637
        %v4639 = vsub.f32 1.0, %v4638
        %v4640 = vmul.f32 %v4637, %v4639
        %v4641 = vadd.f32 %v4637, %v4640
        %vm4642 = vweird.f32 %v3829
        %vm4643 = vweird.f32 %v4637
        %vm4644 = vmor %vm4642, %vm4643
        %v4645 = vsel %vm4644, %v4637, %v4641
        %v4646 = vand.u32 2147483647, %v3829
        %vm4647 = vcmp.eq.f32.partialorder %v4646, 8.507059e+37
        %v4648 = vand.u32 %v3829, 2147483648
        %v4649 = vor.u32 1.1754944e-38, %v4648
        %v4650 = vsel %vm4647, %v4649, %v4645
        %v4651 = vmul.f32 1.0, %v4650
        %v4652 = vrcp.pop %v3830
        %v4653 = vmul.f32 %v3830, %v4652
        %v4654 = vsub.f32 1.0, %v4653
        %v4655 = vmul.f32 %v4652, %v4654
        %v4656 = vadd.f32 %v4652, %v4655
        %vm4657 = vweird.f32 %v3830
        %vm4658 = vweird.f32 %v4652
        %vm4659 = vmor %vm4657, %vm4658
        %v4660 = vsel %vm4659, %v4652, %v4656
        %v4661 = vand.u32 2147483647, %v3830
        %vm4662 = vcmp.eq.f32.partialorder %v4661, 8.507059e+37
        %v4663 = vand.u32 %v3830, 2147483648
        %v4664 = vor.u32 1.1754944e-38, %v4663
        %v4665 = vsel %vm4662, %v4664, %v4660
        %v4666 = vmul.f32 1.0, %v4665
        %v4667 = vrcp.pop %v3831
        %v4668 = vmul.f32 %v3831, %v4667
        %v4669 = vsub.f32 1.0, %v4668
        %v4670 = vmul.f32 %v4667, %v4669
        %v4671 = vadd.f32 %v4667, %v4670
        %vm4672 = vweird.f32 %v3831
        %vm4673 = vweird.f32 %v4667
        %vm4674 = vmor %vm4672, %vm4673
        %v4675 = vsel %vm4674, %v4667, %v4671
        %v4676 = vand.u32 2147483647, %v3831
        %vm4677 = vcmp.eq.f32.partialorder %v4676, 8.507059e+37
        %v4678 = vand.u32 %v3831, 2147483648
        %v4679 = vor.u32 1.1754944e-38, %v4678
        %v4680 = vsel %vm4677, %v4679, %v4675
        %v4681 = vmul.f32 1.0, %v4680
        %v4682 = vrcp.pop %v3832
        %v4683 = vmul.f32 %v3832, %v4682
        %v4684 = vsub.f32 1.0, %v4683
        %v4685 = vmul.f32 %v4682, %v4684
        %v4686 = vadd.f32 %v4682, %v4685
        %vm4687 = vweird.f32 %v3832
        %vm4688 = vweird.f32 %v4682
        %vm4689 = vmor %vm4687, %vm4688
        %v4690 = vsel %vm4689, %v4682, %v4686
        %v4691 = vand.u32 2147483647, %v3832
        %vm4692 = vcmp.eq.f32.partialorder %v4691, 8.507059e+37
        %v4693 = vand.u32 %v3832, 2147483648
        %v4694 = vor.u32 1.1754944e-38, %v4693
        %v4695 = vsel %vm4692, %v4694, %v4690
        %v4696 = vmul.f32 1.0, %v4695
        %v4697 = vrcp.pop %v3833
        %v4698 = vmul.f32 %v3833, %v4697
        %v4699 = vsub.f32 1.0, %v4698
        %v4700 = vmul.f32 %v4697, %v4699
        %v4701 = vadd.f32 %v4697, %v4700
        %vm4702 = vweird.f32 %v3833
        %vm4703 = vweird.f32 %v4697
        %vm4704 = vmor %vm4702, %vm4703
        %v4705 = vsel %vm4704, %v4697, %v4701
        %v4706 = vand.u32 2147483647, %v3833
        %vm4707 = vcmp.eq.f32.partialorder %v4706, 8.507059e+37
        %v4708 = vand.u32 %v3833, 2147483648
        %v4709 = vor.u32 1.1754944e-38, %v4708
        %v4710 = vsel %vm4707, %v4709, %v4705
        %v4711 = vmul.f32 1.0, %v4710
        %v4712 = vrcp.pop %v3834
        %v4713 = vmul.f32 %v3834, %v4712
        %v4714 = vsub.f32 1.0, %v4713
        %v4715 = vmul.f32 %v4712, %v4714
        %v4716 = vadd.f32 %v4712, %v4715
        %vm4717 = vweird.f32 %v3834
        %vm4718 = vweird.f32 %v4712
        %vm4719 = vmor %vm4717, %vm4718
        %v4720 = vsel %vm4719, %v4712, %v4716
        %v4721 = vand.u32 2147483647, %v3834
        %vm4722 = vcmp.eq.f32.partialorder %v4721, 8.507059e+37
        %v4723 = vand.u32 %v3834, 2147483648
        %v4724 = vor.u32 1.1754944e-38, %v4723
        %v4725 = vsel %vm4722, %v4724, %v4720
        %v4726 = vmul.f32 1.0, %v4725
        %v4727 = vrcp.pop %v3835
        %v4728 = vmul.f32 %v3835, %v4727
        %v4729 = vsub.f32 1.0, %v4728
        %v4730 = vmul.f32 %v4727, %v4729
        %v4731 = vadd.f32 %v4727, %v4730
        %vm4732 = vweird.f32 %v3835
        %vm4733 = vweird.f32 %v4727
        %vm4734 = vmor %vm4732, %vm4733
        %v4735 = vsel %vm4734, %v4727, %v4731
        %v4736 = vand.u32 2147483647, %v3835
        %vm4737 = vcmp.eq.f32.partialorder %v4736, 8.507059e+37
        %v4738 = vand.u32 %v3835, 2147483648
        %v4739 = vor.u32 1.1754944e-38, %v4738
        %v4740 = vsel %vm4737, %v4739, %v4735
        %v4741 = vmul.f32 1.0, %v4740
        %v4742 = vrcp.pop %v3836
        %v4743 = vmul.f32 %v3836, %v4742
        %v4744 = vsub.f32 1.0, %v4743
        %v4745 = vmul.f32 %v4742, %v4744
        %v4746 = vadd.f32 %v4742, %v4745
        %vm4747 = vweird.f32 %v3836
        %vm4748 = vweird.f32 %v4742
        %vm4749 = vmor %vm4747, %vm4748
        %v4750 = vsel %vm4749, %v4742, %v4746
        %v4751 = vand.u32 2147483647, %v3836
        %vm4752 = vcmp.eq.f32.partialorder %v4751, 8.507059e+37
        %v4753 = vand.u32 %v3836, 2147483648
        %v4754 = vor.u32 1.1754944e-38, %v4753
        %v4755 = vsel %vm4752, %v4754, %v4750
        %v4756 = vmul.f32 1.0, %v4755
        %v4757 = vrcp.pop %v3837
        %v4758 = vmul.f32 %v3837, %v4757
        %v4759 = vsub.f32 1.0, %v4758
        %v4760 = vmul.f32 %v4757, %v4759
        %v4761 = vadd.f32 %v4757, %v4760
        %vm4762 = vweird.f32 %v3837
        %vm4763 = vweird.f32 %v4757
        %vm4764 = vmor %vm4762, %vm4763
        %v4765 = vsel %vm4764, %v4757, %v4761
        %v4766 = vand.u32 2147483647, %v3837
        %vm4767 = vcmp.eq.f32.partialorder %v4766, 8.507059e+37
        %v4768 = vand.u32 %v3837, 2147483648
        %v4769 = vor.u32 1.1754944e-38, %v4768
        %v4770 = vsel %vm4767, %v4769, %v4765
        %v4771 = vmul.f32 1.0, %v4770
        %v4772 = vrcp.pop %v3838
        %v4773 = vmul.f32 %v3838, %v4772
        %v4774 = vsub.f32 1.0, %v4773
        %v4775 = vmul.f32 %v4772, %v4774
        %v4776 = vadd.f32 %v4772, %v4775
        %vm4777 = vweird.f32 %v3838
        %vm4778 = vweird.f32 %v4772
        %vm4779 = vmor %vm4777, %vm4778
        %v4780 = vsel %vm4779, %v4772, %v4776
        %v4781 = vand.u32 2147483647, %v3838
        %vm4782 = vcmp.eq.f32.partialorder %v4781, 8.507059e+37
        %v4783 = vand.u32 %v3838, 2147483648
        %v4784 = vor.u32 1.1754944e-38, %v4783
        %v4785 = vsel %vm4782, %v4784, %v4780
        %v4786 = vmul.f32 1.0, %v4785
        %v4787 = vrcp.pop %v3839
        %v4788 = vmul.f32 %v3839, %v4787
        %v4789 = vsub.f32 1.0, %v4788
        %v4790 = vmul.f32 %v4787, %v4789
        %v4791 = vadd.f32 %v4787, %v4790
        %vm4792 = vweird.f32 %v3839
        %vm4793 = vweird.f32 %v4787
        %vm4794 = vmor %vm4792, %vm4793
        %v4795 = vsel %vm4794, %v4787, %v4791
        %v4796 = vand.u32 2147483647, %v3839
        %vm4797 = vcmp.eq.f32.partialorder %v4796, 8.507059e+37
        %v4798 = vand.u32 %v3839, 2147483648
        %v4799 = vor.u32 1.1754944e-38, %v4798
        %v4800 = vsel %vm4797, %v4799, %v4795
        %v4801 = vmul.f32 1.0, %v4800
        %v4802 = vrcp.pop %v3840
        %v4803 = vmul.f32 %v3840, %v4802
        %v4804 = vsub.f32 1.0, %v4803
        %v4805 = vmul.f32 %v4802, %v4804
        %v4806 = vadd.f32 %v4802, %v4805
        %vm4807 = vweird.f32 %v3840
        %vm4808 = vweird.f32 %v4802
        %vm4809 = vmor %vm4807, %vm4808
        %v4810 = vsel %vm4809, %v4802, %v4806
        %v4811 = vand.u32 2147483647, %v3840
        %vm4812 = vcmp.eq.f32.partialorder %v4811, 8.507059e+37
        %v4813 = vand.u32 %v3840, 2147483648
        %v4814 = vor.u32 1.1754944e-38, %v4813
        %v4815 = vsel %vm4812, %v4814, %v4810
        %v4816 = vmul.f32 1.0, %v4815
        %v4817 = vrcp.pop %v3841
        %v4818 = vmul.f32 %v3841, %v4817
        %v4819 = vsub.f32 1.0, %v4818
        %v4820 = vmul.f32 %v4817, %v4819
        %v4821 = vadd.f32 %v4817, %v4820
        %vm4822 = vweird.f32 %v3841
        %vm4823 = vweird.f32 %v4817
        %vm4824 = vmor %vm4822, %vm4823
        %v4825 = vsel %vm4824, %v4817, %v4821
        %v4826 = vand.u32 2147483647, %v3841
        %vm4827 = vcmp.eq.f32.partialorder %v4826, 8.507059e+37
        %v4828 = vand.u32 %v3841, 2147483648
        %v4829 = vor.u32 1.1754944e-38, %v4828
        %v4830 = vsel %vm4827, %v4829, %v4825
        %v4831 = vmul.f32 1.0, %v4830
        %v4832 = vrcp.pop %v3842
        %v4833 = vmul.f32 %v3842, %v4832
        %v4834 = vsub.f32 1.0, %v4833
        %v4835 = vmul.f32 %v4832, %v4834
        %v4836 = vadd.f32 %v4832, %v4835
        %vm4837 = vweird.f32 %v3842
        %vm4838 = vweird.f32 %v4832
        %vm4839 = vmor %vm4837, %vm4838
        %v4840 = vsel %vm4839, %v4832, %v4836
        %v4841 = vand.u32 2147483647, %v3842
        %vm4842 = vcmp.eq.f32.partialorder %v4841, 8.507059e+37
        %v4843 = vand.u32 %v3842, 2147483648
        %v4844 = vor.u32 1.1754944e-38, %v4843
        %v4845 = vsel %vm4842, %v4844, %v4840
        %v4846 = vmul.f32 1.0, %v4845
        %v4847 = vrcp.pop %v3843
        %v4848 = vmul.f32 %v3843, %v4847
        %v4849 = vsub.f32 1.0, %v4848
        %v4850 = vmul.f32 %v4847, %v4849
        %v4851 = vadd.f32 %v4847, %v4850
        %vm4852 = vweird.f32 %v3843
        %vm4853 = vweird.f32 %v4847
        %vm4854 = vmor %vm4852, %vm4853
        %v4855 = vsel %vm4854, %v4847, %v4851
        %v4856 = vand.u32 2147483647, %v3843
        %vm4857 = vcmp.eq.f32.partialorder %v4856, 8.507059e+37
        %v4858 = vand.u32 %v3843, 2147483648
        %v4859 = vor.u32 1.1754944e-38, %v4858
        %v4860 = vsel %vm4857, %v4859, %v4855
        %v4861 = vmul.f32 1.0, %v4860
        %v4862 = vrcp.pop %v3844
        %v4863 = vmul.f32 %v3844, %v4862
        %v4864 = vsub.f32 1.0, %v4863
        %v4865 = vmul.f32 %v4862, %v4864
        %v4866 = vadd.f32 %v4862, %v4865
        %vm4867 = vweird.f32 %v3844
        %vm4868 = vweird.f32 %v4862
        %vm4869 = vmor %vm4867, %vm4868
        %v4870 = vsel %vm4869, %v4862, %v4866
        %v4871 = vand.u32 2147483647, %v3844
        %vm4872 = vcmp.eq.f32.partialorder %v4871, 8.507059e+37
        %v4873 = vand.u32 %v3844, 2147483648
        %v4874 = vor.u32 1.1754944e-38, %v4873
        %v4875 = vsel %vm4872, %v4874, %v4870
        %v4876 = vmul.f32 1.0, %v4875
        %v4877 = vrcp.pop %v3845
        %v4878 = vmul.f32 %v3845, %v4877
        %v4879 = vsub.f32 1.0, %v4878
        %v4880 = vmul.f32 %v4877, %v4879
        %v4881 = vadd.f32 %v4877, %v4880
        %vm4882 = vweird.f32 %v3845
        %vm4883 = vweird.f32 %v4877
        %vm4884 = vmor %vm4882, %vm4883
        %v4885 = vsel %vm4884, %v4877, %v4881
        %v4886 = vand.u32 2147483647, %v3845
        %vm4887 = vcmp.eq.f32.partialorder %v4886, 8.507059e+37
        %v4888 = vand.u32 %v3845, 2147483648
        %v4889 = vor.u32 1.1754944e-38, %v4888
        %v4890 = vsel %vm4887, %v4889, %v4885
        %v4891 = vmul.f32 1.0, %v4890
        %v4892 = vrcp.pop %v3846
        %v4893 = vmul.f32 %v3846, %v4892
        %v4894 = vsub.f32 1.0, %v4893
        %v4895 = vmul.f32 %v4892, %v4894
        %v4896 = vadd.f32 %v4892, %v4895
        %vm4897 = vweird.f32 %v3846
        %vm4898 = vweird.f32 %v4892
        %vm4899 = vmor %vm4897, %vm4898
        %v4900 = vsel %vm4899, %v4892, %v4896
        %v4901 = vand.u32 2147483647, %v3846
        %vm4902 = vcmp.eq.f32.partialorder %v4901, 8.507059e+37
        %v4903 = vand.u32 %v3846, 2147483648
        %v4904 = vor.u32 1.1754944e-38, %v4903
        %v4905 = vsel %vm4902, %v4904, %v4900
        %v4906 = vmul.f32 1.0, %v4905
        %v4907 = vrcp.pop %v3847
        %v4908 = vmul.f32 %v3847, %v4907
        %v4909 = vsub.f32 1.0, %v4908
        %v4910 = vmul.f32 %v4907, %v4909
        %v4911 = vadd.f32 %v4907, %v4910
        %vm4912 = vweird.f32 %v3847
        %vm4913 = vweird.f32 %v4907
        %vm4914 = vmor %vm4912, %vm4913
        %v4915 = vsel %vm4914, %v4907, %v4911
        %v4916 = vand.u32 2147483647, %v3847
        %vm4917 = vcmp.eq.f32.partialorder %v4916, 8.507059e+37
        %v4918 = vand.u32 %v3847, 2147483648
        %v4919 = vor.u32 1.1754944e-38, %v4918
        %v4920 = vsel %vm4917, %v4919, %v4915
        %v4921 = vmul.f32 1.0, %v4920
        %v4922 = vrcp.pop %v3848
        %v4923 = vmul.f32 %v3848, %v4922
        %v4924 = vsub.f32 1.0, %v4923
        %v4925 = vmul.f32 %v4922, %v4924
        %v4926 = vadd.f32 %v4922, %v4925
        %vm4927 = vweird.f32 %v3848
        %vm4928 = vweird.f32 %v4922
        %vm4929 = vmor %vm4927, %vm4928
        %v4930 = vsel %vm4929, %v4922, %v4926
        %v4931 = vand.u32 2147483647, %v3848
        %vm4932 = vcmp.eq.f32.partialorder %v4931, 8.507059e+37
        %v4933 = vand.u32 %v3848, 2147483648
        %v4934 = vor.u32 1.1754944e-38, %v4933
        %v4935 = vsel %vm4932, %v4934, %v4930
        %v4936 = vmul.f32 1.0, %v4935
        %v4937 = vrcp.pop %v3849
        %v4938 = vmul.f32 %v3849, %v4937
        %v4939 = vsub.f32 1.0, %v4938
        %v4940 = vmul.f32 %v4937, %v4939
        %v4941 = vadd.f32 %v4937, %v4940
        %vm4942 = vweird.f32 %v3849
        %vm4943 = vweird.f32 %v4937
        %vm4944 = vmor %vm4942, %vm4943
        %v4945 = vsel %vm4944, %v4937, %v4941
        %v4946 = vand.u32 2147483647, %v3849
        %vm4947 = vcmp.eq.f32.partialorder %v4946, 8.507059e+37
        %v4948 = vand.u32 %v3849, 2147483648
        %v4949 = vor.u32 1.1754944e-38, %v4948
        %v4950 = vsel %vm4947, %v4949, %v4945
        %v4951 = vmul.f32 1.0, %v4950
        %v4952 = vrcp.pop %v3850
        %v4953 = vmul.f32 %v3850, %v4952
        %v4954 = vsub.f32 1.0, %v4953
        %v4955 = vmul.f32 %v4952, %v4954
        %v4956 = vadd.f32 %v4952, %v4955
        %vm4957 = vweird.f32 %v3850
        %vm4958 = vweird.f32 %v4952
        %vm4959 = vmor %vm4957, %vm4958
        %v4960 = vsel %vm4959, %v4952, %v4956
        %v4961 = vand.u32 2147483647, %v3850
        %vm4962 = vcmp.eq.f32.partialorder %v4961, 8.507059e+37
        %v4963 = vand.u32 %v3850, 2147483648
        %v4964 = vor.u32 1.1754944e-38, %v4963
        %v4965 = vsel %vm4962, %v4964, %v4960
        %v4966 = vmul.f32 1.0, %v4965
        %v4967 = vrcp.pop %v3851
        %v4968 = vmul.f32 %v3851, %v4967
        %v4969 = vsub.f32 1.0, %v4968
        %v4970 = vmul.f32 %v4967, %v4969
        %v4971 = vadd.f32 %v4967, %v4970
        %vm4972 = vweird.f32 %v3851
        %vm4973 = vweird.f32 %v4967
        %vm4974 = vmor %vm4972, %vm4973
        %v4975 = vsel %vm4974, %v4967, %v4971
        %v4976 = vand.u32 2147483647, %v3851
        %vm4977 = vcmp.eq.f32.partialorder %v4976, 8.507059e+37
        %v4978 = vand.u32 %v3851, 2147483648
        %v4979 = vor.u32 1.1754944e-38, %v4978
        %v4980 = vsel %vm4977, %v4979, %v4975
        %v4981 = vmul.f32 1.0, %v4980
        %v4982 = vrcp.pop %v3852
        %v4983 = vmul.f32 %v3852, %v4982
        %v4984 = vsub.f32 1.0, %v4983
        %v4985 = vmul.f32 %v4982, %v4984
        %v4986 = vadd.f32 %v4982, %v4985
        %vm4987 = vweird.f32 %v3852
        %vm4988 = vweird.f32 %v4982
        %vm4989 = vmor %vm4987, %vm4988
        %v4990 = vsel %vm4989, %v4982, %v4986
        %v4991 = vand.u32 2147483647, %v3852
        %vm4992 = vcmp.eq.f32.partialorder %v4991, 8.507059e+37
        %v4993 = vand.u32 %v3852, 2147483648
        %v4994 = vor.u32 1.1754944e-38, %v4993
        %v4995 = vsel %vm4992, %v4994, %v4990
        %v4996 = vmul.f32 1.0, %v4995
        %v4997 = vrcp.pop %v3853
        %v4998 = vmul.f32 %v3853, %v4997
        %v4999 = vsub.f32 1.0, %v4998
        %v5000 = vmul.f32 %v4997, %v4999
        %v5001 = vadd.f32 %v4997, %v5000
        %vm5002 = vweird.f32 %v3853
        %vm5003 = vweird.f32 %v4997
        %vm5004 = vmor %vm5002, %vm5003
        %v5005 = vsel %vm5004, %v4997, %v5001
        %v5006 = vand.u32 2147483647, %v3853
        %vm5007 = vcmp.eq.f32.partialorder %v5006, 8.507059e+37
        %v5008 = vand.u32 %v3853, 2147483648
        %v5009 = vor.u32 1.1754944e-38, %v5008
        %v5010 = vsel %vm5007, %v5009, %v5005
        %v5011 = vmul.f32 1.0, %v5010
        %v5012 = vrcp.pop %v3854
        %v5013 = vmul.f32 %v3854, %v5012
        %v5014 = vsub.f32 1.0, %v5013
        %v5015 = vmul.f32 %v5012, %v5014
        %v5016 = vadd.f32 %v5012, %v5015
        %vm5017 = vweird.f32 %v3854
        %vm5018 = vweird.f32 %v5012
        %vm5019 = vmor %vm5017, %vm5018
        %v5020 = vsel %vm5019, %v5012, %v5016
        %v5021 = vand.u32 2147483647, %v3854
        %vm5022 = vcmp.eq.f32.partialorder %v5021, 8.507059e+37
        %v5023 = vand.u32 %v3854, 2147483648
        %v5024 = vor.u32 1.1754944e-38, %v5023
        %v5025 = vsel %vm5022, %v5024, %v5020
        %v5026 = vmul.f32 1.0, %v5025
        %v5027 = vrcp.pop %v3855
        %v5028 = vmul.f32 %v3855, %v5027
        %v5029 = vsub.f32 1.0, %v5028
        %v5030 = vmul.f32 %v5027, %v5029
        %v5031 = vadd.f32 %v5027, %v5030
        %vm5032 = vweird.f32 %v3855
        %vm5033 = vweird.f32 %v5027
        %vm5034 = vmor %vm5032, %vm5033
        %v5035 = vsel %vm5034, %v5027, %v5031
        %v5036 = vand.u32 2147483647, %v3855
        %vm5037 = vcmp.eq.f32.partialorder %v5036, 8.507059e+37
        %v5038 = vand.u32 %v3855, 2147483648
        %v5039 = vor.u32 1.1754944e-38, %v5038
        %v5040 = vsel %vm5037, %v5039, %v5035
        %v5041 = vmul.f32 1.0, %v5040
        %v5042 = vrcp.pop %v3856
        %v5043 = vmul.f32 %v3856, %v5042
        %v5044 = vsub.f32 1.0, %v5043
        %v5045 = vmul.f32 %v5042, %v5044
        %v5046 = vadd.f32 %v5042, %v5045
        %vm5047 = vweird.f32 %v3856
        %vm5048 = vweird.f32 %v5042
        %vm5049 = vmor %vm5047, %vm5048
        %v5050 = vsel %vm5049, %v5042, %v5046
        %v5051 = vand.u32 2147483647, %v3856
        %vm5052 = vcmp.eq.f32.partialorder %v5051, 8.507059e+37
        %v5053 = vand.u32 %v3856, 2147483648
        %v5054 = vor.u32 1.1754944e-38, %v5053
        %v5055 = vsel %vm5052, %v5054, %v5050
        %v5056 = vmul.f32 1.0, %v5055
        %v5057 = vrcp.pop %v3857
        %v5058 = vmul.f32 %v3857, %v5057
        %v5059 = vsub.f32 1.0, %v5058
        %v5060 = vmul.f32 %v5057, %v5059
        %v5061 = vadd.f32 %v5057, %v5060
        %vm5062 = vweird.f32 %v3857
        %vm5063 = vweird.f32 %v5057
        %vm5064 = vmor %vm5062, %vm5063
        %v5065 = vsel %vm5064, %v5057, %v5061
        %v5066 = vand.u32 2147483647, %v3857
        %vm5067 = vcmp.eq.f32.partialorder %v5066, 8.507059e+37
        %v5068 = vand.u32 %v3857, 2147483648
        %v5069 = vor.u32 1.1754944e-38, %v5068
        %v5070 = vsel %vm5067, %v5069, %v5065
        %v5071 = vmul.f32 1.0, %v5070
        %v5072 = vrcp.pop %v3858
        %v5073 = vmul.f32 %v3858, %v5072
        %v5074 = vsub.f32 1.0, %v5073
        %v5075 = vmul.f32 %v5072, %v5074
        %v5076 = vadd.f32 %v5072, %v5075
        %vm5077 = vweird.f32 %v3858
        %vm5078 = vweird.f32 %v5072
        %vm5079 = vmor %vm5077, %vm5078
        %v5080 = vsel %vm5079, %v5072, %v5076
        %v5081 = vand.u32 2147483647, %v3858
        %vm5082 = vcmp.eq.f32.partialorder %v5081, 8.507059e+37
        %v5083 = vand.u32 %v3858, 2147483648
        %v5084 = vor.u32 1.1754944e-38, %v5083
        %v5085 = vsel %vm5082, %v5084, %v5080
        %v5086 = vmul.f32 1.0, %v5085
        %v5087 = vrcp.pop %v3859
        %v5088 = vmul.f32 %v3859, %v5087
        %v5089 = vsub.f32 1.0, %v5088
        %v5090 = vmul.f32 %v5087, %v5089
        %v5091 = vadd.f32 %v5087, %v5090
        %vm5092 = vweird.f32 %v3859
        %vm5093 = vweird.f32 %v5087
        %vm5094 = vmor %vm5092, %vm5093
        %v5095 = vsel %vm5094, %v5087, %v5091
        %v5096 = vand.u32 2147483647, %v3859
        %vm5097 = vcmp.eq.f32.partialorder %v5096, 8.507059e+37
        %v5098 = vand.u32 %v3859, 2147483648
        %v5099 = vor.u32 1.1754944e-38, %v5098
        %v5100 = vsel %vm5097, %v5099, %v5095
        %v5101 = vmul.f32 1.0, %v5100
        %v5102 = vrcp.pop %v3860
        %v5103 = vmul.f32 %v3860, %v5102
        %v5104 = vsub.f32 1.0, %v5103
        %v5105 = vmul.f32 %v5102, %v5104
        %v5106 = vadd.f32 %v5102, %v5105
        %vm5107 = vweird.f32 %v3860
        %vm5108 = vweird.f32 %v5102
        %vm5109 = vmor %vm5107, %vm5108
        %v5110 = vsel %vm5109, %v5102, %v5106
        %v5111 = vand.u32 2147483647, %v3860
        %vm5112 = vcmp.eq.f32.partialorder %v5111, 8.507059e+37
        %v5113 = vand.u32 %v3860, 2147483648
        %v5114 = vor.u32 1.1754944e-38, %v5113
        %v5115 = vsel %vm5112, %v5114, %v5110
        %v5116 = vmul.f32 1.0, %v5115
        %v5117 = vrcp.pop %v3861
        %v5118 = vmul.f32 %v3861, %v5117
        %v5119 = vsub.f32 1.0, %v5118
        %v5120 = vmul.f32 %v5117, %v5119
        %v5121 = vadd.f32 %v5117, %v5120
        %vm5122 = vweird.f32 %v3861
        %vm5123 = vweird.f32 %v5117
        %vm5124 = vmor %vm5122, %vm5123
        %v5125 = vsel %vm5124, %v5117, %v5121
        %v5126 = vand.u32 2147483647, %v3861
        %vm5127 = vcmp.eq.f32.partialorder %v5126, 8.507059e+37
        %v5128 = vand.u32 %v3861, 2147483648
        %v5129 = vor.u32 1.1754944e-38, %v5128
        %v5130 = vsel %vm5127, %v5129, %v5125
        %v5131 = vmul.f32 1.0, %v5130
        %v5132 = vrcp.pop %v3862
        %v5133 = vmul.f32 %v3862, %v5132
        %v5134 = vsub.f32 1.0, %v5133
        %v5135 = vmul.f32 %v5132, %v5134
        %v5136 = vadd.f32 %v5132, %v5135
        %vm5137 = vweird.f32 %v3862
        %vm5138 = vweird.f32 %v5132
        %vm5139 = vmor %vm5137, %vm5138
        %v5140 = vsel %vm5139, %v5132, %v5136
        %v5141 = vand.u32 2147483647, %v3862
        %vm5142 = vcmp.eq.f32.partialorder %v5141, 8.507059e+37
        %v5143 = vand.u32 %v3862, 2147483648
        %v5144 = vor.u32 1.1754944e-38, %v5143
        %v5145 = vsel %vm5142, %v5144, %v5140
        %v5146 = vmul.f32 1.0, %v5145
        %v5147 = vrcp.pop %v3863
        %v5148 = vmul.f32 %v3863, %v5147
        %v5149 = vsub.f32 1.0, %v5148
        %v5150 = vmul.f32 %v5147, %v5149
        %v5151 = vadd.f32 %v5147, %v5150
        %vm5152 = vweird.f32 %v3863
        %vm5153 = vweird.f32 %v5147
        %vm5154 = vmor %vm5152, %vm5153
        %v5155 = vsel %vm5154, %v5147, %v5151
        %v5156 = vand.u32 2147483647, %v3863
        %vm5157 = vcmp.eq.f32.partialorder %v5156, 8.507059e+37
        %v5158 = vand.u32 %v3863, 2147483648
        %v5159 = vor.u32 1.1754944e-38, %v5158
        %v5160 = vsel %vm5157, %v5159, %v5155
        %v5161 = vmul.f32 1.0, %v5160
        %v5162 = vrcp.pop %v3864
        %v5163 = vmul.f32 %v3864, %v5162
        %v5164 = vsub.f32 1.0, %v5163
        %v5165 = vmul.f32 %v5162, %v5164
        %v5166 = vadd.f32 %v5162, %v5165
        %vm5167 = vweird.f32 %v3864
        %vm5168 = vweird.f32 %v5162
        %vm5169 = vmor %vm5167, %vm5168
        %v5170 = vsel %vm5169, %v5162, %v5166
        %v5171 = vand.u32 2147483647, %v3864
        %vm5172 = vcmp.eq.f32.partialorder %v5171, 8.507059e+37
        %v5173 = vand.u32 %v3864, 2147483648
        %v5174 = vor.u32 1.1754944e-38, %v5173
        %v5175 = vsel %vm5172, %v5174, %v5170
        %v5176 = vmul.f32 1.0, %v5175
        %v5177 = vrcp.pop %v3865
        %v5178 = vmul.f32 %v3865, %v5177
        %v5179 = vsub.f32 1.0, %v5178
        %v5180 = vmul.f32 %v5177, %v5179
        %v5181 = vadd.f32 %v5177, %v5180
        %vm5182 = vweird.f32 %v3865
        %vm5183 = vweird.f32 %v5177
        %vm5184 = vmor %vm5182, %vm5183
        %v5185 = vsel %vm5184, %v5177, %v5181
        %v5186 = vand.u32 2147483647, %v3865
        %vm5187 = vcmp.eq.f32.partialorder %v5186, 8.507059e+37
        %v5188 = vand.u32 %v3865, 2147483648
        %v5189 = vor.u32 1.1754944e-38, %v5188
        %v5190 = vsel %vm5187, %v5189, %v5185
        %v5191 = vmul.f32 1.0, %v5190
        %v5192 = vrcp.pop %v3866
        %v5193 = vmul.f32 %v3866, %v5192
        %v5194 = vsub.f32 1.0, %v5193
        %v5195 = vmul.f32 %v5192, %v5194
        %v5196 = vadd.f32 %v5192, %v5195
        %vm5197 = vweird.f32 %v3866
        %vm5198 = vweird.f32 %v5192
        %vm5199 = vmor %vm5197, %vm5198
        %v5200 = vsel %vm5199, %v5192, %v5196
        %v5201 = vand.u32 2147483647, %v3866
        %vm5202 = vcmp.eq.f32.partialorder %v5201, 8.507059e+37
        %v5203 = vand.u32 %v3866, 2147483648
        %v5204 = vor.u32 1.1754944e-38, %v5203
        %v5205 = vsel %vm5202, %v5204, %v5200
        %v5206 = vmul.f32 1.0, %v5205
        %v5207 = vrcp.pop %v3867
        %v5208 = vmul.f32 %v3867, %v5207
        %v5209 = vsub.f32 1.0, %v5208
        %v5210 = vmul.f32 %v5207, %v5209
        %v5211 = vadd.f32 %v5207, %v5210
        %vm5212 = vweird.f32 %v3867
        %vm5213 = vweird.f32 %v5207
        %vm5214 = vmor %vm5212, %vm5213
        %v5215 = vsel %vm5214, %v5207, %v5211
        %v5216 = vand.u32 2147483647, %v3867
        %vm5217 = vcmp.eq.f32.partialorder %v5216, 8.507059e+37
        %v5218 = vand.u32 %v3867, 2147483648
        %v5219 = vor.u32 1.1754944e-38, %v5218
        %v5220 = vsel %vm5217, %v5219, %v5215
        %v5221 = vmul.f32 1.0, %v5220
        %v5222 = vrcp.pop %v3868
        %v5223 = vmul.f32 %v3868, %v5222
        %v5224 = vsub.f32 1.0, %v5223
        %v5225 = vmul.f32 %v5222, %v5224
        %v5226 = vadd.f32 %v5222, %v5225
        %vm5227 = vweird.f32 %v3868
        %vm5228 = vweird.f32 %v5222
        %vm5229 = vmor %vm5227, %vm5228
        %v5230 = vsel %vm5229, %v5222, %v5226
        %v5231 = vand.u32 2147483647, %v3868
        %vm5232 = vcmp.eq.f32.partialorder %v5231, 8.507059e+37
        %v5233 = vand.u32 %v3868, 2147483648
        %v5234 = vor.u32 1.1754944e-38, %v5233
        %v5235 = vsel %vm5232, %v5234, %v5230
        %v5236 = vmul.f32 1.0, %v5235
        %v5237 = vrcp.pop %v3869
        %v5238 = vmul.f32 %v3869, %v5237
        %v5239 = vsub.f32 1.0, %v5238
        %v5240 = vmul.f32 %v5237, %v5239
        %v5241 = vadd.f32 %v5237, %v5240
        %vm5242 = vweird.f32 %v3869
        %vm5243 = vweird.f32 %v5237
        %vm5244 = vmor %vm5242, %vm5243
        %v5245 = vsel %vm5244, %v5237, %v5241
        %v5246 = vand.u32 2147483647, %v3869
        %vm5247 = vcmp.eq.f32.partialorder %v5246, 8.507059e+37
        %v5248 = vand.u32 %v3869, 2147483648
        %v5249 = vor.u32 1.1754944e-38, %v5248
        %v5250 = vsel %vm5247, %v5249, %v5245
        %v5251 = vmul.f32 1.0, %v5250
        %v5252 = vrcp.pop %v3870
        %v5253 = vmul.f32 %v3870, %v5252
        %v5254 = vsub.f32 1.0, %v5253
        %v5255 = vmul.f32 %v5252, %v5254
        %v5256 = vadd.f32 %v5252, %v5255
        %vm5257 = vweird.f32 %v3870
        %vm5258 = vweird.f32 %v5252
        %vm5259 = vmor %vm5257, %vm5258
        %v5260 = vsel %vm5259, %v5252, %v5256
        %v5261 = vand.u32 2147483647, %v3870
        %vm5262 = vcmp.eq.f32.partialorder %v5261, 8.507059e+37
        %v5263 = vand.u32 %v3870, 2147483648
        %v5264 = vor.u32 1.1754944e-38, %v5263
        %v5265 = vsel %vm5262, %v5264, %v5260
        %v5266 = vmul.f32 1.0, %v5265
        %v5267 = vrcp.pop %v3871
        %v5268 = vmul.f32 %v3871, %v5267
        %v5269 = vsub.f32 1.0, %v5268
        %v5270 = vmul.f32 %v5267, %v5269
        %v5271 = vadd.f32 %v5267, %v5270
        %vm5272 = vweird.f32 %v3871
        %vm5273 = vweird.f32 %v5267
        %vm5274 = vmor %vm5272, %vm5273
        %v5275 = vsel %vm5274, %v5267, %v5271
        %v5276 = vand.u32 2147483647, %v3871
        %vm5277 = vcmp.eq.f32.partialorder %v5276, 8.507059e+37
        %v5278 = vand.u32 %v3871, 2147483648
        %v5279 = vor.u32 1.1754944e-38, %v5278
        %v5280 = vsel %vm5277, %v5279, %v5275
        %v5281 = vmul.f32 1.0, %v5280
        %v5282 = vrcp.pop %v3872
        %v5283 = vmul.f32 %v3872, %v5282
        %v5284 = vsub.f32 1.0, %v5283
        %v5285 = vmul.f32 %v5282, %v5284
        %v5286 = vadd.f32 %v5282, %v5285
        %vm5287 = vweird.f32 %v3872
        %vm5288 = vweird.f32 %v5282
        %vm5289 = vmor %vm5287, %vm5288
        %v5290 = vsel %vm5289, %v5282, %v5286
        %v5291 = vand.u32 2147483647, %v3872
        %vm5292 = vcmp.eq.f32.partialorder %v5291, 8.507059e+37
        %v5293 = vand.u32 %v3872, 2147483648
        %v5294 = vor.u32 1.1754944e-38, %v5293
        %v5295 = vsel %vm5292, %v5294, %v5290
        %v5296 = vmul.f32 1.0, %v5295
        %v5297 = vrcp.pop %v3873
        %v5298 = vmul.f32 %v3873, %v5297
        %v5299 = vsub.f32 1.0, %v5298
        %v5300 = vmul.f32 %v5297, %v5299
        %v5301 = vadd.f32 %v5297, %v5300
        %vm5302 = vweird.f32 %v3873
        %vm5303 = vweird.f32 %v5297
        %vm5304 = vmor %vm5302, %vm5303
        %v5305 = vsel %vm5304, %v5297, %v5301
        %v5306 = vand.u32 2147483647, %v3873
        %vm5307 = vcmp.eq.f32.partialorder %v5306, 8.507059e+37
        %v5308 = vand.u32 %v3873, 2147483648
        %v5309 = vor.u32 1.1754944e-38, %v5308
        %v5310 = vsel %vm5307, %v5309, %v5305
        %v5311 = vmul.f32 1.0, %v5310
        %v5312 = vrcp.pop %v3874
        %v5313 = vmul.f32 %v3874, %v5312
        %v5314 = vsub.f32 1.0, %v5313
        %v5315 = vmul.f32 %v5312, %v5314
        %v5316 = vadd.f32 %v5312, %v5315
        %vm5317 = vweird.f32 %v3874
        %vm5318 = vweird.f32 %v5312
        %vm5319 = vmor %vm5317, %vm5318
        %v5320 = vsel %vm5319, %v5312, %v5316
        %v5321 = vand.u32 2147483647, %v3874
        %vm5322 = vcmp.eq.f32.partialorder %v5321, 8.507059e+37
        %v5323 = vand.u32 %v3874, 2147483648
        %v5324 = vor.u32 1.1754944e-38, %v5323
        %v5325 = vsel %vm5322, %v5324, %v5320
        %v5326 = vmul.f32 1.0, %v5325
        %v5327 = vrcp.pop %v3875
        %v5328 = vmul.f32 %v3875, %v5327
        %v5329 = vsub.f32 1.0, %v5328
        %v5330 = vmul.f32 %v5327, %v5329
        %v5331 = vadd.f32 %v5327, %v5330
        %vm5332 = vweird.f32 %v3875
        %vm5333 = vweird.f32 %v5327
        %vm5334 = vmor %vm5332, %vm5333
        %v5335 = vsel %vm5334, %v5327, %v5331
        %v5336 = vand.u32 2147483647, %v3875
        %vm5337 = vcmp.eq.f32.partialorder %v5336, 8.507059e+37
        %v5338 = vand.u32 %v3875, 2147483648
        %v5339 = vor.u32 1.1754944e-38, %v5338
        %v5340 = vsel %vm5337, %v5339, %v5335
        %v5341 = vmul.f32 1.0, %v5340
        %v5342 = vrcp.pop %v3876
        %v5343 = vmul.f32 %v3876, %v5342
        %v5344 = vsub.f32 1.0, %v5343
        %v5345 = vmul.f32 %v5342, %v5344
        %v5346 = vadd.f32 %v5342, %v5345
        %vm5347 = vweird.f32 %v3876
        %vm5348 = vweird.f32 %v5342
        %vm5349 = vmor %vm5347, %vm5348
        %v5350 = vsel %vm5349, %v5342, %v5346
        %v5351 = vand.u32 2147483647, %v3876
        %vm5352 = vcmp.eq.f32.partialorder %v5351, 8.507059e+37
        %v5353 = vand.u32 %v3876, 2147483648
        %v5354 = vor.u32 1.1754944e-38, %v5353
        %v5355 = vsel %vm5352, %v5354, %v5350
        %v5356 = vmul.f32 1.0, %v5355
        %v5357 = vrcp.pop %v3877
        %v5358 = vmul.f32 %v3877, %v5357
        %v5359 = vsub.f32 1.0, %v5358
        %v5360 = vmul.f32 %v5357, %v5359
        %v5361 = vadd.f32 %v5357, %v5360
        %vm5362 = vweird.f32 %v3877
        %vm5363 = vweird.f32 %v5357
        %vm5364 = vmor %vm5362, %vm5363
        %v5365 = vsel %vm5364, %v5357, %v5361
        %v5366 = vand.u32 2147483647, %v3877
        %vm5367 = vcmp.eq.f32.partialorder %v5366, 8.507059e+37
        %v5368 = vand.u32 %v3877, 2147483648
        %v5369 = vor.u32 1.1754944e-38, %v5368
        %v5370 = vsel %vm5367, %v5369, %v5365
        %v5371 = vmul.f32 1.0, %v5370
        %v5372 = vrcp.pop %v3878
        %v5373 = vmul.f32 %v3878, %v5372
        %v5374 = vsub.f32 1.0, %v5373
        %v5375 = vmul.f32 %v5372, %v5374
        %v5376 = vadd.f32 %v5372, %v5375
        %vm5377 = vweird.f32 %v3878
        %vm5378 = vweird.f32 %v5372
        %vm5379 = vmor %vm5377, %vm5378
        %v5380 = vsel %vm5379, %v5372, %v5376
        %v5381 = vand.u32 2147483647, %v3878
        %vm5382 = vcmp.eq.f32.partialorder %v5381, 8.507059e+37
        %v5383 = vand.u32 %v3878, 2147483648
        %v5384 = vor.u32 1.1754944e-38, %v5383
        %v5385 = vsel %vm5382, %v5384, %v5380
        %v5386 = vmul.f32 1.0, %v5385
        %v5387 = vrcp.pop %v3879
        %v5388 = vmul.f32 %v3879, %v5387
        %v5389 = vsub.f32 1.0, %v5388
        %v5390 = vmul.f32 %v5387, %v5389
        %v5391 = vadd.f32 %v5387, %v5390
        %vm5392 = vweird.f32 %v3879
        %vm5393 = vweird.f32 %v5387
        %vm5394 = vmor %vm5392, %vm5393
        %v5395 = vsel %vm5394, %v5387, %v5391
        %v5396 = vand.u32 2147483647, %v3879
        %vm5397 = vcmp.eq.f32.partialorder %v5396, 8.507059e+37
        %v5398 = vand.u32 %v3879, 2147483648
        %v5399 = vor.u32 1.1754944e-38, %v5398
        %v5400 = vsel %vm5397, %v5399, %v5395
        %v5401 = vmul.f32 1.0, %v5400
        %v5402 = vrcp.pop %v3880
        %v5403 = vmul.f32 %v3880, %v5402
        %v5404 = vsub.f32 1.0, %v5403
        %v5405 = vmul.f32 %v5402, %v5404
        %v5406 = vadd.f32 %v5402, %v5405
        %vm5407 = vweird.f32 %v3880
        %vm5408 = vweird.f32 %v5402
        %vm5409 = vmor %vm5407, %vm5408
        %v5410 = vsel %vm5409, %v5402, %v5406
        %v5411 = vand.u32 2147483647, %v3880
        %vm5412 = vcmp.eq.f32.partialorder %v5411, 8.507059e+37
        %v5413 = vand.u32 %v3880, 2147483648
        %v5414 = vor.u32 1.1754944e-38, %v5413
        %v5415 = vsel %vm5412, %v5414, %v5410
        %v5416 = vmul.f32 1.0, %v5415
        %v5417 = vrcp.pop %v3881
        %v5418 = vmul.f32 %v3881, %v5417
        %v5419 = vsub.f32 1.0, %v5418
        %v5420 = vmul.f32 %v5417, %v5419
        %v5421 = vadd.f32 %v5417, %v5420
        %vm5422 = vweird.f32 %v3881
        %vm5423 = vweird.f32 %v5417
        %vm5424 = vmor %vm5422, %vm5423
        %v5425 = vsel %vm5424, %v5417, %v5421
        %v5426 = vand.u32 2147483647, %v3881
        %vm5427 = vcmp.eq.f32.partialorder %v5426, 8.507059e+37
        %v5428 = vand.u32 %v3881, 2147483648
        %v5429 = vor.u32 1.1754944e-38, %v5428
        %v5430 = vsel %vm5427, %v5429, %v5425
        %v5431 = vmul.f32 1.0, %v5430
        %v5432 = vrcp.pop %v3882
        %v5433 = vmul.f32 %v3882, %v5432
        %v5434 = vsub.f32 1.0, %v5433
        %v5435 = vmul.f32 %v5432, %v5434
        %v5436 = vadd.f32 %v5432, %v5435
        %vm5437 = vweird.f32 %v3882
        %vm5438 = vweird.f32 %v5432
        %vm5439 = vmor %vm5437, %vm5438
        %v5440 = vsel %vm5439, %v5432, %v5436
        %v5441 = vand.u32 2147483647, %v3882
        %vm5442 = vcmp.eq.f32.partialorder %v5441, 8.507059e+37
        %v5443 = vand.u32 %v3882, 2147483648
        %v5444 = vor.u32 1.1754944e-38, %v5443
        %v5445 = vsel %vm5442, %v5444, %v5440
        %v5446 = vmul.f32 1.0, %v5445
        %v5447 = vrcp.pop %v3883
        %v5448 = vmul.f32 %v3883, %v5447
        %v5449 = vsub.f32 1.0, %v5448
        %v5450 = vmul.f32 %v5447, %v5449
        %v5451 = vadd.f32 %v5447, %v5450
        %vm5452 = vweird.f32 %v3883
        %vm5453 = vweird.f32 %v5447
        %vm5454 = vmor %vm5452, %vm5453
        %v5455 = vsel %vm5454, %v5447, %v5451
        %v5456 = vand.u32 2147483647, %v3883
        %vm5457 = vcmp.eq.f32.partialorder %v5456, 8.507059e+37
        %v5458 = vand.u32 %v3883, 2147483648
        %v5459 = vor.u32 1.1754944e-38, %v5458
        %v5460 = vsel %vm5457, %v5459, %v5455
        %v5461 = vmul.f32 1.0, %v5460
        %v5462 = vrcp.pop %v3884
        %v5463 = vmul.f32 %v3884, %v5462
        %v5464 = vsub.f32 1.0, %v5463
        %v5465 = vmul.f32 %v5462, %v5464
        %v5466 = vadd.f32 %v5462, %v5465
        %vm5467 = vweird.f32 %v3884
        %vm5468 = vweird.f32 %v5462
        %vm5469 = vmor %vm5467, %vm5468
        %v5470 = vsel %vm5469, %v5462, %v5466
        %v5471 = vand.u32 2147483647, %v3884
        %vm5472 = vcmp.eq.f32.partialorder %v5471, 8.507059e+37
        %v5473 = vand.u32 %v3884, 2147483648
        %v5474 = vor.u32 1.1754944e-38, %v5473
        %v5475 = vsel %vm5472, %v5474, %v5470
        %v5476 = vmul.f32 1.0, %v5475
        %v5477 = vrcp.pop %v3885
        %v5478 = vmul.f32 %v3885, %v5477
        %v5479 = vsub.f32 1.0, %v5478
        %v5480 = vmul.f32 %v5477, %v5479
        %v5481 = vadd.f32 %v5477, %v5480
        %vm5482 = vweird.f32 %v3885
        %vm5483 = vweird.f32 %v5477
        %vm5484 = vmor %vm5482, %vm5483
        %v5485 = vsel %vm5484, %v5477, %v5481
        %v5486 = vand.u32 2147483647, %v3885
        %vm5487 = vcmp.eq.f32.partialorder %v5486, 8.507059e+37
        %v5488 = vand.u32 %v3885, 2147483648
        %v5489 = vor.u32 1.1754944e-38, %v5488
        %v5490 = vsel %vm5487, %v5489, %v5485
        %v5491 = vmul.f32 1.0, %v5490
        %v5492 = vrcp.pop %v3886
        %v5493 = vmul.f32 %v3886, %v5492
        %v5494 = vsub.f32 1.0, %v5493
        %v5495 = vmul.f32 %v5492, %v5494
        %v5496 = vadd.f32 %v5492, %v5495
        %vm5497 = vweird.f32 %v3886
        %vm5498 = vweird.f32 %v5492
        %vm5499 = vmor %vm5497, %vm5498
        %v5500 = vsel %vm5499, %v5492, %v5496
        %v5501 = vand.u32 2147483647, %v3886
        %vm5502 = vcmp.eq.f32.partialorder %v5501, 8.507059e+37
        %v5503 = vand.u32 %v3886, 2147483648
        %v5504 = vor.u32 1.1754944e-38, %v5503
        %v5505 = vsel %vm5502, %v5504, %v5500
        %v5506 = vmul.f32 1.0, %v5505
        %v5507 = vrcp.pop %v3887
        %v5508 = vmul.f32 %v3887, %v5507
        %v5509 = vsub.f32 1.0, %v5508
        %v5510 = vmul.f32 %v5507, %v5509
        %v5511 = vadd.f32 %v5507, %v5510
        %vm5512 = vweird.f32 %v3887
        %vm5513 = vweird.f32 %v5507
        %vm5514 = vmor %vm5512, %vm5513
        %v5515 = vsel %vm5514, %v5507, %v5511
        %v5516 = vand.u32 2147483647, %v3887
        %vm5517 = vcmp.eq.f32.partialorder %v5516, 8.507059e+37
        %v5518 = vand.u32 %v3887, 2147483648
        %v5519 = vor.u32 1.1754944e-38, %v5518
        %v5520 = vsel %vm5517, %v5519, %v5515
        %v5521 = vmul.f32 1.0, %v5520
        %v5522 = vrcp.pop %v3888
        %v5523 = vmul.f32 %v3888, %v5522
        %v5524 = vsub.f32 1.0, %v5523
        %v5525 = vmul.f32 %v5522, %v5524
        %v5526 = vadd.f32 %v5522, %v5525
        %vm5527 = vweird.f32 %v3888
        %vm5528 = vweird.f32 %v5522
        %vm5529 = vmor %vm5527, %vm5528
        %v5530 = vsel %vm5529, %v5522, %v5526
        %v5531 = vand.u32 2147483647, %v3888
        %vm5532 = vcmp.eq.f32.partialorder %v5531, 8.507059e+37
        %v5533 = vand.u32 %v3888, 2147483648
        %v5534 = vor.u32 1.1754944e-38, %v5533
        %v5535 = vsel %vm5532, %v5534, %v5530
        %v5536 = vmul.f32 1.0, %v5535
        %v5537 = vrcp.pop %v3889
        %v5538 = vmul.f32 %v3889, %v5537
        %v5539 = vsub.f32 1.0, %v5538
        %v5540 = vmul.f32 %v5537, %v5539
        %v5541 = vadd.f32 %v5537, %v5540
        %vm5542 = vweird.f32 %v3889
        %vm5543 = vweird.f32 %v5537
        %vm5544 = vmor %vm5542, %vm5543
        %v5545 = vsel %vm5544, %v5537, %v5541
        %v5546 = vand.u32 2147483647, %v3889
        %vm5547 = vcmp.eq.f32.partialorder %v5546, 8.507059e+37
        %v5548 = vand.u32 %v3889, 2147483648
        %v5549 = vor.u32 1.1754944e-38, %v5548
        %v5550 = vsel %vm5547, %v5549, %v5545
        %v5551 = vmul.f32 1.0, %v5550
        %v5552 = vrcp.pop %v3890
        %v5553 = vmul.f32 %v3890, %v5552
        %v5554 = vsub.f32 1.0, %v5553
        %v5555 = vmul.f32 %v5552, %v5554
        %v5556 = vadd.f32 %v5552, %v5555
        %vm5557 = vweird.f32 %v3890
        %vm5558 = vweird.f32 %v5552
        %vm5559 = vmor %vm5557, %vm5558
        %v5560 = vsel %vm5559, %v5552, %v5556
        %v5561 = vand.u32 2147483647, %v3890
        %vm5562 = vcmp.eq.f32.partialorder %v5561, 8.507059e+37
        %v5563 = vand.u32 %v3890, 2147483648
        %v5564 = vor.u32 1.1754944e-38, %v5563
        %v5565 = vsel %vm5562, %v5564, %v5560
        %v5566 = vmul.f32 1.0, %v5565
        %v5567 = vrcp.pop %v3891
        %v5568 = vmul.f32 %v3891, %v5567
        %v5569 = vsub.f32 1.0, %v5568
        %v5570 = vmul.f32 %v5567, %v5569
        %v5571 = vadd.f32 %v5567, %v5570
        %vm5572 = vweird.f32 %v3891
        %vm5573 = vweird.f32 %v5567
        %vm5574 = vmor %vm5572, %vm5573
        %v5575 = vsel %vm5574, %v5567, %v5571
        %v5576 = vand.u32 2147483647, %v3891
        %vm5577 = vcmp.eq.f32.partialorder %v5576, 8.507059e+37
        %v5578 = vand.u32 %v3891, 2147483648
        %v5579 = vor.u32 1.1754944e-38, %v5578
        %v5580 = vsel %vm5577, %v5579, %v5575
        %v5581 = vmul.f32 1.0, %v5580
        %v5582 = vrcp.pop %v3892
        %v5583 = vmul.f32 %v3892, %v5582
        %v5584 = vsub.f32 1.0, %v5583
        %v5585 = vmul.f32 %v5582, %v5584
        %v5586 = vadd.f32 %v5582, %v5585
        %vm5587 = vweird.f32 %v3892
        %vm5588 = vweird.f32 %v5582
        %vm5589 = vmor %vm5587, %vm5588
        %v5590 = vsel %vm5589, %v5582, %v5586
        %v5591 = vand.u32 2147483647, %v3892
        %vm5592 = vcmp.eq.f32.partialorder %v5591, 8.507059e+37
        %v5593 = vand.u32 %v3892, 2147483648
        %v5594 = vor.u32 1.1754944e-38, %v5593
        %v5595 = vsel %vm5592, %v5594, %v5590
        %v5596 = vmul.f32 1.0, %v5595
        %v5597 = vrcp.pop %v3893
        %v5598 = vmul.f32 %v3893, %v5597
        %v5599 = vsub.f32 1.0, %v5598
        %v5600 = vmul.f32 %v5597, %v5599
        %v5601 = vadd.f32 %v5597, %v5600
        %vm5602 = vweird.f32 %v3893
        %vm5603 = vweird.f32 %v5597
        %vm5604 = vmor %vm5602, %vm5603
        %v5605 = vsel %vm5604, %v5597, %v5601
        %v5606 = vand.u32 2147483647, %v3893
        %vm5607 = vcmp.eq.f32.partialorder %v5606, 8.507059e+37
        %v5608 = vand.u32 %v3893, 2147483648
        %v5609 = vor.u32 1.1754944e-38, %v5608
        %v5610 = vsel %vm5607, %v5609, %v5605
        %v5611 = vmul.f32 1.0, %v5610
        %v5612 = vrcp.pop %v3894
        %v5613 = vmul.f32 %v3894, %v5612
        %v5614 = vsub.f32 1.0, %v5613
        %v5615 = vmul.f32 %v5612, %v5614
        %v5616 = vadd.f32 %v5612, %v5615
        %vm5617 = vweird.f32 %v3894
        %vm5618 = vweird.f32 %v5612
        %vm5619 = vmor %vm5617, %vm5618
        %v5620 = vsel %vm5619, %v5612, %v5616
        %v5621 = vand.u32 2147483647, %v3894
        %vm5622 = vcmp.eq.f32.partialorder %v5621, 8.507059e+37
        %v5623 = vand.u32 %v3894, 2147483648
        %v5624 = vor.u32 1.1754944e-38, %v5623
        %v5625 = vsel %vm5622, %v5624, %v5620
        %v5626 = vmul.f32 1.0, %v5625
        %v5627 = vrcp.pop %v3895
        %v5628 = vmul.f32 %v3895, %v5627
        %v5629 = vsub.f32 1.0, %v5628
        %v5630 = vmul.f32 %v5627, %v5629
        %v5631 = vadd.f32 %v5627, %v5630
        %vm5632 = vweird.f32 %v3895
        %vm5633 = vweird.f32 %v5627
        %vm5634 = vmor %vm5632, %vm5633
        %v5635 = vsel %vm5634, %v5627, %v5631
        %v5636 = vand.u32 2147483647, %v3895
        %vm5637 = vcmp.eq.f32.partialorder %v5636, 8.507059e+37
        %v5638 = vand.u32 %v3895, 2147483648
        %v5639 = vor.u32 1.1754944e-38, %v5638
        %v5640 = vsel %vm5637, %v5639, %v5635
        %v5641 = vmul.f32 1.0, %v5640
        %v5642 = vrcp.pop %v3896
        %v5643 = vmul.f32 %v3896, %v5642
        %v5644 = vsub.f32 1.0, %v5643
        %v5645 = vmul.f32 %v5642, %v5644
        %v5646 = vadd.f32 %v5642, %v5645
        %vm5647 = vweird.f32 %v3896
        %vm5648 = vweird.f32 %v5642
        %vm5649 = vmor %vm5647, %vm5648
        %v5650 = vsel %vm5649, %v5642, %v5646
        %v5651 = vand.u32 2147483647, %v3896
        %vm5652 = vcmp.eq.f32.partialorder %v5651, 8.507059e+37
        %v5653 = vand.u32 %v3896, 2147483648
        %v5654 = vor.u32 1.1754944e-38, %v5653
        %v5655 = vsel %vm5652, %v5654, %v5650
        %v5656 = vmul.f32 1.0, %v5655
        %v5657 = vrcp.pop %v3897
        %v5658 = vmul.f32 %v3897, %v5657
        %v5659 = vsub.f32 1.0, %v5658
        %v5660 = vmul.f32 %v5657, %v5659
        %v5661 = vadd.f32 %v5657, %v5660
        %vm5662 = vweird.f32 %v3897
        %vm5663 = vweird.f32 %v5657
        %vm5664 = vmor %vm5662, %vm5663
        %v5665 = vsel %vm5664, %v5657, %v5661
        %v5666 = vand.u32 2147483647, %v3897
        %vm5667 = vcmp.eq.f32.partialorder %v5666, 8.507059e+37
        %v5668 = vand.u32 %v3897, 2147483648
        %v5669 = vor.u32 1.1754944e-38, %v5668
        %v5670 = vsel %vm5667, %v5669, %v5665
        %v5671 = vmul.f32 1.0, %v5670
        %v5672 = vrcp.pop %v3898
        %v5673 = vmul.f32 %v3898, %v5672
        %v5674 = vsub.f32 1.0, %v5673
        %v5675 = vmul.f32 %v5672, %v5674
        %v5676 = vadd.f32 %v5672, %v5675
        %vm5677 = vweird.f32 %v3898
        %vm5678 = vweird.f32 %v5672
        %vm5679 = vmor %vm5677, %vm5678
        %v5680 = vsel %vm5679, %v5672, %v5676
        %v5681 = vand.u32 2147483647, %v3898
        %vm5682 = vcmp.eq.f32.partialorder %v5681, 8.507059e+37
        %v5683 = vand.u32 %v3898, 2147483648
        %v5684 = vor.u32 1.1754944e-38, %v5683
        %v5685 = vsel %vm5682, %v5684, %v5680
        %v5686 = vmul.f32 1.0, %v5685
        %v5687 = vrcp.pop %v3899
        %v5688 = vmul.f32 %v3899, %v5687
        %v5689 = vsub.f32 1.0, %v5688
        %v5690 = vmul.f32 %v5687, %v5689
        %v5691 = vadd.f32 %v5687, %v5690
        %vm5692 = vweird.f32 %v3899
        %vm5693 = vweird.f32 %v5687
        %vm5694 = vmor %vm5692, %vm5693
        %v5695 = vsel %vm5694, %v5687, %v5691
        %v5696 = vand.u32 2147483647, %v3899
        %vm5697 = vcmp.eq.f32.partialorder %v5696, 8.507059e+37
        %v5698 = vand.u32 %v3899, 2147483648
        %v5699 = vor.u32 1.1754944e-38, %v5698
        %v5700 = vsel %vm5697, %v5699, %v5695
        %v5701 = vmul.f32 1.0, %v5700
        %v5702 = vrcp.pop %v3900
        %v5703 = vmul.f32 %v3900, %v5702
        %v5704 = vsub.f32 1.0, %v5703
        %v5705 = vmul.f32 %v5702, %v5704
        %v5706 = vadd.f32 %v5702, %v5705
        %vm5707 = vweird.f32 %v3900
        %vm5708 = vweird.f32 %v5702
        %vm5709 = vmor %vm5707, %vm5708
        %v5710 = vsel %vm5709, %v5702, %v5706
        %v5711 = vand.u32 2147483647, %v3900
        %vm5712 = vcmp.eq.f32.partialorder %v5711, 8.507059e+37
        %v5713 = vand.u32 %v3900, 2147483648
        %v5714 = vor.u32 1.1754944e-38, %v5713
        %v5715 = vsel %vm5712, %v5714, %v5710
        %v5716 = vmul.f32 1.0, %v5715
        %v5717 = vrcp.pop %v3901
        %v5718 = vmul.f32 %v3901, %v5717
        %v5719 = vsub.f32 1.0, %v5718
        %v5720 = vmul.f32 %v5717, %v5719
        %v5721 = vadd.f32 %v5717, %v5720
        %vm5722 = vweird.f32 %v3901
        %vm5723 = vweird.f32 %v5717
        %vm5724 = vmor %vm5722, %vm5723
        %v5725 = vsel %vm5724, %v5717, %v5721
        %v5726 = vand.u32 2147483647, %v3901
        %vm5727 = vcmp.eq.f32.partialorder %v5726, 8.507059e+37
        %v5728 = vand.u32 %v3901, 2147483648
        %v5729 = vor.u32 1.1754944e-38, %v5728
        %v5730 = vsel %vm5727, %v5729, %v5725
        %v5731 = vmul.f32 1.0, %v5730
        %v5732 = vrcp.pop %v3902
        %v5733 = vmul.f32 %v3902, %v5732
        %v5734 = vsub.f32 1.0, %v5733
        %v5735 = vmul.f32 %v5732, %v5734
        %v5736 = vadd.f32 %v5732, %v5735
        %vm5737 = vweird.f32 %v3902
        %vm5738 = vweird.f32 %v5732
        %vm5739 = vmor %vm5737, %vm5738
        %v5740 = vsel %vm5739, %v5732, %v5736
        %v5741 = vand.u32 2147483647, %v3902
        %vm5742 = vcmp.eq.f32.partialorder %v5741, 8.507059e+37
        %v5743 = vand.u32 %v3902, 2147483648
        %v5744 = vor.u32 1.1754944e-38, %v5743
        %v5745 = vsel %vm5742, %v5744, %v5740
        %v5746 = vmul.f32 1.0, %v5745
        %v5747 = vrcp.pop %v3903
        %v5748 = vmul.f32 %v3903, %v5747
        %v5749 = vsub.f32 1.0, %v5748
        %v5750 = vmul.f32 %v5747, %v5749
        %v5751 = vadd.f32 %v5747, %v5750
        %vm5752 = vweird.f32 %v3903
        %vm5753 = vweird.f32 %v5747
        %vm5754 = vmor %vm5752, %vm5753
        %v5755 = vsel %vm5754, %v5747, %v5751
        %v5756 = vand.u32 2147483647, %v3903
        %vm5757 = vcmp.eq.f32.partialorder %v5756, 8.507059e+37
        %v5758 = vand.u32 %v3903, 2147483648
        %v5759 = vor.u32 1.1754944e-38, %v5758
        %v5760 = vsel %vm5757, %v5759, %v5755
        %v5761 = vmul.f32 1.0, %v5760
        %v5762 = vrcp.pop %v3904
        %v5763 = vmul.f32 %v3904, %v5762
        %v5764 = vsub.f32 1.0, %v5763
        %v5765 = vmul.f32 %v5762, %v5764
        %v5766 = vadd.f32 %v5762, %v5765
        %vm5767 = vweird.f32 %v3904
        %vm5768 = vweird.f32 %v5762
        %vm5769 = vmor %vm5767, %vm5768
        %v5770 = vsel %vm5769, %v5762, %v5766
        %v5771 = vand.u32 2147483647, %v3904
        %vm5772 = vcmp.eq.f32.partialorder %v5771, 8.507059e+37
        %v5773 = vand.u32 %v3904, 2147483648
        %v5774 = vor.u32 1.1754944e-38, %v5773
        %v5775 = vsel %vm5772, %v5774, %v5770
        %v5776 = vmul.f32 1.0, %v5775
        %v5777 = vrcp.pop %v3905
        %v5778 = vmul.f32 %v3905, %v5777
        %v5779 = vsub.f32 1.0, %v5778
        %v5780 = vmul.f32 %v5777, %v5779
        %v5781 = vadd.f32 %v5777, %v5780
        %vm5782 = vweird.f32 %v3905
        %vm5783 = vweird.f32 %v5777
        %vm5784 = vmor %vm5782, %vm5783
        %v5785 = vsel %vm5784, %v5777, %v5781
        %v5786 = vand.u32 2147483647, %v3905
        %vm5787 = vcmp.eq.f32.partialorder %v5786, 8.507059e+37
        %v5788 = vand.u32 %v3905, 2147483648
        %v5789 = vor.u32 1.1754944e-38, %v5788
        %v5790 = vsel %vm5787, %v5789, %v5785
        %v5791 = vmul.f32 1.0, %v5790
        %v5792 = vrcp.pop %v3906
        %v5793 = vmul.f32 %v3906, %v5792
        %v5794 = vsub.f32 1.0, %v5793
        %v5795 = vmul.f32 %v5792, %v5794
        %v5796 = vadd.f32 %v5792, %v5795
        %vm5797 = vweird.f32 %v3906
        %vm5798 = vweird.f32 %v5792
        %vm5799 = vmor %vm5797, %vm5798
        %v5800 = vsel %vm5799, %v5792, %v5796
        %v5801 = vand.u32 2147483647, %v3906
        %vm5802 = vcmp.eq.f32.partialorder %v5801, 8.507059e+37
        %v5803 = vand.u32 %v3906, 2147483648
        %v5804 = vor.u32 1.1754944e-38, %v5803
        %v5805 = vsel %vm5802, %v5804, %v5800
        %v5806 = vmul.f32 1.0, %v5805
        %v5807 = vrcp.pop %v3907
        %v5808 = vmul.f32 %v3907, %v5807
        %v5809 = vsub.f32 1.0, %v5808
        %v5810 = vmul.f32 %v5807, %v5809
        %v5811 = vadd.f32 %v5807, %v5810
        %vm5812 = vweird.f32 %v3907
        %vm5813 = vweird.f32 %v5807
        %vm5814 = vmor %vm5812, %vm5813
        %v5815 = vsel %vm5814, %v5807, %v5811
        %v5816 = vand.u32 2147483647, %v3907
        %vm5817 = vcmp.eq.f32.partialorder %v5816, 8.507059e+37
        %v5818 = vand.u32 %v3907, 2147483648
        %v5819 = vor.u32 1.1754944e-38, %v5818
        %v5820 = vsel %vm5817, %v5819, %v5815
        %v5821 = vmul.f32 1.0, %v5820
        %v5822 = vrcp.pop %v3908
        %v5823 = vmul.f32 %v3908, %v5822
        %v5824 = vsub.f32 1.0, %v5823
        %v5825 = vmul.f32 %v5822, %v5824
        %v5826 = vadd.f32 %v5822, %v5825
        %vm5827 = vweird.f32 %v3908
        %vm5828 = vweird.f32 %v5822
        %vm5829 = vmor %vm5827, %vm5828
        %v5830 = vsel %vm5829, %v5822, %v5826
        %v5831 = vand.u32 2147483647, %v3908
        %vm5832 = vcmp.eq.f32.partialorder %v5831, 8.507059e+37
        %v5833 = vand.u32 %v3908, 2147483648
        %v5834 = vor.u32 1.1754944e-38, %v5833
        %v5835 = vsel %vm5832, %v5834, %v5830
        %v5836 = vmul.f32 1.0, %v5835
        %v5837 = vrcp.pop %v3909
        %v5838 = vmul.f32 %v3909, %v5837
        %v5839 = vsub.f32 1.0, %v5838
        %v5840 = vmul.f32 %v5837, %v5839
        %v5841 = vadd.f32 %v5837, %v5840
        %vm5842 = vweird.f32 %v3909
        %vm5843 = vweird.f32 %v5837
        %vm5844 = vmor %vm5842, %vm5843
        %v5845 = vsel %vm5844, %v5837, %v5841
        %v5846 = vand.u32 2147483647, %v3909
        %vm5847 = vcmp.eq.f32.partialorder %v5846, 8.507059e+37
        %v5848 = vand.u32 %v3909, 2147483648
        %v5849 = vor.u32 1.1754944e-38, %v5848
        %v5850 = vsel %vm5847, %v5849, %v5845
        %v5851 = vmul.f32 1.0, %v5850
        %v5852 = vrcp.pop %v3910
        %v5853 = vmul.f32 %v3910, %v5852
        %v5854 = vsub.f32 1.0, %v5853
        %v5855 = vmul.f32 %v5852, %v5854
        %v5856 = vadd.f32 %v5852, %v5855
        %vm5857 = vweird.f32 %v3910
        %vm5858 = vweird.f32 %v5852
        %vm5859 = vmor %vm5857, %vm5858
        %v5860 = vsel %vm5859, %v5852, %v5856
        %v5861 = vand.u32 2147483647, %v3910
        %vm5862 = vcmp.eq.f32.partialorder %v5861, 8.507059e+37
        %v5863 = vand.u32 %v3910, 2147483648
        %v5864 = vor.u32 1.1754944e-38, %v5863
        %v5865 = vsel %vm5862, %v5864, %v5860
        %v5866 = vmul.f32 1.0, %v5865
        %v5867 = vrcp.pop %v3911
        %v5868 = vmul.f32 %v3911, %v5867
        %v5869 = vsub.f32 1.0, %v5868
        %v5870 = vmul.f32 %v5867, %v5869
        %v5871 = vadd.f32 %v5867, %v5870
        %vm5872 = vweird.f32 %v3911
        %vm5873 = vweird.f32 %v5867
        %vm5874 = vmor %vm5872, %vm5873
        %v5875 = vsel %vm5874, %v5867, %v5871
        %v5876 = vand.u32 2147483647, %v3911
        %vm5877 = vcmp.eq.f32.partialorder %v5876, 8.507059e+37
        %v5878 = vand.u32 %v3911, 2147483648
        %v5879 = vor.u32 1.1754944e-38, %v5878
        %v5880 = vsel %vm5877, %v5879, %v5875
        %v5881 = vmul.f32 1.0, %v5880
        %v5882 = vrcp.pop %v3912
        %v5883 = vmul.f32 %v3912, %v5882
        %v5884 = vsub.f32 1.0, %v5883
        %v5885 = vmul.f32 %v5882, %v5884
        %v5886 = vadd.f32 %v5882, %v5885
        %vm5887 = vweird.f32 %v3912
        %vm5888 = vweird.f32 %v5882
        %vm5889 = vmor %vm5887, %vm5888
        %v5890 = vsel %vm5889, %v5882, %v5886
        %v5891 = vand.u32 2147483647, %v3912
        %vm5892 = vcmp.eq.f32.partialorder %v5891, 8.507059e+37
        %v5893 = vand.u32 %v3912, 2147483648
        %v5894 = vor.u32 1.1754944e-38, %v5893
        %v5895 = vsel %vm5892, %v5894, %v5890
        %v5896 = vmul.f32 1.0, %v5895
        %v5897 = vrcp.pop %v3913
        %v5898 = vmul.f32 %v3913, %v5897
        %v5899 = vsub.f32 1.0, %v5898
        %v5900 = vmul.f32 %v5897, %v5899
        %v5901 = vadd.f32 %v5897, %v5900
        %vm5902 = vweird.f32 %v3913
        %vm5903 = vweird.f32 %v5897
        %vm5904 = vmor %vm5902, %vm5903
        %v5905 = vsel %vm5904, %v5897, %v5901
        %v5906 = vand.u32 2147483647, %v3913
        %vm5907 = vcmp.eq.f32.partialorder %v5906, 8.507059e+37
        %v5908 = vand.u32 %v3913, 2147483648
        %v5909 = vor.u32 1.1754944e-38, %v5908
        %v5910 = vsel %vm5907, %v5909, %v5905
        %v5911 = vmul.f32 1.0, %v5910
        %v5912 = vrcp.pop %v3914
        %v5913 = vmul.f32 %v3914, %v5912
        %v5914 = vsub.f32 1.0, %v5913
        %v5915 = vmul.f32 %v5912, %v5914
        %v5916 = vadd.f32 %v5912, %v5915
        %vm5917 = vweird.f32 %v3914
        %vm5918 = vweird.f32 %v5912
        %vm5919 = vmor %vm5917, %vm5918
        %v5920 = vsel %vm5919, %v5912, %v5916
        %v5921 = vand.u32 2147483647, %v3914
        %vm5922 = vcmp.eq.f32.partialorder %v5921, 8.507059e+37
        %v5923 = vand.u32 %v3914, 2147483648
        %v5924 = vor.u32 1.1754944e-38, %v5923
        %v5925 = vsel %vm5922, %v5924, %v5920
        %v5926 = vmul.f32 1.0, %v5925
        %v5927 = vrcp.pop %v3915
        %v5928 = vmul.f32 %v3915, %v5927
        %v5929 = vsub.f32 1.0, %v5928
        %v5930 = vmul.f32 %v5927, %v5929
        %v5931 = vadd.f32 %v5927, %v5930
        %vm5932 = vweird.f32 %v3915
        %vm5933 = vweird.f32 %v5927
        %vm5934 = vmor %vm5932, %vm5933
        %v5935 = vsel %vm5934, %v5927, %v5931
        %v5936 = vand.u32 2147483647, %v3915
        %vm5937 = vcmp.eq.f32.partialorder %v5936, 8.507059e+37
        %v5938 = vand.u32 %v3915, 2147483648
        %v5939 = vor.u32 1.1754944e-38, %v5938
        %v5940 = vsel %vm5937, %v5939, %v5935
        %v5941 = vmul.f32 1.0, %v5940
        %v5942 = vrcp.pop %v3916
        %v5943 = vmul.f32 %v3916, %v5942
        %v5944 = vsub.f32 1.0, %v5943
        %v5945 = vmul.f32 %v5942, %v5944
        %v5946 = vadd.f32 %v5942, %v5945
        %vm5947 = vweird.f32 %v3916
        %vm5948 = vweird.f32 %v5942
        %vm5949 = vmor %vm5947, %vm5948
        %v5950 = vsel %vm5949, %v5942, %v5946
        %v5951 = vand.u32 2147483647, %v3916
        %vm5952 = vcmp.eq.f32.partialorder %v5951, 8.507059e+37
        %v5953 = vand.u32 %v3916, 2147483648
        %v5954 = vor.u32 1.1754944e-38, %v5953
        %v5955 = vsel %vm5952, %v5954, %v5950
        %v5956 = vmul.f32 1.0, %v5955
        %v5957 = vrcp.pop %v3917
        %v5958 = vmul.f32 %v3917, %v5957
        %v5959 = vsub.f32 1.0, %v5958
        %v5960 = vmul.f32 %v5957, %v5959
        %v5961 = vadd.f32 %v5957, %v5960
        %vm5962 = vweird.f32 %v3917
        %vm5963 = vweird.f32 %v5957
        %vm5964 = vmor %vm5962, %vm5963
        %v5965 = vsel %vm5964, %v5957, %v5961
        %v5966 = vand.u32 2147483647, %v3917
        %vm5967 = vcmp.eq.f32.partialorder %v5966, 8.507059e+37
        %v5968 = vand.u32 %v3917, 2147483648
        %v5969 = vor.u32 1.1754944e-38, %v5968
        %v5970 = vsel %vm5967, %v5969, %v5965
        %v5971 = vmul.f32 1.0, %v5970
        %v5972 = vrcp.pop %v3918
        %v5973 = vmul.f32 %v3918, %v5972
        %v5974 = vsub.f32 1.0, %v5973
        %v5975 = vmul.f32 %v5972, %v5974
        %v5976 = vadd.f32 %v5972, %v5975
        %vm5977 = vweird.f32 %v3918
        %vm5978 = vweird.f32 %v5972
        %vm5979 = vmor %vm5977, %vm5978
        %v5980 = vsel %vm5979, %v5972, %v5976
        %v5981 = vand.u32 2147483647, %v3918
        %vm5982 = vcmp.eq.f32.partialorder %v5981, 8.507059e+37
        %v5983 = vand.u32 %v3918, 2147483648
        %v5984 = vor.u32 1.1754944e-38, %v5983
        %v5985 = vsel %vm5982, %v5984, %v5980
        %v5986 = vmul.f32 1.0, %v5985
        %v5987 = vrcp.pop %v3919
        %v5988 = vmul.f32 %v3919, %v5987
        %v5989 = vsub.f32 1.0, %v5988
        %v5990 = vmul.f32 %v5987, %v5989
        %v5991 = vadd.f32 %v5987, %v5990
        %vm5992 = vweird.f32 %v3919
        %vm5993 = vweird.f32 %v5987
        %vm5994 = vmor %vm5992, %vm5993
        %v5995 = vsel %vm5994, %v5987, %v5991
        %v5996 = vand.u32 2147483647, %v3919
        %vm5997 = vcmp.eq.f32.partialorder %v5996, 8.507059e+37
        %v5998 = vand.u32 %v3919, 2147483648
        %v5999 = vor.u32 1.1754944e-38, %v5998
        %v6000 = vsel %vm5997, %v5999, %v5995
        %v6001 = vmul.f32 1.0, %v6000
        %v6002 = vrcp.pop %v3920
        %v6003 = vmul.f32 %v3920, %v6002
        %v6004 = vsub.f32 1.0, %v6003
        %v6005 = vmul.f32 %v6002, %v6004
        %v6006 = vadd.f32 %v6002, %v6005
        %vm6007 = vweird.f32 %v3920
        %vm6008 = vweird.f32 %v6002
        %vm6009 = vmor %vm6007, %vm6008
        %v6010 = vsel %vm6009, %v6002, %v6006
        %v6011 = vand.u32 2147483647, %v3920
        %vm6012 = vcmp.eq.f32.partialorder %v6011, 8.507059e+37
        %v6013 = vand.u32 %v3920, 2147483648
        %v6014 = vor.u32 1.1754944e-38, %v6013
        %v6015 = vsel %vm6012, %v6014, %v6010
        %v6016 = vmul.f32 1.0, %v6015
        %v6017 = vrcp.pop %v3921
        %v6018 = vmul.f32 %v3921, %v6017
        %v6019 = vsub.f32 1.0, %v6018
        %v6020 = vmul.f32 %v6017, %v6019
        %v6021 = vadd.f32 %v6017, %v6020
        %vm6022 = vweird.f32 %v3921
        %vm6023 = vweird.f32 %v6017
        %vm6024 = vmor %vm6022, %vm6023
        %v6025 = vsel %vm6024, %v6017, %v6021
        %v6026 = vand.u32 2147483647, %v3921
        %vm6027 = vcmp.eq.f32.partialorder %v6026, 8.507059e+37
        %v6028 = vand.u32 %v3921, 2147483648
        %v6029 = vor.u32 1.1754944e-38, %v6028
        %v6030 = vsel %vm6027, %v6029, %v6025
        %v6031 = vmul.f32 1.0, %v6030
        %v6032 = vrcp.pop %v3922
        %v6033 = vmul.f32 %v3922, %v6032
        %v6034 = vsub.f32 1.0, %v6033
        %v6035 = vmul.f32 %v6032, %v6034
        %v6036 = vadd.f32 %v6032, %v6035
        %vm6037 = vweird.f32 %v3922
        %vm6038 = vweird.f32 %v6032
        %vm6039 = vmor %vm6037, %vm6038
        %v6040 = vsel %vm6039, %v6032, %v6036
        %v6041 = vand.u32 2147483647, %v3922
        %vm6042 = vcmp.eq.f32.partialorder %v6041, 8.507059e+37
        %v6043 = vand.u32 %v3922, 2147483648
        %v6044 = vor.u32 1.1754944e-38, %v6043
        %v6045 = vsel %vm6042, %v6044, %v6040
        %v6046 = vmul.f32 1.0, %v6045
        %v6047 = vrcp.pop %v3923
        %v6048 = vmul.f32 %v3923, %v6047
        %v6049 = vsub.f32 1.0, %v6048
        %v6050 = vmul.f32 %v6047, %v6049
        %v6051 = vadd.f32 %v6047, %v6050
        %vm6052 = vweird.f32 %v3923
        %vm6053 = vweird.f32 %v6047
        %vm6054 = vmor %vm6052, %vm6053
        %v6055 = vsel %vm6054, %v6047, %v6051
        %v6056 = vand.u32 2147483647, %v3923
        %vm6057 = vcmp.eq.f32.partialorder %v6056, 8.507059e+37
        %v6058 = vand.u32 %v3923, 2147483648
        %v6059 = vor.u32 1.1754944e-38, %v6058
        %v6060 = vsel %vm6057, %v6059, %v6055
        %v6061 = vmul.f32 1.0, %v6060
        %v6062 = vrcp.pop %v3924
        %v6063 = vmul.f32 %v3924, %v6062
        %v6064 = vsub.f32 1.0, %v6063
        %v6065 = vmul.f32 %v6062, %v6064
        %v6066 = vadd.f32 %v6062, %v6065
        %vm6067 = vweird.f32 %v3924
        %vm6068 = vweird.f32 %v6062
        %vm6069 = vmor %vm6067, %vm6068
        %v6070 = vsel %vm6069, %v6062, %v6066
        %v6071 = vand.u32 2147483647, %v3924
        %vm6072 = vcmp.eq.f32.partialorder %v6071, 8.507059e+37
        %v6073 = vand.u32 %v3924, 2147483648
        %v6074 = vor.u32 1.1754944e-38, %v6073
        %v6075 = vsel %vm6072, %v6074, %v6070
        %v6076 = vmul.f32 1.0, %v6075
        %v6077 = vrcp.pop %v3925
        %v6078 = vmul.f32 %v3925, %v6077
        %v6079 = vsub.f32 1.0, %v6078
        %v6080 = vmul.f32 %v6077, %v6079
        %v6081 = vadd.f32 %v6077, %v6080
        %vm6082 = vweird.f32 %v3925
        %vm6083 = vweird.f32 %v6077
        %vm6084 = vmor %vm6082, %vm6083
        %v6085 = vsel %vm6084, %v6077, %v6081
        %v6086 = vand.u32 2147483647, %v3925
        %vm6087 = vcmp.eq.f32.partialorder %v6086, 8.507059e+37
        %v6088 = vand.u32 %v3925, 2147483648
        %v6089 = vor.u32 1.1754944e-38, %v6088
        %v6090 = vsel %vm6087, %v6089, %v6085
        %v6091 = vmul.f32 1.0, %v6090
        %v6092 = vrcp.pop %v3926
        %v6093 = vmul.f32 %v3926, %v6092
        %v6094 = vsub.f32 1.0, %v6093
        %v6095 = vmul.f32 %v6092, %v6094
        %v6096 = vadd.f32 %v6092, %v6095
        %vm6097 = vweird.f32 %v3926
        %vm6098 = vweird.f32 %v6092
        %vm6099 = vmor %vm6097, %vm6098
        %v6100 = vsel %vm6099, %v6092, %v6096
        %v6101 = vand.u32 2147483647, %v3926
        %vm6102 = vcmp.eq.f32.partialorder %v6101, 8.507059e+37
        %v6103 = vand.u32 %v3926, 2147483648
        %v6104 = vor.u32 1.1754944e-38, %v6103
        %v6105 = vsel %vm6102, %v6104, %v6100
        %v6106 = vmul.f32 1.0, %v6105
        %v6107 = vrcp.pop %v3927
        %v6108 = vmul.f32 %v3927, %v6107
        %v6109 = vsub.f32 1.0, %v6108
        %v6110 = vmul.f32 %v6107, %v6109
        %v6111 = vadd.f32 %v6107, %v6110
        %vm6112 = vweird.f32 %v3927
        %vm6113 = vweird.f32 %v6107
        %vm6114 = vmor %vm6112, %vm6113
        %v6115 = vsel %vm6114, %v6107, %v6111
        %v6116 = vand.u32 2147483647, %v3927
        %vm6117 = vcmp.eq.f32.partialorder %v6116, 8.507059e+37
        %v6118 = vand.u32 %v3927, 2147483648
        %v6119 = vor.u32 1.1754944e-38, %v6118
        %v6120 = vsel %vm6117, %v6119, %v6115
        %v6121 = vmul.f32 1.0, %v6120
        %v6122 = vrcp.pop %v3928
        %v6123 = vmul.f32 %v3928, %v6122
        %v6124 = vsub.f32 1.0, %v6123
        %v6125 = vmul.f32 %v6122, %v6124
        %v6126 = vadd.f32 %v6122, %v6125
        %vm6127 = vweird.f32 %v3928
        %vm6128 = vweird.f32 %v6122
        %vm6129 = vmor %vm6127, %vm6128
        %v6130 = vsel %vm6129, %v6122, %v6126
        %v6131 = vand.u32 2147483647, %v3928
        %vm6132 = vcmp.eq.f32.partialorder %v6131, 8.507059e+37
        %v6133 = vand.u32 %v3928, 2147483648
        %v6134 = vor.u32 1.1754944e-38, %v6133
        %v6135 = vsel %vm6132, %v6134, %v6130
        %v6136 = vmul.f32 1.0, %v6135
        %v6137 = vrcp.pop %v3929
        %v6138 = vmul.f32 %v3929, %v6137
        %v6139 = vsub.f32 1.0, %v6138
        %v6140 = vmul.f32 %v6137, %v6139
        %v6141 = vadd.f32 %v6137, %v6140
        %vm6142 = vweird.f32 %v3929
        %vm6143 = vweird.f32 %v6137
        %vm6144 = vmor %vm6142, %vm6143
        %v6145 = vsel %vm6144, %v6137, %v6141
        %v6146 = vand.u32 2147483647, %v3929
        %vm6147 = vcmp.eq.f32.partialorder %v6146, 8.507059e+37
        %v6148 = vand.u32 %v3929, 2147483648
        %v6149 = vor.u32 1.1754944e-38, %v6148
        %v6150 = vsel %vm6147, %v6149, %v6145
        %v6151 = vmul.f32 1.0, %v6150
        %v6152 = vrcp.pop %v3930
        %v6153 = vmul.f32 %v3930, %v6152
        %v6154 = vsub.f32 1.0, %v6153
        %v6155 = vmul.f32 %v6152, %v6154
        %v6156 = vadd.f32 %v6152, %v6155
        %vm6157 = vweird.f32 %v3930
        %vm6158 = vweird.f32 %v6152
        %vm6159 = vmor %vm6157, %vm6158
        %v6160 = vsel %vm6159, %v6152, %v6156
        %v6161 = vand.u32 2147483647, %v3930
        %vm6162 = vcmp.eq.f32.partialorder %v6161, 8.507059e+37
        %v6163 = vand.u32 %v3930, 2147483648
        %v6164 = vor.u32 1.1754944e-38, %v6163
        %v6165 = vsel %vm6162, %v6164, %v6160
        %v6166 = vmul.f32 1.0, %v6165
        %v6167 = vrcp.pop %v3931
        %v6168 = vmul.f32 %v3931, %v6167
        %v6169 = vsub.f32 1.0, %v6168
        %v6170 = vmul.f32 %v6167, %v6169
        %v6171 = vadd.f32 %v6167, %v6170
        %vm6172 = vweird.f32 %v3931
        %vm6173 = vweird.f32 %v6167
        %vm6174 = vmor %vm6172, %vm6173
        %v6175 = vsel %vm6174, %v6167, %v6171
        %v6176 = vand.u32 2147483647, %v3931
        %vm6177 = vcmp.eq.f32.partialorder %v6176, 8.507059e+37
        %v6178 = vand.u32 %v3931, 2147483648
        %v6179 = vor.u32 1.1754944e-38, %v6178
        %v6180 = vsel %vm6177, %v6179, %v6175
        %v6181 = vmul.f32 1.0, %v6180
        %v6182 = vrcp.pop %v3932
        %v6183 = vmul.f32 %v3932, %v6182
        %v6184 = vsub.f32 1.0, %v6183
        %v6185 = vmul.f32 %v6182, %v6184
        %v6186 = vadd.f32 %v6182, %v6185
        %vm6187 = vweird.f32 %v3932
        %vm6188 = vweird.f32 %v6182
        %vm6189 = vmor %vm6187, %vm6188
        %v6190 = vsel %vm6189, %v6182, %v6186
        %v6191 = vand.u32 2147483647, %v3932
        %vm6192 = vcmp.eq.f32.partialorder %v6191, 8.507059e+37
        %v6193 = vand.u32 %v3932, 2147483648
        %v6194 = vor.u32 1.1754944e-38, %v6193
        %v6195 = vsel %vm6192, %v6194, %v6190
        %v6196 = vmul.f32 1.0, %v6195
        %v6197 = vrcp.pop %v3933
        %v6198 = vmul.f32 %v3933, %v6197
        %v6199 = vsub.f32 1.0, %v6198
        %v6200 = vmul.f32 %v6197, %v6199
        %v6201 = vadd.f32 %v6197, %v6200
        %vm6202 = vweird.f32 %v3933
        %vm6203 = vweird.f32 %v6197
        %vm6204 = vmor %vm6202, %vm6203
        %v6205 = vsel %vm6204, %v6197, %v6201
        %v6206 = vand.u32 2147483647, %v3933
        %vm6207 = vcmp.eq.f32.partialorder %v6206, 8.507059e+37
        %v6208 = vand.u32 %v3933, 2147483648
        %v6209 = vor.u32 1.1754944e-38, %v6208
        %v6210 = vsel %vm6207, %v6209, %v6205
        %v6211 = vmul.f32 1.0, %v6210
        %v6212 = vrcp.pop %v3934
        %v6213 = vmul.f32 %v3934, %v6212
        %v6214 = vsub.f32 1.0, %v6213
        %v6215 = vmul.f32 %v6212, %v6214
        %v6216 = vadd.f32 %v6212, %v6215
        %vm6217 = vweird.f32 %v3934
        %vm6218 = vweird.f32 %v6212
        %vm6219 = vmor %vm6217, %vm6218
        %v6220 = vsel %vm6219, %v6212, %v6216
        %v6221 = vand.u32 2147483647, %v3934
        %vm6222 = vcmp.eq.f32.partialorder %v6221, 8.507059e+37
        %v6223 = vand.u32 %v3934, 2147483648
        %v6224 = vor.u32 1.1754944e-38, %v6223
        %v6225 = vsel %vm6222, %v6224, %v6220
        %v6226 = vmul.f32 1.0, %v6225
        %v6227 = vrcp.pop %v3935
        %v6228 = vmul.f32 %v3935, %v6227
        %v6229 = vsub.f32 1.0, %v6228
        %v6230 = vmul.f32 %v6227, %v6229
        %v6231 = vadd.f32 %v6227, %v6230
        %vm6232 = vweird.f32 %v3935
        %vm6233 = vweird.f32 %v6227
        %vm6234 = vmor %vm6232, %vm6233
        %v6235 = vsel %vm6234, %v6227, %v6231
        %v6236 = vand.u32 2147483647, %v3935
        %vm6237 = vcmp.eq.f32.partialorder %v6236, 8.507059e+37
        %v6238 = vand.u32 %v3935, 2147483648
        %v6239 = vor.u32 1.1754944e-38, %v6238
        %v6240 = vsel %vm6237, %v6239, %v6235
        %v6241 = vmul.f32 1.0, %v6240
        %v6242 = vrcp.pop %v3936
        %v6243 = vmul.f32 %v3936, %v6242
        %v6244 = vsub.f32 1.0, %v6243
        %v6245 = vmul.f32 %v6242, %v6244
        %v6246 = vadd.f32 %v6242, %v6245
        %vm6247 = vweird.f32 %v3936
        %vm6248 = vweird.f32 %v6242
        %vm6249 = vmor %vm6247, %vm6248
        %v6250 = vsel %vm6249, %v6242, %v6246
        %v6251 = vand.u32 2147483647, %v3936
        %vm6252 = vcmp.eq.f32.partialorder %v6251, 8.507059e+37
        %v6253 = vand.u32 %v3936, 2147483648
        %v6254 = vor.u32 1.1754944e-38, %v6253
        %v6255 = vsel %vm6252, %v6254, %v6250
        %v6256 = vmul.f32 1.0, %v6255
        %v6257 = vrcp.pop %v3937
        %v6258 = vmul.f32 %v3937, %v6257
        %v6259 = vsub.f32 1.0, %v6258
        %v6260 = vmul.f32 %v6257, %v6259
        %v6261 = vadd.f32 %v6257, %v6260
        %vm6262 = vweird.f32 %v3937
        %vm6263 = vweird.f32 %v6257
        %vm6264 = vmor %vm6262, %vm6263
        %v6265 = vsel %vm6264, %v6257, %v6261
        %v6266 = vand.u32 2147483647, %v3937
        %vm6267 = vcmp.eq.f32.partialorder %v6266, 8.507059e+37
        %v6268 = vand.u32 %v3937, 2147483648
        %v6269 = vor.u32 1.1754944e-38, %v6268
        %v6270 = vsel %vm6267, %v6269, %v6265
        %v6271 = vmul.f32 1.0, %v6270
        %v6272 = vrcp.pop %v3938
        %v6273 = vmul.f32 %v3938, %v6272
        %v6274 = vsub.f32 1.0, %v6273
        %v6275 = vmul.f32 %v6272, %v6274
        %v6276 = vadd.f32 %v6272, %v6275
        %vm6277 = vweird.f32 %v3938
        %vm6278 = vweird.f32 %v6272
        %vm6279 = vmor %vm6277, %vm6278
        %v6280 = vsel %vm6279, %v6272, %v6276
        %v6281 = vand.u32 2147483647, %v3938
        %vm6282 = vcmp.eq.f32.partialorder %v6281, 8.507059e+37
        %v6283 = vand.u32 %v3938, 2147483648
        %v6284 = vor.u32 1.1754944e-38, %v6283
        %v6285 = vsel %vm6282, %v6284, %v6280
        %v6286 = vmul.f32 1.0, %v6285
        %v6287 = vrcp.pop %v3939
        %v6288 = vmul.f32 %v3939, %v6287
        %v6289 = vsub.f32 1.0, %v6288
        %v6290 = vmul.f32 %v6287, %v6289
        %v6291 = vadd.f32 %v6287, %v6290
        %vm6292 = vweird.f32 %v3939
        %vm6293 = vweird.f32 %v6287
        %vm6294 = vmor %vm6292, %vm6293
        %v6295 = vsel %vm6294, %v6287, %v6291
        %v6296 = vand.u32 2147483647, %v3939
        %vm6297 = vcmp.eq.f32.partialorder %v6296, 8.507059e+37
        %v6298 = vand.u32 %v3939, 2147483648
        %v6299 = vor.u32 1.1754944e-38, %v6298
        %v6300 = vsel %vm6297, %v6299, %v6295
        %v6301 = vmul.f32 1.0, %v6300
        %v6302 = vrcp.pop %v3940
        %v6303 = vmul.f32 %v3940, %v6302
        %v6304 = vsub.f32 1.0, %v6303
        %v6305 = vmul.f32 %v6302, %v6304
        %v6306 = vadd.f32 %v6302, %v6305
        %vm6307 = vweird.f32 %v3940
        %vm6308 = vweird.f32 %v6302
        %vm6309 = vmor %vm6307, %vm6308
        %v6310 = vsel %vm6309, %v6302, %v6306
        %v6311 = vand.u32 2147483647, %v3940
        %vm6312 = vcmp.eq.f32.partialorder %v6311, 8.507059e+37
        %v6313 = vand.u32 %v3940, 2147483648
        %v6314 = vor.u32 1.1754944e-38, %v6313
        %v6315 = vsel %vm6312, %v6314, %v6310
        %v6316 = vmul.f32 1.0, %v6315
        %v6317 = vrcp.pop %v3941
        %v6318 = vmul.f32 %v3941, %v6317
        %v6319 = vsub.f32 1.0, %v6318
        %v6320 = vmul.f32 %v6317, %v6319
        %v6321 = vadd.f32 %v6317, %v6320
        %vm6322 = vweird.f32 %v3941
        %vm6323 = vweird.f32 %v6317
        %vm6324 = vmor %vm6322, %vm6323
        %v6325 = vsel %vm6324, %v6317, %v6321
        %v6326 = vand.u32 2147483647, %v3941
        %vm6327 = vcmp.eq.f32.partialorder %v6326, 8.507059e+37
        %v6328 = vand.u32 %v3941, 2147483648
        %v6329 = vor.u32 1.1754944e-38, %v6328
        %v6330 = vsel %vm6327, %v6329, %v6325
        %v6331 = vmul.f32 1.0, %v6330
        %v6332 = vrcp.pop %v3942
        %v6333 = vmul.f32 %v3942, %v6332
        %v6334 = vsub.f32 1.0, %v6333
        %v6335 = vmul.f32 %v6332, %v6334
        %v6336 = vadd.f32 %v6332, %v6335
        %vm6337 = vweird.f32 %v3942
        %vm6338 = vweird.f32 %v6332
        %vm6339 = vmor %vm6337, %vm6338
        %v6340 = vsel %vm6339, %v6332, %v6336
        %v6341 = vand.u32 2147483647, %v3942
        %vm6342 = vcmp.eq.f32.partialorder %v6341, 8.507059e+37
        %v6343 = vand.u32 %v3942, 2147483648
        %v6344 = vor.u32 1.1754944e-38, %v6343
        %v6345 = vsel %vm6342, %v6344, %v6340
        %v6346 = vmul.f32 1.0, %v6345
        %v6347 = vrcp.pop %v3943
        %v6348 = vmul.f32 %v3943, %v6347
        %v6349 = vsub.f32 1.0, %v6348
        %v6350 = vmul.f32 %v6347, %v6349
        %v6351 = vadd.f32 %v6347, %v6350
        %vm6352 = vweird.f32 %v3943
        %vm6353 = vweird.f32 %v6347
        %vm6354 = vmor %vm6352, %vm6353
        %v6355 = vsel %vm6354, %v6347, %v6351
        %v6356 = vand.u32 2147483647, %v3943
        %vm6357 = vcmp.eq.f32.partialorder %v6356, 8.507059e+37
        %v6358 = vand.u32 %v3943, 2147483648
        %v6359 = vor.u32 1.1754944e-38, %v6358
        %v6360 = vsel %vm6357, %v6359, %v6355
        %v6361 = vmul.f32 1.0, %v6360
        %v6362 = vrcp.pop %v3944
        %v6363 = vmul.f32 %v3944, %v6362
        %v6364 = vsub.f32 1.0, %v6363
        %v6365 = vmul.f32 %v6362, %v6364
        %v6366 = vadd.f32 %v6362, %v6365
        %vm6367 = vweird.f32 %v3944
        %vm6368 = vweird.f32 %v6362
        %vm6369 = vmor %vm6367, %vm6368
        %v6370 = vsel %vm6369, %v6362, %v6366
        %v6371 = vand.u32 2147483647, %v3944
        %vm6372 = vcmp.eq.f32.partialorder %v6371, 8.507059e+37
        %v6373 = vand.u32 %v3944, 2147483648
        %v6374 = vor.u32 1.1754944e-38, %v6373
        %v6375 = vsel %vm6372, %v6374, %v6370
        %v6376 = vmul.f32 1.0, %v6375
        %v6377 = vrcp.pop %v3945
        %v6378 = vmul.f32 %v3945, %v6377
        %v6379 = vsub.f32 1.0, %v6378
        %v6380 = vmul.f32 %v6377, %v6379
        %v6381 = vadd.f32 %v6377, %v6380
        %vm6382 = vweird.f32 %v3945
        %vm6383 = vweird.f32 %v6377
        %vm6384 = vmor %vm6382, %vm6383
        %v6385 = vsel %vm6384, %v6377, %v6381
        %v6386 = vand.u32 2147483647, %v3945
        %vm6387 = vcmp.eq.f32.partialorder %v6386, 8.507059e+37
        %v6388 = vand.u32 %v3945, 2147483648
        %v6389 = vor.u32 1.1754944e-38, %v6388
        %v6390 = vsel %vm6387, %v6389, %v6385
        %v6391 = vmul.f32 1.0, %v6390
        %v6392 = vrcp.pop %v3946
        %v6393 = vmul.f32 %v3946, %v6392
        %v6394 = vsub.f32 1.0, %v6393
        %v6395 = vmul.f32 %v6392, %v6394
        %v6396 = vadd.f32 %v6392, %v6395
        %vm6397 = vweird.f32 %v3946
        %vm6398 = vweird.f32 %v6392
        %vm6399 = vmor %vm6397, %vm6398
        %v6400 = vsel %vm6399, %v6392, %v6396
        %v6401 = vand.u32 2147483647, %v3946
        %vm6402 = vcmp.eq.f32.partialorder %v6401, 8.507059e+37
        %v6403 = vand.u32 %v3946, 2147483648
        %v6404 = vor.u32 1.1754944e-38, %v6403
        %v6405 = vsel %vm6402, %v6404, %v6400
        %v6406 = vmul.f32 1.0, %v6405
        %v6407 = vrcp.pop %v3947
        %v6408 = vmul.f32 %v3947, %v6407
        %v6409 = vsub.f32 1.0, %v6408
        %v6410 = vmul.f32 %v6407, %v6409
        %v6411 = vadd.f32 %v6407, %v6410
        %vm6412 = vweird.f32 %v3947
        %vm6413 = vweird.f32 %v6407
        %vm6414 = vmor %vm6412, %vm6413
        %v6415 = vsel %vm6414, %v6407, %v6411
        %v6416 = vand.u32 2147483647, %v3947
        %vm6417 = vcmp.eq.f32.partialorder %v6416, 8.507059e+37
        %v6418 = vand.u32 %v3947, 2147483648
        %v6419 = vor.u32 1.1754944e-38, %v6418
        %v6420 = vsel %vm6417, %v6419, %v6415
        %v6421 = vmul.f32 1.0, %v6420
        %v6422 = vrcp.pop %v3948
        %v6423 = vmul.f32 %v3948, %v6422
        %v6424 = vsub.f32 1.0, %v6423
        %v6425 = vmul.f32 %v6422, %v6424
        %v6426 = vadd.f32 %v6422, %v6425
        %vm6427 = vweird.f32 %v3948
        %vm6428 = vweird.f32 %v6422
        %vm6429 = vmor %vm6427, %vm6428
        %v6430 = vsel %vm6429, %v6422, %v6426
        %v6431 = vand.u32 2147483647, %v3948
        %vm6432 = vcmp.eq.f32.partialorder %v6431, 8.507059e+37
        %v6433 = vand.u32 %v3948, 2147483648
        %v6434 = vor.u32 1.1754944e-38, %v6433
        %v6435 = vsel %vm6432, %v6434, %v6430
        %v6436 = vmul.f32 1.0, %v6435
        %v6437 = vrcp.pop %v3949
        %v6438 = vmul.f32 %v3949, %v6437
        %v6439 = vsub.f32 1.0, %v6438
        %v6440 = vmul.f32 %v6437, %v6439
        %v6441 = vadd.f32 %v6437, %v6440
        %vm6442 = vweird.f32 %v3949
        %vm6443 = vweird.f32 %v6437
        %vm6444 = vmor %vm6442, %vm6443
        %v6445 = vsel %vm6444, %v6437, %v6441
        %v6446 = vand.u32 2147483647, %v3949
        %vm6447 = vcmp.eq.f32.partialorder %v6446, 8.507059e+37
        %v6448 = vand.u32 %v3949, 2147483648
        %v6449 = vor.u32 1.1754944e-38, %v6448
        %v6450 = vsel %vm6447, %v6449, %v6445
        %v6451 = vmul.f32 1.0, %v6450
        %v6452 = vrcp.pop %v3950
        %v6453 = vmul.f32 %v3950, %v6452
        %v6454 = vsub.f32 1.0, %v6453
        %v6455 = vmul.f32 %v6452, %v6454
        %v6456 = vadd.f32 %v6452, %v6455
        %vm6457 = vweird.f32 %v3950
        %vm6458 = vweird.f32 %v6452
        %vm6459 = vmor %vm6457, %vm6458
        %v6460 = vsel %vm6459, %v6452, %v6456
        %v6461 = vand.u32 2147483647, %v3950
        %vm6462 = vcmp.eq.f32.partialorder %v6461, 8.507059e+37
        %v6463 = vand.u32 %v3950, 2147483648
        %v6464 = vor.u32 1.1754944e-38, %v6463
        %v6465 = vsel %vm6462, %v6464, %v6460
        %v6466 = vmul.f32 1.0, %v6465
        %v6467 = vrcp.pop %v3951
        %v6468 = vmul.f32 %v3951, %v6467
        %v6469 = vsub.f32 1.0, %v6468
        %v6470 = vmul.f32 %v6467, %v6469
        %v6471 = vadd.f32 %v6467, %v6470
        %vm6472 = vweird.f32 %v3951
        %vm6473 = vweird.f32 %v6467
        %vm6474 = vmor %vm6472, %vm6473
        %v6475 = vsel %vm6474, %v6467, %v6471
        %v6476 = vand.u32 2147483647, %v3951
        %vm6477 = vcmp.eq.f32.partialorder %v6476, 8.507059e+37
        %v6478 = vand.u32 %v3951, 2147483648
        %v6479 = vor.u32 1.1754944e-38, %v6478
        %v6480 = vsel %vm6477, %v6479, %v6475
        %v6481 = vmul.f32 1.0, %v6480
        %v6482 = vrcp.pop %v3952
        %v6483 = vmul.f32 %v3952, %v6482
        %v6484 = vsub.f32 1.0, %v6483
        %v6485 = vmul.f32 %v6482, %v6484
        %v6486 = vadd.f32 %v6482, %v6485
        %vm6487 = vweird.f32 %v3952
        %vm6488 = vweird.f32 %v6482
        %vm6489 = vmor %vm6487, %vm6488
        %v6490 = vsel %vm6489, %v6482, %v6486
        %v6491 = vand.u32 2147483647, %v3952
        %vm6492 = vcmp.eq.f32.partialorder %v6491, 8.507059e+37
        %v6493 = vand.u32 %v3952, 2147483648
        %v6494 = vor.u32 1.1754944e-38, %v6493
        %v6495 = vsel %vm6492, %v6494, %v6490
        %v6496 = vmul.f32 1.0, %v6495
        %v6497 = vrcp.pop %v3953
        %v6498 = vmul.f32 %v3953, %v6497
        %v6499 = vsub.f32 1.0, %v6498
        %v6500 = vmul.f32 %v6497, %v6499
        %v6501 = vadd.f32 %v6497, %v6500
        %vm6502 = vweird.f32 %v3953
        %vm6503 = vweird.f32 %v6497
        %vm6504 = vmor %vm6502, %vm6503
        %v6505 = vsel %vm6504, %v6497, %v6501
        %v6506 = vand.u32 2147483647, %v3953
        %vm6507 = vcmp.eq.f32.partialorder %v6506, 8.507059e+37
        %v6508 = vand.u32 %v3953, 2147483648
        %v6509 = vor.u32 1.1754944e-38, %v6508
        %v6510 = vsel %vm6507, %v6509, %v6505
        %v6511 = vmul.f32 1.0, %v6510
        %v6512 = vrcp.pop %v3954
        %v6513 = vmul.f32 %v3954, %v6512
        %v6514 = vsub.f32 1.0, %v6513
        %v6515 = vmul.f32 %v6512, %v6514
        %v6516 = vadd.f32 %v6512, %v6515
        %vm6517 = vweird.f32 %v3954
        %vm6518 = vweird.f32 %v6512
        %vm6519 = vmor %vm6517, %vm6518
        %v6520 = vsel %vm6519, %v6512, %v6516
        %v6521 = vand.u32 2147483647, %v3954
        %vm6522 = vcmp.eq.f32.partialorder %v6521, 8.507059e+37
        %v6523 = vand.u32 %v3954, 2147483648
        %v6524 = vor.u32 1.1754944e-38, %v6523
        %v6525 = vsel %vm6522, %v6524, %v6520
        %v6526 = vmul.f32 1.0, %v6525
        %v6527 = vrcp.pop %v3955
        %v6528 = vmul.f32 %v3955, %v6527
        %v6529 = vsub.f32 1.0, %v6528
        %v6530 = vmul.f32 %v6527, %v6529
        %v6531 = vadd.f32 %v6527, %v6530
        %vm6532 = vweird.f32 %v3955
        %vm6533 = vweird.f32 %v6527
        %vm6534 = vmor %vm6532, %vm6533
        %v6535 = vsel %vm6534, %v6527, %v6531
        %v6536 = vand.u32 2147483647, %v3955
        %vm6537 = vcmp.eq.f32.partialorder %v6536, 8.507059e+37
        %v6538 = vand.u32 %v3955, 2147483648
        %v6539 = vor.u32 1.1754944e-38, %v6538
        %v6540 = vsel %vm6537, %v6539, %v6535
        %v6541 = vmul.f32 1.0, %v6540
        %v6542 = vrcp.pop %v3956
        %v6543 = vmul.f32 %v3956, %v6542
        %v6544 = vsub.f32 1.0, %v6543
        %v6545 = vmul.f32 %v6542, %v6544
        %v6546 = vadd.f32 %v6542, %v6545
        %vm6547 = vweird.f32 %v3956
        %vm6548 = vweird.f32 %v6542
        %vm6549 = vmor %vm6547, %vm6548
        %v6550 = vsel %vm6549, %v6542, %v6546
        %v6551 = vand.u32 2147483647, %v3956
        %vm6552 = vcmp.eq.f32.partialorder %v6551, 8.507059e+37
        %v6553 = vand.u32 %v3956, 2147483648
        %v6554 = vor.u32 1.1754944e-38, %v6553
        %v6555 = vsel %vm6552, %v6554, %v6550
        %v6556 = vmul.f32 1.0, %v6555
        %v6557 = vrcp.pop %v3957
        %v6558 = vmul.f32 %v3957, %v6557
        %v6559 = vsub.f32 1.0, %v6558
        %v6560 = vmul.f32 %v6557, %v6559
        %v6561 = vadd.f32 %v6557, %v6560
        %vm6562 = vweird.f32 %v3957
        %vm6563 = vweird.f32 %v6557
        %vm6564 = vmor %vm6562, %vm6563
        %v6565 = vsel %vm6564, %v6557, %v6561
        %v6566 = vand.u32 2147483647, %v3957
        %vm6567 = vcmp.eq.f32.partialorder %v6566, 8.507059e+37
        %v6568 = vand.u32 %v3957, 2147483648
        %v6569 = vor.u32 1.1754944e-38, %v6568
        %v6570 = vsel %vm6567, %v6569, %v6565
        %v6571 = vmul.f32 1.0, %v6570
        %v6572 = vrcp.pop %v3958
        %v6573 = vmul.f32 %v3958, %v6572
        %v6574 = vsub.f32 1.0, %v6573
        %v6575 = vmul.f32 %v6572, %v6574
        %v6576 = vadd.f32 %v6572, %v6575
        %vm6577 = vweird.f32 %v3958
        %vm6578 = vweird.f32 %v6572
        %vm6579 = vmor %vm6577, %vm6578
        %v6580 = vsel %vm6579, %v6572, %v6576
        %v6581 = vand.u32 2147483647, %v3958
        %vm6582 = vcmp.eq.f32.partialorder %v6581, 8.507059e+37
        %v6583 = vand.u32 %v3958, 2147483648
        %v6584 = vor.u32 1.1754944e-38, %v6583
        %v6585 = vsel %vm6582, %v6584, %v6580
        %v6586 = vmul.f32 1.0, %v6585
        %v6587 = vrcp.pop %v3959
        %v6588 = vmul.f32 %v3959, %v6587
        %v6589 = vsub.f32 1.0, %v6588
        %v6590 = vmul.f32 %v6587, %v6589
        %v6591 = vadd.f32 %v6587, %v6590
        %vm6592 = vweird.f32 %v3959
        %vm6593 = vweird.f32 %v6587
        %vm6594 = vmor %vm6592, %vm6593
        %v6595 = vsel %vm6594, %v6587, %v6591
        %v6596 = vand.u32 2147483647, %v3959
        %vm6597 = vcmp.eq.f32.partialorder %v6596, 8.507059e+37
        %v6598 = vand.u32 %v3959, 2147483648
        %v6599 = vor.u32 1.1754944e-38, %v6598
        %v6600 = vsel %vm6597, %v6599, %v6595
        %v6601 = vmul.f32 1.0, %v6600
        %v6602 = vrcp.pop %v3960
        %v6603 = vmul.f32 %v3960, %v6602
        %v6604 = vsub.f32 1.0, %v6603
        %v6605 = vmul.f32 %v6602, %v6604
        %v6606 = vadd.f32 %v6602, %v6605
        %vm6607 = vweird.f32 %v3960
        %vm6608 = vweird.f32 %v6602
        %vm6609 = vmor %vm6607, %vm6608
        %v6610 = vsel %vm6609, %v6602, %v6606
        %v6611 = vand.u32 2147483647, %v3960
        %vm6612 = vcmp.eq.f32.partialorder %v6611, 8.507059e+37
        %v6613 = vand.u32 %v3960, 2147483648
        %v6614 = vor.u32 1.1754944e-38, %v6613
        %v6615 = vsel %vm6612, %v6614, %v6610
        %v6616 = vmul.f32 1.0, %v6615
        %v6617 = vrcp.pop %v3961
        %v6618 = vmul.f32 %v3961, %v6617
        %v6619 = vsub.f32 1.0, %v6618
        %v6620 = vmul.f32 %v6617, %v6619
        %v6621 = vadd.f32 %v6617, %v6620
        %vm6622 = vweird.f32 %v3961
        %vm6623 = vweird.f32 %v6617
        %vm6624 = vmor %vm6622, %vm6623
        %v6625 = vsel %vm6624, %v6617, %v6621
        %v6626 = vand.u32 2147483647, %v3961
        %vm6627 = vcmp.eq.f32.partialorder %v6626, 8.507059e+37
        %v6628 = vand.u32 %v3961, 2147483648
        %v6629 = vor.u32 1.1754944e-38, %v6628
        %v6630 = vsel %vm6627, %v6629, %v6625
        %v6631 = vmul.f32 1.0, %v6630
        %v6632 = vrcp.pop %v3962
        %v6633 = vmul.f32 %v3962, %v6632
        %v6634 = vsub.f32 1.0, %v6633
        %v6635 = vmul.f32 %v6632, %v6634
        %v6636 = vadd.f32 %v6632, %v6635
        %vm6637 = vweird.f32 %v3962
        %vm6638 = vweird.f32 %v6632
        %vm6639 = vmor %vm6637, %vm6638
        %v6640 = vsel %vm6639, %v6632, %v6636
        %v6641 = vand.u32 2147483647, %v3962
        %vm6642 = vcmp.eq.f32.partialorder %v6641, 8.507059e+37
        %v6643 = vand.u32 %v3962, 2147483648
        %v6644 = vor.u32 1.1754944e-38, %v6643
        %v6645 = vsel %vm6642, %v6644, %v6640
        %v6646 = vmul.f32 1.0, %v6645
        %v6647 = vrcp.pop %v3963
        %v6648 = vmul.f32 %v3963, %v6647
        %v6649 = vsub.f32 1.0, %v6648
        %v6650 = vmul.f32 %v6647, %v6649
        %v6651 = vadd.f32 %v6647, %v6650
        %vm6652 = vweird.f32 %v3963
        %vm6653 = vweird.f32 %v6647
        %vm6654 = vmor %vm6652, %vm6653
        %v6655 = vsel %vm6654, %v6647, %v6651
        %v6656 = vand.u32 2147483647, %v3963
        %vm6657 = vcmp.eq.f32.partialorder %v6656, 8.507059e+37
        %v6658 = vand.u32 %v3963, 2147483648
        %v6659 = vor.u32 1.1754944e-38, %v6658
        %v6660 = vsel %vm6657, %v6659, %v6655
        %v6661 = vmul.f32 1.0, %v6660
        %v6662 = vrcp.pop %v3964
        %v6663 = vmul.f32 %v3964, %v6662
        %v6664 = vsub.f32 1.0, %v6663
        %v6665 = vmul.f32 %v6662, %v6664
        %v6666 = vadd.f32 %v6662, %v6665
        %vm6667 = vweird.f32 %v3964
        %vm6668 = vweird.f32 %v6662
        %vm6669 = vmor %vm6667, %vm6668
        %v6670 = vsel %vm6669, %v6662, %v6666
        %v6671 = vand.u32 2147483647, %v3964
        %vm6672 = vcmp.eq.f32.partialorder %v6671, 8.507059e+37
        %v6673 = vand.u32 %v3964, 2147483648
        %v6674 = vor.u32 1.1754944e-38, %v6673
        %v6675 = vsel %vm6672, %v6674, %v6670
        %v6676 = vmul.f32 1.0, %v6675
        %v6677 = vrcp.pop %v3965
        %v6678 = vmul.f32 %v3965, %v6677
        %v6679 = vsub.f32 1.0, %v6678
        %v6680 = vmul.f32 %v6677, %v6679
        %v6681 = vadd.f32 %v6677, %v6680
        %vm6682 = vweird.f32 %v3965
        %vm6683 = vweird.f32 %v6677
        %vm6684 = vmor %vm6682, %vm6683
        %v6685 = vsel %vm6684, %v6677, %v6681
        %v6686 = vand.u32 2147483647, %v3965
        %vm6687 = vcmp.eq.f32.partialorder %v6686, 8.507059e+37
        %v6688 = vand.u32 %v3965, 2147483648
        %v6689 = vor.u32 1.1754944e-38, %v6688
        %v6690 = vsel %vm6687, %v6689, %v6685
        %v6691 = vmul.f32 1.0, %v6690
        %v6692 = vrcp.pop %v3966
        %v6693 = vmul.f32 %v3966, %v6692
        %v6694 = vsub.f32 1.0, %v6693
        %v6695 = vmul.f32 %v6692, %v6694
        %v6696 = vadd.f32 %v6692, %v6695
        %vm6697 = vweird.f32 %v3966
        %vm6698 = vweird.f32 %v6692
        %vm6699 = vmor %vm6697, %vm6698
        %v6700 = vsel %vm6699, %v6692, %v6696
        %v6701 = vand.u32 2147483647, %v3966
        %vm6702 = vcmp.eq.f32.partialorder %v6701, 8.507059e+37
        %v6703 = vand.u32 %v3966, 2147483648
        %v6704 = vor.u32 1.1754944e-38, %v6703
        %v6705 = vsel %vm6702, %v6704, %v6700
        %v6706 = vmul.f32 1.0, %v6705
        %v6707 = vrcp.pop %v3967
        %v6708 = vmul.f32 %v3967, %v6707
        %v6709 = vsub.f32 1.0, %v6708
        %v6710 = vmul.f32 %v6707, %v6709
        %v6711 = vadd.f32 %v6707, %v6710
        %vm6712 = vweird.f32 %v3967
        %vm6713 = vweird.f32 %v6707
        %vm6714 = vmor %vm6712, %vm6713
        %v6715 = vsel %vm6714, %v6707, %v6711
        %v6716 = vand.u32 2147483647, %v3967
        %vm6717 = vcmp.eq.f32.partialorder %v6716, 8.507059e+37
        %v6718 = vand.u32 %v3967, 2147483648
        %v6719 = vor.u32 1.1754944e-38, %v6718
        %v6720 = vsel %vm6717, %v6719, %v6715
        %v6721 = vmul.f32 1.0, %v6720
        %v6722 = vrcp.pop %v3968
        %v6723 = vmul.f32 %v3968, %v6722
        %v6724 = vsub.f32 1.0, %v6723
        %v6725 = vmul.f32 %v6722, %v6724
        %v6726 = vadd.f32 %v6722, %v6725
        %vm6727 = vweird.f32 %v3968
        %vm6728 = vweird.f32 %v6722
        %vm6729 = vmor %vm6727, %vm6728
        %v6730 = vsel %vm6729, %v6722, %v6726
        %v6731 = vand.u32 2147483647, %v3968
        %vm6732 = vcmp.eq.f32.partialorder %v6731, 8.507059e+37
        %v6733 = vand.u32 %v3968, 2147483648
        %v6734 = vor.u32 1.1754944e-38, %v6733
        %v6735 = vsel %vm6732, %v6734, %v6730
        %v6736 = vmul.f32 1.0, %v6735
        %v6737 = vrcp.pop %v3969
        %v6738 = vmul.f32 %v3969, %v6737
        %v6739 = vsub.f32 1.0, %v6738
        %v6740 = vmul.f32 %v6737, %v6739
        %v6741 = vadd.f32 %v6737, %v6740
        %vm6742 = vweird.f32 %v3969
        %vm6743 = vweird.f32 %v6737
        %vm6744 = vmor %vm6742, %vm6743
        %v6745 = vsel %vm6744, %v6737, %v6741
        %v6746 = vand.u32 2147483647, %v3969
        %vm6747 = vcmp.eq.f32.partialorder %v6746, 8.507059e+37
        %v6748 = vand.u32 %v3969, 2147483648
        %v6749 = vor.u32 1.1754944e-38, %v6748
        %v6750 = vsel %vm6747, %v6749, %v6745
        %v6751 = vmul.f32 1.0, %v6750
        %v6752 = vrcp.pop %v3970
        %v6753 = vmul.f32 %v3970, %v6752
        %v6754 = vsub.f32 1.0, %v6753
        %v6755 = vmul.f32 %v6752, %v6754
        %v6756 = vadd.f32 %v6752, %v6755
        %vm6757 = vweird.f32 %v3970
        %vm6758 = vweird.f32 %v6752
        %vm6759 = vmor %vm6757, %vm6758
        %v6760 = vsel %vm6759, %v6752, %v6756
        %v6761 = vand.u32 2147483647, %v3970
        %vm6762 = vcmp.eq.f32.partialorder %v6761, 8.507059e+37
        %v6763 = vand.u32 %v3970, 2147483648
        %v6764 = vor.u32 1.1754944e-38, %v6763
        %v6765 = vsel %vm6762, %v6764, %v6760
        %v6766 = vmul.f32 1.0, %v6765
        %v6767 = vrcp.pop %v3971
        %v6768 = vmul.f32 %v3971, %v6767
        %v6769 = vsub.f32 1.0, %v6768
        %v6770 = vmul.f32 %v6767, %v6769
        %v6771 = vadd.f32 %v6767, %v6770
        %vm6772 = vweird.f32 %v3971
        %vm6773 = vweird.f32 %v6767
        %vm6774 = vmor %vm6772, %vm6773
        %v6775 = vsel %vm6774, %v6767, %v6771
        %v6776 = vand.u32 2147483647, %v3971
        %vm6777 = vcmp.eq.f32.partialorder %v6776, 8.507059e+37
        %v6778 = vand.u32 %v3971, 2147483648
        %v6779 = vor.u32 1.1754944e-38, %v6778
        %v6780 = vsel %vm6777, %v6779, %v6775
        %v6781 = vmul.f32 1.0, %v6780
        %v6782 = vrcp.pop %v3972
        %v6783 = vmul.f32 %v3972, %v6782
        %v6784 = vsub.f32 1.0, %v6783
        %v6785 = vmul.f32 %v6782, %v6784
        %v6786 = vadd.f32 %v6782, %v6785
        %vm6787 = vweird.f32 %v3972
        %vm6788 = vweird.f32 %v6782
        %vm6789 = vmor %vm6787, %vm6788
        %v6790 = vsel %vm6789, %v6782, %v6786
        %v6791 = vand.u32 2147483647, %v3972
        %vm6792 = vcmp.eq.f32.partialorder %v6791, 8.507059e+37
        %v6793 = vand.u32 %v3972, 2147483648
        %v6794 = vor.u32 1.1754944e-38, %v6793
        %v6795 = vsel %vm6792, %v6794, %v6790
        %v6796 = vmul.f32 1.0, %v6795
        %v6797 = vrcp.pop %v3973
        %v6798 = vmul.f32 %v3973, %v6797
        %v6799 = vsub.f32 1.0, %v6798
        %v6800 = vmul.f32 %v6797, %v6799
        %v6801 = vadd.f32 %v6797, %v6800
        %vm6802 = vweird.f32 %v3973
        %vm6803 = vweird.f32 %v6797
        %vm6804 = vmor %vm6802, %vm6803
        %v6805 = vsel %vm6804, %v6797, %v6801
        %v6806 = vand.u32 2147483647, %v3973
        %vm6807 = vcmp.eq.f32.partialorder %v6806, 8.507059e+37
        %v6808 = vand.u32 %v3973, 2147483648
        %v6809 = vor.u32 1.1754944e-38, %v6808
        %v6810 = vsel %vm6807, %v6809, %v6805
        %v6811 = vmul.f32 1.0, %v6810
        %v6812 = vrcp.pop %v3974
        %v6813 = vmul.f32 %v3974, %v6812
        %v6814 = vsub.f32 1.0, %v6813
        %v6815 = vmul.f32 %v6812, %v6814
        %v6816 = vadd.f32 %v6812, %v6815
        %vm6817 = vweird.f32 %v3974
        %vm6818 = vweird.f32 %v6812
        %vm6819 = vmor %vm6817, %vm6818
        %v6820 = vsel %vm6819, %v6812, %v6816
        %v6821 = vand.u32 2147483647, %v3974
        %vm6822 = vcmp.eq.f32.partialorder %v6821, 8.507059e+37
        %v6823 = vand.u32 %v3974, 2147483648
        %v6824 = vor.u32 1.1754944e-38, %v6823
        %v6825 = vsel %vm6822, %v6824, %v6820
        %v6826 = vmul.f32 1.0, %v6825
        %v6827 = vrcp.pop %v3975
        %v6828 = vmul.f32 %v3975, %v6827
        %v6829 = vsub.f32 1.0, %v6828
        %v6830 = vmul.f32 %v6827, %v6829
        %v6831 = vadd.f32 %v6827, %v6830
        %vm6832 = vweird.f32 %v3975
        %vm6833 = vweird.f32 %v6827
        %vm6834 = vmor %vm6832, %vm6833
        %v6835 = vsel %vm6834, %v6827, %v6831
        %v6836 = vand.u32 2147483647, %v3975
        %vm6837 = vcmp.eq.f32.partialorder %v6836, 8.507059e+37
        %v6838 = vand.u32 %v3975, 2147483648
        %v6839 = vor.u32 1.1754944e-38, %v6838
        %v6840 = vsel %vm6837, %v6839, %v6835
        %v6841 = vmul.f32 1.0, %v6840
        %v6842 = vrcp.pop %v3976
        %v6843 = vmul.f32 %v3976, %v6842
        %v6844 = vsub.f32 1.0, %v6843
        %v6845 = vmul.f32 %v6842, %v6844
        %v6846 = vadd.f32 %v6842, %v6845
        %vm6847 = vweird.f32 %v3976
        %vm6848 = vweird.f32 %v6842
        %vm6849 = vmor %vm6847, %vm6848
        %v6850 = vsel %vm6849, %v6842, %v6846
        %v6851 = vand.u32 2147483647, %v3976
        %vm6852 = vcmp.eq.f32.partialorder %v6851, 8.507059e+37
        %v6853 = vand.u32 %v3976, 2147483648
        %v6854 = vor.u32 1.1754944e-38, %v6853
        %v6855 = vsel %vm6852, %v6854, %v6850
        %v6856 = vmul.f32 1.0, %v6855
        %v6857 = vld [vmem:[%s519] sm:$0xff]
        %v6858 = vld [vmem:[%s519 + $0x8] sm:$0xff]
        %v6859 = vld [vmem:[%s519 + $0x10] sm:$0xff]
        %v6860 = vld [vmem:[%s519 + $0x18] sm:$0xff]
        %v6861 = vld [vmem:[%s519 + $0x20] sm:$0xff]
        %v6862 = vld [vmem:[%s519 + $0x28] sm:$0xff]
        %v6863 = vld [vmem:[%s519 + $0x30] sm:$0xff]
        %v6864 = vld [vmem:[%s519 + $0x38] sm:$0xff]
        %v6865 = vld [vmem:[%s519 + $0x40] sm:$0xff]
        %v6866 = vld [vmem:[%s519 + $0x48] sm:$0xff]
        %v6867 = vld [vmem:[%s519 + $0x50] sm:$0xff]
        %v6868 = vld [vmem:[%s519 + $0x58] sm:$0xff]
        %v6869 = vld [vmem:[%s519 + $0x60] sm:$0xff]
        %v6870 = vld [vmem:[%s519 + $0x68] sm:$0xff]
        %v6871 = vld [vmem:[%s519 + $0x70] sm:$0xff]
        %v6872 = vld [vmem:[%s519 + $0x78] sm:$0xff]
        %v6873 = vld [vmem:[%s519 + $0x80] sm:$0xff]
        %v6874 = vld [vmem:[%s519 + $0x88] sm:$0xff]
        %v6875 = vld [vmem:[%s519 + $0x90] sm:$0xff]
        %v6876 = vld [vmem:[%s519 + $0x98] sm:$0xff]
        %v6877 = vld [vmem:[%s519 + $0xa0] sm:$0xff]
        %v6878 = vld [vmem:[%s519 + $0xa8] sm:$0xff]
        %v6879 = vld [vmem:[%s519 + $0xb0] sm:$0xff]
        %v6880 = vld [vmem:[%s519 + $0xb8] sm:$0xff]
        %v6881 = vld [vmem:[%s519 + $0xc0] sm:$0xff]
        %v6882 = vld [vmem:[%s519 + $0xc8] sm:$0xff]
        %v6883 = vld [vmem:[%s519 + $0xd0] sm:$0xff]
        %v6884 = vld [vmem:[%s519 + $0xd8] sm:$0xff]
        %v6885 = vld [vmem:[%s519 + $0xe0] sm:$0xff]
        %v6886 = vld [vmem:[%s519 + $0xe8] sm:$0xff]
        %v6887 = vld [vmem:[%s519 + $0xf0] sm:$0xff]
        %v6888 = vld [vmem:[%s519 + $0xf8] sm:$0xff]
        %v6889 = vld [vmem:[%s519 + $0x100] sm:$0xff]
        %v6890 = vld [vmem:[%s519 + $0x108] sm:$0xff]
        %v6891 = vld [vmem:[%s519 + $0x110] sm:$0xff]
        %v6892 = vld [vmem:[%s519 + $0x118] sm:$0xff]
        %v6893 = vld [vmem:[%s519 + $0x120] sm:$0xff]
        %v6894 = vld [vmem:[%s519 + $0x128] sm:$0xff]
        %v6895 = vld [vmem:[%s519 + $0x130] sm:$0xff]
        %v6896 = vld [vmem:[%s519 + $0x138] sm:$0xff]
        %v6897 = vld [vmem:[%s519 + $0x140] sm:$0xff]
        %v6898 = vld [vmem:[%s519 + $0x148] sm:$0xff]
        %v6899 = vld [vmem:[%s519 + $0x150] sm:$0xff]
        %v6900 = vld [vmem:[%s519 + $0x158] sm:$0xff]
        %v6901 = vld [vmem:[%s519 + $0x160] sm:$0xff]
        %v6902 = vld [vmem:[%s519 + $0x168] sm:$0xff]
        %v6903 = vld [vmem:[%s519 + $0x170] sm:$0xff]
        %v6904 = vld [vmem:[%s519 + $0x178] sm:$0xff]
        %v6905 = vld [vmem:[%s519 + $0x180] sm:$0xff]
        %v6906 = vld [vmem:[%s519 + $0x188] sm:$0xff]
        %v6907 = vld [vmem:[%s519 + $0x190] sm:$0xff]
        %v6908 = vld [vmem:[%s519 + $0x198] sm:$0xff]
        %v6909 = vld [vmem:[%s519 + $0x1a0] sm:$0xff]
        %v6910 = vld [vmem:[%s519 + $0x1a8] sm:$0xff]
        %v6911 = vld [vmem:[%s519 + $0x1b0] sm:$0xff]
        %v6912 = vld [vmem:[%s519 + $0x1b8] sm:$0xff]
        %v6913 = vld [vmem:[%s519 + $0x1c0] sm:$0xff]
        %v6914 = vld [vmem:[%s519 + $0x1c8] sm:$0xff]
        %v6915 = vld [vmem:[%s519 + $0x1d0] sm:$0xff]
        %v6916 = vld [vmem:[%s519 + $0x1d8] sm:$0xff]
        %v6917 = vld [vmem:[%s519 + $0x1e0] sm:$0xff]
        %v6918 = vld [vmem:[%s519 + $0x1e8] sm:$0xff]
        %v6919 = vld [vmem:[%s519 + $0x1f0] sm:$0xff]
        %v6920 = vld [vmem:[%s519 + $0x1f8] sm:$0xff]
        %v6921 = vmul.f32 %v3991, %v6857
        %v6922 = vmul.f32 %v4036, %v6858
        %v6923 = vmul.f32 %v4081, %v6859
        %v6924 = vmul.f32 %v4126, %v6860
        %v6925 = vmul.f32 %v4171, %v6861
        %v6926 = vmul.f32 %v4216, %v6862
        %v6927 = vmul.f32 %v4261, %v6863
        %v6928 = vmul.f32 %v4306, %v6864
        %v6929 = vmul.f32 %v4351, %v6865
        %v6930 = vmul.f32 %v4396, %v6866
        %v6931 = vmul.f32 %v4441, %v6867
        %v6932 = vmul.f32 %v4486, %v6868
        %v6933 = vmul.f32 %v4531, %v6869
        %v6934 = vmul.f32 %v4576, %v6870
        %v6935 = vmul.f32 %v4621, %v6871
        %v6936 = vmul.f32 %v4666, %v6872
        %v6937 = vmul.f32 %v4711, %v6873
        %v6938 = vmul.f32 %v4756, %v6874
        %v6939 = vmul.f32 %v4801, %v6875
        %v6940 = vmul.f32 %v4846, %v6876
        %v6941 = vmul.f32 %v4891, %v6877
        %v6942 = vmul.f32 %v4936, %v6878
        %v6943 = vmul.f32 %v4981, %v6879
        %v6944 = vmul.f32 %v5026, %v6880
        %v6945 = vmul.f32 %v5071, %v6881
        %v6946 = vmul.f32 %v5116, %v6882
        %v6947 = vmul.f32 %v5161, %v6883
        %v6948 = vmul.f32 %v5206, %v6884
        %v6949 = vmul.f32 %v5251, %v6885
        %v6950 = vmul.f32 %v5296, %v6886
        %v6951 = vmul.f32 %v5341, %v6887
        %v6952 = vmul.f32 %v5386, %v6888
        %v6953 = vmul.f32 %v5431, %v6889
        %v6954 = vmul.f32 %v5476, %v6890
        %v6955 = vmul.f32 %v5521, %v6891
        %v6956 = vmul.f32 %v5566, %v6892
        %v6957 = vmul.f32 %v5611, %v6893
        %v6958 = vmul.f32 %v5656, %v6894
        %v6959 = vmul.f32 %v5701, %v6895
        %v6960 = vmul.f32 %v5746, %v6896
        %v6961 = vmul.f32 %v5791, %v6897
        %v6962 = vmul.f32 %v5836, %v6898
        %v6963 = vmul.f32 %v5881, %v6899
        %v6964 = vmul.f32 %v5926, %v6900
        %v6965 = vmul.f32 %v5971, %v6901
        %v6966 = vmul.f32 %v6016, %v6902
        %v6967 = vmul.f32 %v6061, %v6903
        %v6968 = vmul.f32 %v6106, %v6904
        %v6969 = vmul.f32 %v6151, %v6905
        %v6970 = vmul.f32 %v6196, %v6906
        %v6971 = vmul.f32 %v6241, %v6907
        %v6972 = vmul.f32 %v6286, %v6908
        %v6973 = vmul.f32 %v6331, %v6909
        %v6974 = vmul.f32 %v6376, %v6910
        %v6975 = vmul.f32 %v6421, %v6911
        %v6976 = vmul.f32 %v6466, %v6912
        %v6977 = vmul.f32 %v6511, %v6913
        %v6978 = vmul.f32 %v6556, %v6914
        %v6979 = vmul.f32 %v6601, %v6915
        %v6980 = vmul.f32 %v6646, %v6916
        %v6981 = vmul.f32 %v6691, %v6917
        %v6982 = vmul.f32 %v6736, %v6918
        %v6983 = vmul.f32 %v6781, %v6919
        %v6984 = vmul.f32 %v6826, %v6920
        %v6985 = vmul.f32 %v4006, %v3145
        %v6986 = vmul.f32 %v4051, %v3146
        %v6987 = vmul.f32 %v4096, %v3147
        %v6988 = vmul.f32 %v4141, %v3148
        %v6989 = vmul.f32 %v4186, %v3149
        %v6990 = vmul.f32 %v4231, %v3150
        %v6991 = vmul.f32 %v4276, %v3151
        %v6992 = vmul.f32 %v4321, %v3152
        %v6993 = vmul.f32 %v4366, %v3153
        %v6994 = vmul.f32 %v4411, %v3154
        %v6995 = vmul.f32 %v4456, %v3155
        %v6996 = vmul.f32 %v4501, %v3156
        %v6997 = vmul.f32 %v4546, %v3157
        %v6998 = vmul.f32 %v4591, %v3158
        %v6999 = vmul.f32 %v4636, %v3159
        %v7000 = vmul.f32 %v4681, %v3160
        %v7001 = vmul.f32 %v4726, %v3161
        %v7002 = vmul.f32 %v4771, %v3162
        %v7003 = vmul.f32 %v4816, %v3163
        %v7004 = vmul.f32 %v4861, %v3164
        %v7005 = vmul.f32 %v4906, %v3165
        %v7006 = vmul.f32 %v4951, %v3166
        %v7007 = vmul.f32 %v4996, %v3167
        %v7008 = vmul.f32 %v5041, %v3168
        %v7009 = vmul.f32 %v5086, %v3169
        %v7010 = vmul.f32 %v5131, %v3170
        %v7011 = vmul.f32 %v5176, %v3171
        %v7012 = vmul.f32 %v5221, %v3172
        %v7013 = vmul.f32 %v5266, %v3173
        %v7014 = vmul.f32 %v5311, %v3174
        %v7015 = vmul.f32 %v5356, %v3175
        %v7016 = vmul.f32 %v5401, %v3176
        %v7017 = vmul.f32 %v5446, %v3177
        %v7018 = vmul.f32 %v5491, %v3178
        %v7019 = vmul.f32 %v5536, %v3179
        %v7020 = vmul.f32 %v5581, %v3180
        %v7021 = vmul.f32 %v5626, %v3181
        %v7022 = vmul.f32 %v5671, %v3182
        %v7023 = vmul.f32 %v5716, %v3183
        %v7024 = vmul.f32 %v5761, %v3184
        %v7025 = vmul.f32 %v5806, %v3185
        %v7026 = vmul.f32 %v5851, %v3186
        %v7027 = vmul.f32 %v5896, %v3187
        %v7028 = vmul.f32 %v5941, %v3188
        %v7029 = vmul.f32 %v5986, %v3189
        %v7030 = vmul.f32 %v6031, %v3190
        %v7031 = vmul.f32 %v6076, %v3191
        %v7032 = vmul.f32 %v6121, %v3192
        %v7033 = vmul.f32 %v6166, %v3193
        %v7034 = vmul.f32 %v6211, %v3194
        %v7035 = vmul.f32 %v6256, %v3195
        %v7036 = vmul.f32 %v6301, %v3196
        %v7037 = vmul.f32 %v6346, %v3197
        %v7038 = vmul.f32 %v6391, %v3198
        %v7039 = vmul.f32 %v6436, %v3199
        %v7040 = vmul.f32 %v6481, %v3200
        %v7041 = vmul.f32 %v6526, %v3201
        %v7042 = vmul.f32 %v6571, %v3202
        %v7043 = vmul.f32 %v6616, %v3203
        %v7044 = vmul.f32 %v6661, %v3204
        %v7045 = vmul.f32 %v6706, %v3205
        %v7046 = vmul.f32 %v6751, %v3206
        %v7047 = vmul.f32 %v6796, %v3207
        %v7048 = vmul.f32 %v6841, %v3208
        %v7049 = vadd.f32 %v6921, %v6985
        %v7050 = vadd.f32 %v6922, %v6986
        %v7051 = vadd.f32 %v6923, %v6987
        %v7052 = vadd.f32 %v6924, %v6988
        %v7053 = vadd.f32 %v6925, %v6989
        %v7054 = vadd.f32 %v6926, %v6990
        %v7055 = vadd.f32 %v6927, %v6991
        %v7056 = vadd.f32 %v6928, %v6992
        %v7057 = vadd.f32 %v6929, %v6993
        %v7058 = vadd.f32 %v6930, %v6994
        %v7059 = vadd.f32 %v6931, %v6995
        %v7060 = vadd.f32 %v6932, %v6996
        %v7061 = vadd.f32 %v6933, %v6997
        %v7062 = vadd.f32 %v6934, %v6998
        %v7063 = vadd.f32 %v6935, %v6999
        %v7064 = vadd.f32 %v6936, %v7000
        %v7065 = vadd.f32 %v6937, %v7001
        %v7066 = vadd.f32 %v6938, %v7002
        %v7067 = vadd.f32 %v6939, %v7003
        %v7068 = vadd.f32 %v6940, %v7004
        %v7069 = vadd.f32 %v6941, %v7005
        %v7070 = vadd.f32 %v6942, %v7006
        %v7071 = vadd.f32 %v6943, %v7007
        %v7072 = vadd.f32 %v6944, %v7008
        %v7073 = vadd.f32 %v6945, %v7009
        %v7074 = vadd.f32 %v6946, %v7010
        %v7075 = vadd.f32 %v6947, %v7011
        %v7076 = vadd.f32 %v6948, %v7012
        %v7077 = vadd.f32 %v6949, %v7013
        %v7078 = vadd.f32 %v6950, %v7014
        %v7079 = vadd.f32 %v6951, %v7015
        %v7080 = vadd.f32 %v6952, %v7016
        %v7081 = vadd.f32 %v6953, %v7017
        %v7082 = vadd.f32 %v6954, %v7018
        %v7083 = vadd.f32 %v6955, %v7019
        %v7084 = vadd.f32 %v6956, %v7020
        %v7085 = vadd.f32 %v6957, %v7021
        %v7086 = vadd.f32 %v6958, %v7022
        %v7087 = vadd.f32 %v6959, %v7023
        %v7088 = vadd.f32 %v6960, %v7024
        %v7089 = vadd.f32 %v6961, %v7025
        %v7090 = vadd.f32 %v6962, %v7026
        %v7091 = vadd.f32 %v6963, %v7027
        %v7092 = vadd.f32 %v6964, %v7028
        %v7093 = vadd.f32 %v6965, %v7029
        %v7094 = vadd.f32 %v6966, %v7030
        %v7095 = vadd.f32 %v6967, %v7031
        %v7096 = vadd.f32 %v6968, %v7032
        %v7097 = vadd.f32 %v6969, %v7033
        %v7098 = vadd.f32 %v6970, %v7034
        %v7099 = vadd.f32 %v6971, %v7035
        %v7100 = vadd.f32 %v6972, %v7036
        %v7101 = vadd.f32 %v6973, %v7037
        %v7102 = vadd.f32 %v6974, %v7038
        %v7103 = vadd.f32 %v6975, %v7039
        %v7104 = vadd.f32 %v6976, %v7040
        %v7105 = vadd.f32 %v6977, %v7041
        %v7106 = vadd.f32 %v6978, %v7042
        %v7107 = vadd.f32 %v6979, %v7043
        %v7108 = vadd.f32 %v6980, %v7044
        %v7109 = vadd.f32 %v6981, %v7045
        %v7110 = vadd.f32 %v6982, %v7046
        %v7111 = vadd.f32 %v6983, %v7047
        %v7112 = vadd.f32 %v6984, %v7048
        %v7113 = vtanh.pop %v7049
        %v7114 = vtanh.pop %v7050
        %v7115 = vtanh.pop %v7051
        %v7116 = vtanh.pop %v7052
        %v7117 = vtanh.pop %v7053
        %v7118 = vtanh.pop %v7054
        %v7119 = vtanh.pop %v7055
        %v7120 = vtanh.pop %v7056
        %v7121 = vtanh.pop %v7057
        %v7122 = vtanh.pop %v7058
        %v7123 = vtanh.pop %v7059
        %v7124 = vtanh.pop %v7060
        %v7125 = vtanh.pop %v7061
        %v7126 = vtanh.pop %v7062
        %v7127 = vtanh.pop %v7063
        %v7128 = vtanh.pop %v7064
        %v7129 = vtanh.pop %v7065
        %v7130 = vtanh.pop %v7066
        %v7131 = vtanh.pop %v7067
        %v7132 = vtanh.pop %v7068
        %v7133 = vtanh.pop %v7069
        %v7134 = vtanh.pop %v7070
        %v7135 = vtanh.pop %v7071
        %v7136 = vtanh.pop %v7072
        %v7137 = vtanh.pop %v7073
        %v7138 = vtanh.pop %v7074
        %v7139 = vtanh.pop %v7075
        %v7140 = vtanh.pop %v7076
        %v7141 = vtanh.pop %v7077
        %v7142 = vtanh.pop %v7078
        %v7143 = vtanh.pop %v7079
        %v7144 = vtanh.pop %v7080
        %v7145 = vtanh.pop %v7081
        %v7146 = vtanh.pop %v7082
        %v7147 = vtanh.pop %v7083
        %v7148 = vtanh.pop %v7084
        %v7149 = vtanh.pop %v7085
        %v7150 = vtanh.pop %v7086
        %v7151 = vtanh.pop %v7087
        %v7152 = vtanh.pop %v7088
        %v7153 = vtanh.pop %v7089
        %v7154 = vtanh.pop %v7090
        %v7155 = vtanh.pop %v7091
        %v7156 = vtanh.pop %v7092
        %v7157 = vtanh.pop %v7093
        %v7158 = vtanh.pop %v7094
        %v7159 = vtanh.pop %v7095
        %v7160 = vtanh.pop %v7096
        %v7161 = vtanh.pop %v7097
        %v7162 = vtanh.pop %v7098
        %v7163 = vtanh.pop %v7099
        %v7164 = vtanh.pop %v7100
        %v7165 = vtanh.pop %v7101
        %v7166 = vtanh.pop %v7102
        %v7167 = vtanh.pop %v7103
        %v7168 = vtanh.pop %v7104
        %v7169 = vtanh.pop %v7105
        %v7170 = vtanh.pop %v7106
        %v7171 = vtanh.pop %v7107
        %v7172 = vtanh.pop %v7108
        %v7173 = vtanh.pop %v7109
        %v7174 = vtanh.pop %v7110
        %v7175 = vtanh.pop %v7111
        %v7176 = vtanh.pop %v7112
        %v7177 = vmul.f32 %v4021, %v7113
        %v7178 = vmul.f32 %v4066, %v7114
        %v7179 = vmul.f32 %v4111, %v7115
        %v7180 = vmul.f32 %v4156, %v7116
        %v7181 = vmul.f32 %v4201, %v7117
        %v7182 = vmul.f32 %v4246, %v7118
        %v7183 = vmul.f32 %v4291, %v7119
        %v7184 = vmul.f32 %v4336, %v7120
        %v7185 = vmul.f32 %v4381, %v7121
        %v7186 = vmul.f32 %v4426, %v7122
        %v7187 = vmul.f32 %v4471, %v7123
        %v7188 = vmul.f32 %v4516, %v7124
        %v7189 = vmul.f32 %v4561, %v7125
        %v7190 = vmul.f32 %v4606, %v7126
        %v7191 = vmul.f32 %v4651, %v7127
        %v7192 = vmul.f32 %v4696, %v7128
        %v7193 = vmul.f32 %v4741, %v7129
        %v7194 = vmul.f32 %v4786, %v7130
        %v7195 = vmul.f32 %v4831, %v7131
        %v7196 = vmul.f32 %v4876, %v7132
        %v7197 = vmul.f32 %v4921, %v7133
        %v7198 = vmul.f32 %v4966, %v7134
        %v7199 = vmul.f32 %v5011, %v7135
        %v7200 = vmul.f32 %v5056, %v7136
        %v7201 = vmul.f32 %v5101, %v7137
        %v7202 = vmul.f32 %v5146, %v7138
        %v7203 = vmul.f32 %v5191, %v7139
        %v7204 = vmul.f32 %v5236, %v7140
        %v7205 = vmul.f32 %v5281, %v7141
        %v7206 = vmul.f32 %v5326, %v7142
        %v7207 = vmul.f32 %v5371, %v7143
        %v7208 = vmul.f32 %v5416, %v7144
        %v7209 = vmul.f32 %v5461, %v7145
        %v7210 = vmul.f32 %v5506, %v7146
        %v7211 = vmul.f32 %v5551, %v7147
        %v7212 = vmul.f32 %v5596, %v7148
        %v7213 = vmul.f32 %v5641, %v7149
        %v7214 = vmul.f32 %v5686, %v7150
        %v7215 = vmul.f32 %v5731, %v7151
        %v7216 = vmul.f32 %v5776, %v7152
        %v7217 = vmul.f32 %v5821, %v7153
        %v7218 = vmul.f32 %v5866, %v7154
        %v7219 = vmul.f32 %v5911, %v7155
        %v7220 = vmul.f32 %v5956, %v7156
        %v7221 = vmul.f32 %v6001, %v7157
        %v7222 = vmul.f32 %v6046, %v7158
        %v7223 = vmul.f32 %v6091, %v7159
        %v7224 = vmul.f32 %v6136, %v7160
        %v7225 = vmul.f32 %v6181, %v7161
        %v7226 = vmul.f32 %v6226, %v7162
        %v7227 = vmul.f32 %v6271, %v7163
        %v7228 = vmul.f32 %v6316, %v7164
        %v7229 = vmul.f32 %v6361, %v7165
        %v7230 = vmul.f32 %v6406, %v7166
        %v7231 = vmul.f32 %v6451, %v7167
        %v7232 = vmul.f32 %v6496, %v7168
        %v7233 = vmul.f32 %v6541, %v7169
        %v7234 = vmul.f32 %v6586, %v7170
        %v7235 = vmul.f32 %v6631, %v7171
        %v7236 = vmul.f32 %v6676, %v7172
        %v7237 = vmul.f32 %v6721, %v7173
        %v7238 = vmul.f32 %v6766, %v7174
        %v7239 = vmul.f32 %v6811, %v7175
        %v7240 = vmul.f32 %v6856, %v7176
        %v7241 = vld [vmem:[%s549] sm:$0xff]
        %v7242 = vld [vmem:[%s549 + $0x8] sm:$0xff]
        %v7243 = vld [vmem:[%s549 + $0x10] sm:$0xff]
        %v7244 = vld [vmem:[%s549 + $0x18] sm:$0xff]
        %v7245 = vld [vmem:[%s549 + $0x20] sm:$0xff]
        %v7246 = vld [vmem:[%s549 + $0x28] sm:$0xff]
        %v7247 = vld [vmem:[%s549 + $0x30] sm:$0xff]
        %v7248 = vld [vmem:[%s549 + $0x38] sm:$0xff]
        %v7249 = vld [vmem:[%s549 + $0x40] sm:$0xff]
        %v7250 = vld [vmem:[%s549 + $0x48] sm:$0xff]
        %v7251 = vld [vmem:[%s549 + $0x50] sm:$0xff]
        %v7252 = vld [vmem:[%s549 + $0x58] sm:$0xff]
        %v7253 = vld [vmem:[%s549 + $0x60] sm:$0xff]
        %v7254 = vld [vmem:[%s549 + $0x68] sm:$0xff]
        %v7255 = vld [vmem:[%s549 + $0x70] sm:$0xff]
        %v7256 = vld [vmem:[%s549 + $0x78] sm:$0xff]
        %v7257 = vld [vmem:[%s549 + $0x80] sm:$0xff]
        %v7258 = vld [vmem:[%s549 + $0x88] sm:$0xff]
        %v7259 = vld [vmem:[%s549 + $0x90] sm:$0xff]
        %v7260 = vld [vmem:[%s549 + $0x98] sm:$0xff]
        %v7261 = vld [vmem:[%s549 + $0xa0] sm:$0xff]
        %v7262 = vld [vmem:[%s549 + $0xa8] sm:$0xff]
        %v7263 = vld [vmem:[%s549 + $0xb0] sm:$0xff]
        %v7264 = vld [vmem:[%s549 + $0xb8] sm:$0xff]
        %v7265 = vld [vmem:[%s549 + $0xc0] sm:$0xff]
        %v7266 = vld [vmem:[%s549 + $0xc8] sm:$0xff]
        %v7267 = vld [vmem:[%s549 + $0xd0] sm:$0xff]
        %v7268 = vld [vmem:[%s549 + $0xd8] sm:$0xff]
        %v7269 = vld [vmem:[%s549 + $0xe0] sm:$0xff]
        %v7270 = vld [vmem:[%s549 + $0xe8] sm:$0xff]
        %v7271 = vld [vmem:[%s549 + $0xf0] sm:$0xff]
        %v7272 = vld [vmem:[%s549 + $0xf8] sm:$0xff]
        %v7273 = vld [vmem:[%s549 + $0x100] sm:$0xff]
        %v7274 = vld [vmem:[%s549 + $0x108] sm:$0xff]
        %v7275 = vld [vmem:[%s549 + $0x110] sm:$0xff]
        %v7276 = vld [vmem:[%s549 + $0x118] sm:$0xff]
        %v7277 = vld [vmem:[%s549 + $0x120] sm:$0xff]
        %v7278 = vld [vmem:[%s549 + $0x128] sm:$0xff]
        %v7279 = vld [vmem:[%s549 + $0x130] sm:$0xff]
        %v7280 = vld [vmem:[%s549 + $0x138] sm:$0xff]
        %v7281 = vld [vmem:[%s549 + $0x140] sm:$0xff]
        %v7282 = vld [vmem:[%s549 + $0x148] sm:$0xff]
        %v7283 = vld [vmem:[%s549 + $0x150] sm:$0xff]
        %v7284 = vld [vmem:[%s549 + $0x158] sm:$0xff]
        %v7285 = vld [vmem:[%s549 + $0x160] sm:$0xff]
        %v7286 = vld [vmem:[%s549 + $0x168] sm:$0xff]
        %v7287 = vld [vmem:[%s549 + $0x170] sm:$0xff]
        %v7288 = vld [vmem:[%s549 + $0x178] sm:$0xff]
        %v7289 = vld [vmem:[%s549 + $0x180] sm:$0xff]
        %v7290 = vld [vmem:[%s549 + $0x188] sm:$0xff]
        %v7291 = vld [vmem:[%s549 + $0x190] sm:$0xff]
        %v7292 = vld [vmem:[%s549 + $0x198] sm:$0xff]
        %v7293 = vld [vmem:[%s549 + $0x1a0] sm:$0xff]
        %v7294 = vld [vmem:[%s549 + $0x1a8] sm:$0xff]
        %v7295 = vld [vmem:[%s549 + $0x1b0] sm:$0xff]
        %v7296 = vld [vmem:[%s549 + $0x1b8] sm:$0xff]
        %v7297 = vld [vmem:[%s549 + $0x1c0] sm:$0xff]
        %v7298 = vld [vmem:[%s549 + $0x1c8] sm:$0xff]
        %v7299 = vld [vmem:[%s549 + $0x1d0] sm:$0xff]
        %v7300 = vld [vmem:[%s549 + $0x1d8] sm:$0xff]
        %v7301 = vld [vmem:[%s549 + $0x1e0] sm:$0xff]
        %v7302 = vld [vmem:[%s549 + $0x1e8] sm:$0xff]
        %v7303 = vld [vmem:[%s549 + $0x1f0] sm:$0xff]
        %v7304 = vld [vmem:[%s549 + $0x1f8] sm:$0xff]
        %v7305 = vmul.f32 %v7241, %v7177
        %v7306 = vmul.f32 %v7242, %v7178
        %v7307 = vmul.f32 %v7243, %v7179
        %v7308 = vmul.f32 %v7244, %v7180
        %v7309 = vmul.f32 %v7245, %v7181
        %v7310 = vmul.f32 %v7246, %v7182
        %v7311 = vmul.f32 %v7247, %v7183
        %v7312 = vmul.f32 %v7248, %v7184
        %v7313 = vmul.f32 %v7249, %v7185
        %v7314 = vmul.f32 %v7250, %v7186
        %v7315 = vmul.f32 %v7251, %v7187
        %v7316 = vmul.f32 %v7252, %v7188
        %v7317 = vmul.f32 %v7253, %v7189
        %v7318 = vmul.f32 %v7254, %v7190
        %v7319 = vmul.f32 %v7255, %v7191
        %v7320 = vmul.f32 %v7256, %v7192
        %v7321 = vmul.f32 %v7257, %v7193
        %v7322 = vmul.f32 %v7258, %v7194
        %v7323 = vmul.f32 %v7259, %v7195
        %v7324 = vmul.f32 %v7260, %v7196
        %v7325 = vmul.f32 %v7261, %v7197
        %v7326 = vmul.f32 %v7262, %v7198
        %v7327 = vmul.f32 %v7263, %v7199
        %v7328 = vmul.f32 %v7264, %v7200
        %v7329 = vmul.f32 %v7265, %v7201
        %v7330 = vmul.f32 %v7266, %v7202
        %v7331 = vmul.f32 %v7267, %v7203
        %v7332 = vmul.f32 %v7268, %v7204
        %v7333 = vmul.f32 %v7269, %v7205
        %v7334 = vmul.f32 %v7270, %v7206
        %v7335 = vmul.f32 %v7271, %v7207
        %v7336 = vmul.f32 %v7272, %v7208
        %v7337 = vmul.f32 %v7273, %v7209
        %v7338 = vmul.f32 %v7274, %v7210
        %v7339 = vmul.f32 %v7275, %v7211
        %v7340 = vmul.f32 %v7276, %v7212
        %v7341 = vmul.f32 %v7277, %v7213
        %v7342 = vmul.f32 %v7278, %v7214
        %v7343 = vmul.f32 %v7279, %v7215
        %v7344 = vmul.f32 %v7280, %v7216
        %v7345 = vmul.f32 %v7281, %v7217
        %v7346 = vmul.f32 %v7282, %v7218
        %v7347 = vmul.f32 %v7283, %v7219
        %v7348 = vmul.f32 %v7284, %v7220
        %v7349 = vmul.f32 %v7285, %v7221
        %v7350 = vmul.f32 %v7286, %v7222
        %v7351 = vmul.f32 %v7287, %v7223
        %v7352 = vmul.f32 %v7288, %v7224
        %v7353 = vmul.f32 %v7289, %v7225
        %v7354 = vmul.f32 %v7290, %v7226
        %v7355 = vmul.f32 %v7291, %v7227
        %v7356 = vmul.f32 %v7292, %v7228
        %v7357 = vmul.f32 %v7293, %v7229
        %v7358 = vmul.f32 %v7294, %v7230
        %v7359 = vmul.f32 %v7295, %v7231
        %v7360 = vmul.f32 %v7296, %v7232
        %v7361 = vmul.f32 %v7297, %v7233
        %v7362 = vmul.f32 %v7298, %v7234
        %v7363 = vmul.f32 %v7299, %v7235
        %v7364 = vmul.f32 %v7300, %v7236
        %v7365 = vmul.f32 %v7301, %v7237
        %v7366 = vmul.f32 %v7302, %v7238
        %v7367 = vmul.f32 %v7303, %v7239
        %v7368 = vmul.f32 %v7304, %v7240
        %7369 = vst [vmem:[%s617] sm:$0xff] %v7305
        %7370 = vst [vmem:[%s617 + $0x8] sm:$0xff] %v7306
        %7371 = vst [vmem:[%s617 + $0x10] sm:$0xff] %v7307
        %7372 = vst [vmem:[%s617 + $0x18] sm:$0xff] %v7308
        %7373 = vst [vmem:[%s617 + $0x20] sm:$0xff] %v7309
        %7374 = vst [vmem:[%s617 + $0x28] sm:$0xff] %v7310
        %7375 = vst [vmem:[%s617 + $0x30] sm:$0xff] %v7311
        %7376 = vst [vmem:[%s617 + $0x38] sm:$0xff] %v7312
        %7377 = vst [vmem:[%s617 + $0x40] sm:$0xff] %v7313
        %7378 = vst [vmem:[%s617 + $0x48] sm:$0xff] %v7314
        %7379 = vst [vmem:[%s617 + $0x50] sm:$0xff] %v7315
        %7380 = vst [vmem:[%s617 + $0x58] sm:$0xff] %v7316
        %7381 = vst [vmem:[%s617 + $0x60] sm:$0xff] %v7317
        %7382 = vst [vmem:[%s617 + $0x68] sm:$0xff] %v7318
        %7383 = vst [vmem:[%s617 + $0x70] sm:$0xff] %v7319
        %7384 = vst [vmem:[%s617 + $0x78] sm:$0xff] %v7320
        %7385 = vst [vmem:[%s617 + $0x80] sm:$0xff] %v7321
        %7386 = vst [vmem:[%s617 + $0x88] sm:$0xff] %v7322
        %7387 = vst [vmem:[%s617 + $0x90] sm:$0xff] %v7323
        %7388 = vst [vmem:[%s617 + $0x98] sm:$0xff] %v7324
        %7389 = vst [vmem:[%s617 + $0xa0] sm:$0xff] %v7325
        %7390 = vst [vmem:[%s617 + $0xa8] sm:$0xff] %v7326
        %7391 = vst [vmem:[%s617 + $0xb0] sm:$0xff] %v7327
        %7392 = vst [vmem:[%s617 + $0xb8] sm:$0xff] %v7328
        %7393 = vst [vmem:[%s617 + $0xc0] sm:$0xff] %v7329
        %7394 = vst [vmem:[%s617 + $0xc8] sm:$0xff] %v7330
        %7395 = vst [vmem:[%s617 + $0xd0] sm:$0xff] %v7331
        %7396 = vst [vmem:[%s617 + $0xd8] sm:$0xff] %v7332
        %7397 = vst [vmem:[%s617 + $0xe0] sm:$0xff] %v7333
        %7398 = vst [vmem:[%s617 + $0xe8] sm:$0xff] %v7334
        %7399 = vst [vmem:[%s617 + $0xf0] sm:$0xff] %v7335
        %7400 = vst [vmem:[%s617 + $0xf8] sm:$0xff] %v7336
        %7401 = vst [vmem:[%s617 + $0x100] sm:$0xff] %v7337
        %7402 = vst [vmem:[%s617 + $0x108] sm:$0xff] %v7338
        %7403 = vst [vmem:[%s617 + $0x110] sm:$0xff] %v7339
        %7404 = vst [vmem:[%s617 + $0x118] sm:$0xff] %v7340
        %7405 = vst [vmem:[%s617 + $0x120] sm:$0xff] %v7341
        %7406 = vst [vmem:[%s617 + $0x128] sm:$0xff] %v7342
        %7407 = vst [vmem:[%s617 + $0x130] sm:$0xff] %v7343
        %7408 = vst [vmem:[%s617 + $0x138] sm:$0xff] %v7344
        %7409 = vst [vmem:[%s617 + $0x140] sm:$0xff] %v7345
        %7410 = vst [vmem:[%s617 + $0x148] sm:$0xff] %v7346
        %7411 = vst [vmem:[%s617 + $0x150] sm:$0xff] %v7347
        %7412 = vst [vmem:[%s617 + $0x158] sm:$0xff] %v7348
        %7413 = vst [vmem:[%s617 + $0x160] sm:$0xff] %v7349
        %7414 = vst [vmem:[%s617 + $0x168] sm:$0xff] %v7350
        %7415 = vst [vmem:[%s617 + $0x170] sm:$0xff] %v7351
        %7416 = vst [vmem:[%s617 + $0x178] sm:$0xff] %v7352
        %7417 = vst [vmem:[%s617 + $0x180] sm:$0xff] %v7353
        %7418 = vst [vmem:[%s617 + $0x188] sm:$0xff] %v7354
        %7419 = vst [vmem:[%s617 + $0x190] sm:$0xff] %v7355
        %7420 = vst [vmem:[%s617 + $0x198] sm:$0xff] %v7356
        %7421 = vst [vmem:[%s617 + $0x1a0] sm:$0xff] %v7357
        %7422 = vst [vmem:[%s617 + $0x1a8] sm:$0xff] %v7358
        %7423 = vst [vmem:[%s617 + $0x1b0] sm:$0xff] %v7359
        %7424 = vst [vmem:[%s617 + $0x1b8] sm:$0xff] %v7360
        %7425 = vst [vmem:[%s617 + $0x1c0] sm:$0xff] %v7361
        %7426 = vst [vmem:[%s617 + $0x1c8] sm:$0xff] %v7362
        %7427 = vst [vmem:[%s617 + $0x1d0] sm:$0xff] %v7363
        %7428 = vst [vmem:[%s617 + $0x1d8] sm:$0xff] %v7364
        %7429 = vst [vmem:[%s617 + $0x1e0] sm:$0xff] %v7365
        %7430 = vst [vmem:[%s617 + $0x1e8] sm:$0xff] %v7366
        %7431 = vst [vmem:[%s617 + $0x1f0] sm:$0xff] %v7367
        %7432 = vst [vmem:[%s617 + $0x1f8] sm:$0xff] %v7368
        %7433 = vst [vmem:[%s624] sm:$0xff] %v7177
        %7434 = vst [vmem:[%s624 + $0x8] sm:$0xff] %v7178
        %7435 = vst [vmem:[%s624 + $0x10] sm:$0xff] %v7179
        %7436 = vst [vmem:[%s624 + $0x18] sm:$0xff] %v7180
        %7437 = vst [vmem:[%s624 + $0x20] sm:$0xff] %v7181
        %7438 = vst [vmem:[%s624 + $0x28] sm:$0xff] %v7182
        %7439 = vst [vmem:[%s624 + $0x30] sm:$0xff] %v7183
        %7440 = vst [vmem:[%s624 + $0x38] sm:$0xff] %v7184
        %7441 = vst [vmem:[%s624 + $0x40] sm:$0xff] %v7185
        %7442 = vst [vmem:[%s624 + $0x48] sm:$0xff] %v7186
        %7443 = vst [vmem:[%s624 + $0x50] sm:$0xff] %v7187
        %7444 = vst [vmem:[%s624 + $0x58] sm:$0xff] %v7188
        %7445 = vst [vmem:[%s624 + $0x60] sm:$0xff] %v7189
        %7446 = vst [vmem:[%s624 + $0x68] sm:$0xff] %v7190
        %7447 = vst [vmem:[%s624 + $0x70] sm:$0xff] %v7191
        %7448 = vst [vmem:[%s624 + $0x78] sm:$0xff] %v7192
        %7449 = vst [vmem:[%s624 + $0x80] sm:$0xff] %v7193
        %7450 = vst [vmem:[%s624 + $0x88] sm:$0xff] %v7194
        %7451 = vst [vmem:[%s624 + $0x90] sm:$0xff] %v7195
        %7452 = vst [vmem:[%s624 + $0x98] sm:$0xff] %v7196
        %7453 = vst [vmem:[%s624 + $0xa0] sm:$0xff] %v7197
        %7454 = vst [vmem:[%s624 + $0xa8] sm:$0xff] %v7198
        %7455 = vst [vmem:[%s624 + $0xb0] sm:$0xff] %v7199
        %7456 = vst [vmem:[%s624 + $0xb8] sm:$0xff] %v7200
        %7457 = vst [vmem:[%s624 + $0xc0] sm:$0xff] %v7201
        %7458 = vst [vmem:[%s624 + $0xc8] sm:$0xff] %v7202
        %7459 = vst [vmem:[%s624 + $0xd0] sm:$0xff] %v7203
        %7460 = vst [vmem:[%s624 + $0xd8] sm:$0xff] %v7204
        %7461 = vst [vmem:[%s624 + $0xe0] sm:$0xff] %v7205
        %7462 = vst [vmem:[%s624 + $0xe8] sm:$0xff] %v7206
        %7463 = vst [vmem:[%s624 + $0xf0] sm:$0xff] %v7207
        %7464 = vst [vmem:[%s624 + $0xf8] sm:$0xff] %v7208
        %7465 = vst [vmem:[%s624 + $0x100] sm:$0xff] %v7209
        %7466 = vst [vmem:[%s624 + $0x108] sm:$0xff] %v7210
        %7467 = vst [vmem:[%s624 + $0x110] sm:$0xff] %v7211
        %7468 = vst [vmem:[%s624 + $0x118] sm:$0xff] %v7212
        %7469 = vst [vmem:[%s624 + $0x120] sm:$0xff] %v7213
        %7470 = vst [vmem:[%s624 + $0x128] sm:$0xff] %v7214
        %7471 = vst [vmem:[%s624 + $0x130] sm:$0xff] %v7215
        %7472 = vst [vmem:[%s624 + $0x138] sm:$0xff] %v7216
        %7473 = vst [vmem:[%s624 + $0x140] sm:$0xff] %v7217
        %7474 = vst [vmem:[%s624 + $0x148] sm:$0xff] %v7218
        %7475 = vst [vmem:[%s624 + $0x150] sm:$0xff] %v7219
        %7476 = vst [vmem:[%s624 + $0x158] sm:$0xff] %v7220
        %7477 = vst [vmem:[%s624 + $0x160] sm:$0xff] %v7221
        %7478 = vst [vmem:[%s624 + $0x168] sm:$0xff] %v7222
        %7479 = vst [vmem:[%s624 + $0x170] sm:$0xff] %v7223
        %7480 = vst [vmem:[%s624 + $0x178] sm:$0xff] %v7224
        %7481 = vst [vmem:[%s624 + $0x180] sm:$0xff] %v7225
        %7482 = vst [vmem:[%s624 + $0x188] sm:$0xff] %v7226
        %7483 = vst [vmem:[%s624 + $0x190] sm:$0xff] %v7227
        %7484 = vst [vmem:[%s624 + $0x198] sm:$0xff] %v7228
        %7485 = vst [vmem:[%s624 + $0x1a0] sm:$0xff] %v7229
        %7486 = vst [vmem:[%s624 + $0x1a8] sm:$0xff] %v7230
        %7487 = vst [vmem:[%s624 + $0x1b0] sm:$0xff] %v7231
        %7488 = vst [vmem:[%s624 + $0x1b8] sm:$0xff] %v7232
        %7489 = vst [vmem:[%s624 + $0x1c0] sm:$0xff] %v7233
        %7490 = vst [vmem:[%s624 + $0x1c8] sm:$0xff] %v7234
        %7491 = vst [vmem:[%s624 + $0x1d0] sm:$0xff] %v7235
        %7492 = vst [vmem:[%s624 + $0x1d8] sm:$0xff] %v7236
        %7493 = vst [vmem:[%s624 + $0x1e0] sm:$0xff] %v7237
        %7494 = vst [vmem:[%s624 + $0x1e8] sm:$0xff] %v7238
        %7495 = vst [vmem:[%s624 + $0x1f0] sm:$0xff] %v7239
        %7496 = vst [vmem:[%s624 + $0x1f8] sm:$0xff] %v7240
        %7497 = vst [vmem:[%s631] sm:$0xff] %v7049
        %7498 = vst [vmem:[%s631 + $0x8] sm:$0xff] %v7050
        %7499 = vst [vmem:[%s631 + $0x10] sm:$0xff] %v7051
        %7500 = vst [vmem:[%s631 + $0x18] sm:$0xff] %v7052
        %7501 = vst [vmem:[%s631 + $0x20] sm:$0xff] %v7053
        %7502 = vst [vmem:[%s631 + $0x28] sm:$0xff] %v7054
        %7503 = vst [vmem:[%s631 + $0x30] sm:$0xff] %v7055
        %7504 = vst [vmem:[%s631 + $0x38] sm:$0xff] %v7056
        %7505 = vst [vmem:[%s631 + $0x40] sm:$0xff] %v7057
        %7506 = vst [vmem:[%s631 + $0x48] sm:$0xff] %v7058
        %7507 = vst [vmem:[%s631 + $0x50] sm:$0xff] %v7059
        %7508 = vst [vmem:[%s631 + $0x58] sm:$0xff] %v7060
        %7509 = vst [vmem:[%s631 + $0x60] sm:$0xff] %v7061
        %7510 = vst [vmem:[%s631 + $0x68] sm:$0xff] %v7062
        %7511 = vst [vmem:[%s631 + $0x70] sm:$0xff] %v7063
        %7512 = vst [vmem:[%s631 + $0x78] sm:$0xff] %v7064
        %7513 = vst [vmem:[%s631 + $0x80] sm:$0xff] %v7065
        %7514 = vst [vmem:[%s631 + $0x88] sm:$0xff] %v7066
        %7515 = vst [vmem:[%s631 + $0x90] sm:$0xff] %v7067
        %7516 = vst [vmem:[%s631 + $0x98] sm:$0xff] %v7068
        %7517 = vst [vmem:[%s631 + $0xa0] sm:$0xff] %v7069
        %7518 = vst [vmem:[%s631 + $0xa8] sm:$0xff] %v7070
        %7519 = vst [vmem:[%s631 + $0xb0] sm:$0xff] %v7071
        %7520 = vst [vmem:[%s631 + $0xb8] sm:$0xff] %v7072
        %7521 = vst [vmem:[%s631 + $0xc0] sm:$0xff] %v7073
        %7522 = vst [vmem:[%s631 + $0xc8] sm:$0xff] %v7074
        %7523 = vst [vmem:[%s631 + $0xd0] sm:$0xff] %v7075
        %7524 = vst [vmem:[%s631 + $0xd8] sm:$0xff] %v7076
        %7525 = vst [vmem:[%s631 + $0xe0] sm:$0xff] %v7077
        %7526 = vst [vmem:[%s631 + $0xe8] sm:$0xff] %v7078
        %7527 = vst [vmem:[%s631 + $0xf0] sm:$0xff] %v7079
        %7528 = vst [vmem:[%s631 + $0xf8] sm:$0xff] %v7080
        %7529 = vst [vmem:[%s631 + $0x100] sm:$0xff] %v7081
        %7530 = vst [vmem:[%s631 + $0x108] sm:$0xff] %v7082
        %7531 = vst [vmem:[%s631 + $0x110] sm:$0xff] %v7083
        %7532 = vst [vmem:[%s631 + $0x118] sm:$0xff] %v7084
        %7533 = vst [vmem:[%s631 + $0x120] sm:$0xff] %v7085
        %7534 = vst [vmem:[%s631 + $0x128] sm:$0xff] %v7086
        %7535 = vst [vmem:[%s631 + $0x130] sm:$0xff] %v7087
        %7536 = vst [vmem:[%s631 + $0x138] sm:$0xff] %v7088
        %7537 = vst [vmem:[%s631 + $0x140] sm:$0xff] %v7089
        %7538 = vst [vmem:[%s631 + $0x148] sm:$0xff] %v7090
        %7539 = vst [vmem:[%s631 + $0x150] sm:$0xff] %v7091
        %7540 = vst [vmem:[%s631 + $0x158] sm:$0xff] %v7092
        %7541 = vst [vmem:[%s631 + $0x160] sm:$0xff] %v7093
        %7542 = vst [vmem:[%s631 + $0x168] sm:$0xff] %v7094
        %7543 = vst [vmem:[%s631 + $0x170] sm:$0xff] %v7095
        %7544 = vst [vmem:[%s631 + $0x178] sm:$0xff] %v7096
        %7545 = vst [vmem:[%s631 + $0x180] sm:$0xff] %v7097
        %7546 = vst [vmem:[%s631 + $0x188] sm:$0xff] %v7098
        %7547 = vst [vmem:[%s631 + $0x190] sm:$0xff] %v7099
        %7548 = vst [vmem:[%s631 + $0x198] sm:$0xff] %v7100
        %7549 = vst [vmem:[%s631 + $0x1a0] sm:$0xff] %v7101
        %7550 = vst [vmem:[%s631 + $0x1a8] sm:$0xff] %v7102
        %7551 = vst [vmem:[%s631 + $0x1b0] sm:$0xff] %v7103
        %7552 = vst [vmem:[%s631 + $0x1b8] sm:$0xff] %v7104
        %7553 = vst [vmem:[%s631 + $0x1c0] sm:$0xff] %v7105
        %7554 = vst [vmem:[%s631 + $0x1c8] sm:$0xff] %v7106
        %7555 = vst [vmem:[%s631 + $0x1d0] sm:$0xff] %v7107
        %7556 = vst [vmem:[%s631 + $0x1d8] sm:$0xff] %v7108
        %7557 = vst [vmem:[%s631 + $0x1e0] sm:$0xff] %v7109
        %7558 = vst [vmem:[%s631 + $0x1e8] sm:$0xff] %v7110
        %7559 = vst [vmem:[%s631 + $0x1f0] sm:$0xff] %v7111
        %7560 = vst [vmem:[%s631 + $0x1f8] sm:$0xff] %v7112
        %s7561 = sand.u32 %s265, 1
        %s7562 = scalar_lea.sflag [#allocation4], %s7561
        %s7563 = sand.u32 %s265, 1
        %s7564 = smul.addr %s7563, 512
        %s7565 = scalar_lea.vmem [#allocation10], %s7564
        %s7566 = sand.u32 %s38, 1
        %s7567 = scalar_lea.sflag [#allocation12], %s7566
        %s7568 = sand.u32 %s291, 1
        %s7569 = smul.addr %s7568, 512
        %s7570 = scalar_lea.vmem [#allocation11], %s7569
        %s7571 = sand.u32 %s38, 1
        %s7572 = scalar_lea.sflag [#allocation12], %s7571
        %s7573 = sand.u32 %s317, 1
        %s7574 = smul.addr %s7573, 512
        %s7575 = scalar_lea.vmem [#allocation13], %s7574
        // Predicated region
        $region73: #{cell_forward.1} parent=55 // pred_check
          %p7576 = pneg %p275
        $region74: #{cell_forward.1} parent=55 // pred_check_branch
          %7578 = sbr.rel (%p7576) target = $region76
        $region75: #{cell_forward.1} parent=55 // pred_region
          %s7579 = smul.u32 64, %s38
          %s7580 = ssub.s32 250, %s7579
          %p7581 = scmp.lt.s32.totalorder %s7580, 64
          %s7582 = scalar_select %p7581, %s7580, 64
          %s7583 = smul.u32 8, %s7582
          %s7584 = ssub.s32 512, %s7583
          %s7585 = sshll.u32 %s7584, 4
          %7586 = vsyncadd %s7562, %s7585
          %p7587 = scmp.ne.s32.totalorder 0, %s7583
          %s7588 = smul.addr %s7579, 8
          %s7589 = scalar_lea.hbm %s9, %s7588
          %s7590 = smul.u32 8, %s7582
          %s7591 = sshll.u32 %s7565, 4
          %s7592 = int_to_ptr.vmem [resolvable:$true] %s7591
          %s7593 = sshll.u32 %s7589, 4
          %s7594 = int_to_ptr.hbm [resolvable:$true] %s7593
          %s7595 = sshll.u32 %s7590, 4
          %7599 = dma.vmem_to_hbm [thread:$0]  (%p7587), %s7592, %s7595, %s7594, %s7562, 128, 128, 8
        $region76: #{cell_forward.1} parent=55 // pred_fallthru
          _
        // Predicated region
        $region77: #{cell_forward.1} parent=55 // pred_check
          %p7600 = pneg %p301
        $region78: #{cell_forward.1} parent=55 // pred_check_branch
          %7602 = sbr.rel (%p7600) target = $region80
        $region79: #{cell_forward.1} parent=55 // pred_region
          %s7603 = smul.u32 64, %s38
          %s7604 = ssub.s32 250, %s7603
          %p7605 = scmp.lt.s32.totalorder %s7604, 64
          %s7606 = scalar_select %p7605, %s7604, 64
          %s7607 = smul.u32 8, %s7606
          %s7608 = ssub.s32 512, %s7607
          %s7609 = sshll.u32 %s7608, 4
          %7610 = vsyncadd %s7567, %s7609
          %p7611 = scmp.ne.s32.totalorder 0, %s7607
          %s7612 = smul.addr %s7603, 8
          %s7613 = scalar_lea.hbm %s10, %s7612
          %s7614 = smul.u32 8, %s7606
          %s7615 = sshll.u32 %s7570, 4
          %s7616 = int_to_ptr.vmem [resolvable:$true] %s7615
          %s7617 = sshll.u32 %s7613, 4
          %s7618 = int_to_ptr.hbm [resolvable:$true] %s7617
          %s7619 = sshll.u32 %s7614, 4
          %7623 = dma.vmem_to_hbm [thread:$0]  (%p7611), %s7616, %s7619, %s7618, %s7567, 128, 128, 8
        $region80: #{cell_forward.1} parent=55 // pred_fallthru
          _
        // Predicated region
        $region81: #{cell_forward.1} parent=55 // pred_check
          %p7624 = pneg %p327
        $region82: #{cell_forward.1} parent=55 // pred_check_branch
          %7626 = sbr.rel (%p7624) target = $region84
        $region83: #{cell_forward.1} parent=55 // pred_region
          %s7627 = smul.u32 64, %s38
          %s7628 = ssub.s32 250, %s7627
          %p7629 = scmp.lt.s32.totalorder %s7628, 64
          %s7630 = scalar_select %p7629, %s7628, 64
          %s7631 = smul.u32 8, %s7630
          %s7632 = ssub.s32 512, %s7631
          %s7633 = sshll.u32 %s7632, 4
          %7634 = vsyncadd %s7572, %s7633
          %p7635 = scmp.ne.s32.totalorder 0, %s7631
          %s7636 = smul.addr %s7627, 8
          %s7637 = scalar_lea.hbm %s11, %s7636
          %s7638 = smul.u32 8, %s7630
          %s7639 = sshll.u32 %s7575, 4
          %s7640 = int_to_ptr.vmem [resolvable:$true] %s7639
          %s7641 = sshll.u32 %s7637, 4
          %s7642 = int_to_ptr.hbm [resolvable:$true] %s7641
          %s7643 = sshll.u32 %s7638, 4
          %7647 = dma.vmem_to_hbm [thread:$0]  (%p7635), %s7640, %s7643, %s7642, %s7572, 128, 128, 8
        $region84: #{cell_forward.1} parent=55 // pred_fallthru
          _
      $region56: #{cell_forward.1} parent=5 // pred_fallthru
        _
      %p7648 = scmp.le.s32.totalorder 2, %s33
      // Predicated region
      $region85: #{cell_forward.1} parent=5 // pred_check
        %p7649 = pneg %p7648
      $region86: #{cell_forward.1} parent=5 // pred_check_branch
        %7651 = sbr.rel (%p7649) target = $region88
      $region87: #{cell_forward.1} parent=5 // pred_region
        %s7652 = ssub.s32 %s33, 2
        // Predicated region
        $region89: #{cell_forward.1} parent=87 // pred_check
          %p7653 = pneg %p281
        $region90: #{cell_forward.1} parent=87 // pred_check_branch
          %7655 = sbr.rel (%p7653) target = $region92
        $region91: #{cell_forward.1} parent=87 // pred_region
          %s7656 = sand.u32 %s266, 1
          %s7657 = scalar_lea.sflag [#allocation4], %s7656
          %s7658 = sand.u32 %s266, 1
          %s7659 = smul.addr %s7658, 512
          %s7660 = scalar_lea.vmem [#allocation10], %s7659
          %7662 = dma.done %s7657, 8192
        $region92: #{cell_forward.1} parent=87 // pred_fallthru
          _
        // Predicated region
        $region93: #{cell_forward.1} parent=87 // pred_check
          %p7663 = pneg %p307
        $region94: #{cell_forward.1} parent=87 // pred_check_branch
          %7665 = sbr.rel (%p7663) target = $region96
        $region95: #{cell_forward.1} parent=87 // pred_region
          %s7666 = sand.u32 %s39, 1
          %s7667 = scalar_lea.sflag [#allocation12], %s7666
          %s7668 = sand.u32 %s292, 1
          %s7669 = smul.addr %s7668, 512
          %s7670 = scalar_lea.vmem [#allocation11], %s7669
          %7672 = dma.done %s7667, 8192
        $region96: #{cell_forward.1} parent=87 // pred_fallthru
          _
        // Predicated region
        $region97: #{cell_forward.1} parent=87 // pred_check
          %p7673 = pneg %p333
        $region98: #{cell_forward.1} parent=87 // pred_check_branch
          %7675 = sbr.rel (%p7673) target = $region100
        $region99: #{cell_forward.1} parent=87 // pred_region
          %s7676 = sand.u32 %s39, 1
          %s7677 = scalar_lea.sflag [#allocation12], %s7676
          %s7678 = sand.u32 %s318, 1
          %s7679 = smul.addr %s7678, 512
          %s7680 = scalar_lea.vmem [#allocation13], %s7679
          %7682 = dma.done %s7677, 8192
        $region100: #{cell_forward.1} parent=87 // pred_fallthru
          _
      $region88: #{cell_forward.1} parent=5 // pred_fallthru
        _
    $region6: #{cell_forward.1} parent=1 // loop_footer
      %s37 = sadd.s32 1, %s33
    $region7: #{cell_forward.1} parent=1 // loop_footer_branch
      %32 = sbr.rel target = $region3
    $region8: #{cell_forward.1} parent=1 // loop_exit
      _
    %7683 = vsyncpa [#allocation3], 1
    %s7684 = scalar_lea.sflag [#allocation3], 1
    %7685 = vsyncpa %s7684, 1
    %7686 = vsyncpa [#allocation6], 1
    %s7687 = scalar_lea.sflag [#allocation6], 1
    %7688 = vsyncpa %s7687, 1
    %7689 = vsyncpa [#allocation9], 1
    %s7690 = scalar_lea.sflag [#allocation9], 1
    %7691 = vsyncpa %s7690, 1
    %7692 = vsyncpa [#allocation4], 1
    %s7693 = scalar_lea.sflag [#allocation4], 1
    %7694 = vsyncpa %s7693, 1
    %7695 = vsyncpa [#allocation12], 1
    %s7696 = scalar_lea.sflag [#allocation12], 1
    %7697 = vsyncpa %s7696, 1

</llo_original>
